<compile_context>
chip_gen: v6e
topology: v6e:2x2x1
jax: 0.10.0
libtpu: 0.0.40
codegen_flags: <defaults>
</compile_context>

<pallas_src>
import functools
import math

import numpy as np
import jax
import jax.numpy as jnp
from jax import lax
from jax.experimental import pallas as pl
from jax.experimental.pallas import tpu as pltpu


# ----------------------------------------------------------------------------
# Static model configuration (stand-in dims match the PyTorch spec interface)
# ----------------------------------------------------------------------------
PAD_CLASSES = 128                       # lane-dense classifier head padding
CONV_C = 32                             # conv-stem channels per backbone
BACKBONE_OUT = (384, 128, 128, 128)     # resnet_t, resnet_n0, resnet_n1, resnet_n2
HEADS = 4
D_MODEL = 64
DS_HIDDEN = 256
DS_OUT = 768
GAT_OUT = 64
NUM_NODES = 5
FC_IN = NUM_NODES * GAT_OUT             # 320
FC_IN_PAD = 384                         # lane-dense padding of the GAT flatten


def _selu(y):
    alpha = 1.6732632423543772
    scale = 1.0507009873554805
    return scale * jnp.where(y > 0.0, y, alpha * (jnp.exp(y) - 1.0))


# ----------------------------------------------------------------------------
# The single fused forward kernel
# ----------------------------------------------------------------------------
def _fused_forward_kernel(
        # -- inputs ---------------------------------------------------------
        pt_ref, p0_ref, p1_ref, p2_ref,                     # im2col patch mats
        conv_w_ref, conv_b_ref, fc_w_ref, fc_b_ref,         # packed conv stems
        wqkv_t_ref, bqkv_t_ref, wqkv_n_ref, bqkv_n_ref,     # cross-attn QKV
        wo_t_ref, bo_t_ref, wo_n_ref, bo_n_ref,             # cross-attn out proj
        blood_ref, trad_ref, nrad_ref,                      # tabular inputs
        dsb_w1_ref, dsb_b1_ref, dsb_w2_ref, dsb_b2_ref,     # DeepSurv blood
        dst_w1_ref, dst_b1_ref, dst_w2_ref, dst_b2_ref,     # DeepSurv t_radiomics
        dsn_w1_ref, dsn_b1_ref, dsn_w2_ref, dsn_b2_ref,     # DeepSurv n_radiomics
        gw_ref, gasrc_ref, gadst_ref,                       # GAT
        fw1_ref, fb1_ref, fw2_ref, fb2_ref, fw3_ref, fb3_ref,  # classifier
        # -- outputs --------------------------------------------------------
        feats_ref, tm_ref, nm_ref, ag_ref, probs_ref,
        *, batch, seg_sizes, heads, d_model, num_class, use_modal):
    B, H, D = batch, heads, d_model
    HD = H * D

    # ------------ stage 1: 4 conv stems + GAP + FC heads (backbones) -------
    patches = jnp.concatenate(
        [pt_ref[...].astype(jnp.bfloat16), p0_ref[...].astype(jnp.bfloat16),
         p1_ref[...].astype(jnp.bfloat16), p2_ref[...].astype(jnp.bfloat16)],
        axis=0)                                              # (M, 27) bf16
    hc = jnp.dot(patches, conv_w_ref[...],
                 preferred_element_type=jnp.float32) + conv_b_ref[...]
    hc = jnp.maximum(hc, 0.0)                                # (M, 128)

    # global average pool via static per-segment sublane sums (no pool matmul)
    pooled_rows = []
    off = 0
    for S in seg_sizes:                                      # static sizes
        for b in range(B):
            seg = hc[off + b * S: off + (b + 1) * S, :]
            pooled_rows.append(jnp.sum(seg, axis=0, keepdims=True) * (1.0 / S))
        off += B * S
    pooled = jnp.concatenate(pooled_rows, axis=0)            # (4B, 128)

    # block-diagonal FC heads: (4B, 128) @ (128, 768)
    feats_all = jnp.dot(pooled.astype(jnp.bfloat16), fc_w_ref[...],
                        preferred_element_type=jnp.float32) + fc_b_ref[...]
    parts = []
    col = 0
    for k, nd in enumerate(BACKBONE_OUT):                    # col offsets 0/384/512/640
        parts.append(feats_all[k * B:(k + 1) * B, col:col + nd])
        col += nd
    feats = jnp.concatenate(parts, axis=1)                   # (B, 768)
    feats_ref[...] = feats
    t = feats[:, :384]
    n = feats[:, 384:]

    # ------------ stage 2: bidirectional cross-attention -------------------
    projt = jnp.dot(t.astype(jnp.bfloat16), wqkv_t_ref[...],
                    preferred_element_type=jnp.float32) + bqkv_t_ref[...]
    projn = jnp.dot(n.astype(jnp.bfloat16), wqkv_n_ref[...],
                    preferred_element_type=jnp.float32) + bqkv_n_ref[...]

    def split_heads(p, off):
        # (B, H*D) column block at `off` -> (H*B, D), row index = h*B + b
        return jnp.concatenate(
            [p[:, off + hh * D: off + (hh + 1) * D] for hh in range(H)], axis=0)

    qt, kt, vt = (split_heads(projt, 0), split_heads(projt, HD),
                  split_heads(projt, 2 * HD))
    qn, kn, vn = (split_heads(projn, 0), split_heads(projn, HD),
                  split_heads(projn, 2 * HD))

    HB = H * B
    ii = lax.broadcasted_iota(jnp.int32, (HB, HB), 0)
    jj = lax.broadcasted_iota(jnp.int32, (HB, HB), 1)
    # same-sample mask: every row keeps exactly H valid keys, so the softmax
    # is never fully masked (invariant relied upon by the -1e30 fill below).
    same_sample = (ii % B) == (jj % B)
    scale = 1.0 / math.sqrt(D)

    def attend(q2, k2, v2):
        s = lax.dot_general(q2, k2, (((1,), (1,)), ((), ())),
                            preferred_element_type=jnp.float32) * scale
        s = jnp.where(same_sample, s, -1e30)
        s = s - jnp.max(s, axis=-1, keepdims=True)
        p = jnp.exp(s)
        p = p * pl.reciprocal(jnp.sum(p, axis=-1, keepdims=True), approx=True)
        return jnp.dot(p, v2, preferred_element_type=jnp.float32)   # (HB, D)

    att_t = attend(qt, kn, vn)         # tumor queries attend to node keys/values
    att_n = attend(qn, kt, vt)

    def merge_heads(blk):
        # (H*B, D) -> (B, H*D)
        return jnp.concatenate([blk[hh * B:(hh + 1) * B, :] for hh in range(H)],
                               axis=1)

    t_att = merge_heads(att_t)
    n_att = merge_heads(att_n)

    t_s = jnp.dot(t_att.astype(jnp.bfloat16), wo_t_ref[...],
                  preferred_element_type=jnp.float32) + bo_t_ref[...]
    n_s = jnp.dot(n_att.astype(jnp.bfloat16), wo_n_ref[...],
                  preferred_element_type=jnp.float32) + bo_n_ref[...]
    t_m = t + t_s
    n_m = n + n_s
    tm_ref[...] = t_m
    nm_ref[...] = n_m

    t_base = t_m if use_modal else t            # concat_type selection (static)
    n_base = n_m if use_modal else n
    t_emb = jnp.concatenate([t_base, t_s], axis=1)          # (B, 768), 128-aligned
    n_emb = jnp.concatenate([n_base, n_s], axis=1)

    # ------------ stage 3: 3x DeepSurv MLPs --------------------------------
    def deep_surv(x_ref, w1_ref, b1_ref, w2_ref, b2_ref):
        h1 = _selu(jnp.dot(x_ref[...].astype(jnp.bfloat16), w1_ref[...],
                           preferred_element_type=jnp.float32) + b1_ref[...])
        return jnp.dot(h1.astype(jnp.bfloat16), w2_ref[...],
                       preferred_element_type=jnp.float32) + b2_ref[...]

    blo = deep_surv(blood_ref, dsb_w1_ref, dsb_b1_ref, dsb_w2_ref, dsb_b2_ref)
    trd = deep_surv(trad_ref, dst_w1_ref, dst_b1_ref, dst_w2_ref, dst_b2_ref)
    nrd = deep_surv(nrad_ref, dsn_w1_ref, dsn_b1_ref, dsn_w2_ref, dsn_b2_ref)

    # ------------ stage 4: dense batched GAT (block-diagonal graphs) -------
    # node ordering: row = type*B + b, types = [t_emb, n_emb, blood, t_rad, n_rad]
    nodes = jnp.concatenate([t_emb, n_emb, blo, trd, nrd], axis=0)      # (5B, 768)
    hg = jnp.dot(nodes.astype(jnp.bfloat16), gw_ref[...],
                 preferred_element_type=jnp.float32)                    # (5B, 64)
    s_src = jnp.sum(hg * gasrc_ref[...], axis=-1, keepdims=True)        # (5B, 1)
    s_dst = lax.dot_general(gadst_ref[...], hg, (((1,), (1,)), ((), ())),
                            preferred_element_type=jnp.float32)         # (1, 5B)
    e = s_src + s_dst
    e = jnp.where(e > 0.0, e, 0.2 * e)                                  # LeakyReLU(0.2)
    nnod = NUM_NODES * B
    gi = lax.broadcasted_iota(jnp.int32, (nnod, nnod), 0)
    gj = lax.broadcasted_iota(jnp.int32, (nnod, nnod), 1)
    # same graph, no self loops -> every row keeps NUM_NODES-1 valid neighbours
    gvalid = ((gi % B) == (gj % B)) & (gi != gj)
    e = jnp.where(gvalid, e, -1e30)
    e = e - jnp.max(e, axis=-1, keepdims=True)
    p = jnp.exp(e)
    p = p * pl.reciprocal(jnp.sum(p, axis=-1, keepdims=True), approx=True)
    gat_out = jnp.dot(p, hg, preferred_element_type=jnp.float32)        # (5B, 64)

    # per-sample flatten of the 5 node embeddings, padded lane-dense to 384
    ag_parts = [gat_out[k * B:(k + 1) * B, :] for k in range(NUM_NODES)]
    ag_parts.append(jnp.zeros((B, FC_IN_PAD - FC_IN), jnp.float32))
    ag_pad = jnp.concatenate(ag_parts, axis=1)                          # (B, 384)
    ag_ref[...] = ag_pad

    # ------------ stage 5: classifier 320->1024->256->num_class ------------
    f1 = _selu(jnp.dot(ag_pad.astype(jnp.bfloat16), fw1_ref[...],
                       preferred_element_type=jnp.float32) + fb1_ref[...])
    f2 = _selu(jnp.dot(f1.astype(jnp.bfloat16), fw2_ref[...],
                       preferred_element_type=jnp.float32) + fb2_ref[...])
    logits = jnp.dot(f2.astype(jnp.bfloat16), fw3_ref[...],
                     preferred_element_type=jnp.float32) + fb3_ref[...]  # (B, 128)
    colid = lax.broadcasted_iota(jnp.int32, logits.shape, 1)
    logits = jnp.where(colid < num_class, logits, -1e30)
    logits = logits - jnp.max(logits, axis=-1, keepdims=True)
    pe = jnp.exp(logits)
    # exact normalization for the user-facing probabilities
    probs_ref[...] = pe / jnp.sum(pe, axis=-1, keepdims=True)


# ----------------------------------------------------------------------------
# XLA glue: channel-last im2col (no HBM transpose) for the conv stems
# ----------------------------------------------------------------------------
def _im2col(x):
    """x: (B, 1, D, H, W) NCDHW -> ((B*S, 27) channel-last patch matrix, S)."""
    B, C, D, H, W = x.shape
    assert C == 1
    x_cl = x.reshape(B, D, H, W, C)           # pure relabel since C == 1
    patches = lax.conv_general_dilated_patches(
        x_cl, filter_shape=(3, 3, 3), window_strides=(2, 2, 2),
        padding=((1, 1), (1, 1), (1, 1)),
        dimension_numbers=("NDHWC", "DHWIO", "NDHWC"))   # (B, OD, OH, OW, 27)
    S = int(np.prod(patches.shape[1:4]))
    K = patches.shape[-1]
    return patches.reshape(B * S, K), S


def _cost_estimate(args, out_shapes, B, M):
    flops = 2 * (
        M * 27 * 4 * CONV_C
        + 4 * B * 4 * CONV_C * sum(BACKBONE_OUT)
        + 2 * B * 384 * 3 * HEADS * D_MODEL
        + 2 * (HEADS * B) * (HEADS * B) * D_MODEL * 2
        + 2 * B * HEADS * D_MODEL * 384
        + B * (33 + 32 + 19) * DS_HIDDEN
        + 3 * B * DS_HIDDEN * DS_OUT
        + NUM_NODES * B * DS_OUT * GAT_OUT
        + (NUM_NODES * B) ** 2 * GAT_OUT
        + B * FC_IN_PAD * 1024 + B * 1024 * 256 + B * 256 * PAD_CLASSES)
    transcendentals = (2 * (HEADS * B) * (HEADS * B)
                       + (NUM_NODES * B) ** 2
                       + B * PAD_CLASSES
                       + 3 * B * DS_HIDDEN + B * (1024 + 256))
    bytes_accessed = (sum(int(a.size) * np.dtype(a.dtype).itemsize for a in args)
                      + sum(int(np.prod(s.shape)) * 4 for s in out_shapes))
    return pl.CostEstimate(flops=int(flops), transcendentals=int(transcendentals),
                           bytes_accessed=int(bytes_accessed))


# ----------------------------------------------------------------------------
# Full forward
# ----------------------------------------------------------------------------
@functools.partial(jax.jit, static_argnames=("concat_type", "num_class"))
def build_model_forward(params, t_img, n_patch0, n_patch1, n_patch2,
                        blood, n_radiomics, t_radiomics,
                        concat_type="train", num_class=10):
    assert num_class <= PAD_CLASSES
    B = t_img.shape[0]

    # im2col for the four conv stems (patch matrices passed separately;
    # no HBM concat ahead of the kernel).
    pt, S_t = _im2col(t_img)
    p0, S_0 = _im2col(n_patch0)
    p1, S_1 = _im2col(n_patch1)
    p2, S_2 = _im2col(n_patch2)
    seg_sizes = (S_t, S_0, S_1, S_2)
    M = B * sum(seg_sizes)

    bp = params["backbones"]
    ca = params["cross_attn"]
    ds = params["deepsurv"]
    g = params["gat"]
    fc = params["fc"]

    args = (pt, p0, p1, p2,
            bp["conv_w"], bp["conv_b"], bp["fc_w"], bp["fc_b"],
            ca["wqkv_t"], ca["bqkv_t"], ca["wqkv_n"], ca["bqkv_n"],
            ca["wo_t"], ca["bo_t"], ca["wo_n"], ca["bo_n"],
            blood, t_radiomics, n_radiomics,
            ds["blood"]["w1"], ds["blood"]["b1"], ds["blood"]["w2"], ds["blood"]["b2"],
            ds["trad"]["w1"], ds["trad"]["b1"], ds["trad"]["w2"], ds["trad"]["b2"],
            ds["nrad"]["w1"], ds["nrad"]["b1"], ds["nrad"]["w2"], ds["nrad"]["b2"],
            g["w"], g["a_src"], g["a_dst"],
            fc["w1"], fc["b1"], fc["w2"], fc["b2"], fc["w3"], fc["b3"])

    out_shapes = (
        jax.ShapeDtypeStruct((B, 768), jnp.float32),        # feats (t_um | n_um)
        jax.ShapeDtypeStruct((B, 384), jnp.float32),        # t_m
        jax.ShapeDtypeStruct((B, 384), jnp.float32),        # n_m
        jax.ShapeDtypeStruct((B, FC_IN_PAD), jnp.float32),  # after_GAT (padded)
        jax.ShapeDtypeStruct((B, PAD_CLASSES), jnp.float32))  # probs (padded)

    kernel = functools.partial(
        _fused_forward_kernel, batch=B, seg_sizes=seg_sizes,
        heads=HEADS, d_model=D_MODEL, num_class=num_class,
        use_modal=(concat_type == "train"))

    feats, t_m, n_m, ag_pad, probs_pad = pl.pallas_call(
        kernel,
        out_shape=out_shapes,
        grid=(1,),
        in_specs=[pl.BlockSpec(a.shape, lambda i: (0, 0)) for a in args],
        out_specs=tuple(pl.BlockSpec(s.shape, lambda i: (0, 0)) for s in out_shapes),
        compiler_params=pltpu.CompilerParams(dimension_semantics=("arbitrary",)),
        cost_estimate=_cost_estimate(args, out_shapes, B, M),
    )(*args)

    t_um = feats[:, :384]
    n_um = feats[:, 384:]
    after_GAT = ag_pad[:, :FC_IN]
    probs = probs_pad[:, :num_class]
    return t_um, t_m, n_um, n_m, after_GAT, probs


# ----------------------------------------------------------------------------
# Deterministic synthetic parameters (packed / padded layouts, bf16 weights)
# ----------------------------------------------------------------------------
def _dense(key, fan_in, fan_out, w_dtype=jnp.float32):
    kw, kb = jax.random.split(key)
    w = (jax.random.normal(kw, (fan_in, fan_out), jnp.float32)
         / math.sqrt(fan_in)).astype(w_dtype)
    b = 0.01 * jax.random.normal(kb, (1, fan_out), jnp.float32)
    return w, b


def _backbone_params(key):
    ks = jax.random.split(key, 8)
    conv_ws, conv_bs = [], []
    for i in range(4):
        w, b = _dense(ks[i], 27, CONV_C, w_dtype=jnp.bfloat16)
        conv_ws.append(w)
        conv_bs.append(b)
    conv_w = jnp.concatenate(conv_ws, axis=1)             # (27, 128) bf16
    conv_b = jnp.concatenate(conv_bs, axis=1)             # (1, 128)  f32

    fc_w = jnp.zeros((4 * CONV_C, sum(BACKBONE_OUT)), jnp.float32)
    fc_b_parts = []
    col = 0
    for i, nd in enumerate(BACKBONE_OUT):
        w, b = _dense(ks[4 + i], CONV_C, nd)
        fc_w = fc_w.at[i * CONV_C:(i + 1) * CONV_C, col:col + nd].set(w)
        fc_b_parts.append(b)
        col += nd
    return dict(conv_w=conv_w, conv_b=conv_b,
                fc_w=fc_w.astype(jnp.bfloat16),            # (128, 768) bf16
                fc_b=jnp.concatenate(fc_b_parts, axis=1))  # (1, 768)  f32


def _cross_attn_params(key):
    dm = HEADS * D_MODEL
    ks = jax.random.split(key, 4)

    def packed_qkv(k):
        kq, kk, kv = jax.random.split(k, 3)
        wq, bq = _dense(kq, 384, dm)
        wk, bk = _dense(kk, 384, dm)
        wv, bv = _dense(kv, 384, dm)
        return (jnp.concatenate([wq, wk, wv], axis=1).astype(jnp.bfloat16),
                jnp.concatenate([bq, bk, bv], axis=1))

    wqkv_t, bqkv_t = packed_qkv(ks[0])
    wqkv_n, bqkv_n = packed_qkv(ks[1])
    wo_t, bo_t = _dense(ks[2], dm, 384, w_dtype=jnp.bfloat16)
    wo_n, bo_n = _dense(ks[3], dm, 384, w_dtype=jnp.bfloat16)
    return dict(wqkv_t=wqkv_t, bqkv_t=bqkv_t, wqkv_n=wqkv_n, bqkv_n=bqkv_n,
                wo_t=wo_t, bo_t=bo_t, wo_n=wo_n, bo_n=bo_n)


def _deepsurv_branch(key, in_dim):
    k1, k2 = jax.random.split(key)
    w1, b1 = _dense(k1, in_dim, DS_HIDDEN, w_dtype=jnp.bfloat16)
    w2, b2 = _dense(k2, DS_HIDDEN, DS_OUT, w_dtype=jnp.bfloat16)
    return dict(w1=w1, b1=b1, w2=w2, b2=b2)


def init_params(key, num_class=10):
    kb, kc, kd, kg, kf = jax.random.split(key, 5)
    backbones = _backbone_params(kb)
    cross_attn = _cross_attn_params(kc)

    kd1, kd2, kd3 = jax.random.split(kd, 3)
    deepsurv = dict(blood=_deepsurv_branch(kd1, 33),
                    trad=_deepsurv_branch(kd2, 32),
                    nrad=_deepsurv_branch(kd3, 19))

    g1, g2, g3 = jax.random.split(kg, 3)
    gat = dict(
        w=(jax.random.normal(g1, (DS_OUT, GAT_OUT), jnp.float32)
           / math.sqrt(DS_OUT)).astype(jnp.bfloat16),
        a_src=jax.random.normal(g2, (1, GAT_OUT), jnp.float32) / math.sqrt(GAT_OUT),
        a_dst=jax.random.normal(g3, (1, GAT_OUT), jnp.float32) / math.sqrt(GAT_OUT),
    )

    f1, f2, f3 = jax.random.split(kf, 3)
    w1r, b1 = _dense(f1, FC_IN, 1024)
    w1 = (jnp.zeros((FC_IN_PAD, 1024), jnp.float32)
          .at[:FC_IN, :].set(w1r).astype(jnp.bfloat16))
    w2, b2 = _dense(f2, 1024, 256, w_dtype=jnp.bfloat16)
    w3r, b3r = _dense(f3, 256, num_class)
    w3 = (jnp.zeros((256, PAD_CLASSES), jnp.float32)
          .at[:, :num_class].set(w3r).astype(jnp.bfloat16))
    b3 = jnp.zeros((1, PAD_CLASSES), jnp.float32).at[:, :num_class].set(b3r)
    fc = dict(w1=w1, b1=b1, w2=w2, b2=b2, w3=w3, b3=b3)

    return dict(backbones=backbones, cross_attn=cross_attn,
                deepsurv=deepsurv, gat=gat, fc=fc)


# ----------------------------------------------------------------------------
if __name__ == "__main__":
    key = jax.random.PRNGKey(0)
    pkey, dkey = jax.random.split(key)
    params = init_params(pkey, num_class=10)

    ks = jax.random.split(dkey, 7)
    B = 2
    t_img = jax.random.normal(ks[0], (B, 1, 8, 16, 16), jnp.float32)
    n_patch0 = jax.random.normal(ks[1], (B, 1, 4, 12, 12), jnp.float32)
    n_patch1 = jax.random.normal(ks[2], (B, 1, 4, 8, 8), jnp.float32)
    n_patch2 = jax.random.normal(ks[3], (B, 1, 4, 8, 8), jnp.float32)
    blood = jax.random.normal(ks[4], (B, 33), jnp.float32)
    n_radiomics = jax.random.normal(ks[5], (B, 19), jnp.float32)
    t_radiomics = jax.random.normal(ks[6], (B, 32), jnp.float32)

    outs = build_model_forward(params, t_img, n_patch0, n_patch1, n_patch2,
                               blood, n_radiomics, t_radiomics,
                               concat_type="train", num_class=10)
    jax.block_until_ready(outs)

    t_um, t_m, n_um, n_m, after_GAT, probs = outs
    assert t_um.shape == (B, 384) and t_m.shape == (B, 384)
    assert n_um.shape == (B, 384) and n_m.shape == (B, 384)
    assert after_GAT.shape == (B, 320) and probs.shape == (B, 10)
    assert bool(jnp.all(jnp.isfinite(probs)))
    assert bool(jnp.all(jnp.abs(jnp.sum(probs, axis=-1) - 1.0) < 1e-3))
    print("KERNEL_OK")
</pallas_src>

<mosaic_0001>
module attributes {stable_mosaic.version = 11 : i64} {
  func.func @_fused_forward_kernel(%arg0: i32, %arg1: memref<512x27xf32, #tpu.memory_space<vmem>>, %arg2: memref<144x27xf32, #tpu.memory_space<vmem>>, %arg3: memref<64x27xf32, #tpu.memory_space<vmem>>, %arg4: memref<64x27xf32, #tpu.memory_space<vmem>>, %arg5: memref<27x128xbf16, #tpu.memory_space<vmem>>, %arg6: memref<1x128xf32, #tpu.memory_space<vmem>>, %arg7: memref<128x768xbf16, #tpu.memory_space<vmem>>, %arg8: memref<1x768xf32, #tpu.memory_space<vmem>>, %arg9: memref<384x768xbf16, #tpu.memory_space<vmem>>, %arg10: memref<1x768xf32, #tpu.memory_space<vmem>>, %arg11: memref<384x768xbf16, #tpu.memory_space<vmem>>, %arg12: memref<1x768xf32, #tpu.memory_space<vmem>>, %arg13: memref<256x384xbf16, #tpu.memory_space<vmem>>, %arg14: memref<1x384xf32, #tpu.memory_space<vmem>>, %arg15: memref<256x384xbf16, #tpu.memory_space<vmem>>, %arg16: memref<1x384xf32, #tpu.memory_space<vmem>>, %arg17: memref<2x33xf32, #tpu.memory_space<vmem>>, %arg18: memref<2x32xf32, #tpu.memory_space<vmem>>, %arg19: memref<2x19xf32, #tpu.memory_space<vmem>>, %arg20: memref<33x256xbf16, #tpu.memory_space<vmem>>, %arg21: memref<1x256xf32, #tpu.memory_space<vmem>>, %arg22: memref<256x768xbf16, #tpu.memory_space<vmem>>, %arg23: memref<1x768xf32, #tpu.memory_space<vmem>>, %arg24: memref<32x256xbf16, #tpu.memory_space<vmem>>, %arg25: memref<1x256xf32, #tpu.memory_space<vmem>>, %arg26: memref<256x768xbf16, #tpu.memory_space<vmem>>, %arg27: memref<1x768xf32, #tpu.memory_space<vmem>>, %arg28: memref<19x256xbf16, #tpu.memory_space<vmem>>, %arg29: memref<1x256xf32, #tpu.memory_space<vmem>>, %arg30: memref<256x768xbf16, #tpu.memory_space<vmem>>, %arg31: memref<1x768xf32, #tpu.memory_space<vmem>>, %arg32: memref<768x64xbf16, #tpu.memory_space<vmem>>, %arg33: memref<1x64xf32, #tpu.memory_space<vmem>>, %arg34: memref<1x64xf32, #tpu.memory_space<vmem>>, %arg35: memref<384x1024xbf16, #tpu.memory_space<vmem>>, %arg36: memref<1x1024xf32, #tpu.memory_space<vmem>>, %arg37: memref<1024x256xbf16, #tpu.memory_space<vmem>>, %arg38: memref<1x256xf32, #tpu.memory_space<vmem>>, %arg39: memref<256x128xbf16, #tpu.memory_space<vmem>>, %arg40: memref<1x128xf32, #tpu.memory_space<vmem>>, %arg41: memref<2x768xf32, #tpu.memory_space<vmem>>, %arg42: memref<2x384xf32, #tpu.memory_space<vmem>>, %arg43: memref<2x384xf32, #tpu.memory_space<vmem>>, %arg44: memref<2x384xf32, #tpu.memory_space<vmem>>, %arg45: memref<2x128xf32, #tpu.memory_space<vmem>>) attributes {dimension_semantics = [#tpu.dimension_semantics<arbitrary>], iteration_bounds = array<i64: 1>, scalar_prefetch = 0 : i64, scratch_operands = 0 : i64, tpu.core_type = #tpu.core_type<tc>, window_params = [{pipeline_mode = #tpu.pipeline_mode<synchronous>, transform_indices = @transform_0, window_bounds = array<i64: 512, 27>}, {pipeline_mode = #tpu.pipeline_mode<synchronous>, transform_indices = @transform_1, window_bounds = array<i64: 144, 27>}, {pipeline_mode = #tpu.pipeline_mode<synchronous>, transform_indices = @transform_2, window_bounds = array<i64: 64, 27>}, {pipeline_mode = #tpu.pipeline_mode<synchronous>, transform_indices = @transform_3, window_bounds = array<i64: 64, 27>}, {pipeline_mode = #tpu.pipeline_mode<synchronous>, transform_indices = @transform_4, window_bounds = array<i64: 27, 128>}, {pipeline_mode = #tpu.pipeline_mode<synchronous>, transform_indices = @transform_5, window_bounds = array<i64: 1, 128>}, {pipeline_mode = #tpu.pipeline_mode<synchronous>, transform_indices = @transform_6, window_bounds = array<i64: 128, 768>}, {pipeline_mode = #tpu.pipeline_mode<synchronous>, transform_indices = @transform_7, window_bounds = array<i64: 1, 768>}, {pipeline_mode = #tpu.pipeline_mode<synchronous>, transform_indices = @transform_8, window_bounds = array<i64: 384, 768>}, {pipeline_mode = #tpu.pipeline_mode<synchronous>, transform_indices = @transform_9, window_bounds = array<i64: 1, 768>}, {pipeline_mode = #tpu.pipeline_mode<synchronous>, transform_indices = @transform_10, window_bounds = array<i64: 384, 768>}, {pipeline_mode = #tpu.pipeline_mode<synchronous>, transform_indices = @transform_11, window_bounds = array<i64: 1, 768>}, {pipeline_mode = #tpu.pipeline_mode<synchronous>, transform_indices = @transform_12, window_bounds = array<i64: 256, 384>}, {pipeline_mode = #tpu.pipeline_mode<synchronous>, transform_indices = @transform_13, window_bounds = array<i64: 1, 384>}, {pipeline_mode = #tpu.pipeline_mode<synchronous>, transform_indices = @transform_14, window_bounds = array<i64: 256, 384>}, {pipeline_mode = #tpu.pipeline_mode<synchronous>, transform_indices = @transform_15, window_bounds = array<i64: 1, 384>}, {pipeline_mode = #tpu.pipeline_mode<synchronous>, transform_indices = @transform_16, window_bounds = array<i64: 2, 33>}, {pipeline_mode = #tpu.pipeline_mode<synchronous>, transform_indices = @transform_17, window_bounds = array<i64: 2, 32>}, {pipeline_mode = #tpu.pipeline_mode<synchronous>, transform_indices = @transform_18, window_bounds = array<i64: 2, 19>}, {pipeline_mode = #tpu.pipeline_mode<synchronous>, transform_indices = @transform_19, window_bounds = array<i64: 33, 256>}, {pipeline_mode = #tpu.pipeline_mode<synchronous>, transform_indices = @transform_20, window_bounds = array<i64: 1, 256>}, {pipeline_mode = #tpu.pipeline_mode<synchronous>, transform_indices = @transform_21, window_bounds = array<i64: 256, 768>}, {pipeline_mode = #tpu.pipeline_mode<synchronous>, transform_indices = @transform_22, window_bounds = array<i64: 1, 768>}, {pipeline_mode = #tpu.pipeline_mode<synchronous>, transform_indices = @transform_23, window_bounds = array<i64: 32, 256>}, {pipeline_mode = #tpu.pipeline_mode<synchronous>, transform_indices = @transform_24, window_bounds = array<i64: 1, 256>}, {pipeline_mode = #tpu.pipeline_mode<synchronous>, transform_indices = @transform_25, window_bounds = array<i64: 256, 768>}, {pipeline_mode = #tpu.pipeline_mode<synchronous>, transform_indices = @transform_26, window_bounds = array<i64: 1, 768>}, {pipeline_mode = #tpu.pipeline_mode<synchronous>, transform_indices = @transform_27, window_bounds = array<i64: 19, 256>}, {pipeline_mode = #tpu.pipeline_mode<synchronous>, transform_indices = @transform_28, window_bounds = array<i64: 1, 256>}, {pipeline_mode = #tpu.pipeline_mode<synchronous>, transform_indices = @transform_29, window_bounds = array<i64: 256, 768>}, {pipeline_mode = #tpu.pipeline_mode<synchronous>, transform_indices = @transform_30, window_bounds = array<i64: 1, 768>}, {pipeline_mode = #tpu.pipeline_mode<synchronous>, transform_indices = @transform_31, window_bounds = array<i64: 768, 64>}, {pipeline_mode = #tpu.pipeline_mode<synchronous>, transform_indices = @transform_32, window_bounds = array<i64: 1, 64>}, {pipeline_mode = #tpu.pipeline_mode<synchronous>, transform_indices = @transform_33, window_bounds = array<i64: 1, 64>}, {pipeline_mode = #tpu.pipeline_mode<synchronous>, transform_indices = @transform_34, window_bounds = array<i64: 384, 1024>}, {pipeline_mode = #tpu.pipeline_mode<synchronous>, transform_indices = @transform_35, window_bounds = array<i64: 1, 1024>}, {pipeline_mode = #tpu.pipeline_mode<synchronous>, transform_indices = @transform_36, window_bounds = array<i64: 1024, 256>}, {pipeline_mode = #tpu.pipeline_mode<synchronous>, transform_indices = @transform_37, window_bounds = array<i64: 1, 256>}, {pipeline_mode = #tpu.pipeline_mode<synchronous>, transform_indices = @transform_38, window_bounds = array<i64: 256, 128>}, {pipeline_mode = #tpu.pipeline_mode<synchronous>, transform_indices = @transform_39, window_bounds = array<i64: 1, 128>}, {pipeline_mode = #tpu.pipeline_mode<synchronous>, transform_indices = @transform_40, window_bounds = array<i64: 2, 768>}, {pipeline_mode = #tpu.pipeline_mode<synchronous>, transform_indices = @transform_41, window_bounds = array<i64: 2, 384>}, {pipeline_mode = #tpu.pipeline_mode<synchronous>, transform_indices = @transform_42, window_bounds = array<i64: 2, 384>}, {pipeline_mode = #tpu.pipeline_mode<synchronous>, transform_indices = @transform_43, window_bounds = array<i64: 2, 384>}, {pipeline_mode = #tpu.pipeline_mode<synchronous>, transform_indices = @transform_44, window_bounds = array<i64: 2, 128>}]} {
    %c0 = arith.constant 0 : index
    %c0_0 = arith.constant 0 : index
    %0 = vector.load %arg1[%c0, %c0_0] : memref<512x27xf32, #tpu.memory_space<vmem>>, vector<512x27xf32>
    %1 = arith.truncf %0 : vector<512x27xf32> to vector<512x27xbf16>
    %c0_1 = arith.constant 0 : index
    %c0_2 = arith.constant 0 : index
    %2 = vector.load %arg2[%c0_1, %c0_2] : memref<144x27xf32, #tpu.memory_space<vmem>>, vector<144x27xf32>
    %3 = arith.truncf %2 : vector<144x27xf32> to vector<144x27xbf16>
    %c0_3 = arith.constant 0 : index
    %c0_4 = arith.constant 0 : index
    %4 = vector.load %arg3[%c0_3, %c0_4] : memref<64x27xf32, #tpu.memory_space<vmem>>, vector<64x27xf32>
    %5 = arith.truncf %4 : vector<64x27xf32> to vector<64x27xbf16>
    %c0_5 = arith.constant 0 : index
    %c0_6 = arith.constant 0 : index
    %6 = vector.load %arg4[%c0_5, %c0_6] : memref<64x27xf32, #tpu.memory_space<vmem>>, vector<64x27xf32>
    %7 = arith.truncf %6 : vector<64x27xf32> to vector<64x27xbf16>
    %8 = tpu.concatenate %1, %3, %5, %7 in 0 : vector<512x27xbf16>, vector<144x27xbf16>, vector<64x27xbf16>, vector<64x27xbf16> -> vector<784x27xbf16>
    %c0_7 = arith.constant 0 : index
    %c0_8 = arith.constant 0 : index
    %9 = vector.load %arg5[%c0_7, %c0_8] : memref<27x128xbf16, #tpu.memory_space<vmem>>, vector<27x128xbf16>
    %cst = arith.constant dense<0.000000e+00> : vector<784x128xf32>
    %10 = tpu.matmul %8, %9, %cst {dimension_numbers = #tpu.dot_dimension_numbers<[1], [0], [0], [1], [0, 0, 1, 1], [], []>} : vector<784x27xbf16>, vector<27x128xbf16>, vector<784x128xf32> -> vector<784x128xf32>
    %c0_9 = arith.constant 0 : index
    %c0_10 = arith.constant 0 : index
    %11 = vector.load %arg6[%c0_9, %c0_10] : memref<1x128xf32, #tpu.memory_space<vmem>>, vector<1x128xf32>
    %12 = vector.broadcast %11 : vector<1x128xf32> to vector<784x128xf32>
    %13 = arith.addf %10, %12 : vector<784x128xf32>
    %cst_11 = arith.constant 0.000000e+00 : f32
    %14 = vector.broadcast %cst_11 : f32 to vector<784x128xf32>
    %15 = arith.maximumf %13, %14 : vector<784x128xf32>
    %16 = vector.extract_strided_slice %15 {offsets = [0, 0], sizes = [256, 128], strides = [1, 1]} : vector<784x128xf32> to vector<256x128xf32>
    %cst_12 = arith.constant dense<0.000000e+00> : vector<128xf32>
    %17 = vector.multi_reduction <add>, %16, %cst_12 [0] : vector<256x128xf32> to vector<128xf32>
    %18 = vector.shape_cast %17 : vector<128xf32> to vector<1x128xf32>
    %cst_13 = arith.constant 3.906250e-03 : f32
    %19 = vector.broadcast %cst_13 : f32 to vector<1x128xf32>
    %20 = arith.mulf %18, %19 : vector<1x128xf32>
    %21 = vector.extract_strided_slice %15 {offsets = [256, 0], sizes = [256, 128], strides = [1, 1]} : vector<784x128xf32> to vector<256x128xf32>
    %cst_14 = arith.constant dense<0.000000e+00> : vector<128xf32>
    %22 = vector.multi_reduction <add>, %21, %cst_14 [0] : vector<256x128xf32> to vector<128xf32>
    %23 = vector.shape_cast %22 : vector<128xf32> to vector<1x128xf32>
    %cst_15 = arith.constant 3.906250e-03 : f32
    %24 = vector.broadcast %cst_15 : f32 to vector<1x128xf32>
    %25 = arith.mulf %23, %24 : vector<1x128xf32>
    %26 = vector.extract_strided_slice %15 {offsets = [512, 0], sizes = [72, 128], strides = [1, 1]} : vector<784x128xf32> to vector<72x128xf32>
    %cst_16 = arith.constant dense<0.000000e+00> : vector<128xf32>
    %27 = vector.multi_reduction <add>, %26, %cst_16 [0] : vector<72x128xf32> to vector<128xf32>
    %28 = vector.shape_cast %27 : vector<128xf32> to vector<1x128xf32>
    %cst_17 = arith.constant 0.013888889 : f32
    %29 = vector.broadcast %cst_17 : f32 to vector<1x128xf32>
    %30 = arith.mulf %28, %29 : vector<1x128xf32>
    %31 = vector.extract_strided_slice %15 {offsets = [584, 0], sizes = [72, 128], strides = [1, 1]} : vector<784x128xf32> to vector<72x128xf32>
    %cst_18 = arith.constant dense<0.000000e+00> : vector<128xf32>
    %32 = vector.multi_reduction <add>, %31, %cst_18 [0] : vector<72x128xf32> to vector<128xf32>
    %33 = vector.shape_cast %32 : vector<128xf32> to vector<1x128xf32>
    %cst_19 = arith.constant 0.013888889 : f32
    %34 = vector.broadcast %cst_19 : f32 to vector<1x128xf32>
    %35 = arith.mulf %33, %34 : vector<1x128xf32>
    %36 = vector.extract_strided_slice %15 {offsets = [656, 0], sizes = [32, 128], strides = [1, 1]} : vector<784x128xf32> to vector<32x128xf32>
    %cst_20 = arith.constant dense<0.000000e+00> : vector<128xf32>
    %37 = vector.multi_reduction <add>, %36, %cst_20 [0] : vector<32x128xf32> to vector<128xf32>
    %38 = vector.shape_cast %37 : vector<128xf32> to vector<1x128xf32>
    %cst_21 = arith.constant 3.125000e-02 : f32
    %39 = vector.broadcast %cst_21 : f32 to vector<1x128xf32>
    %40 = arith.mulf %38, %39 : vector<1x128xf32>
    %41 = vector.extract_strided_slice %15 {offsets = [688, 0], sizes = [32, 128], strides = [1, 1]} : vector<784x128xf32> to vector<32x128xf32>
    %cst_22 = arith.constant dense<0.000000e+00> : vector<128xf32>
    %42 = vector.multi_reduction <add>, %41, %cst_22 [0] : vector<32x128xf32> to vector<128xf32>
    %43 = vector.shape_cast %42 : vector<128xf32> to vector<1x128xf32>
    %cst_23 = arith.constant 3.125000e-02 : f32
    %44 = vector.broadcast %cst_23 : f32 to vector<1x128xf32>
    %45 = arith.mulf %43, %44 : vector<1x128xf32>
    %46 = vector.extract_strided_slice %15 {offsets = [720, 0], sizes = [32, 128], strides = [1, 1]} : vector<784x128xf32> to vector<32x128xf32>
    %cst_24 = arith.constant dense<0.000000e+00> : vector<128xf32>
    %47 = vector.multi_reduction <add>, %46, %cst_24 [0] : vector<32x128xf32> to vector<128xf32>
    %48 = vector.shape_cast %47 : vector<128xf32> to vector<1x128xf32>
    %cst_25 = arith.constant 3.125000e-02 : f32
    %49 = vector.broadcast %cst_25 : f32 to vector<1x128xf32>
    %50 = arith.mulf %48, %49 : vector<1x128xf32>
    %51 = vector.extract_strided_slice %15 {offsets = [752, 0], sizes = [32, 128], strides = [1, 1]} : vector<784x128xf32> to vector<32x128xf32>
    %cst_26 = arith.constant dense<0.000000e+00> : vector<128xf32>
    %52 = vector.multi_reduction <add>, %51, %cst_26 [0] : vector<32x128xf32> to vector<128xf32>
    %53 = vector.shape_cast %52 : vector<128xf32> to vector<1x128xf32>
    %cst_27 = arith.constant 3.125000e-02 : f32
    %54 = vector.broadcast %cst_27 : f32 to vector<1x128xf32>
    %55 = arith.mulf %53, %54 : vector<1x128xf32>
    %56 = tpu.concatenate %20, %25, %30, %35, %40, %45, %50, %55 in 0 : vector<1x128xf32>, vector<1x128xf32>, vector<1x128xf32>, vector<1x128xf32>, vector<1x128xf32>, vector<1x128xf32>, vector<1x128xf32>, vector<1x128xf32> -> vector<8x128xf32>
    %57 = arith.truncf %56 : vector<8x128xf32> to vector<8x128xbf16>
    %c0_28 = arith.constant 0 : index
    %c0_29 = arith.constant 0 : index
    %58 = vector.load %arg7[%c0_28, %c0_29] : memref<128x768xbf16, #tpu.memory_space<vmem>>, vector<128x768xbf16>
    %cst_30 = arith.constant dense<0.000000e+00> : vector<8x768xf32>
    %59 = tpu.matmul %57, %58, %cst_30 {dimension_numbers = #tpu.dot_dimension_numbers<[1], [0], [0], [1], [0, 0, 1, 1], [], []>} : vector<8x128xbf16>, vector<128x768xbf16>, vector<8x768xf32> -> vector<8x768xf32>
    %c0_31 = arith.constant 0 : index
    %c0_32 = arith.constant 0 : index
    %60 = vector.load %arg8[%c0_31, %c0_32] : memref<1x768xf32, #tpu.memory_space<vmem>>, vector<1x768xf32>
    %61 = vector.broadcast %60 : vector<1x768xf32> to vector<8x768xf32>
    %62 = arith.addf %59, %61 : vector<8x768xf32>
    %63 = vector.extract_strided_slice %62 {offsets = [0, 0], sizes = [2, 384], strides = [1, 1]} : vector<8x768xf32> to vector<2x384xf32>
    %64 = vector.extract_strided_slice %62 {offsets = [2, 384], sizes = [2, 128], strides = [1, 1]} : vector<8x768xf32> to vector<2x128xf32>
    %65 = vector.extract_strided_slice %62 {offsets = [4, 512], sizes = [2, 128], strides = [1, 1]} : vector<8x768xf32> to vector<2x128xf32>
    %66 = vector.extract_strided_slice %62 {offsets = [6, 640], sizes = [2, 128], strides = [1, 1]} : vector<8x768xf32> to vector<2x128xf32>
    %67 = tpu.concatenate %63, %64, %65, %66 in 1 : vector<2x384xf32>, vector<2x128xf32>, vector<2x128xf32>, vector<2x128xf32> -> vector<2x768xf32>
    %c0_33 = arith.constant 0 : index
    %c0_34 = arith.constant 0 : index
    %68 = vector.load %arg41[%c0_33, %c0_34] : memref<2x768xf32, #tpu.memory_space<vmem>>, vector<2x768xf32>
    tpu.vector_store %arg41[%c0_33, %c0_34], %67 {strides = array<i32>} : memref<2x768xf32, #tpu.memory_space<vmem>>, vector<2x768xf32>,
    %69 = vector.extract_strided_slice %67 {offsets = [0, 0], sizes = [2, 384], strides = [1, 1]} : vector<2x768xf32> to vector<2x384xf32>
    %70 = vector.extract_strided_slice %67 {offsets = [0, 384], sizes = [2, 384], strides = [1, 1]} : vector<2x768xf32> to vector<2x384xf32>
    %71 = arith.truncf %69 : vector<2x384xf32> to vector<2x384xbf16>
    %c0_35 = arith.constant 0 : index
    %c0_36 = arith.constant 0 : index
    %72 = vector.load %arg9[%c0_35, %c0_36] : memref<384x768xbf16, #tpu.memory_space<vmem>>, vector<384x768xbf16>
    %cst_37 = arith.constant dense<0.000000e+00> : vector<2x768xf32>
    %73 = tpu.matmul %71, %72, %cst_37 {dimension_numbers = #tpu.dot_dimension_numbers<[1], [0], [0], [1], [0, 0, 1, 1], [], []>} : vector<2x384xbf16>, vector<384x768xbf16>, vector<2x768xf32> -> vector<2x768xf32>
    %c0_38 = arith.constant 0 : index
    %c0_39 = arith.constant 0 : index
    %74 = vector.load %arg10[%c0_38, %c0_39] : memref<1x768xf32, #tpu.memory_space<vmem>>, vector<1x768xf32>
    %75 = vector.broadcast %74 : vector<1x768xf32> to vector<2x768xf32>
    %76 = arith.addf %73, %75 : vector<2x768xf32>
    %77 = arith.truncf %70 : vector<2x384xf32> to vector<2x384xbf16>
    %c0_40 = arith.constant 0 : index
    %c0_41 = arith.constant 0 : index
    %78 = vector.load %arg11[%c0_40, %c0_41] : memref<384x768xbf16, #tpu.memory_space<vmem>>, vector<384x768xbf16>
    %cst_42 = arith.constant dense<0.000000e+00> : vector<2x768xf32>
    %79 = tpu.matmul %77, %78, %cst_42 {dimension_numbers = #tpu.dot_dimension_numbers<[1], [0], [0], [1], [0, 0, 1, 1], [], []>} : vector<2x384xbf16>, vector<384x768xbf16>, vector<2x768xf32> -> vector<2x768xf32>
    %c0_43 = arith.constant 0 : index
    %c0_44 = arith.constant 0 : index
    %80 = vector.load %arg12[%c0_43, %c0_44] : memref<1x768xf32, #tpu.memory_space<vmem>>, vector<1x768xf32>
    %81 = vector.broadcast %80 : vector<1x768xf32> to vector<2x768xf32>
    %82 = arith.addf %79, %81 : vector<2x768xf32>
    %83 = vector.extract_strided_slice %76 {offsets = [0, 0], sizes = [2, 64], strides = [1, 1]} : vector<2x768xf32> to vector<2x64xf32>
    %84 = vector.extract_strided_slice %76 {offsets = [0, 64], sizes = [2, 64], strides = [1, 1]} : vector<2x768xf32> to vector<2x64xf32>
    %85 = vector.extract_strided_slice %76 {offsets = [0, 128], sizes = [2, 64], strides = [1, 1]} : vector<2x768xf32> to vector<2x64xf32>
    %86 = vector.extract_strided_slice %76 {offsets = [0, 192], sizes = [2, 64], strides = [1, 1]} : vector<2x768xf32> to vector<2x64xf32>
    %87 = tpu.concatenate %83, %84, %85, %86 in 0 : vector<2x64xf32>, vector<2x64xf32>, vector<2x64xf32>, vector<2x64xf32> -> vector<8x64xf32>
    %88 = vector.extract_strided_slice %76 {offsets = [0, 256], sizes = [2, 64], strides = [1, 1]} : vector<2x768xf32> to vector<2x64xf32>
    %89 = vector.extract_strided_slice %76 {offsets = [0, 320], sizes = [2, 64], strides = [1, 1]} : vector<2x768xf32> to vector<2x64xf32>
    %90 = vector.extract_strided_slice %76 {offsets = [0, 384], sizes = [2, 64], strides = [1, 1]} : vector<2x768xf32> to vector<2x64xf32>
    %91 = vector.extract_strided_slice %76 {offsets = [0, 448], sizes = [2, 64], strides = [1, 1]} : vector<2x768xf32> to vector<2x64xf32>
    %92 = tpu.concatenate %88, %89, %90, %91 in 0 : vector<2x64xf32>, vector<2x64xf32>, vector<2x64xf32>, vector<2x64xf32> -> vector<8x64xf32>
    %93 = vector.extract_strided_slice %76 {offsets = [0, 512], sizes = [2, 64], strides = [1, 1]} : vector<2x768xf32> to vector<2x64xf32>
    %94 = vector.extract_strided_slice %76 {offsets = [0, 576], sizes = [2, 64], strides = [1, 1]} : vector<2x768xf32> to vector<2x64xf32>
    %95 = vector.extract_strided_slice %76 {offsets = [0, 640], sizes = [2, 64], strides = [1, 1]} : vector<2x768xf32> to vector<2x64xf32>
    %96 = vector.extract_strided_slice %76 {offsets = [0, 704], sizes = [2, 64], strides = [1, 1]} : vector<2x768xf32> to vector<2x64xf32>
    %97 = tpu.concatenate %93, %94, %95, %96 in 0 : vector<2x64xf32>, vector<2x64xf32>, vector<2x64xf32>, vector<2x64xf32> -> vector<8x64xf32>
    %98 = vector.extract_strided_slice %82 {offsets = [0, 0], sizes = [2, 64], strides = [1, 1]} : vector<2x768xf32> to vector<2x64xf32>
    %99 = vector.extract_strided_slice %82 {offsets = [0, 64], sizes = [2, 64], strides = [1, 1]} : vector<2x768xf32> to vector<2x64xf32>
    %100 = vector.extract_strided_slice %82 {offsets = [0, 128], sizes = [2, 64], strides = [1, 1]} : vector<2x768xf32> to vector<2x64xf32>
    %101 = vector.extract_strided_slice %82 {offsets = [0, 192], sizes = [2, 64], strides = [1, 1]} : vector<2x768xf32> to vector<2x64xf32>
    %102 = tpu.concatenate %98, %99, %100, %101 in 0 : vector<2x64xf32>, vector<2x64xf32>, vector<2x64xf32>, vector<2x64xf32> -> vector<8x64xf32>
    %103 = vector.extract_strided_slice %82 {offsets = [0, 256], sizes = [2, 64], strides = [1, 1]} : vector<2x768xf32> to vector<2x64xf32>
    %104 = vector.extract_strided_slice %82 {offsets = [0, 320], sizes = [2, 64], strides = [1, 1]} : vector<2x768xf32> to vector<2x64xf32>
    %105 = vector.extract_strided_slice %82 {offsets = [0, 384], sizes = [2, 64], strides = [1, 1]} : vector<2x768xf32> to vector<2x64xf32>
    %106 = vector.extract_strided_slice %82 {offsets = [0, 448], sizes = [2, 64], strides = [1, 1]} : vector<2x768xf32> to vector<2x64xf32>
    %107 = tpu.concatenate %103, %104, %105, %106 in 0 : vector<2x64xf32>, vector<2x64xf32>, vector<2x64xf32>, vector<2x64xf32> -> vector<8x64xf32>
    %108 = vector.extract_strided_slice %82 {offsets = [0, 512], sizes = [2, 64], strides = [1, 1]} : vector<2x768xf32> to vector<2x64xf32>
    %109 = vector.extract_strided_slice %82 {offsets = [0, 576], sizes = [2, 64], strides = [1, 1]} : vector<2x768xf32> to vector<2x64xf32>
    %110 = vector.extract_strided_slice %82 {offsets = [0, 640], sizes = [2, 64], strides = [1, 1]} : vector<2x768xf32> to vector<2x64xf32>
    %111 = vector.extract_strided_slice %82 {offsets = [0, 704], sizes = [2, 64], strides = [1, 1]} : vector<2x768xf32> to vector<2x64xf32>
    %112 = tpu.concatenate %108, %109, %110, %111 in 0 : vector<2x64xf32>, vector<2x64xf32>, vector<2x64xf32>, vector<2x64xf32> -> vector<8x64xf32>
    %113 = tpu.iota {dimensions = array<i32: 0>} : vector<8x8xi32>
    %114 = tpu.iota {dimensions = array<i32: 1>} : vector<8x8xi32>
    %c2_i32 = arith.constant 2 : i32
    %c0_i32 = arith.constant 0 : i32
    %115 = arith.cmpi eq, %c2_i32, %c0_i32 : i32
    %c1_i32 = arith.constant 1 : i32
    %116 = arith.select %115, %c1_i32, %c2_i32 : i32
    %117 = vector.broadcast %116 : i32 to vector<8x8xi32>
    %118 = arith.remsi %113, %117 : vector<8x8xi32>
    %c0_i32_45 = arith.constant 0 : i32
    %119 = vector.broadcast %c0_i32_45 : i32 to vector<8x8xi32>
    %120 = arith.cmpi ne, %118, %119 : vector<8x8xi32>
    %c0_i32_46 = arith.constant 0 : i32
    %121 = vector.broadcast %c0_i32_46 : i32 to vector<8x8xi32>
    %122 = arith.cmpi slt, %118, %121 : vector<8x8xi32>
    %c0_i32_47 = arith.constant 0 : i32
    %123 = arith.cmpi slt, %116, %c0_i32_47 : i32
    %124 = vector.broadcast %123 : i1 to vector<8x8xi1>
    %125 = vector.broadcast %124 : vector<8x8xi1> to vector<8x8xi1>
    %126 = arith.xori %122, %125 : vector<8x8xi1>
    %127 = arith.andi %126, %120 : vector<8x8xi1>
    %128 = vector.broadcast %116 : i32 to vector<8x8xi32>
    %129 = arith.addi %118, %128 : vector<8x8xi32>
    %130 = arith.select %127, %129, %118 : vector<8x8xi1>, vector<8x8xi32>
    %c2_i32_48 = arith.constant 2 : i32
    %c0_i32_49 = arith.constant 0 : i32
    %131 = arith.cmpi eq, %c2_i32_48, %c0_i32_49 : i32
    %c1_i32_50 = arith.constant 1 : i32
    %132 = arith.select %131, %c1_i32_50, %c2_i32_48 : i32
    %133 = vector.broadcast %132 : i32 to vector<8x8xi32>
    %134 = arith.remsi %114, %133 : vector<8x8xi32>
    %c0_i32_51 = arith.constant 0 : i32
    %135 = vector.broadcast %c0_i32_51 : i32 to vector<8x8xi32>
    %136 = arith.cmpi ne, %134, %135 : vector<8x8xi32>
    %c0_i32_52 = arith.constant 0 : i32
    %137 = vector.broadcast %c0_i32_52 : i32 to vector<8x8xi32>
    %138 = arith.cmpi slt, %134, %137 : vector<8x8xi32>
    %c0_i32_53 = arith.constant 0 : i32
    %139 = arith.cmpi slt, %132, %c0_i32_53 : i32
    %140 = vector.broadcast %139 : i1 to vector<8x8xi1>
    %141 = vector.broadcast %140 : vector<8x8xi1> to vector<8x8xi1>
    %142 = arith.xori %138, %141 : vector<8x8xi1>
    %143 = arith.andi %142, %136 : vector<8x8xi1>
    %144 = vector.broadcast %132 : i32 to vector<8x8xi32>
    %145 = arith.addi %134, %144 : vector<8x8xi32>
    %146 = arith.select %143, %145, %134 : vector<8x8xi1>, vector<8x8xi32>
    %147 = arith.cmpi eq, %130, %146 : vector<8x8xi32>
    %cst_54 = arith.constant dense<0.000000e+00> : vector<8x8xf32>
    %148 = tpu.matmul %87, %107, %cst_54 {dimension_numbers = #tpu.dot_dimension_numbers<[1], [1], [0], [0], [0, 0, 1, 0], [], []>} : vector<8x64xf32>, vector<8x64xf32>, vector<8x8xf32> -> vector<8x8xf32>
    %cst_55 = arith.constant 1.250000e-01 : f32
    %149 = vector.broadcast %cst_55 : f32 to vector<8x8xf32>
    %150 = arith.mulf %148, %149 : vector<8x8xf32>
    %cst_56 = arith.constant -1.000000e+30 : f32
    %151 = vector.broadcast %cst_56 : f32 to vector<8x8xf32>
    %152 = arith.select %147, %150, %151 : vector<8x8xi1>, vector<8x8xf32>
    %cst_57 = arith.constant dense<0xFF800000> : vector<8xf32>
    %153 = vector.multi_reduction <maximumf>, %152, %cst_57 [1] : vector<8x8xf32> to vector<8xf32>
    %154 = vector.shape_cast %153 : vector<8xf32> to vector<8x1xf32>
    %155 = vector.broadcast %154 : vector<8x1xf32> to vector<8x8xf32>
    %156 = arith.subf %152, %155 : vector<8x8xf32>
    %157 = math.exp %156 : vector<8x8xf32>
    %cst_58 = arith.constant dense<0.000000e+00> : vector<8xf32>
    %158 = vector.multi_reduction <add>, %157, %cst_58 [1] : vector<8x8xf32> to vector<8xf32>
    %159 = vector.shape_cast %158 : vector<8xf32> to vector<8x1xf32>
    %160 = tpu.reciprocal %159 {approx = true} : vector<8x1xf32> -> vector<8x1xf32>
    %161 = vector.broadcast %160 : vector<8x1xf32> to vector<8x8xf32>
    %162 = arith.mulf %157, %161 : vector<8x8xf32>
    %cst_59 = arith.constant dense<0.000000e+00> : vector<8x64xf32>
    %163 = tpu.matmul %162, %112, %cst_59 {dimension_numbers = #tpu.dot_dimension_numbers<[1], [0], [0], [1], [0, 0, 1, 1], [], []>} : vector<8x8xf32>, vector<8x64xf32>, vector<8x64xf32> -> vector<8x64xf32>
    %cst_60 = arith.constant dense<0.000000e+00> : vector<8x8xf32>
    %164 = tpu.matmul %102, %92, %cst_60 {dimension_numbers = #tpu.dot_dimension_numbers<[1], [1], [0], [0], [0, 0, 1, 0], [], []>} : vector<8x64xf32>, vector<8x64xf32>, vector<8x8xf32> -> vector<8x8xf32>
    %cst_61 = arith.constant 1.250000e-01 : f32
    %165 = vector.broadcast %cst_61 : f32 to vector<8x8xf32>
    %166 = arith.mulf %164, %165 : vector<8x8xf32>
    %cst_62 = arith.constant -1.000000e+30 : f32
    %167 = vector.broadcast %cst_62 : f32 to vector<8x8xf32>
    %168 = arith.select %147, %166, %167 : vector<8x8xi1>, vector<8x8xf32>
    %cst_63 = arith.constant dense<0xFF800000> : vector<8xf32>
    %169 = vector.multi_reduction <maximumf>, %168, %cst_63 [1] : vector<8x8xf32> to vector<8xf32>
    %170 = vector.shape_cast %169 : vector<8xf32> to vector<8x1xf32>
    %171 = vector.broadcast %170 : vector<8x1xf32> to vector<8x8xf32>
    %172 = arith.subf %168, %171 : vector<8x8xf32>
    %173 = math.exp %172 : vector<8x8xf32>
    %cst_64 = arith.constant dense<0.000000e+00> : vector<8xf32>
    %174 = vector.multi_reduction <add>, %173, %cst_64 [1] : vector<8x8xf32> to vector<8xf32>
    %175 = vector.shape_cast %174 : vector<8xf32> to vector<8x1xf32>
    %176 = tpu.reciprocal %175 {approx = true} : vector<8x1xf32> -> vector<8x1xf32>
    %177 = vector.broadcast %176 : vector<8x1xf32> to vector<8x8xf32>
    %178 = arith.mulf %173, %177 : vector<8x8xf32>
    %cst_65 = arith.constant dense<0.000000e+00> : vector<8x64xf32>
    %179 = tpu.matmul %178, %97, %cst_65 {dimension_numbers = #tpu.dot_dimension_numbers<[1], [0], [0], [1], [0, 0, 1, 1], [], []>} : vector<8x8xf32>, vector<8x64xf32>, vector<8x64xf32> -> vector<8x64xf32>
    %180 = vector.extract_strided_slice %163 {offsets = [0, 0], sizes = [2, 64], strides = [1, 1]} : vector<8x64xf32> to vector<2x64xf32>
    %181 = vector.extract_strided_slice %163 {offsets = [2, 0], sizes = [2, 64], strides = [1, 1]} : vector<8x64xf32> to vector<2x64xf32>
    %182 = vector.extract_strided_slice %163 {offsets = [4, 0], sizes = [2, 64], strides = [1, 1]} : vector<8x64xf32> to vector<2x64xf32>
    %183 = vector.extract_strided_slice %163 {offsets = [6, 0], sizes = [2, 64], strides = [1, 1]} : vector<8x64xf32> to vector<2x64xf32>
    %184 = tpu.concatenate %180, %181, %182, %183 in 1 : vector<2x64xf32>, vector<2x64xf32>, vector<2x64xf32>, vector<2x64xf32> -> vector<2x256xf32>
    %185 = vector.extract_strided_slice %179 {offsets = [0, 0], sizes = [2, 64], strides = [1, 1]} : vector<8x64xf32> to vector<2x64xf32>
    %186 = vector.extract_strided_slice %179 {offsets = [2, 0], sizes = [2, 64], strides = [1, 1]} : vector<8x64xf32> to vector<2x64xf32>
    %187 = vector.extract_strided_slice %179 {offsets = [4, 0], sizes = [2, 64], strides = [1, 1]} : vector<8x64xf32> to vector<2x64xf32>
    %188 = vector.extract_strided_slice %179 {offsets = [6, 0], sizes = [2, 64], strides = [1, 1]} : vector<8x64xf32> to vector<2x64xf32>
    %189 = tpu.concatenate %185, %186, %187, %188 in 1 : vector<2x64xf32>, vector<2x64xf32>, vector<2x64xf32>, vector<2x64xf32> -> vector<2x256xf32>
    %190 = arith.truncf %184 : vector<2x256xf32> to vector<2x256xbf16>
    %c0_66 = arith.constant 0 : index
    %c0_67 = arith.constant 0 : index
    %191 = vector.load %arg13[%c0_66, %c0_67] : memref<256x384xbf16, #tpu.memory_space<vmem>>, vector<256x384xbf16>
    %cst_68 = arith.constant dense<0.000000e+00> : vector<2x384xf32>
    %192 = tpu.matmul %190, %191, %cst_68 {dimension_numbers = #tpu.dot_dimension_numbers<[1], [0], [0], [1], [0, 0, 1, 1], [], []>} : vector<2x256xbf16>, vector<256x384xbf16>, vector<2x384xf32> -> vector<2x384xf32>
    %c0_69 = arith.constant 0 : index
    %c0_70 = arith.constant 0 : index
    %193 = vector.load %arg14[%c0_69, %c0_70] : memref<1x384xf32, #tpu.memory_space<vmem>>, vector<1x384xf32>
    %194 = vector.broadcast %193 : vector<1x384xf32> to vector<2x384xf32>
    %195 = arith.addf %192, %194 : vector<2x384xf32>
    %196 = arith.truncf %189 : vector<2x256xf32> to vector<2x256xbf16>
    %c0_71 = arith.constant 0 : index
    %c0_72 = arith.constant 0 : index
    %197 = vector.load %arg15[%c0_71, %c0_72] : memref<256x384xbf16, #tpu.memory_space<vmem>>, vector<256x384xbf16>
    %cst_73 = arith.constant dense<0.000000e+00> : vector<2x384xf32>
    %198 = tpu.matmul %196, %197, %cst_73 {dimension_numbers = #tpu.dot_dimension_numbers<[1], [0], [0], [1], [0, 0, 1, 1], [], []>} : vector<2x256xbf16>, vector<256x384xbf16>, vector<2x384xf32> -> vector<2x384xf32>
    %c0_74 = arith.constant 0 : index
    %c0_75 = arith.constant 0 : index
    %199 = vector.load %arg16[%c0_74, %c0_75] : memref<1x384xf32, #tpu.memory_space<vmem>>, vector<1x384xf32>
    %200 = vector.broadcast %199 : vector<1x384xf32> to vector<2x384xf32>
    %201 = arith.addf %198, %200 : vector<2x384xf32>
    %202 = arith.addf %69, %195 : vector<2x384xf32>
    %203 = arith.addf %70, %201 : vector<2x384xf32>
    %c0_76 = arith.constant 0 : index
    %c0_77 = arith.constant 0 : index
    %204 = vector.load %arg42[%c0_76, %c0_77] : memref<2x384xf32, #tpu.memory_space<vmem>>, vector<2x384xf32>
    tpu.vector_store %arg42[%c0_76, %c0_77], %202 {strides = array<i32>} : memref<2x384xf32, #tpu.memory_space<vmem>>, vector<2x384xf32>,
    %c0_78 = arith.constant 0 : index
    %c0_79 = arith.constant 0 : index
    %205 = vector.load %arg43[%c0_78, %c0_79] : memref<2x384xf32, #tpu.memory_space<vmem>>, vector<2x384xf32>
    tpu.vector_store %arg43[%c0_78, %c0_79], %203 {strides = array<i32>} : memref<2x384xf32, #tpu.memory_space<vmem>>, vector<2x384xf32>,
    %206 = tpu.concatenate %202, %195 in 1 : vector<2x384xf32>, vector<2x384xf32> -> vector<2x768xf32>
    %207 = tpu.concatenate %203, %201 in 1 : vector<2x384xf32>, vector<2x384xf32> -> vector<2x768xf32>
    %c0_80 = arith.constant 0 : index
    %c0_81 = arith.constant 0 : index
    %208 = vector.load %arg17[%c0_80, %c0_81] : memref<2x33xf32, #tpu.memory_space<vmem>>, vector<2x33xf32>
    %209 = arith.truncf %208 : vector<2x33xf32> to vector<2x33xbf16>
    %c0_82 = arith.constant 0 : index
    %c0_83 = arith.constant 0 : index
    %210 = vector.load %arg20[%c0_82, %c0_83] : memref<33x256xbf16, #tpu.memory_space<vmem>>, vector<33x256xbf16>
    %cst_84 = arith.constant dense<0.000000e+00> : vector<2x256xf32>
    %211 = tpu.matmul %209, %210, %cst_84 {dimension_numbers = #tpu.dot_dimension_numbers<[1], [0], [0], [1], [0, 0, 1, 1], [], []>} : vector<2x33xbf16>, vector<33x256xbf16>, vector<2x256xf32> -> vector<2x256xf32>
    %c0_85 = arith.constant 0 : index
    %c0_86 = arith.constant 0 : index
    %212 = vector.load %arg21[%c0_85, %c0_86] : memref<1x256xf32, #tpu.memory_space<vmem>>, vector<1x256xf32>
    %213 = vector.broadcast %212 : vector<1x256xf32> to vector<2x256xf32>
    %214 = arith.addf %211, %213 : vector<2x256xf32>
    %cst_87 = arith.constant 0.000000e+00 : f32
    %215 = vector.broadcast %cst_87 : f32 to vector<2x256xf32>
    %216 = arith.cmpf ogt, %214, %215 : vector<2x256xf32>
    %217 = math.exp %214 : vector<2x256xf32>
    %cst_88 = arith.constant 1.000000e+00 : f32
    %218 = vector.broadcast %cst_88 : f32 to vector<2x256xf32>
    %219 = arith.subf %217, %218 : vector<2x256xf32>
    %cst_89 = arith.constant 1.67326319 : f32
    %220 = vector.broadcast %cst_89 : f32 to vector<2x256xf32>
    %221 = arith.mulf %220, %219 : vector<2x256xf32>
    %222 = arith.select %216, %214, %221 : vector<2x256xi1>, vector<2x256xf32>
    %cst_90 = arith.constant 1.05070102 : f32
    %223 = vector.broadcast %cst_90 : f32 to vector<2x256xf32>
    %224 = arith.mulf %223, %222 : vector<2x256xf32>
    %225 = arith.truncf %224 : vector<2x256xf32> to vector<2x256xbf16>
    %c0_91 = arith.constant 0 : index
    %c0_92 = arith.constant 0 : index
    %226 = vector.load %arg22[%c0_91, %c0_92] : memref<256x768xbf16, #tpu.memory_space<vmem>>, vector<256x768xbf16>
    %cst_93 = arith.constant dense<0.000000e+00> : vector<2x768xf32>
    %227 = tpu.matmul %225, %226, %cst_93 {dimension_numbers = #tpu.dot_dimension_numbers<[1], [0], [0], [1], [0, 0, 1, 1], [], []>} : vector<2x256xbf16>, vector<256x768xbf16>, vector<2x768xf32> -> vector<2x768xf32>
    %c0_94 = arith.constant 0 : index
    %c0_95 = arith.constant 0 : index
    %228 = vector.load %arg23[%c0_94, %c0_95] : memref<1x768xf32, #tpu.memory_space<vmem>>, vector<1x768xf32>
    %229 = vector.broadcast %228 : vector<1x768xf32> to vector<2x768xf32>
    %230 = arith.addf %227, %229 : vector<2x768xf32>
    %c0_96 = arith.constant 0 : index
    %c0_97 = arith.constant 0 : index
    %231 = vector.load %arg18[%c0_96, %c0_97] : memref<2x32xf32, #tpu.memory_space<vmem>>, vector<2x32xf32>
    %232 = arith.truncf %231 : vector<2x32xf32> to vector<2x32xbf16>
    %c0_98 = arith.constant 0 : index
    %c0_99 = arith.constant 0 : index
    %233 = vector.load %arg24[%c0_98, %c0_99] : memref<32x256xbf16, #tpu.memory_space<vmem>>, vector<32x256xbf16>
    %cst_100 = arith.constant dense<0.000000e+00> : vector<2x256xf32>
    %234 = tpu.matmul %232, %233, %cst_100 {dimension_numbers = #tpu.dot_dimension_numbers<[1], [0], [0], [1], [0, 0, 1, 1], [], []>} : vector<2x32xbf16>, vector<32x256xbf16>, vector<2x256xf32> -> vector<2x256xf32>
    %c0_101 = arith.constant 0 : index
    %c0_102 = arith.constant 0 : index
    %235 = vector.load %arg25[%c0_101, %c0_102] : memref<1x256xf32, #tpu.memory_space<vmem>>, vector<1x256xf32>
    %236 = vector.broadcast %235 : vector<1x256xf32> to vector<2x256xf32>
    %237 = arith.addf %234, %236 : vector<2x256xf32>
    %cst_103 = arith.constant 0.000000e+00 : f32
    %238 = vector.broadcast %cst_103 : f32 to vector<2x256xf32>
    %239 = arith.cmpf ogt, %237, %238 : vector<2x256xf32>
    %240 = math.exp %237 : vector<2x256xf32>
    %cst_104 = arith.constant 1.000000e+00 : f32
    %241 = vector.broadcast %cst_104 : f32 to vector<2x256xf32>
    %242 = arith.subf %240, %241 : vector<2x256xf32>
    %cst_105 = arith.constant 1.67326319 : f32
    %243 = vector.broadcast %cst_105 : f32 to vector<2x256xf32>
    %244 = arith.mulf %243, %242 : vector<2x256xf32>
    %245 = arith.select %239, %237, %244 : vector<2x256xi1>, vector<2x256xf32>
    %cst_106 = arith.constant 1.05070102 : f32
    %246 = vector.broadcast %cst_106 : f32 to vector<2x256xf32>
    %247 = arith.mulf %246, %245 : vector<2x256xf32>
    %248 = arith.truncf %247 : vector<2x256xf32> to vector<2x256xbf16>
    %c0_107 = arith.constant 0 : index
    %c0_108 = arith.constant 0 : index
    %249 = vector.load %arg26[%c0_107, %c0_108] : memref<256x768xbf16, #tpu.memory_space<vmem>>, vector<256x768xbf16>
    %cst_109 = arith.constant dense<0.000000e+00> : vector<2x768xf32>
    %250 = tpu.matmul %248, %249, %cst_109 {dimension_numbers = #tpu.dot_dimension_numbers<[1], [0], [0], [1], [0, 0, 1, 1], [], []>} : vector<2x256xbf16>, vector<256x768xbf16>, vector<2x768xf32> -> vector<2x768xf32>
    %c0_110 = arith.constant 0 : index
    %c0_111 = arith.constant 0 : index
    %251 = vector.load %arg27[%c0_110, %c0_111] : memref<1x768xf32, #tpu.memory_space<vmem>>, vector<1x768xf32>
    %252 = vector.broadcast %251 : vector<1x768xf32> to vector<2x768xf32>
    %253 = arith.addf %250, %252 : vector<2x768xf32>
    %c0_112 = arith.constant 0 : index
    %c0_113 = arith.constant 0 : index
    %254 = vector.load %arg19[%c0_112, %c0_113] : memref<2x19xf32, #tpu.memory_space<vmem>>, vector<2x19xf32>
    %255 = arith.truncf %254 : vector<2x19xf32> to vector<2x19xbf16>
    %c0_114 = arith.constant 0 : index
    %c0_115 = arith.constant 0 : index
    %256 = vector.load %arg28[%c0_114, %c0_115] : memref<19x256xbf16, #tpu.memory_space<vmem>>, vector<19x256xbf16>
    %cst_116 = arith.constant dense<0.000000e+00> : vector<2x256xf32>
    %257 = tpu.matmul %255, %256, %cst_116 {dimension_numbers = #tpu.dot_dimension_numbers<[1], [0], [0], [1], [0, 0, 1, 1], [], []>} : vector<2x19xbf16>, vector<19x256xbf16>, vector<2x256xf32> -> vector<2x256xf32>
    %c0_117 = arith.constant 0 : index
    %c0_118 = arith.constant 0 : index
    %258 = vector.load %arg29[%c0_117, %c0_118] : memref<1x256xf32, #tpu.memory_space<vmem>>, vector<1x256xf32>
    %259 = vector.broadcast %258 : vector<1x256xf32> to vector<2x256xf32>
    %260 = arith.addf %257, %259 : vector<2x256xf32>
    %cst_119 = arith.constant 0.000000e+00 : f32
    %261 = vector.broadcast %cst_119 : f32 to vector<2x256xf32>
    %262 = arith.cmpf ogt, %260, %261 : vector<2x256xf32>
    %263 = math.exp %260 : vector<2x256xf32>
    %cst_120 = arith.constant 1.000000e+00 : f32
    %264 = vector.broadcast %cst_120 : f32 to vector<2x256xf32>
    %265 = arith.subf %263, %264 : vector<2x256xf32>
    %cst_121 = arith.constant 1.67326319 : f32
    %266 = vector.broadcast %cst_121 : f32 to vector<2x256xf32>
    %267 = arith.mulf %266, %265 : vector<2x256xf32>
    %268 = arith.select %262, %260, %267 : vector<2x256xi1>, vector<2x256xf32>
    %cst_122 = arith.constant 1.05070102 : f32
    %269 = vector.broadcast %cst_122 : f32 to vector<2x256xf32>
    %270 = arith.mulf %269, %268 : vector<2x256xf32>
    %271 = arith.truncf %270 : vector<2x256xf32> to vector<2x256xbf16>
    %c0_123 = arith.constant 0 : index
    %c0_124 = arith.constant 0 : index
    %272 = vector.load %arg30[%c0_123, %c0_124] : memref<256x768xbf16, #tpu.memory_space<vmem>>, vector<256x768xbf16>
    %cst_125 = arith.constant dense<0.000000e+00> : vector<2x768xf32>
    %273 = tpu.matmul %271, %272, %cst_125 {dimension_numbers = #tpu.dot_dimension_numbers<[1], [0], [0], [1], [0, 0, 1, 1], [], []>} : vector<2x256xbf16>, vector<256x768xbf16>, vector<2x768xf32> -> vector<2x768xf32>
    %c0_126 = arith.constant 0 : index
    %c0_127 = arith.constant 0 : index
    %274 = vector.load %arg31[%c0_126, %c0_127] : memref<1x768xf32, #tpu.memory_space<vmem>>, vector<1x768xf32>
    %275 = vector.broadcast %274 : vector<1x768xf32> to vector<2x768xf32>
    %276 = arith.addf %273, %275 : vector<2x768xf32>
    %277 = tpu.concatenate %206, %207, %230, %253, %276 in 0 : vector<2x768xf32>, vector<2x768xf32>, vector<2x768xf32>, vector<2x768xf32>, vector<2x768xf32> -> vector<10x768xf32>
    %278 = arith.truncf %277 : vector<10x768xf32> to vector<10x768xbf16>
    %c0_128 = arith.constant 0 : index
    %c0_129 = arith.constant 0 : index
    %279 = vector.load %arg32[%c0_128, %c0_129] : memref<768x64xbf16, #tpu.memory_space<vmem>>, vector<768x64xbf16>
    %cst_130 = arith.constant dense<0.000000e+00> : vector<10x64xf32>
    %280 = tpu.matmul %278, %279, %cst_130 {dimension_numbers = #tpu.dot_dimension_numbers<[1], [0], [0], [1], [0, 0, 1, 1], [], []>} : vector<10x768xbf16>, vector<768x64xbf16>, vector<10x64xf32> -> vector<10x64xf32>
    %c0_131 = arith.constant 0 : index
    %c0_132 = arith.constant 0 : index
    %281 = vector.load %arg33[%c0_131, %c0_132] : memref<1x64xf32, #tpu.memory_space<vmem>>, vector<1x64xf32>
    %282 = vector.broadcast %281 : vector<1x64xf32> to vector<10x64xf32>
    %283 = arith.mulf %280, %282 : vector<10x64xf32>
    %cst_133 = arith.constant dense<0.000000e+00> : vector<10xf32>
    %284 = vector.multi_reduction <add>, %283, %cst_133 [1] : vector<10x64xf32> to vector<10xf32>
    %285 = vector.shape_cast %284 : vector<10xf32> to vector<10x1xf32>
    %c0_134 = arith.constant 0 : index
    %c0_135 = arith.constant 0 : index
    %286 = vector.load %arg34[%c0_134, %c0_135] : memref<1x64xf32, #tpu.memory_space<vmem>>, vector<1x64xf32>
    %cst_136 = arith.constant dense<0.000000e+00> : vector<1x10xf32>
    %287 = tpu.matmul %286, %280, %cst_136 {dimension_numbers = #tpu.dot_dimension_numbers<[1], [1], [0], [0], [0, 0, 1, 0], [], []>} : vector<1x64xf32>, vector<10x64xf32>, vector<1x10xf32> -> vector<1x10xf32>
    %288 = vector.broadcast %285 : vector<10x1xf32> to vector<10x10xf32>
    %289 = vector.broadcast %287 : vector<1x10xf32> to vector<10x10xf32>
    %290 = arith.addf %288, %289 : vector<10x10xf32>
    %cst_137 = arith.constant 0.000000e+00 : f32
    %291 = vector.broadcast %cst_137 : f32 to vector<10x10xf32>
    %292 = arith.cmpf ogt, %290, %291 : vector<10x10xf32>
    %cst_138 = arith.constant 2.000000e-01 : f32
    %293 = vector.broadcast %cst_138 : f32 to vector<10x10xf32>
    %294 = arith.mulf %293, %290 : vector<10x10xf32>
    %295 = arith.select %292, %290, %294 : vector<10x10xi1>, vector<10x10xf32>
    %296 = tpu.iota {dimensions = array<i32: 0>} : vector<10x10xi32>
    %297 = tpu.iota {dimensions = array<i32: 1>} : vector<10x10xi32>
    %c2_i32_139 = arith.constant 2 : i32
    %c0_i32_140 = arith.constant 0 : i32
    %298 = arith.cmpi eq, %c2_i32_139, %c0_i32_140 : i32
    %c1_i32_141 = arith.constant 1 : i32
    %299 = arith.select %298, %c1_i32_141, %c2_i32_139 : i32
    %300 = vector.broadcast %299 : i32 to vector<10x10xi32>
    %301 = arith.remsi %296, %300 : vector<10x10xi32>
    %c0_i32_142 = arith.constant 0 : i32
    %302 = vector.broadcast %c0_i32_142 : i32 to vector<10x10xi32>
    %303 = arith.cmpi ne, %301, %302 : vector<10x10xi32>
    %c0_i32_143 = arith.constant 0 : i32
    %304 = vector.broadcast %c0_i32_143 : i32 to vector<10x10xi32>
    %305 = arith.cmpi slt, %301, %304 : vector<10x10xi32>
    %c0_i32_144 = arith.constant 0 : i32
    %306 = arith.cmpi slt, %299, %c0_i32_144 : i32
    %307 = vector.broadcast %306 : i1 to vector<10x10xi1>
    %308 = vector.broadcast %307 : vector<10x10xi1> to vector<10x10xi1>
    %309 = arith.xori %305, %308 : vector<10x10xi1>
    %310 = arith.andi %309, %303 : vector<10x10xi1>
    %311 = vector.broadcast %299 : i32 to vector<10x10xi32>
    %312 = arith.addi %301, %311 : vector<10x10xi32>
    %313 = arith.select %310, %312, %301 : vector<10x10xi1>, vector<10x10xi32>
    %c2_i32_145 = arith.constant 2 : i32
    %c0_i32_146 = arith.constant 0 : i32
    %314 = arith.cmpi eq, %c2_i32_145, %c0_i32_146 : i32
    %c1_i32_147 = arith.constant 1 : i32
    %315 = arith.select %314, %c1_i32_147, %c2_i32_145 : i32
    %316 = vector.broadcast %315 : i32 to vector<10x10xi32>
    %317 = arith.remsi %297, %316 : vector<10x10xi32>
    %c0_i32_148 = arith.constant 0 : i32
    %318 = vector.broadcast %c0_i32_148 : i32 to vector<10x10xi32>
    %319 = arith.cmpi ne, %317, %318 : vector<10x10xi32>
    %c0_i32_149 = arith.constant 0 : i32
    %320 = vector.broadcast %c0_i32_149 : i32 to vector<10x10xi32>
    %321 = arith.cmpi slt, %317, %320 : vector<10x10xi32>
    %c0_i32_150 = arith.constant 0 : i32
    %322 = arith.cmpi slt, %315, %c0_i32_150 : i32
    %323 = vector.broadcast %322 : i1 to vector<10x10xi1>
    %324 = vector.broadcast %323 : vector<10x10xi1> to vector<10x10xi1>
    %325 = arith.xori %321, %324 : vector<10x10xi1>
    %326 = arith.andi %325, %319 : vector<10x10xi1>
    %327 = vector.broadcast %315 : i32 to vector<10x10xi32>
    %328 = arith.addi %317, %327 : vector<10x10xi32>
    %329 = arith.select %326, %328, %317 : vector<10x10xi1>, vector<10x10xi32>
    %330 = arith.cmpi eq, %313, %329 : vector<10x10xi32>
    %331 = arith.cmpi ne, %296, %297 : vector<10x10xi32>
    %332 = arith.andi %330, %331 : vector<10x10xi1>
    %cst_151 = arith.constant -1.000000e+30 : f32
    %333 = vector.broadcast %cst_151 : f32 to vector<10x10xf32>
    %334 = arith.select %332, %295, %333 : vector<10x10xi1>, vector<10x10xf32>
    %cst_152 = arith.constant dense<0xFF800000> : vector<10xf32>
    %335 = vector.multi_reduction <maximumf>, %334, %cst_152 [1] : vector<10x10xf32> to vector<10xf32>
    %336 = vector.shape_cast %335 : vector<10xf32> to vector<10x1xf32>
    %337 = vector.broadcast %336 : vector<10x1xf32> to vector<10x10xf32>
    %338 = arith.subf %334, %337 : vector<10x10xf32>
    %339 = math.exp %338 : vector<10x10xf32>
    %cst_153 = arith.constant dense<0.000000e+00> : vector<10xf32>
    %340 = vector.multi_reduction <add>, %339, %cst_153 [1] : vector<10x10xf32> to vector<10xf32>
    %341 = vector.shape_cast %340 : vector<10xf32> to vector<10x1xf32>
    %342 = tpu.reciprocal %341 {approx = true} : vector<10x1xf32> -> vector<10x1xf32>
    %343 = vector.broadcast %342 : vector<10x1xf32> to vector<10x10xf32>
    %344 = arith.mulf %339, %343 : vector<10x10xf32>
    %cst_154 = arith.constant dense<0.000000e+00> : vector<10x64xf32>
    %345 = tpu.matmul %344, %280, %cst_154 {dimension_numbers = #tpu.dot_dimension_numbers<[1], [0], [0], [1], [0, 0, 1, 1], [], []>} : vector<10x10xf32>, vector<10x64xf32>, vector<10x64xf32> -> vector<10x64xf32>
    %346 = vector.extract_strided_slice %345 {offsets = [0, 0], sizes = [2, 64], strides = [1, 1]} : vector<10x64xf32> to vector<2x64xf32>
    %347 = vector.extract_strided_slice %345 {offsets = [2, 0], sizes = [2, 64], strides = [1, 1]} : vector<10x64xf32> to vector<2x64xf32>
    %348 = vector.extract_strided_slice %345 {offsets = [4, 0], sizes = [2, 64], strides = [1, 1]} : vector<10x64xf32> to vector<2x64xf32>
    %349 = vector.extract_strided_slice %345 {offsets = [6, 0], sizes = [2, 64], strides = [1, 1]} : vector<10x64xf32> to vector<2x64xf32>
    %350 = vector.extract_strided_slice %345 {offsets = [8, 0], sizes = [2, 64], strides = [1, 1]} : vector<10x64xf32> to vector<2x64xf32>
    %cst_155 = arith.constant 0.000000e+00 : f32
    %351 = vector.broadcast %cst_155 : f32 to vector<2x64xf32>
    %352 = tpu.concatenate %346, %347, %348, %349, %350, %351 in 1 : vector<2x64xf32>, vector<2x64xf32>, vector<2x64xf32>, vector<2x64xf32>, vector<2x64xf32>, vector<2x64xf32> -> vector<2x384xf32>
    %c0_156 = arith.constant 0 : index
    %c0_157 = arith.constant 0 : index
    %353 = vector.load %arg44[%c0_156, %c0_157] : memref<2x384xf32, #tpu.memory_space<vmem>>, vector<2x384xf32>
    tpu.vector_store %arg44[%c0_156, %c0_157], %352 {strides = array<i32>} : memref<2x384xf32, #tpu.memory_space<vmem>>, vector<2x384xf32>,
    %354 = arith.truncf %352 : vector<2x384xf32> to vector<2x384xbf16>
    %c0_158 = arith.constant 0 : index
    %c0_159 = arith.constant 0 : index
    %355 = vector.load %arg35[%c0_158, %c0_159] : memref<384x1024xbf16, #tpu.memory_space<vmem>>, vector<384x1024xbf16>
    %cst_160 = arith.constant dense<0.000000e+00> : vector<2x1024xf32>
    %356 = tpu.matmul %354, %355, %cst_160 {dimension_numbers = #tpu.dot_dimension_numbers<[1], [0], [0], [1], [0, 0, 1, 1], [], []>} : vector<2x384xbf16>, vector<384x1024xbf16>, vector<2x1024xf32> -> vector<2x1024xf32>
    %c0_161 = arith.constant 0 : index
    %c0_162 = arith.constant 0 : index
    %357 = vector.load %arg36[%c0_161, %c0_162] : memref<1x1024xf32, #tpu.memory_space<vmem>>, vector<1x1024xf32>
    %358 = vector.broadcast %357 : vector<1x1024xf32> to vector<2x1024xf32>
    %359 = arith.addf %356, %358 : vector<2x1024xf32>
    %cst_163 = arith.constant 0.000000e+00 : f32
    %360 = vector.broadcast %cst_163 : f32 to vector<2x1024xf32>
    %361 = arith.cmpf ogt, %359, %360 : vector<2x1024xf32>
    %362 = math.exp %359 : vector<2x1024xf32>
    %cst_164 = arith.constant 1.000000e+00 : f32
    %363 = vector.broadcast %cst_164 : f32 to vector<2x1024xf32>
    %364 = arith.subf %362, %363 : vector<2x1024xf32>
    %cst_165 = arith.constant 1.67326319 : f32
    %365 = vector.broadcast %cst_165 : f32 to vector<2x1024xf32>
    %366 = arith.mulf %365, %364 : vector<2x1024xf32>
    %367 = arith.select %361, %359, %366 : vector<2x1024xi1>, vector<2x1024xf32>
    %cst_166 = arith.constant 1.05070102 : f32
    %368 = vector.broadcast %cst_166 : f32 to vector<2x1024xf32>
    %369 = arith.mulf %368, %367 : vector<2x1024xf32>
    %370 = arith.truncf %369 : vector<2x1024xf32> to vector<2x1024xbf16>
    %c0_167 = arith.constant 0 : index
    %c0_168 = arith.constant 0 : index
    %371 = vector.load %arg37[%c0_167, %c0_168] : memref<1024x256xbf16, #tpu.memory_space<vmem>>, vector<1024x256xbf16>
    %cst_169 = arith.constant dense<0.000000e+00> : vector<2x256xf32>
    %372 = tpu.matmul %370, %371, %cst_169 {dimension_numbers = #tpu.dot_dimension_numbers<[1], [0], [0], [1], [0, 0, 1, 1], [], []>} : vector<2x1024xbf16>, vector<1024x256xbf16>, vector<2x256xf32> -> vector<2x256xf32>
    %c0_170 = arith.constant 0 : index
    %c0_171 = arith.constant 0 : index
    %373 = vector.load %arg38[%c0_170, %c0_171] : memref<1x256xf32, #tpu.memory_space<vmem>>, vector<1x256xf32>
    %374 = vector.broadcast %373 : vector<1x256xf32> to vector<2x256xf32>
    %375 = arith.addf %372, %374 : vector<2x256xf32>
    %cst_172 = arith.constant 0.000000e+00 : f32
    %376 = vector.broadcast %cst_172 : f32 to vector<2x256xf32>
    %377 = arith.cmpf ogt, %375, %376 : vector<2x256xf32>
    %378 = math.exp %375 : vector<2x256xf32>
    %cst_173 = arith.constant 1.000000e+00 : f32
    %379 = vector.broadcast %cst_173 : f32 to vector<2x256xf32>
    %380 = arith.subf %378, %379 : vector<2x256xf32>
    %cst_174 = arith.constant 1.67326319 : f32
    %381 = vector.broadcast %cst_174 : f32 to vector<2x256xf32>
    %382 = arith.mulf %381, %380 : vector<2x256xf32>
    %383 = arith.select %377, %375, %382 : vector<2x256xi1>, vector<2x256xf32>
    %cst_175 = arith.constant 1.05070102 : f32
    %384 = vector.broadcast %cst_175 : f32 to vector<2x256xf32>
    %385 = arith.mulf %384, %383 : vector<2x256xf32>
    %386 = arith.truncf %385 : vector<2x256xf32> to vector<2x256xbf16>
    %c0_176 = arith.constant 0 : index
    %c0_177 = arith.constant 0 : index
    %387 = vector.load %arg39[%c0_176, %c0_177] : memref<256x128xbf16, #tpu.memory_space<vmem>>, vector<256x128xbf16>
    %cst_178 = arith.constant dense<0.000000e+00> : vector<2x128xf32>
    %388 = tpu.matmul %386, %387, %cst_178 {dimension_numbers = #tpu.dot_dimension_numbers<[1], [0], [0], [1], [0, 0, 1, 1], [], []>} : vector<2x256xbf16>, vector<256x128xbf16>, vector<2x128xf32> -> vector<2x128xf32>
    %c0_179 = arith.constant 0 : index
    %c0_180 = arith.constant 0 : index
    %389 = vector.load %arg40[%c0_179, %c0_180] : memref<1x128xf32, #tpu.memory_space<vmem>>, vector<1x128xf32>
    %390 = vector.broadcast %389 : vector<1x128xf32> to vector<2x128xf32>
    %391 = arith.addf %388, %390 : vector<2x128xf32>
    %392 = tpu.iota {dimensions = array<i32: 1>} : vector<2x128xi32>
    %c10_i32 = arith.constant 10 : i32
    %393 = vector.broadcast %c10_i32 : i32 to vector<2x128xi32>
    %394 = arith.cmpi slt, %392, %393 : vector<2x128xi32>
    %cst_181 = arith.constant -1.000000e+30 : f32
    %395 = vector.broadcast %cst_181 : f32 to vector<2x128xf32>
    %396 = arith.select %394, %391, %395 : vector<2x128xi1>, vector<2x128xf32>
    %cst_182 = arith.constant dense<0xFF800000> : vector<2xf32>
    %397 = vector.multi_reduction <maximumf>, %396, %cst_182 [1] : vector<2x128xf32> to vector<2xf32>
    %398 = vector.shape_cast %397 : vector<2xf32> to vector<2x1xf32>
    %399 = vector.broadcast %398 : vector<2x1xf32> to vector<2x128xf32>
    %400 = arith.subf %396, %399 : vector<2x128xf32>
    %401 = math.exp %400 : vector<2x128xf32>
    %cst_183 = arith.constant dense<0.000000e+00> : vector<2xf32>
    %402 = vector.multi_reduction <add>, %401, %cst_183 [1] : vector<2x128xf32> to vector<2xf32>
    %403 = vector.shape_cast %402 : vector<2xf32> to vector<2x1xf32>
    %404 = vector.broadcast %403 : vector<2x1xf32> to vector<2x128xf32>
    %405 = arith.divf %401, %404 : vector<2x128xf32>
    %c0_184 = arith.constant 0 : index
    %c0_185 = arith.constant 0 : index
    %406 = vector.load %arg45[%c0_184, %c0_185] : memref<2x128xf32, #tpu.memory_space<vmem>>, vector<2x128xf32>
    tpu.vector_store %arg45[%c0_184, %c0_185], %405 {strides = array<i32>} : memref<2x128xf32, #tpu.memory_space<vmem>>, vector<2x128xf32>,
    return
  }
  func.func @transform_0(%arg0: i32) -> (i32, i32) {
    %c0_i32 = arith.constant 0 : i32
    %c0_i32_0 = arith.constant 0 : i32
    %c0_i32_1 = arith.constant 0 : i32
    return %c0_i32, %c0_i32_0 : i32, i32
  }
  func.func @transform_1(%arg0: i32) -> (i32, i32) {
    %c0_i32 = arith.constant 0 : i32
    %c0_i32_0 = arith.constant 0 : i32
    %c0_i32_1 = arith.constant 0 : i32
    return %c0_i32, %c0_i32_0 : i32, i32
  }
  func.func @transform_2(%arg0: i32) -> (i32, i32) {
    %c0_i32 = arith.constant 0 : i32
    %c0_i32_0 = arith.constant 0 : i32
    %c0_i32_1 = arith.constant 0 : i32
    return %c0_i32, %c0_i32_0 : i32, i32
  }
  func.func @transform_3(%arg0: i32) -> (i32, i32) {
    %c0_i32 = arith.constant 0 : i32
    %c0_i32_0 = arith.constant 0 : i32
    %c0_i32_1 = arith.constant 0 : i32
    return %c0_i32, %c0_i32_0 : i32, i32
  }
  func.func @transform_4(%arg0: i32) -> (i32, i32) {
    %c0_i32 = arith.constant 0 : i32
    %c0_i32_0 = arith.constant 0 : i32
    %c0_i32_1 = arith.constant 0 : i32
    return %c0_i32, %c0_i32_0 : i32, i32
  }
  func.func @transform_5(%arg0: i32) -> (i32, i32) {
    %c0_i32 = arith.constant 0 : i32
    %c0_i32_0 = arith.constant 0 : i32
    %c0_i32_1 = arith.constant 0 : i32
    return %c0_i32, %c0_i32_0 : i32, i32
  }
  func.func @transform_6(%arg0: i32) -> (i32, i32) {
    %c0_i32 = arith.constant 0 : i32
    %c0_i32_0 = arith.constant 0 : i32
    %c0_i32_1 = arith.constant 0 : i32
    return %c0_i32, %c0_i32_0 : i32, i32
  }
  func.func @transform_7(%arg0: i32) -> (i32, i32) {
    %c0_i32 = arith.constant 0 : i32
    %c0_i32_0 = arith.constant 0 : i32
    %c0_i32_1 = arith.constant 0 : i32
    return %c0_i32, %c0_i32_0 : i32, i32
  }
  func.func @transform_8(%arg0: i32) -> (i32, i32) {
    %c0_i32 = arith.constant 0 : i32
    %c0_i32_0 = arith.constant 0 : i32
    %c0_i32_1 = arith.constant 0 : i32
    return %c0_i32, %c0_i32_0 : i32, i32
  }
  func.func @transform_9(%arg0: i32) -> (i32, i32) {
    %c0_i32 = arith.constant 0 : i32
    %c0_i32_0 = arith.constant 0 : i32
    %c0_i32_1 = arith.constant 0 : i32
    return %c0_i32, %c0_i32_0 : i32, i32
  }
  func.func @transform_10(%arg0: i32) -> (i32, i32) {
    %c0_i32 = arith.constant 0 : i32
    %c0_i32_0 = arith.constant 0 : i32
    %c0_i32_1 = arith.constant 0 : i32
    return %c0_i32, %c0_i32_0 : i32, i32
  }
  func.func @transform_11(%arg0: i32) -> (i32, i32) {
    %c0_i32 = arith.constant 0 : i32
    %c0_i32_0 = arith.constant 0 : i32
    %c0_i32_1 = arith.constant 0 : i32
    return %c0_i32, %c0_i32_0 : i32, i32
  }
  func.func @transform_12(%arg0: i32) -> (i32, i32) {
    %c0_i32 = arith.constant 0 : i32
    %c0_i32_0 = arith.constant 0 : i32
    %c0_i32_1 = arith.constant 0 : i32
    return %c0_i32, %c0_i32_0 : i32, i32
  }
  func.func @transform_13(%arg0: i32) -> (i32, i32) {
    %c0_i32 = arith.constant 0 : i32
    %c0_i32_0 = arith.constant 0 : i32
    %c0_i32_1 = arith.constant 0 : i32
    return %c0_i32, %c0_i32_0 : i32, i32
  }
  func.func @transform_14(%arg0: i32) -> (i32, i32) {
    %c0_i32 = arith.constant 0 : i32
    %c0_i32_0 = arith.constant 0 : i32
    %c0_i32_1 = arith.constant 0 : i32
    return %c0_i32, %c0_i32_0 : i32, i32
  }
  func.func @transform_15(%arg0: i32) -> (i32, i32) {
    %c0_i32 = arith.constant 0 : i32
    %c0_i32_0 = arith.constant 0 : i32
    %c0_i32_1 = arith.constant 0 : i32
    return %c0_i32, %c0_i32_0 : i32, i32
  }
  func.func @transform_16(%arg0: i32) -> (i32, i32) {
    %c0_i32 = arith.constant 0 : i32
    %c0_i32_0 = arith.constant 0 : i32
    %c0_i32_1 = arith.constant 0 : i32
    return %c0_i32, %c0_i32_0 : i32, i32
  }
  func.func @transform_17(%arg0: i32) -> (i32, i32) {
    %c0_i32 = arith.constant 0 : i32
    %c0_i32_0 = arith.constant 0 : i32
    %c0_i32_1 = arith.constant 0 : i32
    return %c0_i32, %c0_i32_0 : i32, i32
  }
  func.func @transform_18(%arg0: i32) -> (i32, i32) {
    %c0_i32 = arith.constant 0 : i32
    %c0_i32_0 = arith.constant 0 : i32
    %c0_i32_1 = arith.constant 0 : i32
    return %c0_i32, %c0_i32_0 : i32, i32
  }
  func.func @transform_19(%arg0: i32) -> (i32, i32) {
    %c0_i32 = arith.constant 0 : i32
    %c0_i32_0 = arith.constant 0 : i32
    %c0_i32_1 = arith.constant 0 : i32
    return %c0_i32, %c0_i32_0 : i32, i32
  }
  func.func @transform_20(%arg0: i32) -> (i32, i32) {
    %c0_i32 = arith.constant 0 : i32
    %c0_i32_0 = arith.constant 0 : i32
    %c0_i32_1 = arith.constant 0 : i32
    return %c0_i32, %c0_i32_0 : i32, i32
  }
  func.func @transform_21(%arg0: i32) -> (i32, i32) {
    %c0_i32 = arith.constant 0 : i32
    %c0_i32_0 = arith.constant 0 : i32
    %c0_i32_1 = arith.constant 0 : i32
    return %c0_i32, %c0_i32_0 : i32, i32
  }
  func.func @transform_22(%arg0: i32) -> (i32, i32) {
    %c0_i32 = arith.constant 0 : i32
    %c0_i32_0 = arith.constant 0 : i32
    %c0_i32_1 = arith.constant 0 : i32
    return %c0_i32, %c0_i32_0 : i32, i32
  }
  func.func @transform_23(%arg0: i32) -> (i32, i32) {
    %c0_i32 = arith.constant 0 : i32
    %c0_i32_0 = arith.constant 0 : i32
    %c0_i32_1 = arith.constant 0 : i32
    return %c0_i32, %c0_i32_0 : i32, i32
  }
  func.func @transform_24(%arg0: i32) -> (i32, i32) {
    %c0_i32 = arith.constant 0 : i32
    %c0_i32_0 = arith.constant 0 : i32
    %c0_i32_1 = arith.constant 0 : i32
    return %c0_i32, %c0_i32_0 : i32, i32
  }
  func.func @transform_25(%arg0: i32) -> (i32, i32) {
    %c0_i32 = arith.constant 0 : i32
    %c0_i32_0 = arith.constant 0 : i32
    %c0_i32_1 = arith.constant 0 : i32
    return %c0_i32, %c0_i32_0 : i32, i32
  }
  func.func @transform_26(%arg0: i32) -> (i32, i32) {
    %c0_i32 = arith.constant 0 : i32
    %c0_i32_0 = arith.constant 0 : i32
    %c0_i32_1 = arith.constant 0 : i32
    return %c0_i32, %c0_i32_0 : i32, i32
  }
  func.func @transform_27(%arg0: i32) -> (i32, i32) {
    %c0_i32 = arith.constant 0 : i32
    %c0_i32_0 = arith.constant 0 : i32
    %c0_i32_1 = arith.constant 0 : i32
    return %c0_i32, %c0_i32_0 : i32, i32
  }
  func.func @transform_28(%arg0: i32) -> (i32, i32) {
    %c0_i32 = arith.constant 0 : i32
    %c0_i32_0 = arith.constant 0 : i32
    %c0_i32_1 = arith.constant 0 : i32
    return %c0_i32, %c0_i32_0 : i32, i32
  }
  func.func @transform_29(%arg0: i32) -> (i32, i32) {
    %c0_i32 = arith.constant 0 : i32
    %c0_i32_0 = arith.constant 0 : i32
    %c0_i32_1 = arith.constant 0 : i32
    return %c0_i32, %c0_i32_0 : i32, i32
  }
  func.func @transform_30(%arg0: i32) -> (i32, i32) {
    %c0_i32 = arith.constant 0 : i32
    %c0_i32_0 = arith.constant 0 : i32
    %c0_i32_1 = arith.constant 0 : i32
    return %c0_i32, %c0_i32_0 : i32, i32
  }
  func.func @transform_31(%arg0: i32) -> (i32, i32) {
    %c0_i32 = arith.constant 0 : i32
    %c0_i32_0 = arith.constant 0 : i32
    %c0_i32_1 = arith.constant 0 : i32
    return %c0_i32, %c0_i32_0 : i32, i32
  }
  func.func @transform_32(%arg0: i32) -> (i32, i32) {
    %c0_i32 = arith.constant 0 : i32
    %c0_i32_0 = arith.constant 0 : i32
    %c0_i32_1 = arith.constant 0 : i32
    return %c0_i32, %c0_i32_0 : i32, i32
  }
  func.func @transform_33(%arg0: i32) -> (i32, i32) {
    %c0_i32 = arith.constant 0 : i32
    %c0_i32_0 = arith.constant 0 : i32
    %c0_i32_1 = arith.constant 0 : i32
    return %c0_i32, %c0_i32_0 : i32, i32
  }
  func.func @transform_34(%arg0: i32) -> (i32, i32) {
    %c0_i32 = arith.constant 0 : i32
    %c0_i32_0 = arith.constant 0 : i32
    %c0_i32_1 = arith.constant 0 : i32
    return %c0_i32, %c0_i32_0 : i32, i32
  }
  func.func @transform_35(%arg0: i32) -> (i32, i32) {
    %c0_i32 = arith.constant 0 : i32
    %c0_i32_0 = arith.constant 0 : i32
    %c0_i32_1 = arith.constant 0 : i32
    return %c0_i32, %c0_i32_0 : i32, i32
  }
  func.func @transform_36(%arg0: i32) -> (i32, i32) {
    %c0_i32 = arith.constant 0 : i32
    %c0_i32_0 = arith.constant 0 : i32
    %c0_i32_1 = arith.constant 0 : i32
    return %c0_i32, %c0_i32_0 : i32, i32
  }
  func.func @transform_37(%arg0: i32) -> (i32, i32) {
    %c0_i32 = arith.constant 0 : i32
    %c0_i32_0 = arith.constant 0 : i32
    %c0_i32_1 = arith.constant 0 : i32
    return %c0_i32, %c0_i32_0 : i32, i32
  }
  func.func @transform_38(%arg0: i32) -> (i32, i32) {
    %c0_i32 = arith.constant 0 : i32
    %c0_i32_0 = arith.constant 0 : i32
    %c0_i32_1 = arith.constant 0 : i32
    return %c0_i32, %c0_i32_0 : i32, i32
  }
  func.func @transform_39(%arg0: i32) -> (i32, i32) {
    %c0_i32 = arith.constant 0 : i32
    %c0_i32_0 = arith.constant 0 : i32
    %c0_i32_1 = arith.constant 0 : i32
    return %c0_i32, %c0_i32_0 : i32, i32
  }
  func.func @transform_40(%arg0: i32) -> (i32, i32) {
    %c0_i32 = arith.constant 0 : i32
    %c0_i32_0 = arith.constant 0 : i32
    %c0_i32_1 = arith.constant 0 : i32
    return %c0_i32, %c0_i32_0 : i32, i32
  }
  func.func @transform_41(%arg0: i32) -> (i32, i32) {
    %c0_i32 = arith.constant 0 : i32
    %c0_i32_0 = arith.constant 0 : i32
    %c0_i32_1 = arith.constant 0 : i32
    return %c0_i32, %c0_i32_0 : i32, i32
  }
  func.func @transform_42(%arg0: i32) -> (i32, i32) {
    %c0_i32 = arith.constant 0 : i32
    %c0_i32_0 = arith.constant 0 : i32
    %c0_i32_1 = arith.constant 0 : i32
    return %c0_i32, %c0_i32_0 : i32, i32
  }
  func.func @transform_43(%arg0: i32) -> (i32, i32) {
    %c0_i32 = arith.constant 0 : i32
    %c0_i32_0 = arith.constant 0 : i32
    %c0_i32_1 = arith.constant 0 : i32
    return %c0_i32, %c0_i32_0 : i32, i32
  }
  func.func @transform_44(%arg0: i32) -> (i32, i32) {
    %c0_i32 = arith.constant 0 : i32
    %c0_i32_0 = arith.constant 0 : i32
    %c0_i32_1 = arith.constant 0 : i32
    return %c0_i32, %c0_i32_0 : i32, i32
  }
}

</mosaic_0001>

<llo_original>
// kernel: build_model_forward.1
$region0: #{build_model_forward.1}
  #allocation0 [shape = 'u32[]', space=smem, size = 0x4, offset = 0x4, fixed_abs, tag = 'smem constant byte address 0x4 - core index']
  #allocation1 [shape = 'u32[144,128]{1,0:T(1,128)}', space=vmem, size = 0x12000, scoped, tag = 'internal scratch']
  %s0 = inlined_call_operand.smem [shape: u32[45], index: -1, kind: input, shape index: {}]
  %s1 = sld [smem:[%s0]]
  %s2 = scalar_lea.smem %s0, 1
  %s3 = sld [smem:[%s2]]
  %s4 = scalar_lea.smem %s0, 2
  %s5 = sld [smem:[%s4]]
  %s6 = scalar_lea.smem %s0, 3
  %s7 = sld [smem:[%s6]]
  %s8 = scalar_lea.smem %s0, 4
  %s9 = sld [smem:[%s8]]
  %s10 = scalar_lea.smem %s0, 5
  %s11 = sld [smem:[%s10]]
  %s12 = scalar_lea.smem %s0, 6
  %s13 = sld [smem:[%s12]]
  %s14 = scalar_lea.smem %s0, 7
  %s15 = sld [smem:[%s14]]
  %s16 = scalar_lea.smem %s0, 8
  %s17 = sld [smem:[%s16]]
  %s18 = scalar_lea.smem %s0, 9
  %s19 = sld [smem:[%s18]]
  %s20 = scalar_lea.smem %s0, 10
  %s21 = sld [smem:[%s20]]
  %s22 = scalar_lea.smem %s0, 11
  %s23 = sld [smem:[%s22]]
  %s24 = scalar_lea.smem %s0, 12
  %s25 = sld [smem:[%s24]]
  %s26 = scalar_lea.smem %s0, 13
  %s27 = sld [smem:[%s26]]
  %s28 = scalar_lea.smem %s0, 14
  %s29 = sld [smem:[%s28]]
  %s30 = scalar_lea.smem %s0, 15
  %s31 = sld [smem:[%s30]]
  %s32 = scalar_lea.smem %s0, 16
  %s33 = sld [smem:[%s32]]
  %s34 = scalar_lea.smem %s0, 17
  %s35 = sld [smem:[%s34]]
  %s36 = scalar_lea.smem %s0, 18
  %s37 = sld [smem:[%s36]]
  %s38 = scalar_lea.smem %s0, 19
  %s39 = sld [smem:[%s38]]
  %s40 = scalar_lea.smem %s0, 20
  %s41 = sld [smem:[%s40]]
  %s42 = scalar_lea.smem %s0, 21
  %s43 = sld [smem:[%s42]]
  %s44 = scalar_lea.smem %s0, 22
  %s45 = sld [smem:[%s44]]
  %s46 = scalar_lea.smem %s0, 23
  %s47 = sld [smem:[%s46]]
  %s48 = scalar_lea.smem %s0, 24
  %s49 = sld [smem:[%s48]]
  %s50 = scalar_lea.smem %s0, 25
  %s51 = sld [smem:[%s50]]
  %s52 = scalar_lea.smem %s0, 26
  %s53 = sld [smem:[%s52]]
  %s54 = scalar_lea.smem %s0, 27
  %s55 = sld [smem:[%s54]]
  %s56 = scalar_lea.smem %s0, 28
  %s57 = sld [smem:[%s56]]
  %s58 = scalar_lea.smem %s0, 29
  %s59 = sld [smem:[%s58]]
  %s60 = scalar_lea.smem %s0, 30
  %s61 = sld [smem:[%s60]]
  %s62 = scalar_lea.smem %s0, 31
  %s63 = sld [smem:[%s62]]
  %s64 = scalar_lea.smem %s0, 32
  %s65 = sld [smem:[%s64]]
  %s66 = scalar_lea.smem %s0, 33
  %s67 = sld [smem:[%s66]]
  %s68 = scalar_lea.smem %s0, 34
  %s69 = sld [smem:[%s68]]
  %s70 = scalar_lea.smem %s0, 35
  %s71 = sld [smem:[%s70]]
  %s72 = scalar_lea.smem %s0, 36
  %s73 = sld [smem:[%s72]]
  %s74 = scalar_lea.smem %s0, 37
  %s75 = sld [smem:[%s74]]
  %s76 = scalar_lea.smem %s0, 38
  %s77 = sld [smem:[%s76]]
  %s78 = scalar_lea.smem %s0, 39
  %s79 = sld [smem:[%s78]]
  %s80 = scalar_lea.smem %s0, 40
  %s81 = sld [smem:[%s80]]
  %s82 = scalar_lea.smem %s0, 41
  %s83 = sld [smem:[%s82]]
  %s84 = scalar_lea.smem %s0, 42
  %s85 = sld [smem:[%s84]]
  %s86 = scalar_lea.smem %s0, 43
  %s87 = sld [smem:[%s86]]
  %s88 = scalar_lea.smem %s0, 44
  %s89 = sld [smem:[%s88]]
  %90 = xla_tuple %s81, %s83, %s85, %s87, %s89
  %s91 = sld [smem:[#allocation0]]
  $region202: #{build_model_forward.1} parent=0
    _
  %s93 = ssub.s32 1, %s91
  %s94 = scalar_select 0, %s93, %s91
  $region1: #{build_model_forward.1} parent=0
    #allocation2 [shape = 'u8[3072]{0}', space=vmem, size = 0xc00, scoped, tag = 'output window, operand 1, single buffered']
    #allocation3 [shape = 's32[1]{0}', space=sflag, size = 0x4, scoped, tag = 'scoped memory for build_model_forward.1']
    #allocation4 [shape = 'u8[3072]{0}', space=vmem, size = 0xc00, scoped, tag = 'output window, operand 2, single buffered']
    #allocation5 [shape = 's32[1]{0}', space=sflag, size = 0x4, scoped, tag = 'scoped memory for build_model_forward.1']
    #allocation6 [shape = 'u8[3072]{0}', space=vmem, size = 0xc00, scoped, tag = 'output window, operand 3, single buffered']
    #allocation7 [shape = 'u8[1024]{0}', space=vmem, size = 0x400, scoped, tag = 'output window, operand 4, single buffered']
    #allocation8 [shape = 's32[1]{0}', space=sflag, size = 0x4, scoped, tag = 'scoped memory for build_model_forward.1']
    %95 = vsyncpa [#allocation3], 0
    %96 = vsyncpa [#allocation5], 0
    %97 = vsyncpa [#allocation8], 0
    // Predicated region
    $region2: #{build_model_forward.1} parent=1 // pred_check
      _
    $region3: #{build_model_forward.1} parent=1 // pred_check_branch
      %99 = sbr.rel (0) target = $region5
    $region4: #{build_model_forward.1} parent=1 // pred_region
      _
    $region5: #{build_model_forward.1} parent=1 // pred_fallthru
      _
    // Predicated region
    $region6: #{build_model_forward.1} parent=1 // pred_check
      _
    $region7: #{build_model_forward.1} parent=1 // pred_check_branch
      %101 = sbr.rel (0) target = $region9
    $region8: #{build_model_forward.1} parent=1 // pred_region
      _
    $region9: #{build_model_forward.1} parent=1 // pred_fallthru
      _
    // Predicated region
    $region10: #{build_model_forward.1} parent=1 // pred_check
      _
    $region11: #{build_model_forward.1} parent=1 // pred_check_branch
      %103 = sbr.rel (0) target = $region13
    $region12: #{build_model_forward.1} parent=1 // pred_region
      _
    $region13: #{build_model_forward.1} parent=1 // pred_fallthru
      _
    // Predicated region
    $region14: #{build_model_forward.1} parent=1 // pred_check
      _
    $region15: #{build_model_forward.1} parent=1 // pred_check_branch
      %105 = sbr.rel (0) target = $region17
    $region16: #{build_model_forward.1} parent=1 // pred_region
      _
    $region17: #{build_model_forward.1} parent=1 // pred_fallthru
      _
    // Predicated region
    $region18: #{build_model_forward.1} parent=1 // pred_check
      _
    $region19: #{build_model_forward.1} parent=1 // pred_check_branch
      %107 = sbr.rel (0) target = $region21
    $region20: #{build_model_forward.1} parent=1 // pred_region
      _
    $region21: #{build_model_forward.1} parent=1 // pred_fallthru
      _
    // Predicated region
    $region22: #{build_model_forward.1} parent=1 // pred_check
      _
    $region23: #{build_model_forward.1} parent=1 // pred_check_branch
      %109 = sbr.rel (0) target = $region25
    $region24: #{build_model_forward.1} parent=1 // pred_region
      _
    $region25: #{build_model_forward.1} parent=1 // pred_fallthru
      _
    // Predicated region
    $region26: #{build_model_forward.1} parent=1 // pred_check
      _
    $region27: #{build_model_forward.1} parent=1 // pred_check_branch
      %111 = sbr.rel (0) target = $region29
    $region28: #{build_model_forward.1} parent=1 // pred_region
      _
    $region29: #{build_model_forward.1} parent=1 // pred_fallthru
      _
    // Predicated region
    $region30: #{build_model_forward.1} parent=1 // pred_check
      _
    $region31: #{build_model_forward.1} parent=1 // pred_check_branch
      %113 = sbr.rel (0) target = $region33
    $region32: #{build_model_forward.1} parent=1 // pred_region
      _
    $region33: #{build_model_forward.1} parent=1 // pred_fallthru
      _
    // Predicated region
    $region34: #{build_model_forward.1} parent=1 // pred_check
      _
    $region35: #{build_model_forward.1} parent=1 // pred_check_branch
      %115 = sbr.rel (0) target = $region37
    $region36: #{build_model_forward.1} parent=1 // pred_region
      _
    $region37: #{build_model_forward.1} parent=1 // pred_fallthru
      _
    // Predicated region
    $region38: #{build_model_forward.1} parent=1 // pred_check
      _
    $region39: #{build_model_forward.1} parent=1 // pred_check_branch
      %117 = sbr.rel (0) target = $region41
    $region40: #{build_model_forward.1} parent=1 // pred_region
      _
    $region41: #{build_model_forward.1} parent=1 // pred_fallthru
      _
    // Predicated region
    $region42: #{build_model_forward.1} parent=1 // pred_check
      _
    $region43: #{build_model_forward.1} parent=1 // pred_check_branch
      %119 = sbr.rel (0) target = $region45
    $region44: #{build_model_forward.1} parent=1 // pred_region
      _
    $region45: #{build_model_forward.1} parent=1 // pred_fallthru
      _
    // Predicated region
    $region46: #{build_model_forward.1} parent=1 // pred_check
      _
    $region47: #{build_model_forward.1} parent=1 // pred_check_branch
      %121 = sbr.rel (0) target = $region49
    $region48: #{build_model_forward.1} parent=1 // pred_region
      _
    $region49: #{build_model_forward.1} parent=1 // pred_fallthru
      _
    // Predicated region
    $region50: #{build_model_forward.1} parent=1 // pred_check
      _
    $region51: #{build_model_forward.1} parent=1 // pred_check_branch
      %123 = sbr.rel (0) target = $region53
    $region52: #{build_model_forward.1} parent=1 // pred_region
      _
    $region53: #{build_model_forward.1} parent=1 // pred_fallthru
      _
    // Predicated region
    $region54: #{build_model_forward.1} parent=1 // pred_check
      _
    $region55: #{build_model_forward.1} parent=1 // pred_check_branch
      %125 = sbr.rel (0) target = $region57
    $region56: #{build_model_forward.1} parent=1 // pred_region
      _
    $region57: #{build_model_forward.1} parent=1 // pred_fallthru
      _
    // Predicated region
    $region58: #{build_model_forward.1} parent=1 // pred_check
      _
    $region59: #{build_model_forward.1} parent=1 // pred_check_branch
      %127 = sbr.rel (0) target = $region61
    $region60: #{build_model_forward.1} parent=1 // pred_region
      _
    $region61: #{build_model_forward.1} parent=1 // pred_fallthru
      _
    // Predicated region
    $region62: #{build_model_forward.1} parent=1 // pred_check
      _
    $region63: #{build_model_forward.1} parent=1 // pred_check_branch
      %129 = sbr.rel (0) target = $region65
    $region64: #{build_model_forward.1} parent=1 // pred_region
      _
    $region65: #{build_model_forward.1} parent=1 // pred_fallthru
      _
    // Predicated region
    $region66: #{build_model_forward.1} parent=1 // pred_check
      _
    $region67: #{build_model_forward.1} parent=1 // pred_check_branch
      %131 = sbr.rel (0) target = $region69
    $region68: #{build_model_forward.1} parent=1 // pred_region
      _
    $region69: #{build_model_forward.1} parent=1 // pred_fallthru
      _
    // Predicated region
    $region70: #{build_model_forward.1} parent=1 // pred_check
      _
    $region71: #{build_model_forward.1} parent=1 // pred_check_branch
      %133 = sbr.rel (0) target = $region73
    $region72: #{build_model_forward.1} parent=1 // pred_region
      _
    $region73: #{build_model_forward.1} parent=1 // pred_fallthru
      _
    // Predicated region
    $region74: #{build_model_forward.1} parent=1 // pred_check
      _
    $region75: #{build_model_forward.1} parent=1 // pred_check_branch
      %135 = sbr.rel (0) target = $region77
    $region76: #{build_model_forward.1} parent=1 // pred_region
      _
    $region77: #{build_model_forward.1} parent=1 // pred_fallthru
      _
    // Predicated region
    $region78: #{build_model_forward.1} parent=1 // pred_check
      _
    $region79: #{build_model_forward.1} parent=1 // pred_check_branch
      %137 = sbr.rel (0) target = $region81
    $region80: #{build_model_forward.1} parent=1 // pred_region
      _
    $region81: #{build_model_forward.1} parent=1 // pred_fallthru
      _
    // Predicated region
    $region82: #{build_model_forward.1} parent=1 // pred_check
      _
    $region83: #{build_model_forward.1} parent=1 // pred_check_branch
      %139 = sbr.rel (0) target = $region85
    $region84: #{build_model_forward.1} parent=1 // pred_region
      _
    $region85: #{build_model_forward.1} parent=1 // pred_fallthru
      _
    // Predicated region
    $region86: #{build_model_forward.1} parent=1 // pred_check
      _
    $region87: #{build_model_forward.1} parent=1 // pred_check_branch
      %141 = sbr.rel (0) target = $region89
    $region88: #{build_model_forward.1} parent=1 // pred_region
      _
    $region89: #{build_model_forward.1} parent=1 // pred_fallthru
      _
    // Predicated region
    $region90: #{build_model_forward.1} parent=1 // pred_check
      _
    $region91: #{build_model_forward.1} parent=1 // pred_check_branch
      %143 = sbr.rel (0) target = $region93
    $region92: #{build_model_forward.1} parent=1 // pred_region
      _
    $region93: #{build_model_forward.1} parent=1 // pred_fallthru
      _
    // Predicated region
    $region94: #{build_model_forward.1} parent=1 // pred_check
      _
    $region95: #{build_model_forward.1} parent=1 // pred_check_branch
      %145 = sbr.rel (0) target = $region97
    $region96: #{build_model_forward.1} parent=1 // pred_region
      _
    $region97: #{build_model_forward.1} parent=1 // pred_fallthru
      _
    // Predicated region
    $region98: #{build_model_forward.1} parent=1 // pred_check
      _
    $region99: #{build_model_forward.1} parent=1 // pred_check_branch
      %147 = sbr.rel (0) target = $region101
    $region100: #{build_model_forward.1} parent=1 // pred_region
      _
    $region101: #{build_model_forward.1} parent=1 // pred_fallthru
      _
    // Predicated region
    $region102: #{build_model_forward.1} parent=1 // pred_check
      _
    $region103: #{build_model_forward.1} parent=1 // pred_check_branch
      %149 = sbr.rel (0) target = $region105
    $region104: #{build_model_forward.1} parent=1 // pred_region
      _
    $region105: #{build_model_forward.1} parent=1 // pred_fallthru
      _
    // Predicated region
    $region106: #{build_model_forward.1} parent=1 // pred_check
      _
    $region107: #{build_model_forward.1} parent=1 // pred_check_branch
      %151 = sbr.rel (0) target = $region109
    $region108: #{build_model_forward.1} parent=1 // pred_region
      _
    $region109: #{build_model_forward.1} parent=1 // pred_fallthru
      _
    // Predicated region
    $region110: #{build_model_forward.1} parent=1 // pred_check
      _
    $region111: #{build_model_forward.1} parent=1 // pred_check_branch
      %153 = sbr.rel (0) target = $region113
    $region112: #{build_model_forward.1} parent=1 // pred_region
      _
    $region113: #{build_model_forward.1} parent=1 // pred_fallthru
      _
    // Predicated region
    $region114: #{build_model_forward.1} parent=1 // pred_check
      _
    $region115: #{build_model_forward.1} parent=1 // pred_check_branch
      %155 = sbr.rel (0) target = $region117
    $region116: #{build_model_forward.1} parent=1 // pred_region
      _
    $region117: #{build_model_forward.1} parent=1 // pred_fallthru
      _
    // Predicated region
    $region118: #{build_model_forward.1} parent=1 // pred_check
      _
    $region119: #{build_model_forward.1} parent=1 // pred_check_branch
      %157 = sbr.rel (0) target = $region121
    $region120: #{build_model_forward.1} parent=1 // pred_region
      _
    $region121: #{build_model_forward.1} parent=1 // pred_fallthru
      _
    // Predicated region
    $region122: #{build_model_forward.1} parent=1 // pred_check
      _
    $region123: #{build_model_forward.1} parent=1 // pred_check_branch
      %159 = sbr.rel (0) target = $region125
    $region124: #{build_model_forward.1} parent=1 // pred_region
      _
    $region125: #{build_model_forward.1} parent=1 // pred_fallthru
      _
    // Predicated region
    $region126: #{build_model_forward.1} parent=1 // pred_check
      _
    $region127: #{build_model_forward.1} parent=1 // pred_check_branch
      %161 = sbr.rel (0) target = $region129
    $region128: #{build_model_forward.1} parent=1 // pred_region
      _
    $region129: #{build_model_forward.1} parent=1 // pred_fallthru
      _
    // Predicated region
    $region130: #{build_model_forward.1} parent=1 // pred_check
      _
    $region131: #{build_model_forward.1} parent=1 // pred_check_branch
      %163 = sbr.rel (0) target = $region133
    $region132: #{build_model_forward.1} parent=1 // pred_region
      _
    $region133: #{build_model_forward.1} parent=1 // pred_fallthru
      _
    // Predicated region
    $region134: #{build_model_forward.1} parent=1 // pred_check
      _
    $region135: #{build_model_forward.1} parent=1 // pred_check_branch
      %165 = sbr.rel (0) target = $region137
    $region136: #{build_model_forward.1} parent=1 // pred_region
      _
    $region137: #{build_model_forward.1} parent=1 // pred_fallthru
      _
    // Predicated region
    $region138: #{build_model_forward.1} parent=1 // pred_check
      _
    $region139: #{build_model_forward.1} parent=1 // pred_check_branch
      %167 = sbr.rel (0) target = $region141
    $region140: #{build_model_forward.1} parent=1 // pred_region
      _
    $region141: #{build_model_forward.1} parent=1 // pred_fallthru
      _
    // Predicated region
    $region142: #{build_model_forward.1} parent=1 // pred_check
      _
    $region143: #{build_model_forward.1} parent=1 // pred_check_branch
      %169 = sbr.rel (0) target = $region145
    $region144: #{build_model_forward.1} parent=1 // pred_region
      _
    $region145: #{build_model_forward.1} parent=1 // pred_fallthru
      _
    // Predicated region
    $region146: #{build_model_forward.1} parent=1 // pred_check
      _
    $region147: #{build_model_forward.1} parent=1 // pred_check_branch
      %171 = sbr.rel (0) target = $region149
    $region148: #{build_model_forward.1} parent=1 // pred_region
      _
    $region149: #{build_model_forward.1} parent=1 // pred_fallthru
      _
    // Predicated region
    $region150: #{build_model_forward.1} parent=1 // pred_check
      _
    $region151: #{build_model_forward.1} parent=1 // pred_check_branch
      %173 = sbr.rel (0) target = $region153
    $region152: #{build_model_forward.1} parent=1 // pred_region
      _
    $region153: #{build_model_forward.1} parent=1 // pred_fallthru
      _
    // Predicated region
    $region154: #{build_model_forward.1} parent=1 // pred_check
      _
    $region155: #{build_model_forward.1} parent=1 // pred_check_branch
      %175 = sbr.rel (0) target = $region157
    $region156: #{build_model_forward.1} parent=1 // pred_region
      _
    $region157: #{build_model_forward.1} parent=1 // pred_fallthru
      _
    // Predicated region
    $region158: #{build_model_forward.1} parent=1 // pred_check
      _
    $region159: #{build_model_forward.1} parent=1 // pred_check_branch
      %177 = sbr.rel (0) target = $region161
    $region160: #{build_model_forward.1} parent=1 // pred_region
      _
    $region161: #{build_model_forward.1} parent=1 // pred_fallthru
      _
    %v179 = vld [vmem:[%s1] sm:$0xff]
    %v180 = vld [vmem:[%s1 + $0x8] sm:$0xff]
    %v181 = vld [vmem:[%s1 + $0x10] sm:$0xff]
    %v182 = vld [vmem:[%s1 + $0x18] sm:$0xff]
    %v183 = vld [vmem:[%s1 + $0x20] sm:$0xff]
    %v184 = vld [vmem:[%s1 + $0x28] sm:$0xff]
    %v185 = vld [vmem:[%s1 + $0x30] sm:$0xff]
    %v186 = vld [vmem:[%s1 + $0x38] sm:$0xff]
    %v187 = vld [vmem:[%s1 + $0x40] sm:$0xff]
    %v188 = vld [vmem:[%s1 + $0x48] sm:$0xff]
    %v189 = vld [vmem:[%s1 + $0x50] sm:$0xff]
    %v190 = vld [vmem:[%s1 + $0x58] sm:$0xff]
    %v191 = vld [vmem:[%s1 + $0x60] sm:$0xff]
    %v192 = vld [vmem:[%s1 + $0x68] sm:$0xff]
    %v193 = vld [vmem:[%s1 + $0x70] sm:$0xff]
    %v194 = vld [vmem:[%s1 + $0x78] sm:$0xff]
    %v195 = vld [vmem:[%s1 + $0x80] sm:$0xff]
    %v196 = vld [vmem:[%s1 + $0x88] sm:$0xff]
    %v197 = vld [vmem:[%s1 + $0x90] sm:$0xff]
    %v198 = vld [vmem:[%s1 + $0x98] sm:$0xff]
    %v199 = vld [vmem:[%s1 + $0xa0] sm:$0xff]
    %v200 = vld [vmem:[%s1 + $0xa8] sm:$0xff]
    %v201 = vld [vmem:[%s1 + $0xb0] sm:$0xff]
    %v202 = vld [vmem:[%s1 + $0xb8] sm:$0xff]
    %v203 = vld [vmem:[%s1 + $0xc0] sm:$0xff]
    %v204 = vld [vmem:[%s1 + $0xc8] sm:$0xff]
    %v205 = vld [vmem:[%s1 + $0xd0] sm:$0xff]
    %v206 = vld [vmem:[%s1 + $0xd8] sm:$0xff]
    %v207 = vld [vmem:[%s1 + $0xe0] sm:$0xff]
    %v208 = vld [vmem:[%s1 + $0xe8] sm:$0xff]
    %v209 = vld [vmem:[%s1 + $0xf0] sm:$0xff]
    %v210 = vld [vmem:[%s1 + $0xf8] sm:$0xff]
    %v211 = vld [vmem:[%s1 + $0x100] sm:$0xff]
    %v212 = vld [vmem:[%s1 + $0x108] sm:$0xff]
    %v213 = vld [vmem:[%s1 + $0x110] sm:$0xff]
    %v214 = vld [vmem:[%s1 + $0x118] sm:$0xff]
    %v215 = vld [vmem:[%s1 + $0x120] sm:$0xff]
    %v216 = vld [vmem:[%s1 + $0x128] sm:$0xff]
    %v217 = vld [vmem:[%s1 + $0x130] sm:$0xff]
    %v218 = vld [vmem:[%s1 + $0x138] sm:$0xff]
    %v219 = vld [vmem:[%s1 + $0x140] sm:$0xff]
    %v220 = vld [vmem:[%s1 + $0x148] sm:$0xff]
    %v221 = vld [vmem:[%s1 + $0x150] sm:$0xff]
    %v222 = vld [vmem:[%s1 + $0x158] sm:$0xff]
    %v223 = vld [vmem:[%s1 + $0x160] sm:$0xff]
    %v224 = vld [vmem:[%s1 + $0x168] sm:$0xff]
    %v225 = vld [vmem:[%s1 + $0x170] sm:$0xff]
    %v226 = vld [vmem:[%s1 + $0x178] sm:$0xff]
    %v227 = vld [vmem:[%s1 + $0x180] sm:$0xff]
    %v228 = vld [vmem:[%s1 + $0x188] sm:$0xff]
    %v229 = vld [vmem:[%s1 + $0x190] sm:$0xff]
    %v230 = vld [vmem:[%s1 + $0x198] sm:$0xff]
    %v231 = vld [vmem:[%s1 + $0x1a0] sm:$0xff]
    %v232 = vld [vmem:[%s1 + $0x1a8] sm:$0xff]
    %v233 = vld [vmem:[%s1 + $0x1b0] sm:$0xff]
    %v234 = vld [vmem:[%s1 + $0x1b8] sm:$0xff]
    %v235 = vld [vmem:[%s1 + $0x1c0] sm:$0xff]
    %v236 = vld [vmem:[%s1 + $0x1c8] sm:$0xff]
    %v237 = vld [vmem:[%s1 + $0x1d0] sm:$0xff]
    %v238 = vld [vmem:[%s1 + $0x1d8] sm:$0xff]
    %v239 = vld [vmem:[%s1 + $0x1e0] sm:$0xff]
    %v240 = vld [vmem:[%s1 + $0x1e8] sm:$0xff]
    %v241 = vld [vmem:[%s1 + $0x1f0] sm:$0xff]
    %v242 = vld [vmem:[%s1 + $0x1f8] sm:$0xff]
    %v243 = vpack.c.bf16 %v180, %v179
    %v244 = vpack.c.bf16 %v182, %v181
    %v245 = vpack.c.bf16 %v184, %v183
    %v246 = vpack.c.bf16 %v186, %v185
    %v247 = vpack.c.bf16 %v188, %v187
    %v248 = vpack.c.bf16 %v190, %v189
    %v249 = vpack.c.bf16 %v192, %v191
    %v250 = vpack.c.bf16 %v194, %v193
    %v251 = vpack.c.bf16 %v196, %v195
    %v252 = vpack.c.bf16 %v198, %v197
    %v253 = vpack.c.bf16 %v200, %v199
    %v254 = vpack.c.bf16 %v202, %v201
    %v255 = vpack.c.bf16 %v204, %v203
    %v256 = vpack.c.bf16 %v206, %v205
    %v257 = vpack.c.bf16 %v208, %v207
    %v258 = vpack.c.bf16 %v210, %v209
    %v259 = vpack.c.bf16 %v212, %v211
    %v260 = vpack.c.bf16 %v214, %v213
    %v261 = vpack.c.bf16 %v216, %v215
    %v262 = vpack.c.bf16 %v218, %v217
    %v263 = vpack.c.bf16 %v220, %v219
    %v264 = vpack.c.bf16 %v222, %v221
    %v265 = vpack.c.bf16 %v224, %v223
    %v266 = vpack.c.bf16 %v226, %v225
    %v267 = vpack.c.bf16 %v228, %v227
    %v268 = vpack.c.bf16 %v230, %v229
    %v269 = vpack.c.bf16 %v232, %v231
    %v270 = vpack.c.bf16 %v234, %v233
    %v271 = vpack.c.bf16 %v236, %v235
    %v272 = vpack.c.bf16 %v238, %v237
    %v273 = vpack.c.bf16 %v240, %v239
    %v274 = vpack.c.bf16 %v242, %v241
    %v275 = vld [vmem:[%s3] sm:$0xff]
    %v276 = vld [vmem:[%s3 + $0x8] sm:$0xff]
    %v277 = vld [vmem:[%s3 + $0x10] sm:$0xff]
    %v278 = vld [vmem:[%s3 + $0x18] sm:$0xff]
    %v279 = vld [vmem:[%s3 + $0x20] sm:$0xff]
    %v280 = vld [vmem:[%s3 + $0x28] sm:$0xff]
    %v281 = vld [vmem:[%s3 + $0x30] sm:$0xff]
    %v282 = vld [vmem:[%s3 + $0x38] sm:$0xff]
    %v283 = vld [vmem:[%s3 + $0x40] sm:$0xff]
    %v284 = vld [vmem:[%s3 + $0x48] sm:$0xff]
    %v285 = vld [vmem:[%s3 + $0x50] sm:$0xff]
    %v286 = vld [vmem:[%s3 + $0x58] sm:$0xff]
    %v287 = vld [vmem:[%s3 + $0x60] sm:$0xff]
    %v288 = vld [vmem:[%s3 + $0x68] sm:$0xff]
    %v289 = vld [vmem:[%s3 + $0x70] sm:$0xff]
    %v290 = vld [vmem:[%s3 + $0x78] sm:$0xff]
    %v291 = vld [vmem:[%s3 + $0x80] sm:$0xff]
    %v292 = vld [vmem:[%s3 + $0x88] sm:$0xff]
    %v293 = vpack.c.bf16 %v276, %v275
    %v294 = vpack.c.bf16 %v278, %v277
    %v295 = vpack.c.bf16 %v280, %v279
    %v296 = vpack.c.bf16 %v282, %v281
    %v297 = vpack.c.bf16 %v284, %v283
    %v298 = vpack.c.bf16 %v286, %v285
    %v299 = vpack.c.bf16 %v288, %v287
    %v300 = vpack.c.bf16 %v290, %v289
    %v301 = vpack.c.bf16 %v292, %v291
    %v302 = vld [vmem:[%s5] sm:$0xff]
    %v303 = vld [vmem:[%s5 + $0x8] sm:$0xff]
    %v304 = vld [vmem:[%s5 + $0x10] sm:$0xff]
    %v305 = vld [vmem:[%s5 + $0x18] sm:$0xff]
    %v306 = vld [vmem:[%s5 + $0x20] sm:$0xff]
    %v307 = vld [vmem:[%s5 + $0x28] sm:$0xff]
    %v308 = vld [vmem:[%s5 + $0x30] sm:$0xff]
    %v309 = vld [vmem:[%s5 + $0x38] sm:$0xff]
    %v310 = vpack.c.bf16 %v303, %v302
    %v311 = vpack.c.bf16 %v305, %v304
    %v312 = vpack.c.bf16 %v307, %v306
    %v313 = vpack.c.bf16 %v309, %v308
    %v314 = vld [vmem:[%s7] sm:$0xff]
    %v315 = vld [vmem:[%s7 + $0x8] sm:$0xff]
    %v316 = vld [vmem:[%s7 + $0x10] sm:$0xff]
    %v317 = vld [vmem:[%s7 + $0x18] sm:$0xff]
    %v318 = vld [vmem:[%s7 + $0x20] sm:$0xff]
    %v319 = vld [vmem:[%s7 + $0x28] sm:$0xff]
    %v320 = vld [vmem:[%s7 + $0x30] sm:$0xff]
    %v321 = vld [vmem:[%s7 + $0x38] sm:$0xff]
    %v322 = vpack.c.bf16 %v315, %v314
    %v323 = vpack.c.bf16 %v317, %v316
    %v324 = vpack.c.bf16 %v319, %v318
    %v325 = vpack.c.bf16 %v321, %v320
    %v326 = vld [vmem:[%s9] sm:$0xf]
    %v327 = vld [vmem:[%s9 + $0x4] sm:$0xf]
    %v328 = vld [vmem:[%s9 + $0x8] sm:$0xf]
    %v329 = vld [vmem:[%s9 + $0xc] sm:$0x3]
    %v330 = vld [vmem:[%s11] sm:$0x1]
    %v332 = vlaneseq
    %v333 = vshrl.u32 %v332, 7
    %v334 = vsub.s32 0, %v333
    %v335 = vrot.slane %v330, %v334
    %v341 = vunpack.c.l.b16 %v326
    %v342 = vunpack.c.l.b16 %v327
    %v343 = vunpack.c.l.b16 %v328
    %v344 = vunpack.c.l.b16 %v329
    %v345 = vpack.c.b16 %v342, %v341
    %v346 = vpack.c.b16 %v344, %v343
    %vm348 = vcmask 220160
    %v350 = vsel %vm348, %v243, 0
    %v353 = vsel %vm348, %v244, 0
    %v356 = vsel %vm348, %v245, 0
    %v359 = vsel %vm348, %v246, 0
    %v362 = vsel %vm348, %v247, 0
    %v365 = vsel %vm348, %v248, 0
    %v368 = vsel %vm348, %v249, 0
    %v371 = vsel %vm348, %v250, 0
    %v374 = vsel %vm348, %v251, 0
    %v377 = vsel %vm348, %v252, 0
    %v380 = vsel %vm348, %v253, 0
    %v383 = vsel %vm348, %v254, 0
    %v386 = vsel %vm348, %v255, 0
    %v389 = vsel %vm348, %v256, 0
    %v392 = vsel %vm348, %v257, 0
    %v395 = vsel %vm348, %v258, 0
    %v398 = vsel %vm348, %v259, 0
    %v401 = vsel %vm348, %v260, 0
    %v404 = vsel %vm348, %v261, 0
    %v407 = vsel %vm348, %v262, 0
    %v410 = vsel %vm348, %v263, 0
    %v413 = vsel %vm348, %v264, 0
    %v416 = vsel %vm348, %v265, 0
    %v419 = vsel %vm348, %v266, 0
    %v422 = vsel %vm348, %v267, 0
    %v425 = vsel %vm348, %v268, 0
    %v428 = vsel %vm348, %v269, 0
    %v431 = vsel %vm348, %v270, 0
    %v434 = vsel %vm348, %v271, 0
    %v437 = vsel %vm348, %v272, 0
    %v440 = vsel %vm348, %v273, 0
    %v443 = vsel %vm348, %v274, 0
    %v446 = vsel %vm348, %v293, 0
    %v449 = vsel %vm348, %v294, 0
    %v452 = vsel %vm348, %v295, 0
    %v455 = vsel %vm348, %v296, 0
    %v458 = vsel %vm348, %v297, 0
    %v461 = vsel %vm348, %v298, 0
    %v464 = vsel %vm348, %v299, 0
    %v467 = vsel %vm348, %v300, 0
    %v470 = vsel %vm348, %v301, 0
    %v473 = vsel %vm348, %v310, 0
    %v476 = vsel %vm348, %v311, 0
    %v479 = vsel %vm348, %v312, 0
    %v482 = vsel %vm348, %v313, 0
    %v485 = vsel %vm348, %v322, 0
    %v488 = vsel %vm348, %v323, 0
    %v491 = vsel %vm348, %v324, 0
    %v494 = vsel %vm348, %v325, 0
    %vm496 = vcmask 1044480
    %vm497 = vcmask 1045504
    %v498 = vsel %vm496, 4294967295, 65535
    %v499 = vsel %vm497, %v498, 0
    %v501 = vand.u32 %v346, %v499
    %503 = vmatprep.subr.bf16.mxu0 0
    %504 = vmatpush1.bf16.msra.mxu0 0
    %505 = vmatprep.subr.bf16.mxu0 0
    %506 = vmatpush1.bf16.msra.mxu0 0
    %507 = vmatprep.subr.bf16.mxu0 0
    %508 = vmatpush1.bf16.msra.mxu0 0
    %509 = vmatprep.subr.bf16.mxu0 0
    %510 = vmatpush1.bf16.msra.mxu0 0
    %511 = vmatprep.subr.bf16.mxu0 0
    %512 = vmatpush1.bf16.msra.mxu0 0
    %513 = vmatprep.subr.bf16.mxu0 0
    %514 = vmatpush1.bf16.msra.mxu0 0
    %515 = vmatprep.subr.bf16.mxu0 0
    %516 = vmatpush1.bf16.msra.mxu0 %v501
    %517 = vmatprep.subr.bf16.mxu0 0
    %518 = vmatpush1.bf16.msra.mxu0 %v345
    %519 = vmatprep.subr.bf16.mxu0 0
    %520 = vmatpush2.bf16.msra.mxu0 0
    %521 = vmatprep.subr.bf16.mxu0 0
    %522 = vmatpush2.bf16.msra.mxu0 0
    %523 = vmatprep.subr.bf16.mxu0 0
    %524 = vmatpush2.bf16.msra.mxu0 0
    %525 = vmatprep.subr.bf16.mxu0 0
    %526 = vmatpush2.bf16.msra.mxu0 0
    %527 = vmatprep.subr.bf16.mxu0 0
    %528 = vmatpush2.bf16.msra.mxu0 0
    %529 = vmatprep.subr.bf16.mxu0 0
    %530 = vmatpush2.bf16.msra.mxu0 0
    %531 = vmatprep.subr.bf16.mxu0 0
    %532 = vmatpush2.bf16.msra.mxu0 0
    %533 = vmatprep.subr.bf16.mxu0 0
    %534 = vmatpush2.bf16.msra.mxu0 0
    %535 = vmatprep.mubr.bf16.mxu0 0
    %536 = vmatmul.mubr.bf16.gmra.mxu0 %v350
    %v537 = vpop.f32.mrf.mxu0
    %v538 = vadd.f32 %v335, %v537
    %v539 = vpop.f32.mrf.mxu0
    %v540 = vpop.f32.mrf.mxu0
    %v541 = vadd.f32 %v335, %v540
    %v542 = vpop.f32.mrf.mxu0
    %543 = vmatprep.mubr.bf16.mxu0 0
    %544 = vmatmul.mubr.bf16.gmra.mxu0 %v353
    %v545 = vpop.f32.mrf.mxu0
    %v546 = vadd.f32 %v335, %v545
    %v547 = vpop.f32.mrf.mxu0
    %v548 = vpop.f32.mrf.mxu0
    %v549 = vadd.f32 %v335, %v548
    %v550 = vpop.f32.mrf.mxu0
    %551 = vmatprep.mubr.bf16.mxu0 0
    %552 = vmatmul.mubr.bf16.gmra.mxu0 %v356
    %v553 = vpop.f32.mrf.mxu0
    %v554 = vadd.f32 %v335, %v553
    %v555 = vpop.f32.mrf.mxu0
    %v556 = vpop.f32.mrf.mxu0
    %v557 = vadd.f32 %v335, %v556
    %v558 = vpop.f32.mrf.mxu0
    %559 = vmatprep.mubr.bf16.mxu0 0
    %560 = vmatmul.mubr.bf16.gmra.mxu0 %v359
    %v561 = vpop.f32.mrf.mxu0
    %v562 = vadd.f32 %v335, %v561
    %v563 = vpop.f32.mrf.mxu0
    %v564 = vpop.f32.mrf.mxu0
    %v565 = vadd.f32 %v335, %v564
    %v566 = vpop.f32.mrf.mxu0
    %567 = vmatprep.mubr.bf16.mxu0 0
    %568 = vmatmul.mubr.bf16.gmra.mxu0 %v362
    %v569 = vpop.f32.mrf.mxu0
    %v570 = vadd.f32 %v335, %v569
    %v571 = vpop.f32.mrf.mxu0
    %v572 = vpop.f32.mrf.mxu0
    %v573 = vadd.f32 %v335, %v572
    %v574 = vpop.f32.mrf.mxu0
    %575 = vmatprep.mubr.bf16.mxu0 0
    %576 = vmatmul.mubr.bf16.gmra.mxu0 %v365
    %v577 = vpop.f32.mrf.mxu0
    %v578 = vadd.f32 %v335, %v577
    %v579 = vpop.f32.mrf.mxu0
    %v580 = vpop.f32.mrf.mxu0
    %v581 = vadd.f32 %v335, %v580
    %v582 = vpop.f32.mrf.mxu0
    %583 = vmatprep.mubr.bf16.mxu0 0
    %584 = vmatmul.mubr.bf16.gmra.mxu0 %v368
    %v585 = vpop.f32.mrf.mxu0
    %v586 = vadd.f32 %v335, %v585
    %v587 = vpop.f32.mrf.mxu0
    %v588 = vpop.f32.mrf.mxu0
    %v589 = vadd.f32 %v335, %v588
    %v590 = vpop.f32.mrf.mxu0
    %591 = vmatprep.mubr.bf16.mxu0 0
    %592 = vmatmul.mubr.bf16.gmra.mxu0 %v371
    %v593 = vpop.f32.mrf.mxu0
    %v594 = vadd.f32 %v335, %v593
    %v595 = vpop.f32.mrf.mxu0
    %v596 = vpop.f32.mrf.mxu0
    %v597 = vadd.f32 %v335, %v596
    %v598 = vpop.f32.mrf.mxu0
    %599 = vmatprep.mubr.bf16.mxu0 0
    %600 = vmatmul.mubr.bf16.gmra.mxu0 %v374
    %v601 = vpop.f32.mrf.mxu0
    %v602 = vadd.f32 %v335, %v601
    %v603 = vpop.f32.mrf.mxu0
    %v604 = vpop.f32.mrf.mxu0
    %v605 = vadd.f32 %v335, %v604
    %v606 = vpop.f32.mrf.mxu0
    %607 = vmatprep.mubr.bf16.mxu0 0
    %608 = vmatmul.mubr.bf16.gmra.mxu0 %v377
    %v609 = vpop.f32.mrf.mxu0
    %v610 = vadd.f32 %v335, %v609
    %v611 = vpop.f32.mrf.mxu0
    %v612 = vpop.f32.mrf.mxu0
    %v613 = vadd.f32 %v335, %v612
    %v614 = vpop.f32.mrf.mxu0
    %615 = vmatprep.mubr.bf16.mxu0 0
    %616 = vmatmul.mubr.bf16.gmra.mxu0 %v380
    %v617 = vpop.f32.mrf.mxu0
    %v618 = vadd.f32 %v335, %v617
    %v619 = vpop.f32.mrf.mxu0
    %v620 = vpop.f32.mrf.mxu0
    %v621 = vadd.f32 %v335, %v620
    %v622 = vpop.f32.mrf.mxu0
    %623 = vmatprep.mubr.bf16.mxu0 0
    %624 = vmatmul.mubr.bf16.gmra.mxu0 %v383
    %v625 = vpop.f32.mrf.mxu0
    %v626 = vadd.f32 %v335, %v625
    %v627 = vpop.f32.mrf.mxu0
    %v628 = vpop.f32.mrf.mxu0
    %v629 = vadd.f32 %v335, %v628
    %v630 = vpop.f32.mrf.mxu0
    %631 = vmatprep.mubr.bf16.mxu0 0
    %632 = vmatmul.mubr.bf16.gmra.mxu0 %v386
    %v633 = vpop.f32.mrf.mxu0
    %v634 = vadd.f32 %v335, %v633
    %v635 = vpop.f32.mrf.mxu0
    %v636 = vpop.f32.mrf.mxu0
    %v637 = vadd.f32 %v335, %v636
    %v638 = vpop.f32.mrf.mxu0
    %639 = vmatprep.mubr.bf16.mxu0 0
    %640 = vmatmul.mubr.bf16.gmra.mxu0 %v389
    %v641 = vpop.f32.mrf.mxu0
    %v642 = vadd.f32 %v335, %v641
    %v643 = vpop.f32.mrf.mxu0
    %v644 = vpop.f32.mrf.mxu0
    %v645 = vadd.f32 %v335, %v644
    %v646 = vpop.f32.mrf.mxu0
    %647 = vmatprep.mubr.bf16.mxu0 0
    %648 = vmatmul.mubr.bf16.gmra.mxu0 %v392
    %v649 = vpop.f32.mrf.mxu0
    %v650 = vadd.f32 %v335, %v649
    %v651 = vpop.f32.mrf.mxu0
    %v652 = vpop.f32.mrf.mxu0
    %v653 = vadd.f32 %v335, %v652
    %v654 = vpop.f32.mrf.mxu0
    %655 = vmatprep.mubr.bf16.mxu0 0
    %656 = vmatmul.mubr.bf16.gmra.mxu0 %v395
    %v657 = vpop.f32.mrf.mxu0
    %v658 = vadd.f32 %v335, %v657
    %v659 = vpop.f32.mrf.mxu0
    %v660 = vpop.f32.mrf.mxu0
    %v661 = vadd.f32 %v335, %v660
    %v662 = vpop.f32.mrf.mxu0
    %663 = vmatprep.mubr.bf16.mxu0 0
    %664 = vmatmul.mubr.bf16.gmra.mxu0 %v398
    %v665 = vpop.f32.mrf.mxu0
    %v666 = vadd.f32 %v335, %v665
    %v667 = vpop.f32.mrf.mxu0
    %v668 = vpop.f32.mrf.mxu0
    %v669 = vadd.f32 %v335, %v668
    %v670 = vpop.f32.mrf.mxu0
    %671 = vmatprep.mubr.bf16.mxu0 0
    %672 = vmatmul.mubr.bf16.gmra.mxu0 %v401
    %v673 = vpop.f32.mrf.mxu0
    %v674 = vadd.f32 %v335, %v673
    %v675 = vpop.f32.mrf.mxu0
    %v676 = vpop.f32.mrf.mxu0
    %v677 = vadd.f32 %v335, %v676
    %v678 = vpop.f32.mrf.mxu0
    %679 = vmatprep.mubr.bf16.mxu0 0
    %680 = vmatmul.mubr.bf16.gmra.mxu0 %v404
    %v681 = vpop.f32.mrf.mxu0
    %v682 = vadd.f32 %v335, %v681
    %v683 = vpop.f32.mrf.mxu0
    %v684 = vpop.f32.mrf.mxu0
    %v685 = vadd.f32 %v335, %v684
    %v686 = vpop.f32.mrf.mxu0
    %687 = vmatprep.mubr.bf16.mxu0 0
    %688 = vmatmul.mubr.bf16.gmra.mxu0 %v407
    %v689 = vpop.f32.mrf.mxu0
    %v690 = vadd.f32 %v335, %v689
    %v691 = vpop.f32.mrf.mxu0
    %v692 = vpop.f32.mrf.mxu0
    %v693 = vadd.f32 %v335, %v692
    %v694 = vpop.f32.mrf.mxu0
    %695 = vmatprep.mubr.bf16.mxu0 0
    %696 = vmatmul.mubr.bf16.gmra.mxu0 %v410
    %v697 = vpop.f32.mrf.mxu0
    %v698 = vadd.f32 %v335, %v697
    %v699 = vpop.f32.mrf.mxu0
    %v700 = vpop.f32.mrf.mxu0
    %v701 = vadd.f32 %v335, %v700
    %v702 = vpop.f32.mrf.mxu0
    %703 = vmatprep.mubr.bf16.mxu0 0
    %704 = vmatmul.mubr.bf16.gmra.mxu0 %v413
    %v705 = vpop.f32.mrf.mxu0
    %v706 = vadd.f32 %v335, %v705
    %v707 = vpop.f32.mrf.mxu0
    %v708 = vpop.f32.mrf.mxu0
    %v709 = vadd.f32 %v335, %v708
    %v710 = vpop.f32.mrf.mxu0
    %711 = vmatprep.mubr.bf16.mxu0 0
    %712 = vmatmul.mubr.bf16.gmra.mxu0 %v416
    %v713 = vpop.f32.mrf.mxu0
    %v714 = vadd.f32 %v335, %v713
    %v715 = vpop.f32.mrf.mxu0
    %v716 = vpop.f32.mrf.mxu0
    %v717 = vadd.f32 %v335, %v716
    %v718 = vpop.f32.mrf.mxu0
    %719 = vmatprep.mubr.bf16.mxu0 0
    %720 = vmatmul.mubr.bf16.gmra.mxu0 %v419
    %v721 = vpop.f32.mrf.mxu0
    %v722 = vadd.f32 %v335, %v721
    %v723 = vpop.f32.mrf.mxu0
    %v724 = vpop.f32.mrf.mxu0
    %v725 = vadd.f32 %v335, %v724
    %v726 = vpop.f32.mrf.mxu0
    %727 = vmatprep.mubr.bf16.mxu0 0
    %728 = vmatmul.mubr.bf16.gmra.mxu0 %v422
    %v729 = vpop.f32.mrf.mxu0
    %v730 = vadd.f32 %v335, %v729
    %v731 = vpop.f32.mrf.mxu0
    %v732 = vpop.f32.mrf.mxu0
    %v733 = vadd.f32 %v335, %v732
    %v734 = vpop.f32.mrf.mxu0
    %735 = vmatprep.mubr.bf16.mxu0 0
    %736 = vmatmul.mubr.bf16.gmra.mxu0 %v425
    %v737 = vpop.f32.mrf.mxu0
    %v738 = vadd.f32 %v335, %v737
    %v739 = vpop.f32.mrf.mxu0
    %v740 = vpop.f32.mrf.mxu0
    %v741 = vadd.f32 %v335, %v740
    %v742 = vpop.f32.mrf.mxu0
    %743 = vmatprep.mubr.bf16.mxu0 0
    %744 = vmatmul.mubr.bf16.gmra.mxu0 %v428
    %v745 = vpop.f32.mrf.mxu0
    %v746 = vadd.f32 %v335, %v745
    %v747 = vpop.f32.mrf.mxu0
    %v748 = vpop.f32.mrf.mxu0
    %v749 = vadd.f32 %v335, %v748
    %v750 = vpop.f32.mrf.mxu0
    %751 = vmatprep.mubr.bf16.mxu0 0
    %752 = vmatmul.mubr.bf16.gmra.mxu0 %v431
    %v753 = vpop.f32.mrf.mxu0
    %v754 = vadd.f32 %v335, %v753
    %v755 = vpop.f32.mrf.mxu0
    %v756 = vpop.f32.mrf.mxu0
    %v757 = vadd.f32 %v335, %v756
    %v758 = vpop.f32.mrf.mxu0
    %759 = vmatprep.mubr.bf16.mxu0 0
    %760 = vmatmul.mubr.bf16.gmra.mxu0 %v434
    %v761 = vpop.f32.mrf.mxu0
    %v762 = vadd.f32 %v335, %v761
    %v763 = vpop.f32.mrf.mxu0
    %v764 = vpop.f32.mrf.mxu0
    %v765 = vadd.f32 %v335, %v764
    %v766 = vpop.f32.mrf.mxu0
    %767 = vmatprep.mubr.bf16.mxu0 0
    %768 = vmatmul.mubr.bf16.gmra.mxu0 %v437
    %v769 = vpop.f32.mrf.mxu0
    %v770 = vadd.f32 %v335, %v769
    %v771 = vpop.f32.mrf.mxu0
    %v772 = vpop.f32.mrf.mxu0
    %v773 = vadd.f32 %v335, %v772
    %v774 = vpop.f32.mrf.mxu0
    %775 = vmatprep.mubr.bf16.mxu0 0
    %776 = vmatmul.mubr.bf16.gmra.mxu0 %v440
    %v777 = vpop.f32.mrf.mxu0
    %v778 = vadd.f32 %v335, %v777
    %v779 = vpop.f32.mrf.mxu0
    %v780 = vpop.f32.mrf.mxu0
    %v781 = vadd.f32 %v335, %v780
    %v782 = vpop.f32.mrf.mxu0
    %783 = vmatprep.mubr.bf16.mxu0 0
    %784 = vmatmul.mubr.bf16.gmra.mxu0 %v443
    %v785 = vpop.f32.mrf.mxu0
    %v786 = vadd.f32 %v335, %v785
    %v787 = vpop.f32.mrf.mxu0
    %v788 = vpop.f32.mrf.mxu0
    %v789 = vadd.f32 %v335, %v788
    %v790 = vpop.f32.mrf.mxu0
    %791 = vmatprep.mubr.bf16.mxu0 0
    %792 = vmatmul.mubr.bf16.gmra.mxu0 %v446
    %v793 = vpop.f32.mrf.mxu0
    %v794 = vadd.f32 %v335, %v793
    %v795 = vpop.f32.mrf.mxu0
    %v796 = vpop.f32.mrf.mxu0
    %v797 = vadd.f32 %v335, %v796
    %v798 = vpop.f32.mrf.mxu0
    %799 = vmatprep.mubr.bf16.mxu0 0
    %800 = vmatmul.mubr.bf16.gmra.mxu0 %v449
    %v801 = vpop.f32.mrf.mxu0
    %v802 = vadd.f32 %v335, %v801
    %v803 = vpop.f32.mrf.mxu0
    %v804 = vpop.f32.mrf.mxu0
    %v805 = vadd.f32 %v335, %v804
    %v806 = vpop.f32.mrf.mxu0
    %807 = vmatprep.mubr.bf16.mxu0 0
    %808 = vmatmul.mubr.bf16.gmra.mxu0 %v452
    %v809 = vpop.f32.mrf.mxu0
    %v810 = vadd.f32 %v335, %v809
    %v811 = vpop.f32.mrf.mxu0
    %v812 = vpop.f32.mrf.mxu0
    %v813 = vadd.f32 %v335, %v812
    %v814 = vpop.f32.mrf.mxu0
    %815 = vmatprep.mubr.bf16.mxu0 0
    %816 = vmatmul.mubr.bf16.gmra.mxu0 %v455
    %v817 = vpop.f32.mrf.mxu0
    %v818 = vadd.f32 %v335, %v817
    %v819 = vpop.f32.mrf.mxu0
    %v820 = vpop.f32.mrf.mxu0
    %v821 = vadd.f32 %v335, %v820
    %v822 = vpop.f32.mrf.mxu0
    %823 = vmatprep.mubr.bf16.mxu0 0
    %824 = vmatmul.mubr.bf16.gmra.mxu0 %v458
    %v825 = vpop.f32.mrf.mxu0
    %v826 = vadd.f32 %v335, %v825
    %v827 = vpop.f32.mrf.mxu0
    %v828 = vpop.f32.mrf.mxu0
    %v829 = vadd.f32 %v335, %v828
    %v830 = vpop.f32.mrf.mxu0
    %831 = vmatprep.mubr.bf16.mxu0 0
    %832 = vmatmul.mubr.bf16.gmra.mxu0 %v461
    %v833 = vpop.f32.mrf.mxu0
    %v834 = vadd.f32 %v335, %v833
    %v835 = vpop.f32.mrf.mxu0
    %v836 = vpop.f32.mrf.mxu0
    %v837 = vadd.f32 %v335, %v836
    %v838 = vpop.f32.mrf.mxu0
    %839 = vmatprep.mubr.bf16.mxu0 0
    %840 = vmatmul.mubr.bf16.gmra.mxu0 %v464
    %v841 = vpop.f32.mrf.mxu0
    %v842 = vadd.f32 %v335, %v841
    %v843 = vpop.f32.mrf.mxu0
    %v844 = vpop.f32.mrf.mxu0
    %v845 = vadd.f32 %v335, %v844
    %v846 = vpop.f32.mrf.mxu0
    %847 = vmatprep.mubr.bf16.mxu0 0
    %848 = vmatmul.mubr.bf16.gmra.mxu0 %v467
    %v849 = vpop.f32.mrf.mxu0
    %v850 = vadd.f32 %v335, %v849
    %v851 = vpop.f32.mrf.mxu0
    %v852 = vpop.f32.mrf.mxu0
    %v853 = vadd.f32 %v335, %v852
    %v854 = vpop.f32.mrf.mxu0
    %855 = vmatprep.mubr.bf16.mxu0 0
    %856 = vmatmul.mubr.bf16.gmra.mxu0 %v470
    %v857 = vpop.f32.mrf.mxu0
    %v858 = vadd.f32 %v335, %v857
    %v859 = vpop.f32.mrf.mxu0
    %v860 = vpop.f32.mrf.mxu0
    %v861 = vadd.f32 %v335, %v860
    %v862 = vpop.f32.mrf.mxu0
    %863 = vmatprep.mubr.bf16.mxu0 0
    %864 = vmatmul.mubr.bf16.gmra.mxu0 %v473
    %v865 = vpop.f32.mrf.mxu0
    %v866 = vadd.f32 %v335, %v865
    %v867 = vpop.f32.mrf.mxu0
    %v868 = vpop.f32.mrf.mxu0
    %v869 = vadd.f32 %v335, %v868
    %v870 = vpop.f32.mrf.mxu0
    %871 = vmatprep.mubr.bf16.mxu0 0
    %872 = vmatmul.mubr.bf16.gmra.mxu0 %v476
    %v873 = vpop.f32.mrf.mxu0
    %v874 = vadd.f32 %v335, %v873
    %v875 = vpop.f32.mrf.mxu0
    %v876 = vpop.f32.mrf.mxu0
    %v877 = vadd.f32 %v335, %v876
    %v878 = vpop.f32.mrf.mxu0
    %879 = vmatprep.mubr.bf16.mxu0 0
    %880 = vmatmul.mubr.bf16.gmra.mxu0 %v479
    %v881 = vpop.f32.mrf.mxu0
    %v882 = vadd.f32 %v335, %v881
    %v883 = vpop.f32.mrf.mxu0
    %v884 = vpop.f32.mrf.mxu0
    %v885 = vadd.f32 %v335, %v884
    %v886 = vpop.f32.mrf.mxu0
    %887 = vmatprep.mubr.bf16.mxu0 0
    %888 = vmatmul.mubr.bf16.gmra.mxu0 %v482
    %v889 = vpop.f32.mrf.mxu0
    %v890 = vadd.f32 %v335, %v889
    %v891 = vpop.f32.mrf.mxu0
    %v892 = vpop.f32.mrf.mxu0
    %v893 = vadd.f32 %v335, %v892
    %v894 = vpop.f32.mrf.mxu0
    %895 = vmatprep.mubr.bf16.mxu0 0
    %896 = vmatmul.mubr.bf16.gmra.mxu0 %v485
    %v897 = vpop.f32.mrf.mxu0
    %v898 = vadd.f32 %v335, %v897
    %v899 = vpop.f32.mrf.mxu0
    %v900 = vpop.f32.mrf.mxu0
    %v901 = vadd.f32 %v335, %v900
    %v902 = vpop.f32.mrf.mxu0
    %903 = vmatprep.mubr.bf16.mxu0 0
    %904 = vmatmul.mubr.bf16.gmra.mxu0 %v488
    %v905 = vpop.f32.mrf.mxu0
    %v906 = vadd.f32 %v335, %v905
    %v907 = vpop.f32.mrf.mxu0
    %v908 = vpop.f32.mrf.mxu0
    %v909 = vadd.f32 %v335, %v908
    %v910 = vpop.f32.mrf.mxu0
    %911 = vmatprep.mubr.bf16.mxu0 0
    %912 = vmatmul.mubr.bf16.gmra.mxu0 %v491
    %v913 = vpop.f32.mrf.mxu0
    %v914 = vadd.f32 %v335, %v913
    %v915 = vpop.f32.mrf.mxu0
    %v916 = vpop.f32.mrf.mxu0
    %v917 = vadd.f32 %v335, %v916
    %v918 = vpop.f32.mrf.mxu0
    %919 = vmatprep.mubr.bf16.mxu0 0
    %920 = vmatmul.mubr.bf16.gmra.mxu0 %v494
    %v921 = vpop.f32.mrf.mxu0
    %v922 = vadd.f32 %v335, %v921
    %v923 = vpop.f32.mrf.mxu0
    %v924 = vpop.f32.mrf.mxu0
    %v925 = vadd.f32 %v335, %v924
    %v926 = vpop.f32.mrf.mxu0
    %927 = vdwg.mxu0
    %v928 = vmax.f32 %v538, 0.0
    %v929 = vmax.f32 %v541, 0.0
    %v930 = vmax.f32 %v546, 0.0
    %v931 = vmax.f32 %v549, 0.0
    %v932 = vmax.f32 %v554, 0.0
    %v933 = vmax.f32 %v557, 0.0
    %v934 = vmax.f32 %v562, 0.0
    %v935 = vmax.f32 %v565, 0.0
    %v936 = vmax.f32 %v570, 0.0
    %v937 = vmax.f32 %v573, 0.0
    %v938 = vmax.f32 %v578, 0.0
    %v939 = vmax.f32 %v581, 0.0
    %v940 = vmax.f32 %v586, 0.0
    %v941 = vmax.f32 %v589, 0.0
    %v942 = vmax.f32 %v594, 0.0
    %v943 = vmax.f32 %v597, 0.0
    %v944 = vmax.f32 %v602, 0.0
    %v945 = vmax.f32 %v605, 0.0
    %v946 = vmax.f32 %v610, 0.0
    %v947 = vmax.f32 %v613, 0.0
    %v948 = vmax.f32 %v618, 0.0
    %v949 = vmax.f32 %v621, 0.0
    %v950 = vmax.f32 %v626, 0.0
    %v951 = vmax.f32 %v629, 0.0
    %v952 = vmax.f32 %v634, 0.0
    %v953 = vmax.f32 %v637, 0.0
    %v954 = vmax.f32 %v642, 0.0
    %v955 = vmax.f32 %v645, 0.0
    %v956 = vmax.f32 %v650, 0.0
    %v957 = vmax.f32 %v653, 0.0
    %v958 = vmax.f32 %v658, 0.0
    %v959 = vmax.f32 %v661, 0.0
    %v960 = vmax.f32 %v666, 0.0
    %v961 = vmax.f32 %v669, 0.0
    %v962 = vmax.f32 %v674, 0.0
    %v963 = vmax.f32 %v677, 0.0
    %v964 = vmax.f32 %v682, 0.0
    %v965 = vmax.f32 %v685, 0.0
    %v966 = vmax.f32 %v690, 0.0
    %v967 = vmax.f32 %v693, 0.0
    %v968 = vmax.f32 %v698, 0.0
    %v969 = vmax.f32 %v701, 0.0
    %v970 = vmax.f32 %v706, 0.0
    %v971 = vmax.f32 %v709, 0.0
    %v972 = vmax.f32 %v714, 0.0
    %v973 = vmax.f32 %v717, 0.0
    %v974 = vmax.f32 %v722, 0.0
    %v975 = vmax.f32 %v725, 0.0
    %v976 = vmax.f32 %v730, 0.0
    %v977 = vmax.f32 %v733, 0.0
    %v978 = vmax.f32 %v738, 0.0
    %v979 = vmax.f32 %v741, 0.0
    %v980 = vmax.f32 %v746, 0.0
    %v981 = vmax.f32 %v749, 0.0
    %v982 = vmax.f32 %v754, 0.0
    %v983 = vmax.f32 %v757, 0.0
    %v984 = vmax.f32 %v762, 0.0
    %v985 = vmax.f32 %v765, 0.0
    %v986 = vmax.f32 %v770, 0.0
    %v987 = vmax.f32 %v773, 0.0
    %v988 = vmax.f32 %v778, 0.0
    %v989 = vmax.f32 %v781, 0.0
    %v990 = vmax.f32 %v786, 0.0
    %v991 = vmax.f32 %v789, 0.0
    %v992 = vmax.f32 %v794, 0.0
    %v993 = vmax.f32 %v797, 0.0
    %v994 = vmax.f32 %v802, 0.0
    %v995 = vmax.f32 %v805, 0.0
    %v996 = vmax.f32 %v810, 0.0
    %v997 = vmax.f32 %v813, 0.0
    %v998 = vmax.f32 %v818, 0.0
    %v999 = vmax.f32 %v821, 0.0
    %v1000 = vmax.f32 %v826, 0.0
    %v1001 = vmax.f32 %v829, 0.0
    %v1002 = vmax.f32 %v834, 0.0
    %v1003 = vmax.f32 %v837, 0.0
    %v1004 = vmax.f32 %v842, 0.0
    %v1005 = vmax.f32 %v845, 0.0
    %v1006 = vmax.f32 %v850, 0.0
    %v1007 = vmax.f32 %v853, 0.0
    %v1008 = vmax.f32 %v858, 0.0
    %v1009 = vmax.f32 %v861, 0.0
    %v1010 = vmax.f32 %v866, 0.0
    %v1011 = vmax.f32 %v869, 0.0
    %v1012 = vmax.f32 %v874, 0.0
    %v1013 = vmax.f32 %v877, 0.0
    %v1014 = vmax.f32 %v882, 0.0
    %v1015 = vmax.f32 %v885, 0.0
    %v1016 = vmax.f32 %v890, 0.0
    %v1017 = vmax.f32 %v893, 0.0
    %v1018 = vmax.f32 %v898, 0.0
    %v1019 = vmax.f32 %v901, 0.0
    %v1020 = vmax.f32 %v906, 0.0
    %v1021 = vmax.f32 %v909, 0.0
    %v1022 = vmax.f32 %v914, 0.0
    %v1023 = vmax.f32 %v917, 0.0
    %v1024 = vmax.f32 %v922, 0.0
    %v1025 = vmax.f32 %v925, 0.0
    %v1026 = vadd.f32 %v928, %v929
    %v1027 = vadd.f32 %v1026, %v930
    %v1028 = vadd.f32 %v1027, %v931
    %v1029 = vadd.f32 %v1028, %v932
    %v1030 = vadd.f32 %v1029, %v933
    %v1031 = vadd.f32 %v1030, %v934
    %v1032 = vadd.f32 %v1031, %v935
    %v1033 = vadd.f32 %v1032, %v936
    %v1034 = vadd.f32 %v1033, %v937
    %v1035 = vadd.f32 %v1034, %v938
    %v1036 = vadd.f32 %v1035, %v939
    %v1037 = vadd.f32 %v1036, %v940
    %v1038 = vadd.f32 %v1037, %v941
    %v1039 = vadd.f32 %v1038, %v942
    %v1040 = vadd.f32 %v1039, %v943
    %v1041 = vadd.f32 %v1040, %v944
    %v1042 = vadd.f32 %v1041, %v945
    %v1043 = vadd.f32 %v1042, %v946
    %v1044 = vadd.f32 %v1043, %v947
    %v1045 = vadd.f32 %v1044, %v948
    %v1046 = vadd.f32 %v1045, %v949
    %v1047 = vadd.f32 %v1046, %v950
    %v1048 = vadd.f32 %v1047, %v951
    %v1049 = vadd.f32 %v1048, %v952
    %v1050 = vadd.f32 %v1049, %v953
    %v1051 = vadd.f32 %v1050, %v954
    %v1052 = vadd.f32 %v1051, %v955
    %v1053 = vadd.f32 %v1052, %v956
    %v1054 = vadd.f32 %v1053, %v957
    %v1055 = vadd.f32 %v1054, %v958
    %v1056 = vadd.f32 %v1055, %v959
    %v1057 = vrot.slane %v1056, 4
    %v1058 = vadd.f32 %v1056, %v1057
    %v1059 = vrot.slane %v1058, 2
    %v1060 = vadd.f32 %v1058, %v1059
    %v1061 = vrot.slane %v1060, 1
    %v1062 = vadd.f32 %v1060, %v1061
    %v1063 = vmul.f32 %v1062, 0.00390625
    %v1064 = vadd.f32 %v960, %v961
    %v1065 = vadd.f32 %v1064, %v962
    %v1066 = vadd.f32 %v1065, %v963
    %v1067 = vadd.f32 %v1066, %v964
    %v1068 = vadd.f32 %v1067, %v965
    %v1069 = vadd.f32 %v1068, %v966
    %v1070 = vadd.f32 %v1069, %v967
    %v1071 = vadd.f32 %v1070, %v968
    %v1072 = vadd.f32 %v1071, %v969
    %v1073 = vadd.f32 %v1072, %v970
    %v1074 = vadd.f32 %v1073, %v971
    %v1075 = vadd.f32 %v1074, %v972
    %v1076 = vadd.f32 %v1075, %v973
    %v1077 = vadd.f32 %v1076, %v974
    %v1078 = vadd.f32 %v1077, %v975
    %v1079 = vadd.f32 %v1078, %v976
    %v1080 = vadd.f32 %v1079, %v977
    %v1081 = vadd.f32 %v1080, %v978
    %v1082 = vadd.f32 %v1081, %v979
    %v1083 = vadd.f32 %v1082, %v980
    %v1084 = vadd.f32 %v1083, %v981
    %v1085 = vadd.f32 %v1084, %v982
    %v1086 = vadd.f32 %v1085, %v983
    %v1087 = vadd.f32 %v1086, %v984
    %v1088 = vadd.f32 %v1087, %v985
    %v1089 = vadd.f32 %v1088, %v986
    %v1090 = vadd.f32 %v1089, %v987
    %v1091 = vadd.f32 %v1090, %v988
    %v1092 = vadd.f32 %v1091, %v989
    %v1093 = vadd.f32 %v1092, %v990
    %v1094 = vadd.f32 %v1093, %v991
    %v1095 = vrot.slane %v1094, 4
    %v1096 = vadd.f32 %v1094, %v1095
    %v1097 = vrot.slane %v1096, 2
    %v1098 = vadd.f32 %v1096, %v1097
    %v1099 = vrot.slane %v1098, 1
    %v1100 = vadd.f32 %v1098, %v1099
    %v1101 = vmul.f32 %v1100, 0.00390625
    %v1102 = vadd.f32 %v992, %v993
    %v1103 = vadd.f32 %v1102, %v994
    %v1104 = vadd.f32 %v1103, %v995
    %v1105 = vadd.f32 %v1104, %v996
    %v1106 = vadd.f32 %v1105, %v997
    %v1107 = vadd.f32 %v1106, %v998
    %v1108 = vadd.f32 %v1107, %v999
    %v1109 = vadd.f32 %v1108, %v1000
    %v1110 = vrot.slane %v1109, 4
    %v1111 = vadd.f32 %v1109, %v1110
    %v1112 = vrot.slane %v1111, 2
    %v1113 = vadd.f32 %v1111, %v1112
    %v1114 = vrot.slane %v1113, 1
    %v1115 = vadd.f32 %v1113, %v1114
    %v1116 = vmul.f32 %v1115, 0.013888889
    %v1117 = vadd.f32 %v1001, %v1002
    %v1118 = vadd.f32 %v1117, %v1003
    %v1119 = vadd.f32 %v1118, %v1004
    %v1120 = vadd.f32 %v1119, %v1005
    %v1121 = vadd.f32 %v1120, %v1006
    %v1122 = vadd.f32 %v1121, %v1007
    %v1123 = vadd.f32 %v1122, %v1008
    %v1124 = vadd.f32 %v1123, %v1009
    %v1125 = vrot.slane %v1124, 4
    %v1126 = vadd.f32 %v1124, %v1125
    %v1127 = vrot.slane %v1126, 2
    %v1128 = vadd.f32 %v1126, %v1127
    %v1129 = vrot.slane %v1128, 1
    %v1130 = vadd.f32 %v1128, %v1129
    %v1131 = vmul.f32 %v1130, 0.013888889
    %v1132 = vadd.f32 %v1010, %v1011
    %v1133 = vadd.f32 %v1132, %v1012
    %v1134 = vadd.f32 %v1133, %v1013
    %v1135 = vrot.slane %v1134, 4
    %v1136 = vadd.f32 %v1134, %v1135
    %v1137 = vrot.slane %v1136, 2
    %v1138 = vadd.f32 %v1136, %v1137
    %v1139 = vrot.slane %v1138, 1
    %v1140 = vadd.f32 %v1138, %v1139
    %v1141 = vmul.f32 %v1140, 0.03125
    %v1142 = vadd.f32 %v1014, %v1015
    %v1143 = vadd.f32 %v1142, %v1016
    %v1144 = vadd.f32 %v1143, %v1017
    %v1145 = vrot.slane %v1144, 4
    %v1146 = vadd.f32 %v1144, %v1145
    %v1147 = vrot.slane %v1146, 2
    %v1148 = vadd.f32 %v1146, %v1147
    %v1149 = vrot.slane %v1148, 1
    %v1150 = vadd.f32 %v1148, %v1149
    %v1151 = vmul.f32 %v1150, 0.03125
    %v1152 = vadd.f32 %v1018, %v1019
    %v1153 = vadd.f32 %v1152, %v1020
    %v1154 = vadd.f32 %v1153, %v1021
    %v1155 = vrot.slane %v1154, 4
    %v1156 = vadd.f32 %v1154, %v1155
    %v1157 = vrot.slane %v1156, 2
    %v1158 = vadd.f32 %v1156, %v1157
    %v1159 = vrot.slane %v1158, 1
    %v1160 = vadd.f32 %v1158, %v1159
    %v1161 = vmul.f32 %v1160, 0.03125
    %v1162 = vadd.f32 %v1022, %v1023
    %v1163 = vadd.f32 %v1162, %v1024
    %v1164 = vadd.f32 %v1163, %v1025
    %v1165 = vrot.slane %v1164, 4
    %v1166 = vadd.f32 %v1164, %v1165
    %v1167 = vrot.slane %v1166, 2
    %v1168 = vadd.f32 %v1166, %v1167
    %v1169 = vrot.slane %v1168, 1
    %v1170 = vadd.f32 %v1168, %v1169
    %v1171 = vmul.f32 %v1170, 0.03125
    %vm1172 = vcmask 1040384
    %v1173 = vsel %vm1172, %v1063, %v1101
    %vm1174 = vcmask 1041408
    %v1175 = vsel %vm1174, %v1173, %v1116
    %vm1176 = vcmask 1042432
    %v1177 = vsel %vm1176, %v1175, %v1131
    %vm1178 = vcmask 1043456
    %v1179 = vsel %vm1178, %v1177, %v1141
    %v1180 = vsel %vm496, %v1179, %v1151
    %v1181 = vsel %vm497, %v1180, %v1161
    %vm1182 = vcmask 1046528
    %v1183 = vsel %vm1182, %v1181, %v1171
    %v1184 = vpack.c.bf16 %v1183, %v1183
    %v1185 = vld [vmem:[%s13] sm:$0xff]
    %v1186 = vld [vmem:[%s13 + $0x8] sm:$0xff]
    %v1187 = vld [vmem:[%s13 + $0x10] sm:$0xff]
    %v1188 = vld [vmem:[%s13 + $0x18] sm:$0xff]
    %v1189 = vld [vmem:[%s13 + $0x20] sm:$0xff]
    %v1190 = vld [vmem:[%s13 + $0x28] sm:$0xff]
    %v1191 = vld [vmem:[%s13 + $0x30] sm:$0xff]
    %v1192 = vld [vmem:[%s13 + $0x38] sm:$0xff]
    %v1193 = vld [vmem:[%s13 + $0x40] sm:$0xff]
    %v1194 = vld [vmem:[%s13 + $0x48] sm:$0xff]
    %v1195 = vld [vmem:[%s13 + $0x50] sm:$0xff]
    %v1196 = vld [vmem:[%s13 + $0x58] sm:$0xff]
    %v1197 = vld [vmem:[%s13 + $0x60] sm:$0xff]
    %v1198 = vld [vmem:[%s13 + $0x68] sm:$0xff]
    %v1199 = vld [vmem:[%s13 + $0x70] sm:$0xff]
    %v1200 = vld [vmem:[%s13 + $0x78] sm:$0xff]
    %v1201 = vld [vmem:[%s13 + $0x80] sm:$0xff]
    %v1202 = vld [vmem:[%s13 + $0x88] sm:$0xff]
    %v1203 = vld [vmem:[%s13 + $0x90] sm:$0xff]
    %v1204 = vld [vmem:[%s13 + $0x98] sm:$0xff]
    %v1205 = vld [vmem:[%s13 + $0xa0] sm:$0xff]
    %v1206 = vld [vmem:[%s13 + $0xa8] sm:$0xff]
    %v1207 = vld [vmem:[%s13 + $0xb0] sm:$0xff]
    %v1208 = vld [vmem:[%s13 + $0xb8] sm:$0xff]
    %v1209 = vld [vmem:[%s13 + $0xc0] sm:$0xff]
    %v1210 = vld [vmem:[%s13 + $0xc8] sm:$0xff]
    %v1211 = vld [vmem:[%s13 + $0xd0] sm:$0xff]
    %v1212 = vld [vmem:[%s13 + $0xd8] sm:$0xff]
    %v1213 = vld [vmem:[%s13 + $0xe0] sm:$0xff]
    %v1214 = vld [vmem:[%s13 + $0xe8] sm:$0xff]
    %v1215 = vld [vmem:[%s13 + $0xf0] sm:$0xff]
    %v1216 = vld [vmem:[%s13 + $0xf8] sm:$0xff]
    %v1217 = vld [vmem:[%s13 + $0x100] sm:$0xff]
    %v1218 = vld [vmem:[%s13 + $0x108] sm:$0xff]
    %v1219 = vld [vmem:[%s13 + $0x110] sm:$0xff]
    %v1220 = vld [vmem:[%s13 + $0x118] sm:$0xff]
    %v1221 = vld [vmem:[%s13 + $0x120] sm:$0xff]
    %v1222 = vld [vmem:[%s13 + $0x128] sm:$0xff]
    %v1223 = vld [vmem:[%s13 + $0x130] sm:$0xff]
    %v1224 = vld [vmem:[%s13 + $0x138] sm:$0xff]
    %v1225 = vld [vmem:[%s13 + $0x140] sm:$0xff]
    %v1226 = vld [vmem:[%s13 + $0x148] sm:$0xff]
    %v1227 = vld [vmem:[%s13 + $0x150] sm:$0xff]
    %v1228 = vld [vmem:[%s13 + $0x158] sm:$0xff]
    %v1229 = vld [vmem:[%s13 + $0x160] sm:$0xff]
    %v1230 = vld [vmem:[%s13 + $0x168] sm:$0xff]
    %v1231 = vld [vmem:[%s13 + $0x170] sm:$0xff]
    %v1232 = vld [vmem:[%s13 + $0x178] sm:$0xff]
    %v1233 = vld [vmem:[%s15] sm:$0x3f]
    %v1235 = vlaneseq
    %v1236 = vshrl.u32 %v1235, 7
    %v1237 = vsub.s32 0, %v1236
    %v1238 = vrot.slane %v1233, %v1237
    %v1239 = vlaneseq
    %v1240 = vshrl.u32 %v1239, 7
    %v1241 = vsub.s32 1, %v1240
    %v1242 = vrot.slane %v1233, %v1241
    %v1243 = vlaneseq
    %v1244 = vshrl.u32 %v1243, 7
    %v1245 = vsub.s32 2, %v1244
    %v1246 = vrot.slane %v1233, %v1245
    %v1247 = vlaneseq
    %v1248 = vshrl.u32 %v1247, 7
    %v1249 = vsub.s32 3, %v1248
    %v1250 = vrot.slane %v1233, %v1249
    %v1251 = vlaneseq
    %v1252 = vshrl.u32 %v1251, 7
    %v1253 = vsub.s32 4, %v1252
    %v1254 = vrot.slane %v1233, %v1253
    %v1255 = vlaneseq
    %v1256 = vshrl.u32 %v1255, 7
    %v1257 = vsub.s32 5, %v1256
    %v1258 = vrot.slane %v1233, %v1257
    %v1313 = vunpack.c.l.b16 %v1185
    %v1314 = vunpack.c.h.b16 %v1185
    %v1315 = vunpack.c.l.b16 %v1186
    %v1316 = vunpack.c.h.b16 %v1186
    %v1317 = vunpack.c.l.b16 %v1187
    %v1318 = vunpack.c.h.b16 %v1187
    %v1319 = vunpack.c.l.b16 %v1188
    %v1320 = vunpack.c.h.b16 %v1188
    %v1321 = vunpack.c.l.b16 %v1189
    %v1322 = vunpack.c.h.b16 %v1189
    %v1323 = vunpack.c.l.b16 %v1190
    %v1324 = vunpack.c.h.b16 %v1190
    %v1325 = vunpack.c.l.b16 %v1191
    %v1326 = vunpack.c.h.b16 %v1191
    %v1327 = vunpack.c.l.b16 %v1192
    %v1328 = vunpack.c.h.b16 %v1192
    %v1329 = vunpack.c.l.b16 %v1193
    %v1330 = vunpack.c.h.b16 %v1193
    %v1331 = vunpack.c.l.b16 %v1194
    %v1332 = vunpack.c.h.b16 %v1194
    %v1333 = vunpack.c.l.b16 %v1195
    %v1334 = vunpack.c.h.b16 %v1195
    %v1335 = vunpack.c.l.b16 %v1196
    %v1336 = vunpack.c.h.b16 %v1196
    %v1337 = vunpack.c.l.b16 %v1197
    %v1338 = vunpack.c.h.b16 %v1197
    %v1339 = vunpack.c.l.b16 %v1198
    %v1340 = vunpack.c.h.b16 %v1198
    %v1341 = vunpack.c.l.b16 %v1199
    %v1342 = vunpack.c.h.b16 %v1199
    %v1343 = vunpack.c.l.b16 %v1200
    %v1344 = vunpack.c.h.b16 %v1200
    %v1345 = vunpack.c.l.b16 %v1201
    %v1346 = vunpack.c.h.b16 %v1201
    %v1347 = vunpack.c.l.b16 %v1202
    %v1348 = vunpack.c.h.b16 %v1202
    %v1349 = vunpack.c.l.b16 %v1203
    %v1350 = vunpack.c.h.b16 %v1203
    %v1351 = vunpack.c.l.b16 %v1204
    %v1352 = vunpack.c.h.b16 %v1204
    %v1353 = vunpack.c.l.b16 %v1205
    %v1354 = vunpack.c.h.b16 %v1205
    %v1355 = vunpack.c.l.b16 %v1206
    %v1356 = vunpack.c.h.b16 %v1206
    %v1357 = vunpack.c.l.b16 %v1207
    %v1358 = vunpack.c.h.b16 %v1207
    %v1359 = vunpack.c.l.b16 %v1208
    %v1360 = vunpack.c.h.b16 %v1208
    %v1361 = vunpack.c.l.b16 %v1209
    %v1362 = vunpack.c.h.b16 %v1209
    %v1363 = vunpack.c.l.b16 %v1210
    %v1364 = vunpack.c.h.b16 %v1210
    %v1365 = vunpack.c.l.b16 %v1211
    %v1366 = vunpack.c.h.b16 %v1211
    %v1367 = vunpack.c.l.b16 %v1212
    %v1368 = vunpack.c.h.b16 %v1212
    %v1369 = vunpack.c.l.b16 %v1213
    %v1370 = vunpack.c.h.b16 %v1213
    %v1371 = vunpack.c.l.b16 %v1214
    %v1372 = vunpack.c.h.b16 %v1214
    %v1373 = vunpack.c.l.b16 %v1215
    %v1374 = vunpack.c.h.b16 %v1215
    %v1375 = vunpack.c.l.b16 %v1216
    %v1376 = vunpack.c.h.b16 %v1216
    %v1377 = vunpack.c.l.b16 %v1217
    %v1378 = vunpack.c.h.b16 %v1217
    %v1379 = vunpack.c.l.b16 %v1218
    %v1380 = vunpack.c.h.b16 %v1218
    %v1381 = vunpack.c.l.b16 %v1219
    %v1382 = vunpack.c.h.b16 %v1219
    %v1383 = vunpack.c.l.b16 %v1220
    %v1384 = vunpack.c.h.b16 %v1220
    %v1385 = vunpack.c.l.b16 %v1221
    %v1386 = vunpack.c.h.b16 %v1221
    %v1387 = vunpack.c.l.b16 %v1222
    %v1388 = vunpack.c.h.b16 %v1222
    %v1389 = vunpack.c.l.b16 %v1223
    %v1390 = vunpack.c.h.b16 %v1223
    %v1391 = vunpack.c.l.b16 %v1224
    %v1392 = vunpack.c.h.b16 %v1224
    %v1393 = vunpack.c.l.b16 %v1225
    %v1394 = vunpack.c.h.b16 %v1225
    %v1395 = vunpack.c.l.b16 %v1226
    %v1396 = vunpack.c.h.b16 %v1226
    %v1397 = vunpack.c.l.b16 %v1227
    %v1398 = vunpack.c.h.b16 %v1227
    %v1399 = vunpack.c.l.b16 %v1228
    %v1400 = vunpack.c.h.b16 %v1228
    %v1401 = vunpack.c.l.b16 %v1229
    %v1402 = vunpack.c.h.b16 %v1229
    %v1403 = vunpack.c.l.b16 %v1230
    %v1404 = vunpack.c.h.b16 %v1230
    %v1405 = vunpack.c.l.b16 %v1231
    %v1406 = vunpack.c.h.b16 %v1231
    %v1407 = vunpack.c.l.b16 %v1232
    %v1408 = vunpack.c.h.b16 %v1232
    %v1409 = vpack.c.b16 %v1319, %v1313
    %v1410 = vpack.c.b16 %v1320, %v1314
    %v1411 = vpack.c.b16 %v1321, %v1315
    %v1412 = vpack.c.b16 %v1322, %v1316
    %v1413 = vpack.c.b16 %v1323, %v1317
    %v1414 = vpack.c.b16 %v1324, %v1318
    %v1415 = vpack.c.b16 %v1331, %v1325
    %v1416 = vpack.c.b16 %v1332, %v1326
    %v1417 = vpack.c.b16 %v1333, %v1327
    %v1418 = vpack.c.b16 %v1334, %v1328
    %v1419 = vpack.c.b16 %v1335, %v1329
    %v1420 = vpack.c.b16 %v1336, %v1330
    %v1421 = vpack.c.b16 %v1343, %v1337
    %v1422 = vpack.c.b16 %v1344, %v1338
    %v1423 = vpack.c.b16 %v1345, %v1339
    %v1424 = vpack.c.b16 %v1346, %v1340
    %v1425 = vpack.c.b16 %v1347, %v1341
    %v1426 = vpack.c.b16 %v1348, %v1342
    %v1427 = vpack.c.b16 %v1355, %v1349
    %v1428 = vpack.c.b16 %v1356, %v1350
    %v1429 = vpack.c.b16 %v1357, %v1351
    %v1430 = vpack.c.b16 %v1358, %v1352
    %v1431 = vpack.c.b16 %v1359, %v1353
    %v1432 = vpack.c.b16 %v1360, %v1354
    %v1433 = vpack.c.b16 %v1367, %v1361
    %v1434 = vpack.c.b16 %v1368, %v1362
    %v1435 = vpack.c.b16 %v1369, %v1363
    %v1436 = vpack.c.b16 %v1370, %v1364
    %v1437 = vpack.c.b16 %v1371, %v1365
    %v1438 = vpack.c.b16 %v1372, %v1366
    %v1439 = vpack.c.b16 %v1379, %v1373
    %v1440 = vpack.c.b16 %v1380, %v1374
    %v1441 = vpack.c.b16 %v1381, %v1375
    %v1442 = vpack.c.b16 %v1382, %v1376
    %v1443 = vpack.c.b16 %v1383, %v1377
    %v1444 = vpack.c.b16 %v1384, %v1378
    %v1445 = vpack.c.b16 %v1391, %v1385
    %v1446 = vpack.c.b16 %v1392, %v1386
    %v1447 = vpack.c.b16 %v1393, %v1387
    %v1448 = vpack.c.b16 %v1394, %v1388
    %v1449 = vpack.c.b16 %v1395, %v1389
    %v1450 = vpack.c.b16 %v1396, %v1390
    %v1451 = vpack.c.b16 %v1403, %v1397
    %v1452 = vpack.c.b16 %v1404, %v1398
    %v1453 = vpack.c.b16 %v1405, %v1399
    %v1454 = vpack.c.b16 %v1406, %v1400
    %v1455 = vpack.c.b16 %v1407, %v1401
    %v1456 = vpack.c.b16 %v1408, %v1402
    %1505 = vmatprep.subr.bf16.mxu0 %v1452
    %1506 = vmatpush1.bf16.msra.mxu0 %v1451
    %1507 = vmatprep.subr.bf16.mxu0 %v1446
    %1508 = vmatpush1.bf16.msra.mxu0 %v1445
    %1509 = vmatprep.subr.bf16.mxu0 %v1440
    %1510 = vmatpush1.bf16.msra.mxu0 %v1439
    %1511 = vmatprep.subr.bf16.mxu0 %v1434
    %1512 = vmatpush1.bf16.msra.mxu0 %v1433
    %1513 = vmatprep.subr.bf16.mxu0 %v1428
    %1514 = vmatpush1.bf16.msra.mxu0 %v1427
    %1515 = vmatprep.subr.bf16.mxu0 %v1422
    %1516 = vmatpush1.bf16.msra.mxu0 %v1421
    %1517 = vmatprep.subr.bf16.mxu0 %v1416
    %1518 = vmatpush1.bf16.msra.mxu0 %v1415
    %1519 = vmatprep.subr.bf16.mxu0 %v1410
    %1520 = vmatpush1.bf16.msra.mxu0 %v1409
    %1521 = vmatprep.subr.bf16.mxu0 0
    %1522 = vmatpush2.bf16.msra.mxu0 0
    %1523 = vmatprep.subr.bf16.mxu0 0
    %1524 = vmatpush2.bf16.msra.mxu0 0
    %1525 = vmatprep.subr.bf16.mxu0 0
    %1526 = vmatpush2.bf16.msra.mxu0 0
    %1527 = vmatprep.subr.bf16.mxu0 0
    %1528 = vmatpush2.bf16.msra.mxu0 0
    %1529 = vmatprep.subr.bf16.mxu0 0
    %1530 = vmatpush2.bf16.msra.mxu0 0
    %1531 = vmatprep.subr.bf16.mxu0 0
    %1532 = vmatpush2.bf16.msra.mxu0 0
    %1533 = vmatprep.subr.bf16.mxu0 0
    %1534 = vmatpush2.bf16.msra.mxu0 0
    %1535 = vmatprep.subr.bf16.mxu0 0
    %1536 = vmatpush2.bf16.msra.mxu0 0
    %1537 = vmatprep.mubr.bf16.mxu0 0
    %1538 = vmatmul.mubr.bf16.gmra.mxu0 %v1184
    %v1539 = vpop.f32.mrf.mxu0
    %v1540 = vadd.f32 %v1238, %v1539
    %v1541 = vpop.f32.mrf.mxu0
    %v1542 = vadd.f32 %v1242, %v1541
    %v1543 = vpop.f32.mrf.mxu0
    %v1544 = vpop.f32.mrf.mxu0
    %1545 = vdwg.mxu0
    %1546 = vmatprep.subr.bf16.mxu0 %v1454
    %1547 = vmatpush1.bf16.msra.mxu0 %v1453
    %1548 = vmatprep.subr.bf16.mxu0 %v1448
    %1549 = vmatpush1.bf16.msra.mxu0 %v1447
    %1550 = vmatprep.subr.bf16.mxu0 %v1442
    %1551 = vmatpush1.bf16.msra.mxu0 %v1441
    %1552 = vmatprep.subr.bf16.mxu0 %v1436
    %1553 = vmatpush1.bf16.msra.mxu0 %v1435
    %1554 = vmatprep.subr.bf16.mxu0 %v1430
    %1555 = vmatpush1.bf16.msra.mxu0 %v1429
    %1556 = vmatprep.subr.bf16.mxu0 %v1424
    %1557 = vmatpush1.bf16.msra.mxu0 %v1423
    %1558 = vmatprep.subr.bf16.mxu0 %v1418
    %1559 = vmatpush1.bf16.msra.mxu0 %v1417
    %1560 = vmatprep.subr.bf16.mxu0 %v1412
    %1561 = vmatpush1.bf16.msra.mxu0 %v1411
    %1562 = vmatprep.subr.bf16.mxu0 0
    %1563 = vmatpush2.bf16.msra.mxu0 0
    %1564 = vmatprep.subr.bf16.mxu0 0
    %1565 = vmatpush2.bf16.msra.mxu0 0
    %1566 = vmatprep.subr.bf16.mxu0 0
    %1567 = vmatpush2.bf16.msra.mxu0 0
    %1568 = vmatprep.subr.bf16.mxu0 0
    %1569 = vmatpush2.bf16.msra.mxu0 0
    %1570 = vmatprep.subr.bf16.mxu0 0
    %1571 = vmatpush2.bf16.msra.mxu0 0
    %1572 = vmatprep.subr.bf16.mxu0 0
    %1573 = vmatpush2.bf16.msra.mxu0 0
    %1574 = vmatprep.subr.bf16.mxu0 0
    %1575 = vmatpush2.bf16.msra.mxu0 0
    %1576 = vmatprep.subr.bf16.mxu0 0
    %1577 = vmatpush2.bf16.msra.mxu0 0
    %1578 = vmatprep.mubr.bf16.mxu0 0
    %1579 = vmatmul.mubr.bf16.gmra.mxu0 %v1184
    %v1580 = vpop.f32.mrf.mxu0
    %v1581 = vadd.f32 %v1246, %v1580
    %v1582 = vpop.f32.mrf.mxu0
    %v1583 = vadd.f32 %v1250, %v1582
    %v1584 = vpop.f32.mrf.mxu0
    %v1585 = vpop.f32.mrf.mxu0
    %1586 = vdwg.mxu0
    %1587 = vmatprep.subr.bf16.mxu0 %v1456
    %1588 = vmatpush1.bf16.msra.mxu0 %v1455
    %1589 = vmatprep.subr.bf16.mxu0 %v1450
    %1590 = vmatpush1.bf16.msra.mxu0 %v1449
    %1591 = vmatprep.subr.bf16.mxu0 %v1444
    %1592 = vmatpush1.bf16.msra.mxu0 %v1443
    %1593 = vmatprep.subr.bf16.mxu0 %v1438
    %1594 = vmatpush1.bf16.msra.mxu0 %v1437
    %1595 = vmatprep.subr.bf16.mxu0 %v1432
    %1596 = vmatpush1.bf16.msra.mxu0 %v1431
    %1597 = vmatprep.subr.bf16.mxu0 %v1426
    %1598 = vmatpush1.bf16.msra.mxu0 %v1425
    %1599 = vmatprep.subr.bf16.mxu0 %v1420
    %1600 = vmatpush1.bf16.msra.mxu0 %v1419
    %1601 = vmatprep.subr.bf16.mxu0 %v1414
    %1602 = vmatpush1.bf16.msra.mxu0 %v1413
    %1603 = vmatprep.subr.bf16.mxu0 0
    %1604 = vmatpush2.bf16.msra.mxu0 0
    %1605 = vmatprep.subr.bf16.mxu0 0
    %1606 = vmatpush2.bf16.msra.mxu0 0
    %1607 = vmatprep.subr.bf16.mxu0 0
    %1608 = vmatpush2.bf16.msra.mxu0 0
    %1609 = vmatprep.subr.bf16.mxu0 0
    %1610 = vmatpush2.bf16.msra.mxu0 0
    %1611 = vmatprep.subr.bf16.mxu0 0
    %1612 = vmatpush2.bf16.msra.mxu0 0
    %1613 = vmatprep.subr.bf16.mxu0 0
    %1614 = vmatpush2.bf16.msra.mxu0 0
    %1615 = vmatprep.subr.bf16.mxu0 0
    %1616 = vmatpush2.bf16.msra.mxu0 0
    %1617 = vmatprep.subr.bf16.mxu0 0
    %1618 = vmatpush2.bf16.msra.mxu0 0
    %1619 = vmatprep.mubr.bf16.mxu0 0
    %1620 = vmatmul.mubr.bf16.gmra.mxu0 %v1184
    %v1621 = vpop.f32.mrf.mxu0
    %v1622 = vadd.f32 %v1254, %v1621
    %v1623 = vpop.f32.mrf.mxu0
    %v1624 = vadd.f32 %v1258, %v1623
    %v1625 = vpop.f32.mrf.mxu0
    %v1626 = vpop.f32.mrf.mxu0
    %1627 = vdwg.mxu0
    %v1629 = vrot.slane %v1583, 2
    %v1632 = vrot.slane %v1622, 4
    %v1635 = vrot.slane %v1624, 6
    %v1640 = vcombine.low %v1540, %v1542
    %v1641 = vcombine.low %v1581, %v1629
    %v1643 = vunpack.c.l.s4 1983009808
    %v1644 = vunpack.c.0.s8 %v1643
    %v1645 = vlaneseq
    %v1646 = vshrl.u32 %v1645, 7
    %v1647 = vsub.s32 %v1644, %v1646
    %v1648 = vrot.slane %v1640, %v1647
    %v1650 = vunpack.c.l.s4 1983009808
    %v1651 = vunpack.c.0.s8 %v1650
    %v1652 = vlaneseq
    %v1653 = vshrl.u32 %v1652, 7
    %v1654 = vsub.s32 %v1651, %v1653
    %v1655 = vrot.slane %v1641, %v1654
    %v1656 = vcombine.low %v1648, %v1655
    %v1657 = vcombine.low %v1632, %v1635
    %v1659 = vunpack.c.l.s4 1983009808
    %v1660 = vunpack.c.0.s8 %v1659
    %v1661 = vlaneseq
    %v1662 = vshrl.u32 %v1661, 7
    %v1663 = vsub.s32 %v1660, %v1662
    %v1664 = vrot.slane %v1657, %v1663
    %1667 = vst [vmem:[%s81] sm:$0xff] %v1656
    %1668 = vst [vmem:[%s81 + $0x8] sm:$0xf] %v1664
    %v1669 = vpack.c.bf16 %v1540, %v1540
    %v1670 = vpack.c.bf16 %v1542, %v1542
    %v1671 = vpack.c.bf16 %v1581, %v1581
    %v1672 = vld [vmem:[%s17] sm:$0xff]
    %v1673 = vld [vmem:[%s17 + $0x8] sm:$0xff]
    %v1674 = vld [vmem:[%s17 + $0x10] sm:$0xff]
    %v1675 = vld [vmem:[%s17 + $0x18] sm:$0xff]
    %v1676 = vld [vmem:[%s17 + $0x20] sm:$0xff]
    %v1677 = vld [vmem:[%s17 + $0x28] sm:$0xff]
    %v1678 = vld [vmem:[%s17 + $0x30] sm:$0xff]
    %v1679 = vld [vmem:[%s17 + $0x38] sm:$0xff]
    %v1680 = vld [vmem:[%s17 + $0x40] sm:$0xff]
    %v1681 = vld [vmem:[%s17 + $0x48] sm:$0xff]
    %v1682 = vld [vmem:[%s17 + $0x50] sm:$0xff]
    %v1683 = vld [vmem:[%s17 + $0x58] sm:$0xff]
    %v1684 = vld [vmem:[%s17 + $0x60] sm:$0xff]
    %v1685 = vld [vmem:[%s17 + $0x68] sm:$0xff]
    %v1686 = vld [vmem:[%s17 + $0x70] sm:$0xff]
    %v1687 = vld [vmem:[%s17 + $0x78] sm:$0xff]
    %v1688 = vld [vmem:[%s17 + $0x80] sm:$0xff]
    %v1689 = vld [vmem:[%s17 + $0x88] sm:$0xff]
    %v1690 = vld [vmem:[%s17 + $0x90] sm:$0xff]
    %v1691 = vld [vmem:[%s17 + $0x98] sm:$0xff]
    %v1692 = vld [vmem:[%s17 + $0xa0] sm:$0xff]
    %v1693 = vld [vmem:[%s17 + $0xa8] sm:$0xff]
    %v1694 = vld [vmem:[%s17 + $0xb0] sm:$0xff]
    %v1695 = vld [vmem:[%s17 + $0xb8] sm:$0xff]
    %v1696 = vld [vmem:[%s17 + $0xc0] sm:$0xff]
    %v1697 = vld [vmem:[%s17 + $0xc8] sm:$0xff]
    %v1698 = vld [vmem:[%s17 + $0xd0] sm:$0xff]
    %v1699 = vld [vmem:[%s17 + $0xd8] sm:$0xff]
    %v1700 = vld [vmem:[%s17 + $0xe0] sm:$0xff]
    %v1701 = vld [vmem:[%s17 + $0xe8] sm:$0xff]
    %v1702 = vld [vmem:[%s17 + $0xf0] sm:$0xff]
    %v1703 = vld [vmem:[%s17 + $0xf8] sm:$0xff]
    %v1704 = vld [vmem:[%s17 + $0x100] sm:$0xff]
    %v1705 = vld [vmem:[%s17 + $0x108] sm:$0xff]
    %v1706 = vld [vmem:[%s17 + $0x110] sm:$0xff]
    %v1707 = vld [vmem:[%s17 + $0x118] sm:$0xff]
    %v1708 = vld [vmem:[%s17 + $0x120] sm:$0xff]
    %v1709 = vld [vmem:[%s17 + $0x128] sm:$0xff]
    %v1710 = vld [vmem:[%s17 + $0x130] sm:$0xff]
    %v1711 = vld [vmem:[%s17 + $0x138] sm:$0xff]
    %v1712 = vld [vmem:[%s17 + $0x140] sm:$0xff]
    %v1713 = vld [vmem:[%s17 + $0x148] sm:$0xff]
    %v1714 = vld [vmem:[%s17 + $0x150] sm:$0xff]
    %v1715 = vld [vmem:[%s17 + $0x158] sm:$0xff]
    %v1716 = vld [vmem:[%s17 + $0x160] sm:$0xff]
    %v1717 = vld [vmem:[%s17 + $0x168] sm:$0xff]
    %v1718 = vld [vmem:[%s17 + $0x170] sm:$0xff]
    %v1719 = vld [vmem:[%s17 + $0x178] sm:$0xff]
    %v1720 = vld [vmem:[%s17 + $0x180] sm:$0xff]
    %v1721 = vld [vmem:[%s17 + $0x188] sm:$0xff]
    %v1722 = vld [vmem:[%s17 + $0x190] sm:$0xff]
    %v1723 = vld [vmem:[%s17 + $0x198] sm:$0xff]
    %v1724 = vld [vmem:[%s17 + $0x1a0] sm:$0xff]
    %v1725 = vld [vmem:[%s17 + $0x1a8] sm:$0xff]
    %v1726 = vld [vmem:[%s17 + $0x1b0] sm:$0xff]
    %v1727 = vld [vmem:[%s17 + $0x1b8] sm:$0xff]
    %v1728 = vld [vmem:[%s17 + $0x1c0] sm:$0xff]
    %v1729 = vld [vmem:[%s17 + $0x1c8] sm:$0xff]
    %v1730 = vld [vmem:[%s17 + $0x1d0] sm:$0xff]
    %v1731 = vld [vmem:[%s17 + $0x1d8] sm:$0xff]
    %v1732 = vld [vmem:[%s17 + $0x1e0] sm:$0xff]
    %v1733 = vld [vmem:[%s17 + $0x1e8] sm:$0xff]
    %v1734 = vld [vmem:[%s17 + $0x1f0] sm:$0xff]
    %v1735 = vld [vmem:[%s17 + $0x1f8] sm:$0xff]
    %v1736 = vld [vmem:[%s17 + $0x200] sm:$0xff]
    %v1737 = vld [vmem:[%s17 + $0x208] sm:$0xff]
    %v1738 = vld [vmem:[%s17 + $0x210] sm:$0xff]
    %v1739 = vld [vmem:[%s17 + $0x218] sm:$0xff]
    %v1740 = vld [vmem:[%s17 + $0x220] sm:$0xff]
    %v1741 = vld [vmem:[%s17 + $0x228] sm:$0xff]
    %v1742 = vld [vmem:[%s17 + $0x230] sm:$0xff]
    %v1743 = vld [vmem:[%s17 + $0x238] sm:$0xff]
    %v1744 = vld [vmem:[%s17 + $0x240] sm:$0xff]
    %v1745 = vld [vmem:[%s17 + $0x248] sm:$0xff]
    %v1746 = vld [vmem:[%s17 + $0x250] sm:$0xff]
    %v1747 = vld [vmem:[%s17 + $0x258] sm:$0xff]
    %v1748 = vld [vmem:[%s17 + $0x260] sm:$0xff]
    %v1749 = vld [vmem:[%s17 + $0x268] sm:$0xff]
    %v1750 = vld [vmem:[%s17 + $0x270] sm:$0xff]
    %v1751 = vld [vmem:[%s17 + $0x278] sm:$0xff]
    %v1752 = vld [vmem:[%s17 + $0x280] sm:$0xff]
    %v1753 = vld [vmem:[%s17 + $0x288] sm:$0xff]
    %v1754 = vld [vmem:[%s17 + $0x290] sm:$0xff]
    %v1755 = vld [vmem:[%s17 + $0x298] sm:$0xff]
    %v1756 = vld [vmem:[%s17 + $0x2a0] sm:$0xff]
    %v1757 = vld [vmem:[%s17 + $0x2a8] sm:$0xff]
    %v1758 = vld [vmem:[%s17 + $0x2b0] sm:$0xff]
    %v1759 = vld [vmem:[%s17 + $0x2b8] sm:$0xff]
    %v1760 = vld [vmem:[%s17 + $0x2c0] sm:$0xff]
    %v1761 = vld [vmem:[%s17 + $0x2c8] sm:$0xff]
    %v1762 = vld [vmem:[%s17 + $0x2d0] sm:$0xff]
    %v1763 = vld [vmem:[%s17 + $0x2d8] sm:$0xff]
    %v1764 = vld [vmem:[%s17 + $0x2e0] sm:$0xff]
    %v1765 = vld [vmem:[%s17 + $0x2e8] sm:$0xff]
    %v1766 = vld [vmem:[%s17 + $0x2f0] sm:$0xff]
    %v1767 = vld [vmem:[%s17 + $0x2f8] sm:$0xff]
    %v1768 = vld [vmem:[%s17 + $0x300] sm:$0xff]
    %v1769 = vld [vmem:[%s17 + $0x308] sm:$0xff]
    %v1770 = vld [vmem:[%s17 + $0x310] sm:$0xff]
    %v1771 = vld [vmem:[%s17 + $0x318] sm:$0xff]
    %v1772 = vld [vmem:[%s17 + $0x320] sm:$0xff]
    %v1773 = vld [vmem:[%s17 + $0x328] sm:$0xff]
    %v1774 = vld [vmem:[%s17 + $0x330] sm:$0xff]
    %v1775 = vld [vmem:[%s17 + $0x338] sm:$0xff]
    %v1776 = vld [vmem:[%s17 + $0x340] sm:$0xff]
    %v1777 = vld [vmem:[%s17 + $0x348] sm:$0xff]
    %v1778 = vld [vmem:[%s17 + $0x350] sm:$0xff]
    %v1779 = vld [vmem:[%s17 + $0x358] sm:$0xff]
    %v1780 = vld [vmem:[%s17 + $0x360] sm:$0xff]
    %v1781 = vld [vmem:[%s17 + $0x368] sm:$0xff]
    %v1782 = vld [vmem:[%s17 + $0x370] sm:$0xff]
    %v1783 = vld [vmem:[%s17 + $0x378] sm:$0xff]
    %v1784 = vld [vmem:[%s17 + $0x380] sm:$0xff]
    %v1785 = vld [vmem:[%s17 + $0x388] sm:$0xff]
    %v1786 = vld [vmem:[%s17 + $0x390] sm:$0xff]
    %v1787 = vld [vmem:[%s17 + $0x398] sm:$0xff]
    %v1788 = vld [vmem:[%s17 + $0x3a0] sm:$0xff]
    %v1789 = vld [vmem:[%s17 + $0x3a8] sm:$0xff]
    %v1790 = vld [vmem:[%s17 + $0x3b0] sm:$0xff]
    %v1791 = vld [vmem:[%s17 + $0x3b8] sm:$0xff]
    %v1792 = vld [vmem:[%s17 + $0x3c0] sm:$0xff]
    %v1793 = vld [vmem:[%s17 + $0x3c8] sm:$0xff]
    %v1794 = vld [vmem:[%s17 + $0x3d0] sm:$0xff]
    %v1795 = vld [vmem:[%s17 + $0x3d8] sm:$0xff]
    %v1796 = vld [vmem:[%s17 + $0x3e0] sm:$0xff]
    %v1797 = vld [vmem:[%s17 + $0x3e8] sm:$0xff]
    %v1798 = vld [vmem:[%s17 + $0x3f0] sm:$0xff]
    %v1799 = vld [vmem:[%s17 + $0x3f8] sm:$0xff]
    %v1800 = vld [vmem:[%s17 + $0x400] sm:$0xff]
    %v1801 = vld [vmem:[%s17 + $0x408] sm:$0xff]
    %v1802 = vld [vmem:[%s17 + $0x410] sm:$0xff]
    %v1803 = vld [vmem:[%s17 + $0x418] sm:$0xff]
    %v1804 = vld [vmem:[%s17 + $0x420] sm:$0xff]
    %v1805 = vld [vmem:[%s17 + $0x428] sm:$0xff]
    %v1806 = vld [vmem:[%s17 + $0x430] sm:$0xff]
    %v1807 = vld [vmem:[%s17 + $0x438] sm:$0xff]
    %v1808 = vld [vmem:[%s17 + $0x440] sm:$0xff]
    %v1809 = vld [vmem:[%s17 + $0x448] sm:$0xff]
    %v1810 = vld [vmem:[%s17 + $0x450] sm:$0xff]
    %v1811 = vld [vmem:[%s17 + $0x458] sm:$0xff]
    %v1812 = vld [vmem:[%s17 + $0x460] sm:$0xff]
    %v1813 = vld [vmem:[%s17 + $0x468] sm:$0xff]
    %v1814 = vld [vmem:[%s17 + $0x470] sm:$0xff]
    %v1815 = vld [vmem:[%s17 + $0x478] sm:$0xff]
    %v1816 = vld [vmem:[%s19] sm:$0x3f]
    %v1818 = vlaneseq
    %v1819 = vshrl.u32 %v1818, 7
    %v1820 = vsub.s32 0, %v1819
    %v1821 = vrot.slane %v1816, %v1820
    %v1822 = vlaneseq
    %v1823 = vshrl.u32 %v1822, 7
    %v1824 = vsub.s32 1, %v1823
    %v1825 = vrot.slane %v1816, %v1824
    %v1826 = vlaneseq
    %v1827 = vshrl.u32 %v1826, 7
    %v1828 = vsub.s32 2, %v1827
    %v1829 = vrot.slane %v1816, %v1828
    %v1830 = vlaneseq
    %v1831 = vshrl.u32 %v1830, 7
    %v1832 = vsub.s32 3, %v1831
    %v1833 = vrot.slane %v1816, %v1832
    %v1834 = vlaneseq
    %v1835 = vshrl.u32 %v1834, 7
    %v1836 = vsub.s32 4, %v1835
    %v1837 = vrot.slane %v1816, %v1836
    %v1838 = vlaneseq
    %v1839 = vshrl.u32 %v1838, 7
    %v1840 = vsub.s32 5, %v1839
    %v1841 = vrot.slane %v1816, %v1840
    %v1992 = vunpack.c.l.b16 %v1672
    %v1993 = vunpack.c.h.b16 %v1672
    %v1994 = vunpack.c.l.b16 %v1673
    %v1995 = vunpack.c.h.b16 %v1673
    %v1996 = vunpack.c.l.b16 %v1674
    %v1997 = vunpack.c.h.b16 %v1674
    %v1998 = vunpack.c.l.b16 %v1675
    %v1999 = vunpack.c.h.b16 %v1675
    %v2000 = vunpack.c.l.b16 %v1676
    %v2001 = vunpack.c.h.b16 %v1676
    %v2002 = vunpack.c.l.b16 %v1677
    %v2003 = vunpack.c.h.b16 %v1677
    %v2004 = vunpack.c.l.b16 %v1678
    %v2005 = vunpack.c.h.b16 %v1678
    %v2006 = vunpack.c.l.b16 %v1679
    %v2007 = vunpack.c.h.b16 %v1679
    %v2008 = vunpack.c.l.b16 %v1680
    %v2009 = vunpack.c.h.b16 %v1680
    %v2010 = vunpack.c.l.b16 %v1681
    %v2011 = vunpack.c.h.b16 %v1681
    %v2012 = vunpack.c.l.b16 %v1682
    %v2013 = vunpack.c.h.b16 %v1682
    %v2014 = vunpack.c.l.b16 %v1683
    %v2015 = vunpack.c.h.b16 %v1683
    %v2016 = vunpack.c.l.b16 %v1684
    %v2017 = vunpack.c.h.b16 %v1684
    %v2018 = vunpack.c.l.b16 %v1685
    %v2019 = vunpack.c.h.b16 %v1685
    %v2020 = vunpack.c.l.b16 %v1686
    %v2021 = vunpack.c.h.b16 %v1686
    %v2022 = vunpack.c.l.b16 %v1687
    %v2023 = vunpack.c.h.b16 %v1687
    %v2024 = vunpack.c.l.b16 %v1688
    %v2025 = vunpack.c.h.b16 %v1688
    %v2026 = vunpack.c.l.b16 %v1689
    %v2027 = vunpack.c.h.b16 %v1689
    %v2028 = vunpack.c.l.b16 %v1690
    %v2029 = vunpack.c.h.b16 %v1690
    %v2030 = vunpack.c.l.b16 %v1691
    %v2031 = vunpack.c.h.b16 %v1691
    %v2032 = vunpack.c.l.b16 %v1692
    %v2033 = vunpack.c.h.b16 %v1692
    %v2034 = vunpack.c.l.b16 %v1693
    %v2035 = vunpack.c.h.b16 %v1693
    %v2036 = vunpack.c.l.b16 %v1694
    %v2037 = vunpack.c.h.b16 %v1694
    %v2038 = vunpack.c.l.b16 %v1695
    %v2039 = vunpack.c.h.b16 %v1695
    %v2040 = vunpack.c.l.b16 %v1696
    %v2041 = vunpack.c.h.b16 %v1696
    %v2042 = vunpack.c.l.b16 %v1697
    %v2043 = vunpack.c.h.b16 %v1697
    %v2044 = vunpack.c.l.b16 %v1698
    %v2045 = vunpack.c.h.b16 %v1698
    %v2046 = vunpack.c.l.b16 %v1699
    %v2047 = vunpack.c.h.b16 %v1699
    %v2048 = vunpack.c.l.b16 %v1700
    %v2049 = vunpack.c.h.b16 %v1700
    %v2050 = vunpack.c.l.b16 %v1701
    %v2051 = vunpack.c.h.b16 %v1701
    %v2052 = vunpack.c.l.b16 %v1702
    %v2053 = vunpack.c.h.b16 %v1702
    %v2054 = vunpack.c.l.b16 %v1703
    %v2055 = vunpack.c.h.b16 %v1703
    %v2056 = vunpack.c.l.b16 %v1704
    %v2057 = vunpack.c.h.b16 %v1704
    %v2058 = vunpack.c.l.b16 %v1705
    %v2059 = vunpack.c.h.b16 %v1705
    %v2060 = vunpack.c.l.b16 %v1706
    %v2061 = vunpack.c.h.b16 %v1706
    %v2062 = vunpack.c.l.b16 %v1707
    %v2063 = vunpack.c.h.b16 %v1707
    %v2064 = vunpack.c.l.b16 %v1708
    %v2065 = vunpack.c.h.b16 %v1708
    %v2066 = vunpack.c.l.b16 %v1709
    %v2067 = vunpack.c.h.b16 %v1709
    %v2068 = vunpack.c.l.b16 %v1710
    %v2069 = vunpack.c.h.b16 %v1710
    %v2070 = vunpack.c.l.b16 %v1711
    %v2071 = vunpack.c.h.b16 %v1711
    %v2072 = vunpack.c.l.b16 %v1712
    %v2073 = vunpack.c.h.b16 %v1712
    %v2074 = vunpack.c.l.b16 %v1713
    %v2075 = vunpack.c.h.b16 %v1713
    %v2076 = vunpack.c.l.b16 %v1714
    %v2077 = vunpack.c.h.b16 %v1714
    %v2078 = vunpack.c.l.b16 %v1715
    %v2079 = vunpack.c.h.b16 %v1715
    %v2080 = vunpack.c.l.b16 %v1716
    %v2081 = vunpack.c.h.b16 %v1716
    %v2082 = vunpack.c.l.b16 %v1717
    %v2083 = vunpack.c.h.b16 %v1717
    %v2084 = vunpack.c.l.b16 %v1718
    %v2085 = vunpack.c.h.b16 %v1718
    %v2086 = vunpack.c.l.b16 %v1719
    %v2087 = vunpack.c.h.b16 %v1719
    %v2088 = vunpack.c.l.b16 %v1720
    %v2089 = vunpack.c.h.b16 %v1720
    %v2090 = vunpack.c.l.b16 %v1721
    %v2091 = vunpack.c.h.b16 %v1721
    %v2092 = vunpack.c.l.b16 %v1722
    %v2093 = vunpack.c.h.b16 %v1722
    %v2094 = vunpack.c.l.b16 %v1723
    %v2095 = vunpack.c.h.b16 %v1723
    %v2096 = vunpack.c.l.b16 %v1724
    %v2097 = vunpack.c.h.b16 %v1724
    %v2098 = vunpack.c.l.b16 %v1725
    %v2099 = vunpack.c.h.b16 %v1725
    %v2100 = vunpack.c.l.b16 %v1726
    %v2101 = vunpack.c.h.b16 %v1726
    %v2102 = vunpack.c.l.b16 %v1727
    %v2103 = vunpack.c.h.b16 %v1727
    %v2104 = vunpack.c.l.b16 %v1728
    %v2105 = vunpack.c.h.b16 %v1728
    %v2106 = vunpack.c.l.b16 %v1729
    %v2107 = vunpack.c.h.b16 %v1729
    %v2108 = vunpack.c.l.b16 %v1730
    %v2109 = vunpack.c.h.b16 %v1730
    %v2110 = vunpack.c.l.b16 %v1731
    %v2111 = vunpack.c.h.b16 %v1731
    %v2112 = vunpack.c.l.b16 %v1732
    %v2113 = vunpack.c.h.b16 %v1732
    %v2114 = vunpack.c.l.b16 %v1733
    %v2115 = vunpack.c.h.b16 %v1733
    %v2116 = vunpack.c.l.b16 %v1734
    %v2117 = vunpack.c.h.b16 %v1734
    %v2118 = vunpack.c.l.b16 %v1735
    %v2119 = vunpack.c.h.b16 %v1735
    %v2120 = vunpack.c.l.b16 %v1736
    %v2121 = vunpack.c.h.b16 %v1736
    %v2122 = vunpack.c.l.b16 %v1737
    %v2123 = vunpack.c.h.b16 %v1737
    %v2124 = vunpack.c.l.b16 %v1738
    %v2125 = vunpack.c.h.b16 %v1738
    %v2126 = vunpack.c.l.b16 %v1739
    %v2127 = vunpack.c.h.b16 %v1739
    %v2128 = vunpack.c.l.b16 %v1740
    %v2129 = vunpack.c.h.b16 %v1740
    %v2130 = vunpack.c.l.b16 %v1741
    %v2131 = vunpack.c.h.b16 %v1741
    %v2132 = vunpack.c.l.b16 %v1742
    %v2133 = vunpack.c.h.b16 %v1742
    %v2134 = vunpack.c.l.b16 %v1743
    %v2135 = vunpack.c.h.b16 %v1743
    %v2136 = vunpack.c.l.b16 %v1744
    %v2137 = vunpack.c.h.b16 %v1744
    %v2138 = vunpack.c.l.b16 %v1745
    %v2139 = vunpack.c.h.b16 %v1745
    %v2140 = vunpack.c.l.b16 %v1746
    %v2141 = vunpack.c.h.b16 %v1746
    %v2142 = vunpack.c.l.b16 %v1747
    %v2143 = vunpack.c.h.b16 %v1747
    %v2144 = vunpack.c.l.b16 %v1748
    %v2145 = vunpack.c.h.b16 %v1748
    %v2146 = vunpack.c.l.b16 %v1749
    %v2147 = vunpack.c.h.b16 %v1749
    %v2148 = vunpack.c.l.b16 %v1750
    %v2149 = vunpack.c.h.b16 %v1750
    %v2150 = vunpack.c.l.b16 %v1751
    %v2151 = vunpack.c.h.b16 %v1751
    %v2152 = vunpack.c.l.b16 %v1752
    %v2153 = vunpack.c.h.b16 %v1752
    %v2154 = vunpack.c.l.b16 %v1753
    %v2155 = vunpack.c.h.b16 %v1753
    %v2156 = vunpack.c.l.b16 %v1754
    %v2157 = vunpack.c.h.b16 %v1754
    %v2158 = vunpack.c.l.b16 %v1755
    %v2159 = vunpack.c.h.b16 %v1755
    %v2160 = vunpack.c.l.b16 %v1756
    %v2161 = vunpack.c.h.b16 %v1756
    %v2162 = vunpack.c.l.b16 %v1757
    %v2163 = vunpack.c.h.b16 %v1757
    %v2164 = vunpack.c.l.b16 %v1758
    %v2165 = vunpack.c.h.b16 %v1758
    %v2166 = vunpack.c.l.b16 %v1759
    %v2167 = vunpack.c.h.b16 %v1759
    %v2168 = vunpack.c.l.b16 %v1760
    %v2169 = vunpack.c.h.b16 %v1760
    %v2170 = vunpack.c.l.b16 %v1761
    %v2171 = vunpack.c.h.b16 %v1761
    %v2172 = vunpack.c.l.b16 %v1762
    %v2173 = vunpack.c.h.b16 %v1762
    %v2174 = vunpack.c.l.b16 %v1763
    %v2175 = vunpack.c.h.b16 %v1763
    %v2176 = vunpack.c.l.b16 %v1764
    %v2177 = vunpack.c.h.b16 %v1764
    %v2178 = vunpack.c.l.b16 %v1765
    %v2179 = vunpack.c.h.b16 %v1765
    %v2180 = vunpack.c.l.b16 %v1766
    %v2181 = vunpack.c.h.b16 %v1766
    %v2182 = vunpack.c.l.b16 %v1767
    %v2183 = vunpack.c.h.b16 %v1767
    %v2184 = vunpack.c.l.b16 %v1768
    %v2185 = vunpack.c.h.b16 %v1768
    %v2186 = vunpack.c.l.b16 %v1769
    %v2187 = vunpack.c.h.b16 %v1769
    %v2188 = vunpack.c.l.b16 %v1770
    %v2189 = vunpack.c.h.b16 %v1770
    %v2190 = vunpack.c.l.b16 %v1771
    %v2191 = vunpack.c.h.b16 %v1771
    %v2192 = vunpack.c.l.b16 %v1772
    %v2193 = vunpack.c.h.b16 %v1772
    %v2194 = vunpack.c.l.b16 %v1773
    %v2195 = vunpack.c.h.b16 %v1773
    %v2196 = vunpack.c.l.b16 %v1774
    %v2197 = vunpack.c.h.b16 %v1774
    %v2198 = vunpack.c.l.b16 %v1775
    %v2199 = vunpack.c.h.b16 %v1775
    %v2200 = vunpack.c.l.b16 %v1776
    %v2201 = vunpack.c.h.b16 %v1776
    %v2202 = vunpack.c.l.b16 %v1777
    %v2203 = vunpack.c.h.b16 %v1777
    %v2204 = vunpack.c.l.b16 %v1778
    %v2205 = vunpack.c.h.b16 %v1778
    %v2206 = vunpack.c.l.b16 %v1779
    %v2207 = vunpack.c.h.b16 %v1779
    %v2208 = vunpack.c.l.b16 %v1780
    %v2209 = vunpack.c.h.b16 %v1780
    %v2210 = vunpack.c.l.b16 %v1781
    %v2211 = vunpack.c.h.b16 %v1781
    %v2212 = vunpack.c.l.b16 %v1782
    %v2213 = vunpack.c.h.b16 %v1782
    %v2214 = vunpack.c.l.b16 %v1783
    %v2215 = vunpack.c.h.b16 %v1783
    %v2216 = vunpack.c.l.b16 %v1784
    %v2217 = vunpack.c.h.b16 %v1784
    %v2218 = vunpack.c.l.b16 %v1785
    %v2219 = vunpack.c.h.b16 %v1785
    %v2220 = vunpack.c.l.b16 %v1786
    %v2221 = vunpack.c.h.b16 %v1786
    %v2222 = vunpack.c.l.b16 %v1787
    %v2223 = vunpack.c.h.b16 %v1787
    %v2224 = vunpack.c.l.b16 %v1788
    %v2225 = vunpack.c.h.b16 %v1788
    %v2226 = vunpack.c.l.b16 %v1789
    %v2227 = vunpack.c.h.b16 %v1789
    %v2228 = vunpack.c.l.b16 %v1790
    %v2229 = vunpack.c.h.b16 %v1790
    %v2230 = vunpack.c.l.b16 %v1791
    %v2231 = vunpack.c.h.b16 %v1791
    %v2232 = vunpack.c.l.b16 %v1792
    %v2233 = vunpack.c.h.b16 %v1792
    %v2234 = vunpack.c.l.b16 %v1793
    %v2235 = vunpack.c.h.b16 %v1793
    %v2236 = vunpack.c.l.b16 %v1794
    %v2237 = vunpack.c.h.b16 %v1794
    %v2238 = vunpack.c.l.b16 %v1795
    %v2239 = vunpack.c.h.b16 %v1795
    %v2240 = vunpack.c.l.b16 %v1796
    %v2241 = vunpack.c.h.b16 %v1796
    %v2242 = vunpack.c.l.b16 %v1797
    %v2243 = vunpack.c.h.b16 %v1797
    %v2244 = vunpack.c.l.b16 %v1798
    %v2245 = vunpack.c.h.b16 %v1798
    %v2246 = vunpack.c.l.b16 %v1799
    %v2247 = vunpack.c.h.b16 %v1799
    %v2248 = vunpack.c.l.b16 %v1800
    %v2249 = vunpack.c.h.b16 %v1800
    %v2250 = vunpack.c.l.b16 %v1801
    %v2251 = vunpack.c.h.b16 %v1801
    %v2252 = vunpack.c.l.b16 %v1802
    %v2253 = vunpack.c.h.b16 %v1802
    %v2254 = vunpack.c.l.b16 %v1803
    %v2255 = vunpack.c.h.b16 %v1803
    %v2256 = vunpack.c.l.b16 %v1804
    %v2257 = vunpack.c.h.b16 %v1804
    %v2258 = vunpack.c.l.b16 %v1805
    %v2259 = vunpack.c.h.b16 %v1805
    %v2260 = vunpack.c.l.b16 %v1806
    %v2261 = vunpack.c.h.b16 %v1806
    %v2262 = vunpack.c.l.b16 %v1807
    %v2263 = vunpack.c.h.b16 %v1807
    %v2264 = vunpack.c.l.b16 %v1808
    %v2265 = vunpack.c.h.b16 %v1808
    %v2266 = vunpack.c.l.b16 %v1809
    %v2267 = vunpack.c.h.b16 %v1809
    %v2268 = vunpack.c.l.b16 %v1810
    %v2269 = vunpack.c.h.b16 %v1810
    %v2270 = vunpack.c.l.b16 %v1811
    %v2271 = vunpack.c.h.b16 %v1811
    %v2272 = vunpack.c.l.b16 %v1812
    %v2273 = vunpack.c.h.b16 %v1812
    %v2274 = vunpack.c.l.b16 %v1813
    %v2275 = vunpack.c.h.b16 %v1813
    %v2276 = vunpack.c.l.b16 %v1814
    %v2277 = vunpack.c.h.b16 %v1814
    %v2278 = vunpack.c.l.b16 %v1815
    %v2279 = vunpack.c.h.b16 %v1815
    %v2280 = vpack.c.b16 %v1998, %v1992
    %v2281 = vpack.c.b16 %v1999, %v1993
    %v2282 = vpack.c.b16 %v2000, %v1994
    %v2283 = vpack.c.b16 %v2001, %v1995
    %v2284 = vpack.c.b16 %v2002, %v1996
    %v2285 = vpack.c.b16 %v2003, %v1997
    %v2286 = vpack.c.b16 %v2010, %v2004
    %v2287 = vpack.c.b16 %v2011, %v2005
    %v2288 = vpack.c.b16 %v2012, %v2006
    %v2289 = vpack.c.b16 %v2013, %v2007
    %v2290 = vpack.c.b16 %v2014, %v2008
    %v2291 = vpack.c.b16 %v2015, %v2009
    %v2292 = vpack.c.b16 %v2022, %v2016
    %v2293 = vpack.c.b16 %v2023, %v2017
    %v2294 = vpack.c.b16 %v2024, %v2018
    %v2295 = vpack.c.b16 %v2025, %v2019
    %v2296 = vpack.c.b16 %v2026, %v2020
    %v2297 = vpack.c.b16 %v2027, %v2021
    %v2298 = vpack.c.b16 %v2034, %v2028
    %v2299 = vpack.c.b16 %v2035, %v2029
    %v2300 = vpack.c.b16 %v2036, %v2030
    %v2301 = vpack.c.b16 %v2037, %v2031
    %v2302 = vpack.c.b16 %v2038, %v2032
    %v2303 = vpack.c.b16 %v2039, %v2033
    %v2304 = vpack.c.b16 %v2046, %v2040
    %v2305 = vpack.c.b16 %v2047, %v2041
    %v2306 = vpack.c.b16 %v2048, %v2042
    %v2307 = vpack.c.b16 %v2049, %v2043
    %v2308 = vpack.c.b16 %v2050, %v2044
    %v2309 = vpack.c.b16 %v2051, %v2045
    %v2310 = vpack.c.b16 %v2058, %v2052
    %v2311 = vpack.c.b16 %v2059, %v2053
    %v2312 = vpack.c.b16 %v2060, %v2054
    %v2313 = vpack.c.b16 %v2061, %v2055
    %v2314 = vpack.c.b16 %v2062, %v2056
    %v2315 = vpack.c.b16 %v2063, %v2057
    %v2316 = vpack.c.b16 %v2070, %v2064
    %v2317 = vpack.c.b16 %v2071, %v2065
    %v2318 = vpack.c.b16 %v2072, %v2066
    %v2319 = vpack.c.b16 %v2073, %v2067
    %v2320 = vpack.c.b16 %v2074, %v2068
    %v2321 = vpack.c.b16 %v2075, %v2069
    %v2322 = vpack.c.b16 %v2082, %v2076
    %v2323 = vpack.c.b16 %v2083, %v2077
    %v2324 = vpack.c.b16 %v2084, %v2078
    %v2325 = vpack.c.b16 %v2085, %v2079
    %v2326 = vpack.c.b16 %v2086, %v2080
    %v2327 = vpack.c.b16 %v2087, %v2081
    %v2328 = vpack.c.b16 %v2094, %v2088
    %v2329 = vpack.c.b16 %v2095, %v2089
    %v2330 = vpack.c.b16 %v2096, %v2090
    %v2331 = vpack.c.b16 %v2097, %v2091
    %v2332 = vpack.c.b16 %v2098, %v2092
    %v2333 = vpack.c.b16 %v2099, %v2093
    %v2334 = vpack.c.b16 %v2106, %v2100
    %v2335 = vpack.c.b16 %v2107, %v2101
    %v2336 = vpack.c.b16 %v2108, %v2102
    %v2337 = vpack.c.b16 %v2109, %v2103
    %v2338 = vpack.c.b16 %v2110, %v2104
    %v2339 = vpack.c.b16 %v2111, %v2105
    %v2340 = vpack.c.b16 %v2118, %v2112
    %v2341 = vpack.c.b16 %v2119, %v2113
    %v2342 = vpack.c.b16 %v2120, %v2114
    %v2343 = vpack.c.b16 %v2121, %v2115
    %v2344 = vpack.c.b16 %v2122, %v2116
    %v2345 = vpack.c.b16 %v2123, %v2117
    %v2346 = vpack.c.b16 %v2130, %v2124
    %v2347 = vpack.c.b16 %v2131, %v2125
    %v2348 = vpack.c.b16 %v2132, %v2126
    %v2349 = vpack.c.b16 %v2133, %v2127
    %v2350 = vpack.c.b16 %v2134, %v2128
    %v2351 = vpack.c.b16 %v2135, %v2129
    %v2352 = vpack.c.b16 %v2142, %v2136
    %v2353 = vpack.c.b16 %v2143, %v2137
    %v2354 = vpack.c.b16 %v2144, %v2138
    %v2355 = vpack.c.b16 %v2145, %v2139
    %v2356 = vpack.c.b16 %v2146, %v2140
    %v2357 = vpack.c.b16 %v2147, %v2141
    %v2358 = vpack.c.b16 %v2154, %v2148
    %v2359 = vpack.c.b16 %v2155, %v2149
    %v2360 = vpack.c.b16 %v2156, %v2150
    %v2361 = vpack.c.b16 %v2157, %v2151
    %v2362 = vpack.c.b16 %v2158, %v2152
    %v2363 = vpack.c.b16 %v2159, %v2153
    %v2364 = vpack.c.b16 %v2166, %v2160
    %v2365 = vpack.c.b16 %v2167, %v2161
    %v2366 = vpack.c.b16 %v2168, %v2162
    %v2367 = vpack.c.b16 %v2169, %v2163
    %v2368 = vpack.c.b16 %v2170, %v2164
    %v2369 = vpack.c.b16 %v2171, %v2165
    %v2370 = vpack.c.b16 %v2178, %v2172
    %v2371 = vpack.c.b16 %v2179, %v2173
    %v2372 = vpack.c.b16 %v2180, %v2174
    %v2373 = vpack.c.b16 %v2181, %v2175
    %v2374 = vpack.c.b16 %v2182, %v2176
    %v2375 = vpack.c.b16 %v2183, %v2177
    %v2376 = vpack.c.b16 %v2190, %v2184
    %v2377 = vpack.c.b16 %v2191, %v2185
    %v2378 = vpack.c.b16 %v2192, %v2186
    %v2379 = vpack.c.b16 %v2193, %v2187
    %v2380 = vpack.c.b16 %v2194, %v2188
    %v2381 = vpack.c.b16 %v2195, %v2189
    %v2382 = vpack.c.b16 %v2202, %v2196
    %v2383 = vpack.c.b16 %v2203, %v2197
    %v2384 = vpack.c.b16 %v2204, %v2198
    %v2385 = vpack.c.b16 %v2205, %v2199
    %v2386 = vpack.c.b16 %v2206, %v2200
    %v2387 = vpack.c.b16 %v2207, %v2201
    %v2388 = vpack.c.b16 %v2214, %v2208
    %v2389 = vpack.c.b16 %v2215, %v2209
    %v2390 = vpack.c.b16 %v2216, %v2210
    %v2391 = vpack.c.b16 %v2217, %v2211
    %v2392 = vpack.c.b16 %v2218, %v2212
    %v2393 = vpack.c.b16 %v2219, %v2213
    %v2394 = vpack.c.b16 %v2226, %v2220
    %v2395 = vpack.c.b16 %v2227, %v2221
    %v2396 = vpack.c.b16 %v2228, %v2222
    %v2397 = vpack.c.b16 %v2229, %v2223
    %v2398 = vpack.c.b16 %v2230, %v2224
    %v2399 = vpack.c.b16 %v2231, %v2225
    %v2400 = vpack.c.b16 %v2238, %v2232
    %v2401 = vpack.c.b16 %v2239, %v2233
    %v2402 = vpack.c.b16 %v2240, %v2234
    %v2403 = vpack.c.b16 %v2241, %v2235
    %v2404 = vpack.c.b16 %v2242, %v2236
    %v2405 = vpack.c.b16 %v2243, %v2237
    %v2406 = vpack.c.b16 %v2250, %v2244
    %v2407 = vpack.c.b16 %v2251, %v2245
    %v2408 = vpack.c.b16 %v2252, %v2246
    %v2409 = vpack.c.b16 %v2253, %v2247
    %v2410 = vpack.c.b16 %v2254, %v2248
    %v2411 = vpack.c.b16 %v2255, %v2249
    %v2412 = vpack.c.b16 %v2262, %v2256
    %v2413 = vpack.c.b16 %v2263, %v2257
    %v2414 = vpack.c.b16 %v2264, %v2258
    %v2415 = vpack.c.b16 %v2265, %v2259
    %v2416 = vpack.c.b16 %v2266, %v2260
    %v2417 = vpack.c.b16 %v2267, %v2261
    %v2418 = vpack.c.b16 %v2274, %v2268
    %v2419 = vpack.c.b16 %v2275, %v2269
    %v2420 = vpack.c.b16 %v2276, %v2270
    %v2421 = vpack.c.b16 %v2277, %v2271
    %v2422 = vpack.c.b16 %v2278, %v2272
    %v2423 = vpack.c.b16 %v2279, %v2273
    %2568 = vmatprep.subr.bf16.mxu0 %v2323
    %2569 = vmatpush1.bf16.msra.mxu0 %v2322
    %2570 = vmatprep.subr.bf16.mxu0 %v2317
    %2571 = vmatpush1.bf16.msra.mxu0 %v2316
    %2572 = vmatprep.subr.bf16.mxu0 %v2311
    %2573 = vmatpush1.bf16.msra.mxu0 %v2310
    %2574 = vmatprep.subr.bf16.mxu0 %v2305
    %2575 = vmatpush1.bf16.msra.mxu0 %v2304
    %2576 = vmatprep.subr.bf16.mxu0 %v2299
    %2577 = vmatpush1.bf16.msra.mxu0 %v2298
    %2578 = vmatprep.subr.bf16.mxu0 %v2293
    %2579 = vmatpush1.bf16.msra.mxu0 %v2292
    %2580 = vmatprep.subr.bf16.mxu0 %v2287
    %2581 = vmatpush1.bf16.msra.mxu0 %v2286
    %2582 = vmatprep.subr.bf16.mxu0 %v2281
    %2583 = vmatpush1.bf16.msra.mxu0 %v2280
    %2584 = vmatprep.subr.bf16.mxu0 %v2371
    %2585 = vmatpush2.bf16.msra.mxu0 %v2370
    %2586 = vmatprep.subr.bf16.mxu0 %v2365
    %2587 = vmatpush2.bf16.msra.mxu0 %v2364
    %2588 = vmatprep.subr.bf16.mxu0 %v2359
    %2589 = vmatpush2.bf16.msra.mxu0 %v2358
    %2590 = vmatprep.subr.bf16.mxu0 %v2353
    %2591 = vmatpush2.bf16.msra.mxu0 %v2352
    %2592 = vmatprep.subr.bf16.mxu0 %v2347
    %2593 = vmatpush2.bf16.msra.mxu0 %v2346
    %2594 = vmatprep.subr.bf16.mxu0 %v2341
    %2595 = vmatpush2.bf16.msra.mxu0 %v2340
    %2596 = vmatprep.subr.bf16.mxu0 %v2335
    %2597 = vmatpush2.bf16.msra.mxu0 %v2334
    %2598 = vmatprep.subr.bf16.mxu0 %v2329
    %2599 = vmatpush2.bf16.msra.mxu0 %v2328
    %2600 = vmatprep.mubr.bf16.mxu0 %v1670
    %2601 = vmatmul.mubr.bf16.gmra.mxu0 %v1669
    %v2602 = vpop.f32.mrf.mxu0
    %v2603 = vadd.f32 %v1821, %v2602
    %v2604 = vpop.f32.mrf.mxu0
    %v2605 = vadd.f32 %v1825, %v2604
    %v2606 = vpop.f32.mrf.mxu0
    %v2607 = vpop.f32.mrf.mxu0
    %2608 = vdwg.mxu0
    %2609 = vmatprep.subr.bf16.mxu0 %v2419
    %2610 = vmatpush1.bf16.msra.mxu0 %v2418
    %2611 = vmatprep.subr.bf16.mxu0 %v2413
    %2612 = vmatpush1.bf16.msra.mxu0 %v2412
    %2613 = vmatprep.subr.bf16.mxu0 %v2407
    %2614 = vmatpush1.bf16.msra.mxu0 %v2406
    %2615 = vmatprep.subr.bf16.mxu0 %v2401
    %2616 = vmatpush1.bf16.msra.mxu0 %v2400
    %2617 = vmatprep.subr.bf16.mxu0 %v2395
    %2618 = vmatpush1.bf16.msra.mxu0 %v2394
    %2619 = vmatprep.subr.bf16.mxu0 %v2389
    %2620 = vmatpush1.bf16.msra.mxu0 %v2388
    %2621 = vmatprep.subr.bf16.mxu0 %v2383
    %2622 = vmatpush1.bf16.msra.mxu0 %v2382
    %2623 = vmatprep.subr.bf16.mxu0 %v2377
    %2624 = vmatpush1.bf16.msra.mxu0 %v2376
    %2625 = vmatprep.subr.bf16.mxu0 0
    %2626 = vmatpush2.bf16.msra.mxu0 0
    %2627 = vmatprep.subr.bf16.mxu0 0
    %2628 = vmatpush2.bf16.msra.mxu0 0
    %2629 = vmatprep.subr.bf16.mxu0 0
    %2630 = vmatpush2.bf16.msra.mxu0 0
    %2631 = vmatprep.subr.bf16.mxu0 0
    %2632 = vmatpush2.bf16.msra.mxu0 0
    %2633 = vmatprep.subr.bf16.mxu0 0
    %2634 = vmatpush2.bf16.msra.mxu0 0
    %2635 = vmatprep.subr.bf16.mxu0 0
    %2636 = vmatpush2.bf16.msra.mxu0 0
    %2637 = vmatprep.subr.bf16.mxu0 0
    %2638 = vmatpush2.bf16.msra.mxu0 0
    %2639 = vmatprep.subr.bf16.mxu0 0
    %2640 = vmatpush2.bf16.msra.mxu0 0
    %2641 = vmatprep.mubr.bf16.mxu0 0
    %2642 = vmatmul.mubr.bf16.gmra.mxu0 %v1671
    %v2643 = vpop.f32.mrf.mxu0
    %v2644 = vadd.f32 %v2603, %v2643
    %v2645 = vpop.f32.mrf.mxu0
    %v2646 = vadd.f32 %v2605, %v2645
    %v2647 = vpop.f32.mrf.mxu0
    %v2648 = vpop.f32.mrf.mxu0
    %2649 = vdwg.mxu0
    %2650 = vmatprep.subr.bf16.mxu0 %v2325
    %2651 = vmatpush1.bf16.msra.mxu0 %v2324
    %2652 = vmatprep.subr.bf16.mxu0 %v2319
    %2653 = vmatpush1.bf16.msra.mxu0 %v2318
    %2654 = vmatprep.subr.bf16.mxu0 %v2313
    %2655 = vmatpush1.bf16.msra.mxu0 %v2312
    %2656 = vmatprep.subr.bf16.mxu0 %v2307
    %2657 = vmatpush1.bf16.msra.mxu0 %v2306
    %2658 = vmatprep.subr.bf16.mxu0 %v2301
    %2659 = vmatpush1.bf16.msra.mxu0 %v2300
    %2660 = vmatprep.subr.bf16.mxu0 %v2295
    %2661 = vmatpush1.bf16.msra.mxu0 %v2294
    %2662 = vmatprep.subr.bf16.mxu0 %v2289
    %2663 = vmatpush1.bf16.msra.mxu0 %v2288
    %2664 = vmatprep.subr.bf16.mxu0 %v2283
    %2665 = vmatpush1.bf16.msra.mxu0 %v2282
    %2666 = vmatprep.subr.bf16.mxu0 %v2373
    %2667 = vmatpush2.bf16.msra.mxu0 %v2372
    %2668 = vmatprep.subr.bf16.mxu0 %v2367
    %2669 = vmatpush2.bf16.msra.mxu0 %v2366
    %2670 = vmatprep.subr.bf16.mxu0 %v2361
    %2671 = vmatpush2.bf16.msra.mxu0 %v2360
    %2672 = vmatprep.subr.bf16.mxu0 %v2355
    %2673 = vmatpush2.bf16.msra.mxu0 %v2354
    %2674 = vmatprep.subr.bf16.mxu0 %v2349
    %2675 = vmatpush2.bf16.msra.mxu0 %v2348
    %2676 = vmatprep.subr.bf16.mxu0 %v2343
    %2677 = vmatpush2.bf16.msra.mxu0 %v2342
    %2678 = vmatprep.subr.bf16.mxu0 %v2337
    %2679 = vmatpush2.bf16.msra.mxu0 %v2336
    %2680 = vmatprep.subr.bf16.mxu0 %v2331
    %2681 = vmatpush2.bf16.msra.mxu0 %v2330
    %2682 = vmatprep.mubr.bf16.mxu0 %v1670
    %2683 = vmatmul.mubr.bf16.gmra.mxu0 %v1669
    %v2684 = vpop.f32.mrf.mxu0
    %v2685 = vadd.f32 %v1829, %v2684
    %v2686 = vpop.f32.mrf.mxu0
    %v2687 = vadd.f32 %v1833, %v2686
    %v2688 = vpop.f32.mrf.mxu0
    %v2689 = vpop.f32.mrf.mxu0
    %2690 = vdwg.mxu0
    %2691 = vmatprep.subr.bf16.mxu0 %v2421
    %2692 = vmatpush1.bf16.msra.mxu0 %v2420
    %2693 = vmatprep.subr.bf16.mxu0 %v2415
    %2694 = vmatpush1.bf16.msra.mxu0 %v2414
    %2695 = vmatprep.subr.bf16.mxu0 %v2409
    %2696 = vmatpush1.bf16.msra.mxu0 %v2408
    %2697 = vmatprep.subr.bf16.mxu0 %v2403
    %2698 = vmatpush1.bf16.msra.mxu0 %v2402
    %2699 = vmatprep.subr.bf16.mxu0 %v2397
    %2700 = vmatpush1.bf16.msra.mxu0 %v2396
    %2701 = vmatprep.subr.bf16.mxu0 %v2391
    %2702 = vmatpush1.bf16.msra.mxu0 %v2390
    %2703 = vmatprep.subr.bf16.mxu0 %v2385
    %2704 = vmatpush1.bf16.msra.mxu0 %v2384
    %2705 = vmatprep.subr.bf16.mxu0 %v2379
    %2706 = vmatpush1.bf16.msra.mxu0 %v2378
    %2707 = vmatprep.subr.bf16.mxu0 0
    %2708 = vmatpush2.bf16.msra.mxu0 0
    %2709 = vmatprep.subr.bf16.mxu0 0
    %2710 = vmatpush2.bf16.msra.mxu0 0
    %2711 = vmatprep.subr.bf16.mxu0 0
    %2712 = vmatpush2.bf16.msra.mxu0 0
    %2713 = vmatprep.subr.bf16.mxu0 0
    %2714 = vmatpush2.bf16.msra.mxu0 0
    %2715 = vmatprep.subr.bf16.mxu0 0
    %2716 = vmatpush2.bf16.msra.mxu0 0
    %2717 = vmatprep.subr.bf16.mxu0 0
    %2718 = vmatpush2.bf16.msra.mxu0 0
    %2719 = vmatprep.subr.bf16.mxu0 0
    %2720 = vmatpush2.bf16.msra.mxu0 0
    %2721 = vmatprep.subr.bf16.mxu0 0
    %2722 = vmatpush2.bf16.msra.mxu0 0
    %2723 = vmatprep.mubr.bf16.mxu0 0
    %2724 = vmatmul.mubr.bf16.gmra.mxu0 %v1671
    %v2725 = vpop.f32.mrf.mxu0
    %v2726 = vadd.f32 %v2685, %v2725
    %v2727 = vpop.f32.mrf.mxu0
    %v2728 = vadd.f32 %v2687, %v2727
    %v2729 = vpop.f32.mrf.mxu0
    %v2730 = vpop.f32.mrf.mxu0
    %2731 = vdwg.mxu0
    %2732 = vmatprep.subr.bf16.mxu0 %v2327
    %2733 = vmatpush1.bf16.msra.mxu0 %v2326
    %2734 = vmatprep.subr.bf16.mxu0 %v2321
    %2735 = vmatpush1.bf16.msra.mxu0 %v2320
    %2736 = vmatprep.subr.bf16.mxu0 %v2315
    %2737 = vmatpush1.bf16.msra.mxu0 %v2314
    %2738 = vmatprep.subr.bf16.mxu0 %v2309
    %2739 = vmatpush1.bf16.msra.mxu0 %v2308
    %2740 = vmatprep.subr.bf16.mxu0 %v2303
    %2741 = vmatpush1.bf16.msra.mxu0 %v2302
    %2742 = vmatprep.subr.bf16.mxu0 %v2297
    %2743 = vmatpush1.bf16.msra.mxu0 %v2296
    %2744 = vmatprep.subr.bf16.mxu0 %v2291
    %2745 = vmatpush1.bf16.msra.mxu0 %v2290
    %2746 = vmatprep.subr.bf16.mxu0 %v2285
    %2747 = vmatpush1.bf16.msra.mxu0 %v2284
    %2748 = vmatprep.subr.bf16.mxu0 %v2375
    %2749 = vmatpush2.bf16.msra.mxu0 %v2374
    %2750 = vmatprep.subr.bf16.mxu0 %v2369
    %2751 = vmatpush2.bf16.msra.mxu0 %v2368
    %2752 = vmatprep.subr.bf16.mxu0 %v2363
    %2753 = vmatpush2.bf16.msra.mxu0 %v2362
    %2754 = vmatprep.subr.bf16.mxu0 %v2357
    %2755 = vmatpush2.bf16.msra.mxu0 %v2356
    %2756 = vmatprep.subr.bf16.mxu0 %v2351
    %2757 = vmatpush2.bf16.msra.mxu0 %v2350
    %2758 = vmatprep.subr.bf16.mxu0 %v2345
    %2759 = vmatpush2.bf16.msra.mxu0 %v2344
    %2760 = vmatprep.subr.bf16.mxu0 %v2339
    %2761 = vmatpush2.bf16.msra.mxu0 %v2338
    %2762 = vmatprep.subr.bf16.mxu0 %v2333
    %2763 = vmatpush2.bf16.msra.mxu0 %v2332
    %2764 = vmatprep.mubr.bf16.mxu0 %v1670
    %2765 = vmatmul.mubr.bf16.gmra.mxu0 %v1669
    %v2766 = vpop.f32.mrf.mxu0
    %v2767 = vadd.f32 %v1837, %v2766
    %v2768 = vpop.f32.mrf.mxu0
    %v2769 = vadd.f32 %v1841, %v2768
    %v2770 = vpop.f32.mrf.mxu0
    %v2771 = vpop.f32.mrf.mxu0
    %2772 = vdwg.mxu0
    %2773 = vmatprep.subr.bf16.mxu0 %v2423
    %2774 = vmatpush1.bf16.msra.mxu0 %v2422
    %2775 = vmatprep.subr.bf16.mxu0 %v2417
    %2776 = vmatpush1.bf16.msra.mxu0 %v2416
    %2777 = vmatprep.subr.bf16.mxu0 %v2411
    %2778 = vmatpush1.bf16.msra.mxu0 %v2410
    %2779 = vmatprep.subr.bf16.mxu0 %v2405
    %2780 = vmatpush1.bf16.msra.mxu0 %v2404
    %2781 = vmatprep.subr.bf16.mxu0 %v2399
    %2782 = vmatpush1.bf16.msra.mxu0 %v2398
    %2783 = vmatprep.subr.bf16.mxu0 %v2393
    %2784 = vmatpush1.bf16.msra.mxu0 %v2392
    %2785 = vmatprep.subr.bf16.mxu0 %v2387
    %2786 = vmatpush1.bf16.msra.mxu0 %v2386
    %2787 = vmatprep.subr.bf16.mxu0 %v2381
    %2788 = vmatpush1.bf16.msra.mxu0 %v2380
    %2789 = vmatprep.subr.bf16.mxu0 0
    %2790 = vmatpush2.bf16.msra.mxu0 0
    %2791 = vmatprep.subr.bf16.mxu0 0
    %2792 = vmatpush2.bf16.msra.mxu0 0
    %2793 = vmatprep.subr.bf16.mxu0 0
    %2794 = vmatpush2.bf16.msra.mxu0 0
    %2795 = vmatprep.subr.bf16.mxu0 0
    %2796 = vmatpush2.bf16.msra.mxu0 0
    %2797 = vmatprep.subr.bf16.mxu0 0
    %2798 = vmatpush2.bf16.msra.mxu0 0
    %2799 = vmatprep.subr.bf16.mxu0 0
    %2800 = vmatpush2.bf16.msra.mxu0 0
    %2801 = vmatprep.subr.bf16.mxu0 0
    %2802 = vmatpush2.bf16.msra.mxu0 0
    %2803 = vmatprep.subr.bf16.mxu0 0
    %2804 = vmatpush2.bf16.msra.mxu0 0
    %2805 = vmatprep.mubr.bf16.mxu0 0
    %2806 = vmatmul.mubr.bf16.gmra.mxu0 %v1671
    %v2807 = vpop.f32.mrf.mxu0
    %v2808 = vadd.f32 %v2767, %v2807
    %v2809 = vpop.f32.mrf.mxu0
    %v2810 = vadd.f32 %v2769, %v2809
    %v2811 = vpop.f32.mrf.mxu0
    %v2812 = vpop.f32.mrf.mxu0
    %2813 = vdwg.mxu0
    %v2814 = vpack.c.bf16 %v1629, %v1629
    %v2815 = vpack.c.bf16 %v1632, %v1632
    %v2816 = vpack.c.bf16 %v1635, %v1635
    %v2817 = vld [vmem:[%s21] sm:$0xff]
    %v2818 = vld [vmem:[%s21 + $0x8] sm:$0xff]
    %v2819 = vld [vmem:[%s21 + $0x10] sm:$0xff]
    %v2820 = vld [vmem:[%s21 + $0x18] sm:$0xff]
    %v2821 = vld [vmem:[%s21 + $0x20] sm:$0xff]
    %v2822 = vld [vmem:[%s21 + $0x28] sm:$0xff]
    %v2823 = vld [vmem:[%s21 + $0x30] sm:$0xff]
    %v2824 = vld [vmem:[%s21 + $0x38] sm:$0xff]
    %v2825 = vld [vmem:[%s21 + $0x40] sm:$0xff]
    %v2826 = vld [vmem:[%s21 + $0x48] sm:$0xff]
    %v2827 = vld [vmem:[%s21 + $0x50] sm:$0xff]
    %v2828 = vld [vmem:[%s21 + $0x58] sm:$0xff]
    %v2829 = vld [vmem:[%s21 + $0x60] sm:$0xff]
    %v2830 = vld [vmem:[%s21 + $0x68] sm:$0xff]
    %v2831 = vld [vmem:[%s21 + $0x70] sm:$0xff]
    %v2832 = vld [vmem:[%s21 + $0x78] sm:$0xff]
    %v2833 = vld [vmem:[%s21 + $0x80] sm:$0xff]
    %v2834 = vld [vmem:[%s21 + $0x88] sm:$0xff]
    %v2835 = vld [vmem:[%s21 + $0x90] sm:$0xff]
    %v2836 = vld [vmem:[%s21 + $0x98] sm:$0xff]
    %v2837 = vld [vmem:[%s21 + $0xa0] sm:$0xff]
    %v2838 = vld [vmem:[%s21 + $0xa8] sm:$0xff]
    %v2839 = vld [vmem:[%s21 + $0xb0] sm:$0xff]
    %v2840 = vld [vmem:[%s21 + $0xb8] sm:$0xff]
    %v2841 = vld [vmem:[%s21 + $0xc0] sm:$0xff]
    %v2842 = vld [vmem:[%s21 + $0xc8] sm:$0xff]
    %v2843 = vld [vmem:[%s21 + $0xd0] sm:$0xff]
    %v2844 = vld [vmem:[%s21 + $0xd8] sm:$0xff]
    %v2845 = vld [vmem:[%s21 + $0xe0] sm:$0xff]
    %v2846 = vld [vmem:[%s21 + $0xe8] sm:$0xff]
    %v2847 = vld [vmem:[%s21 + $0xf0] sm:$0xff]
    %v2848 = vld [vmem:[%s21 + $0xf8] sm:$0xff]
    %v2849 = vld [vmem:[%s21 + $0x100] sm:$0xff]
    %v2850 = vld [vmem:[%s21 + $0x108] sm:$0xff]
    %v2851 = vld [vmem:[%s21 + $0x110] sm:$0xff]
    %v2852 = vld [vmem:[%s21 + $0x118] sm:$0xff]
    %v2853 = vld [vmem:[%s21 + $0x120] sm:$0xff]
    %v2854 = vld [vmem:[%s21 + $0x128] sm:$0xff]
    %v2855 = vld [vmem:[%s21 + $0x130] sm:$0xff]
    %v2856 = vld [vmem:[%s21 + $0x138] sm:$0xff]
    %v2857 = vld [vmem:[%s21 + $0x140] sm:$0xff]
    %v2858 = vld [vmem:[%s21 + $0x148] sm:$0xff]
    %v2859 = vld [vmem:[%s21 + $0x150] sm:$0xff]
    %v2860 = vld [vmem:[%s21 + $0x158] sm:$0xff]
    %v2861 = vld [vmem:[%s21 + $0x160] sm:$0xff]
    %v2862 = vld [vmem:[%s21 + $0x168] sm:$0xff]
    %v2863 = vld [vmem:[%s21 + $0x170] sm:$0xff]
    %v2864 = vld [vmem:[%s21 + $0x178] sm:$0xff]
    %v2865 = vld [vmem:[%s21 + $0x180] sm:$0xff]
    %v2866 = vld [vmem:[%s21 + $0x188] sm:$0xff]
    %v2867 = vld [vmem:[%s21 + $0x190] sm:$0xff]
    %v2868 = vld [vmem:[%s21 + $0x198] sm:$0xff]
    %v2869 = vld [vmem:[%s21 + $0x1a0] sm:$0xff]
    %v2870 = vld [vmem:[%s21 + $0x1a8] sm:$0xff]
    %v2871 = vld [vmem:[%s21 + $0x1b0] sm:$0xff]
    %v2872 = vld [vmem:[%s21 + $0x1b8] sm:$0xff]
    %v2873 = vld [vmem:[%s21 + $0x1c0] sm:$0xff]
    %v2874 = vld [vmem:[%s21 + $0x1c8] sm:$0xff]
    %v2875 = vld [vmem:[%s21 + $0x1d0] sm:$0xff]
    %v2876 = vld [vmem:[%s21 + $0x1d8] sm:$0xff]
    %v2877 = vld [vmem:[%s21 + $0x1e0] sm:$0xff]
    %v2878 = vld [vmem:[%s21 + $0x1e8] sm:$0xff]
    %v2879 = vld [vmem:[%s21 + $0x1f0] sm:$0xff]
    %v2880 = vld [vmem:[%s21 + $0x1f8] sm:$0xff]
    %v2881 = vld [vmem:[%s21 + $0x200] sm:$0xff]
    %v2882 = vld [vmem:[%s21 + $0x208] sm:$0xff]
    %v2883 = vld [vmem:[%s21 + $0x210] sm:$0xff]
    %v2884 = vld [vmem:[%s21 + $0x218] sm:$0xff]
    %v2885 = vld [vmem:[%s21 + $0x220] sm:$0xff]
    %v2886 = vld [vmem:[%s21 + $0x228] sm:$0xff]
    %v2887 = vld [vmem:[%s21 + $0x230] sm:$0xff]
    %v2888 = vld [vmem:[%s21 + $0x238] sm:$0xff]
    %v2889 = vld [vmem:[%s21 + $0x240] sm:$0xff]
    %v2890 = vld [vmem:[%s21 + $0x248] sm:$0xff]
    %v2891 = vld [vmem:[%s21 + $0x250] sm:$0xff]
    %v2892 = vld [vmem:[%s21 + $0x258] sm:$0xff]
    %v2893 = vld [vmem:[%s21 + $0x260] sm:$0xff]
    %v2894 = vld [vmem:[%s21 + $0x268] sm:$0xff]
    %v2895 = vld [vmem:[%s21 + $0x270] sm:$0xff]
    %v2896 = vld [vmem:[%s21 + $0x278] sm:$0xff]
    %v2897 = vld [vmem:[%s21 + $0x280] sm:$0xff]
    %v2898 = vld [vmem:[%s21 + $0x288] sm:$0xff]
    %v2899 = vld [vmem:[%s21 + $0x290] sm:$0xff]
    %v2900 = vld [vmem:[%s21 + $0x298] sm:$0xff]
    %v2901 = vld [vmem:[%s21 + $0x2a0] sm:$0xff]
    %v2902 = vld [vmem:[%s21 + $0x2a8] sm:$0xff]
    %v2903 = vld [vmem:[%s21 + $0x2b0] sm:$0xff]
    %v2904 = vld [vmem:[%s21 + $0x2b8] sm:$0xff]
    %v2905 = vld [vmem:[%s21 + $0x2c0] sm:$0xff]
    %v2906 = vld [vmem:[%s21 + $0x2c8] sm:$0xff]
    %v2907 = vld [vmem:[%s21 + $0x2d0] sm:$0xff]
    %v2908 = vld [vmem:[%s21 + $0x2d8] sm:$0xff]
    %v2909 = vld [vmem:[%s21 + $0x2e0] sm:$0xff]
    %v2910 = vld [vmem:[%s21 + $0x2e8] sm:$0xff]
    %v2911 = vld [vmem:[%s21 + $0x2f0] sm:$0xff]
    %v2912 = vld [vmem:[%s21 + $0x2f8] sm:$0xff]
    %v2913 = vld [vmem:[%s21 + $0x300] sm:$0xff]
    %v2914 = vld [vmem:[%s21 + $0x308] sm:$0xff]
    %v2915 = vld [vmem:[%s21 + $0x310] sm:$0xff]
    %v2916 = vld [vmem:[%s21 + $0x318] sm:$0xff]
    %v2917 = vld [vmem:[%s21 + $0x320] sm:$0xff]
    %v2918 = vld [vmem:[%s21 + $0x328] sm:$0xff]
    %v2919 = vld [vmem:[%s21 + $0x330] sm:$0xff]
    %v2920 = vld [vmem:[%s21 + $0x338] sm:$0xff]
    %v2921 = vld [vmem:[%s21 + $0x340] sm:$0xff]
    %v2922 = vld [vmem:[%s21 + $0x348] sm:$0xff]
    %v2923 = vld [vmem:[%s21 + $0x350] sm:$0xff]
    %v2924 = vld [vmem:[%s21 + $0x358] sm:$0xff]
    %v2925 = vld [vmem:[%s21 + $0x360] sm:$0xff]
    %v2926 = vld [vmem:[%s21 + $0x368] sm:$0xff]
    %v2927 = vld [vmem:[%s21 + $0x370] sm:$0xff]
    %v2928 = vld [vmem:[%s21 + $0x378] sm:$0xff]
    %v2929 = vld [vmem:[%s21 + $0x380] sm:$0xff]
    %v2930 = vld [vmem:[%s21 + $0x388] sm:$0xff]
    %v2931 = vld [vmem:[%s21 + $0x390] sm:$0xff]
    %v2932 = vld [vmem:[%s21 + $0x398] sm:$0xff]
    %v2933 = vld [vmem:[%s21 + $0x3a0] sm:$0xff]
    %v2934 = vld [vmem:[%s21 + $0x3a8] sm:$0xff]
    %v2935 = vld [vmem:[%s21 + $0x3b0] sm:$0xff]
    %v2936 = vld [vmem:[%s21 + $0x3b8] sm:$0xff]
    %v2937 = vld [vmem:[%s21 + $0x3c0] sm:$0xff]
    %v2938 = vld [vmem:[%s21 + $0x3c8] sm:$0xff]
    %v2939 = vld [vmem:[%s21 + $0x3d0] sm:$0xff]
    %v2940 = vld [vmem:[%s21 + $0x3d8] sm:$0xff]
    %v2941 = vld [vmem:[%s21 + $0x3e0] sm:$0xff]
    %v2942 = vld [vmem:[%s21 + $0x3e8] sm:$0xff]
    %v2943 = vld [vmem:[%s21 + $0x3f0] sm:$0xff]
    %v2944 = vld [vmem:[%s21 + $0x3f8] sm:$0xff]
    %v2945 = vld [vmem:[%s21 + $0x400] sm:$0xff]
    %v2946 = vld [vmem:[%s21 + $0x408] sm:$0xff]
    %v2947 = vld [vmem:[%s21 + $0x410] sm:$0xff]
    %v2948 = vld [vmem:[%s21 + $0x418] sm:$0xff]
    %v2949 = vld [vmem:[%s21 + $0x420] sm:$0xff]
    %v2950 = vld [vmem:[%s21 + $0x428] sm:$0xff]
    %v2951 = vld [vmem:[%s21 + $0x430] sm:$0xff]
    %v2952 = vld [vmem:[%s21 + $0x438] sm:$0xff]
    %v2953 = vld [vmem:[%s21 + $0x440] sm:$0xff]
    %v2954 = vld [vmem:[%s21 + $0x448] sm:$0xff]
    %v2955 = vld [vmem:[%s21 + $0x450] sm:$0xff]
    %v2956 = vld [vmem:[%s21 + $0x458] sm:$0xff]
    %v2957 = vld [vmem:[%s21 + $0x460] sm:$0xff]
    %v2958 = vld [vmem:[%s21 + $0x468] sm:$0xff]
    %v2959 = vld [vmem:[%s21 + $0x470] sm:$0xff]
    %v2960 = vld [vmem:[%s21 + $0x478] sm:$0xff]
    %v2961 = vld [vmem:[%s23] sm:$0x3f]
    %v2963 = vlaneseq
    %v2964 = vshrl.u32 %v2963, 7
    %v2965 = vsub.s32 0, %v2964
    %v2966 = vrot.slane %v2961, %v2965
    %v2967 = vlaneseq
    %v2968 = vshrl.u32 %v2967, 7
    %v2969 = vsub.s32 1, %v2968
    %v2970 = vrot.slane %v2961, %v2969
    %v2971 = vlaneseq
    %v2972 = vshrl.u32 %v2971, 7
    %v2973 = vsub.s32 2, %v2972
    %v2974 = vrot.slane %v2961, %v2973
    %v2975 = vlaneseq
    %v2976 = vshrl.u32 %v2975, 7
    %v2977 = vsub.s32 3, %v2976
    %v2978 = vrot.slane %v2961, %v2977
    %v2979 = vlaneseq
    %v2980 = vshrl.u32 %v2979, 7
    %v2981 = vsub.s32 4, %v2980
    %v2982 = vrot.slane %v2961, %v2981
    %v2983 = vlaneseq
    %v2984 = vshrl.u32 %v2983, 7
    %v2985 = vsub.s32 5, %v2984
    %v2986 = vrot.slane %v2961, %v2985
    %v3137 = vunpack.c.l.b16 %v2817
    %v3138 = vunpack.c.h.b16 %v2817
    %v3139 = vunpack.c.l.b16 %v2818
    %v3140 = vunpack.c.h.b16 %v2818
    %v3141 = vunpack.c.l.b16 %v2819
    %v3142 = vunpack.c.h.b16 %v2819
    %v3143 = vunpack.c.l.b16 %v2820
    %v3144 = vunpack.c.h.b16 %v2820
    %v3145 = vunpack.c.l.b16 %v2821
    %v3146 = vunpack.c.h.b16 %v2821
    %v3147 = vunpack.c.l.b16 %v2822
    %v3148 = vunpack.c.h.b16 %v2822
    %v3149 = vunpack.c.l.b16 %v2823
    %v3150 = vunpack.c.h.b16 %v2823
    %v3151 = vunpack.c.l.b16 %v2824
    %v3152 = vunpack.c.h.b16 %v2824
    %v3153 = vunpack.c.l.b16 %v2825
    %v3154 = vunpack.c.h.b16 %v2825
    %v3155 = vunpack.c.l.b16 %v2826
    %v3156 = vunpack.c.h.b16 %v2826
    %v3157 = vunpack.c.l.b16 %v2827
    %v3158 = vunpack.c.h.b16 %v2827
    %v3159 = vunpack.c.l.b16 %v2828
    %v3160 = vunpack.c.h.b16 %v2828
    %v3161 = vunpack.c.l.b16 %v2829
    %v3162 = vunpack.c.h.b16 %v2829
    %v3163 = vunpack.c.l.b16 %v2830
    %v3164 = vunpack.c.h.b16 %v2830
    %v3165 = vunpack.c.l.b16 %v2831
    %v3166 = vunpack.c.h.b16 %v2831
    %v3167 = vunpack.c.l.b16 %v2832
    %v3168 = vunpack.c.h.b16 %v2832
    %v3169 = vunpack.c.l.b16 %v2833
    %v3170 = vunpack.c.h.b16 %v2833
    %v3171 = vunpack.c.l.b16 %v2834
    %v3172 = vunpack.c.h.b16 %v2834
    %v3173 = vunpack.c.l.b16 %v2835
    %v3174 = vunpack.c.h.b16 %v2835
    %v3175 = vunpack.c.l.b16 %v2836
    %v3176 = vunpack.c.h.b16 %v2836
    %v3177 = vunpack.c.l.b16 %v2837
    %v3178 = vunpack.c.h.b16 %v2837
    %v3179 = vunpack.c.l.b16 %v2838
    %v3180 = vunpack.c.h.b16 %v2838
    %v3181 = vunpack.c.l.b16 %v2839
    %v3182 = vunpack.c.h.b16 %v2839
    %v3183 = vunpack.c.l.b16 %v2840
    %v3184 = vunpack.c.h.b16 %v2840
    %v3185 = vunpack.c.l.b16 %v2841
    %v3186 = vunpack.c.h.b16 %v2841
    %v3187 = vunpack.c.l.b16 %v2842
    %v3188 = vunpack.c.h.b16 %v2842
    %v3189 = vunpack.c.l.b16 %v2843
    %v3190 = vunpack.c.h.b16 %v2843
    %v3191 = vunpack.c.l.b16 %v2844
    %v3192 = vunpack.c.h.b16 %v2844
    %v3193 = vunpack.c.l.b16 %v2845
    %v3194 = vunpack.c.h.b16 %v2845
    %v3195 = vunpack.c.l.b16 %v2846
    %v3196 = vunpack.c.h.b16 %v2846
    %v3197 = vunpack.c.l.b16 %v2847
    %v3198 = vunpack.c.h.b16 %v2847
    %v3199 = vunpack.c.l.b16 %v2848
    %v3200 = vunpack.c.h.b16 %v2848
    %v3201 = vunpack.c.l.b16 %v2849
    %v3202 = vunpack.c.h.b16 %v2849
    %v3203 = vunpack.c.l.b16 %v2850
    %v3204 = vunpack.c.h.b16 %v2850
    %v3205 = vunpack.c.l.b16 %v2851
    %v3206 = vunpack.c.h.b16 %v2851
    %v3207 = vunpack.c.l.b16 %v2852
    %v3208 = vunpack.c.h.b16 %v2852
    %v3209 = vunpack.c.l.b16 %v2853
    %v3210 = vunpack.c.h.b16 %v2853
    %v3211 = vunpack.c.l.b16 %v2854
    %v3212 = vunpack.c.h.b16 %v2854
    %v3213 = vunpack.c.l.b16 %v2855
    %v3214 = vunpack.c.h.b16 %v2855
    %v3215 = vunpack.c.l.b16 %v2856
    %v3216 = vunpack.c.h.b16 %v2856
    %v3217 = vunpack.c.l.b16 %v2857
    %v3218 = vunpack.c.h.b16 %v2857
    %v3219 = vunpack.c.l.b16 %v2858
    %v3220 = vunpack.c.h.b16 %v2858
    %v3221 = vunpack.c.l.b16 %v2859
    %v3222 = vunpack.c.h.b16 %v2859
    %v3223 = vunpack.c.l.b16 %v2860
    %v3224 = vunpack.c.h.b16 %v2860
    %v3225 = vunpack.c.l.b16 %v2861
    %v3226 = vunpack.c.h.b16 %v2861
    %v3227 = vunpack.c.l.b16 %v2862
    %v3228 = vunpack.c.h.b16 %v2862
    %v3229 = vunpack.c.l.b16 %v2863
    %v3230 = vunpack.c.h.b16 %v2863
    %v3231 = vunpack.c.l.b16 %v2864
    %v3232 = vunpack.c.h.b16 %v2864
    %v3233 = vunpack.c.l.b16 %v2865
    %v3234 = vunpack.c.h.b16 %v2865
    %v3235 = vunpack.c.l.b16 %v2866
    %v3236 = vunpack.c.h.b16 %v2866
    %v3237 = vunpack.c.l.b16 %v2867
    %v3238 = vunpack.c.h.b16 %v2867
    %v3239 = vunpack.c.l.b16 %v2868
    %v3240 = vunpack.c.h.b16 %v2868
    %v3241 = vunpack.c.l.b16 %v2869
    %v3242 = vunpack.c.h.b16 %v2869
    %v3243 = vunpack.c.l.b16 %v2870
    %v3244 = vunpack.c.h.b16 %v2870
    %v3245 = vunpack.c.l.b16 %v2871
    %v3246 = vunpack.c.h.b16 %v2871
    %v3247 = vunpack.c.l.b16 %v2872
    %v3248 = vunpack.c.h.b16 %v2872
    %v3249 = vunpack.c.l.b16 %v2873
    %v3250 = vunpack.c.h.b16 %v2873
    %v3251 = vunpack.c.l.b16 %v2874
    %v3252 = vunpack.c.h.b16 %v2874
    %v3253 = vunpack.c.l.b16 %v2875
    %v3254 = vunpack.c.h.b16 %v2875
    %v3255 = vunpack.c.l.b16 %v2876
    %v3256 = vunpack.c.h.b16 %v2876
    %v3257 = vunpack.c.l.b16 %v2877
    %v3258 = vunpack.c.h.b16 %v2877
    %v3259 = vunpack.c.l.b16 %v2878
    %v3260 = vunpack.c.h.b16 %v2878
    %v3261 = vunpack.c.l.b16 %v2879
    %v3262 = vunpack.c.h.b16 %v2879
    %v3263 = vunpack.c.l.b16 %v2880
    %v3264 = vunpack.c.h.b16 %v2880
    %v3265 = vunpack.c.l.b16 %v2881
    %v3266 = vunpack.c.h.b16 %v2881
    %v3267 = vunpack.c.l.b16 %v2882
    %v3268 = vunpack.c.h.b16 %v2882
    %v3269 = vunpack.c.l.b16 %v2883
    %v3270 = vunpack.c.h.b16 %v2883
    %v3271 = vunpack.c.l.b16 %v2884
    %v3272 = vunpack.c.h.b16 %v2884
    %v3273 = vunpack.c.l.b16 %v2885
    %v3274 = vunpack.c.h.b16 %v2885
    %v3275 = vunpack.c.l.b16 %v2886
    %v3276 = vunpack.c.h.b16 %v2886
    %v3277 = vunpack.c.l.b16 %v2887
    %v3278 = vunpack.c.h.b16 %v2887
    %v3279 = vunpack.c.l.b16 %v2888
    %v3280 = vunpack.c.h.b16 %v2888
    %v3281 = vunpack.c.l.b16 %v2889
    %v3282 = vunpack.c.h.b16 %v2889
    %v3283 = vunpack.c.l.b16 %v2890
    %v3284 = vunpack.c.h.b16 %v2890
    %v3285 = vunpack.c.l.b16 %v2891
    %v3286 = vunpack.c.h.b16 %v2891
    %v3287 = vunpack.c.l.b16 %v2892
    %v3288 = vunpack.c.h.b16 %v2892
    %v3289 = vunpack.c.l.b16 %v2893
    %v3290 = vunpack.c.h.b16 %v2893
    %v3291 = vunpack.c.l.b16 %v2894
    %v3292 = vunpack.c.h.b16 %v2894
    %v3293 = vunpack.c.l.b16 %v2895
    %v3294 = vunpack.c.h.b16 %v2895
    %v3295 = vunpack.c.l.b16 %v2896
    %v3296 = vunpack.c.h.b16 %v2896
    %v3297 = vunpack.c.l.b16 %v2897
    %v3298 = vunpack.c.h.b16 %v2897
    %v3299 = vunpack.c.l.b16 %v2898
    %v3300 = vunpack.c.h.b16 %v2898
    %v3301 = vunpack.c.l.b16 %v2899
    %v3302 = vunpack.c.h.b16 %v2899
    %v3303 = vunpack.c.l.b16 %v2900
    %v3304 = vunpack.c.h.b16 %v2900
    %v3305 = vunpack.c.l.b16 %v2901
    %v3306 = vunpack.c.h.b16 %v2901
    %v3307 = vunpack.c.l.b16 %v2902
    %v3308 = vunpack.c.h.b16 %v2902
    %v3309 = vunpack.c.l.b16 %v2903
    %v3310 = vunpack.c.h.b16 %v2903
    %v3311 = vunpack.c.l.b16 %v2904
    %v3312 = vunpack.c.h.b16 %v2904
    %v3313 = vunpack.c.l.b16 %v2905
    %v3314 = vunpack.c.h.b16 %v2905
    %v3315 = vunpack.c.l.b16 %v2906
    %v3316 = vunpack.c.h.b16 %v2906
    %v3317 = vunpack.c.l.b16 %v2907
    %v3318 = vunpack.c.h.b16 %v2907
    %v3319 = vunpack.c.l.b16 %v2908
    %v3320 = vunpack.c.h.b16 %v2908
    %v3321 = vunpack.c.l.b16 %v2909
    %v3322 = vunpack.c.h.b16 %v2909
    %v3323 = vunpack.c.l.b16 %v2910
    %v3324 = vunpack.c.h.b16 %v2910
    %v3325 = vunpack.c.l.b16 %v2911
    %v3326 = vunpack.c.h.b16 %v2911
    %v3327 = vunpack.c.l.b16 %v2912
    %v3328 = vunpack.c.h.b16 %v2912
    %v3329 = vunpack.c.l.b16 %v2913
    %v3330 = vunpack.c.h.b16 %v2913
    %v3331 = vunpack.c.l.b16 %v2914
    %v3332 = vunpack.c.h.b16 %v2914
    %v3333 = vunpack.c.l.b16 %v2915
    %v3334 = vunpack.c.h.b16 %v2915
    %v3335 = vunpack.c.l.b16 %v2916
    %v3336 = vunpack.c.h.b16 %v2916
    %v3337 = vunpack.c.l.b16 %v2917
    %v3338 = vunpack.c.h.b16 %v2917
    %v3339 = vunpack.c.l.b16 %v2918
    %v3340 = vunpack.c.h.b16 %v2918
    %v3341 = vunpack.c.l.b16 %v2919
    %v3342 = vunpack.c.h.b16 %v2919
    %v3343 = vunpack.c.l.b16 %v2920
    %v3344 = vunpack.c.h.b16 %v2920
    %v3345 = vunpack.c.l.b16 %v2921
    %v3346 = vunpack.c.h.b16 %v2921
    %v3347 = vunpack.c.l.b16 %v2922
    %v3348 = vunpack.c.h.b16 %v2922
    %v3349 = vunpack.c.l.b16 %v2923
    %v3350 = vunpack.c.h.b16 %v2923
    %v3351 = vunpack.c.l.b16 %v2924
    %v3352 = vunpack.c.h.b16 %v2924
    %v3353 = vunpack.c.l.b16 %v2925
    %v3354 = vunpack.c.h.b16 %v2925
    %v3355 = vunpack.c.l.b16 %v2926
    %v3356 = vunpack.c.h.b16 %v2926
    %v3357 = vunpack.c.l.b16 %v2927
    %v3358 = vunpack.c.h.b16 %v2927
    %v3359 = vunpack.c.l.b16 %v2928
    %v3360 = vunpack.c.h.b16 %v2928
    %v3361 = vunpack.c.l.b16 %v2929
    %v3362 = vunpack.c.h.b16 %v2929
    %v3363 = vunpack.c.l.b16 %v2930
    %v3364 = vunpack.c.h.b16 %v2930
    %v3365 = vunpack.c.l.b16 %v2931
    %v3366 = vunpack.c.h.b16 %v2931
    %v3367 = vunpack.c.l.b16 %v2932
    %v3368 = vunpack.c.h.b16 %v2932
    %v3369 = vunpack.c.l.b16 %v2933
    %v3370 = vunpack.c.h.b16 %v2933
    %v3371 = vunpack.c.l.b16 %v2934
    %v3372 = vunpack.c.h.b16 %v2934
    %v3373 = vunpack.c.l.b16 %v2935
    %v3374 = vunpack.c.h.b16 %v2935
    %v3375 = vunpack.c.l.b16 %v2936
    %v3376 = vunpack.c.h.b16 %v2936
    %v3377 = vunpack.c.l.b16 %v2937
    %v3378 = vunpack.c.h.b16 %v2937
    %v3379 = vunpack.c.l.b16 %v2938
    %v3380 = vunpack.c.h.b16 %v2938
    %v3381 = vunpack.c.l.b16 %v2939
    %v3382 = vunpack.c.h.b16 %v2939
    %v3383 = vunpack.c.l.b16 %v2940
    %v3384 = vunpack.c.h.b16 %v2940
    %v3385 = vunpack.c.l.b16 %v2941
    %v3386 = vunpack.c.h.b16 %v2941
    %v3387 = vunpack.c.l.b16 %v2942
    %v3388 = vunpack.c.h.b16 %v2942
    %v3389 = vunpack.c.l.b16 %v2943
    %v3390 = vunpack.c.h.b16 %v2943
    %v3391 = vunpack.c.l.b16 %v2944
    %v3392 = vunpack.c.h.b16 %v2944
    %v3393 = vunpack.c.l.b16 %v2945
    %v3394 = vunpack.c.h.b16 %v2945
    %v3395 = vunpack.c.l.b16 %v2946
    %v3396 = vunpack.c.h.b16 %v2946
    %v3397 = vunpack.c.l.b16 %v2947
    %v3398 = vunpack.c.h.b16 %v2947
    %v3399 = vunpack.c.l.b16 %v2948
    %v3400 = vunpack.c.h.b16 %v2948
    %v3401 = vunpack.c.l.b16 %v2949
    %v3402 = vunpack.c.h.b16 %v2949
    %v3403 = vunpack.c.l.b16 %v2950
    %v3404 = vunpack.c.h.b16 %v2950
    %v3405 = vunpack.c.l.b16 %v2951
    %v3406 = vunpack.c.h.b16 %v2951
    %v3407 = vunpack.c.l.b16 %v2952
    %v3408 = vunpack.c.h.b16 %v2952
    %v3409 = vunpack.c.l.b16 %v2953
    %v3410 = vunpack.c.h.b16 %v2953
    %v3411 = vunpack.c.l.b16 %v2954
    %v3412 = vunpack.c.h.b16 %v2954
    %v3413 = vunpack.c.l.b16 %v2955
    %v3414 = vunpack.c.h.b16 %v2955
    %v3415 = vunpack.c.l.b16 %v2956
    %v3416 = vunpack.c.h.b16 %v2956
    %v3417 = vunpack.c.l.b16 %v2957
    %v3418 = vunpack.c.h.b16 %v2957
    %v3419 = vunpack.c.l.b16 %v2958
    %v3420 = vunpack.c.h.b16 %v2958
    %v3421 = vunpack.c.l.b16 %v2959
    %v3422 = vunpack.c.h.b16 %v2959
    %v3423 = vunpack.c.l.b16 %v2960
    %v3424 = vunpack.c.h.b16 %v2960
    %v3425 = vpack.c.b16 %v3143, %v3137
    %v3426 = vpack.c.b16 %v3144, %v3138
    %v3427 = vpack.c.b16 %v3145, %v3139
    %v3428 = vpack.c.b16 %v3146, %v3140
    %v3429 = vpack.c.b16 %v3147, %v3141
    %v3430 = vpack.c.b16 %v3148, %v3142
    %v3431 = vpack.c.b16 %v3155, %v3149
    %v3432 = vpack.c.b16 %v3156, %v3150
    %v3433 = vpack.c.b16 %v3157, %v3151
    %v3434 = vpack.c.b16 %v3158, %v3152
    %v3435 = vpack.c.b16 %v3159, %v3153
    %v3436 = vpack.c.b16 %v3160, %v3154
    %v3437 = vpack.c.b16 %v3167, %v3161
    %v3438 = vpack.c.b16 %v3168, %v3162
    %v3439 = vpack.c.b16 %v3169, %v3163
    %v3440 = vpack.c.b16 %v3170, %v3164
    %v3441 = vpack.c.b16 %v3171, %v3165
    %v3442 = vpack.c.b16 %v3172, %v3166
    %v3443 = vpack.c.b16 %v3179, %v3173
    %v3444 = vpack.c.b16 %v3180, %v3174
    %v3445 = vpack.c.b16 %v3181, %v3175
    %v3446 = vpack.c.b16 %v3182, %v3176
    %v3447 = vpack.c.b16 %v3183, %v3177
    %v3448 = vpack.c.b16 %v3184, %v3178
    %v3449 = vpack.c.b16 %v3191, %v3185
    %v3450 = vpack.c.b16 %v3192, %v3186
    %v3451 = vpack.c.b16 %v3193, %v3187
    %v3452 = vpack.c.b16 %v3194, %v3188
    %v3453 = vpack.c.b16 %v3195, %v3189
    %v3454 = vpack.c.b16 %v3196, %v3190
    %v3455 = vpack.c.b16 %v3203, %v3197
    %v3456 = vpack.c.b16 %v3204, %v3198
    %v3457 = vpack.c.b16 %v3205, %v3199
    %v3458 = vpack.c.b16 %v3206, %v3200
    %v3459 = vpack.c.b16 %v3207, %v3201
    %v3460 = vpack.c.b16 %v3208, %v3202
    %v3461 = vpack.c.b16 %v3215, %v3209
    %v3462 = vpack.c.b16 %v3216, %v3210
    %v3463 = vpack.c.b16 %v3217, %v3211
    %v3464 = vpack.c.b16 %v3218, %v3212
    %v3465 = vpack.c.b16 %v3219, %v3213
    %v3466 = vpack.c.b16 %v3220, %v3214
    %v3467 = vpack.c.b16 %v3227, %v3221
    %v3468 = vpack.c.b16 %v3228, %v3222
    %v3469 = vpack.c.b16 %v3229, %v3223
    %v3470 = vpack.c.b16 %v3230, %v3224
    %v3471 = vpack.c.b16 %v3231, %v3225
    %v3472 = vpack.c.b16 %v3232, %v3226
    %v3473 = vpack.c.b16 %v3239, %v3233
    %v3474 = vpack.c.b16 %v3240, %v3234
    %v3475 = vpack.c.b16 %v3241, %v3235
    %v3476 = vpack.c.b16 %v3242, %v3236
    %v3477 = vpack.c.b16 %v3243, %v3237
    %v3478 = vpack.c.b16 %v3244, %v3238
    %v3479 = vpack.c.b16 %v3251, %v3245
    %v3480 = vpack.c.b16 %v3252, %v3246
    %v3481 = vpack.c.b16 %v3253, %v3247
    %v3482 = vpack.c.b16 %v3254, %v3248
    %v3483 = vpack.c.b16 %v3255, %v3249
    %v3484 = vpack.c.b16 %v3256, %v3250
    %v3485 = vpack.c.b16 %v3263, %v3257
    %v3486 = vpack.c.b16 %v3264, %v3258
    %v3487 = vpack.c.b16 %v3265, %v3259
    %v3488 = vpack.c.b16 %v3266, %v3260
    %v3489 = vpack.c.b16 %v3267, %v3261
    %v3490 = vpack.c.b16 %v3268, %v3262
    %v3491 = vpack.c.b16 %v3275, %v3269
    %v3492 = vpack.c.b16 %v3276, %v3270
    %v3493 = vpack.c.b16 %v3277, %v3271
    %v3494 = vpack.c.b16 %v3278, %v3272
    %v3495 = vpack.c.b16 %v3279, %v3273
    %v3496 = vpack.c.b16 %v3280, %v3274
    %v3497 = vpack.c.b16 %v3287, %v3281
    %v3498 = vpack.c.b16 %v3288, %v3282
    %v3499 = vpack.c.b16 %v3289, %v3283
    %v3500 = vpack.c.b16 %v3290, %v3284
    %v3501 = vpack.c.b16 %v3291, %v3285
    %v3502 = vpack.c.b16 %v3292, %v3286
    %v3503 = vpack.c.b16 %v3299, %v3293
    %v3504 = vpack.c.b16 %v3300, %v3294
    %v3505 = vpack.c.b16 %v3301, %v3295
    %v3506 = vpack.c.b16 %v3302, %v3296
    %v3507 = vpack.c.b16 %v3303, %v3297
    %v3508 = vpack.c.b16 %v3304, %v3298
    %v3509 = vpack.c.b16 %v3311, %v3305
    %v3510 = vpack.c.b16 %v3312, %v3306
    %v3511 = vpack.c.b16 %v3313, %v3307
    %v3512 = vpack.c.b16 %v3314, %v3308
    %v3513 = vpack.c.b16 %v3315, %v3309
    %v3514 = vpack.c.b16 %v3316, %v3310
    %v3515 = vpack.c.b16 %v3323, %v3317
    %v3516 = vpack.c.b16 %v3324, %v3318
    %v3517 = vpack.c.b16 %v3325, %v3319
    %v3518 = vpack.c.b16 %v3326, %v3320
    %v3519 = vpack.c.b16 %v3327, %v3321
    %v3520 = vpack.c.b16 %v3328, %v3322
    %v3521 = vpack.c.b16 %v3335, %v3329
    %v3522 = vpack.c.b16 %v3336, %v3330
    %v3523 = vpack.c.b16 %v3337, %v3331
    %v3524 = vpack.c.b16 %v3338, %v3332
    %v3525 = vpack.c.b16 %v3339, %v3333
    %v3526 = vpack.c.b16 %v3340, %v3334
    %v3527 = vpack.c.b16 %v3347, %v3341
    %v3528 = vpack.c.b16 %v3348, %v3342
    %v3529 = vpack.c.b16 %v3349, %v3343
    %v3530 = vpack.c.b16 %v3350, %v3344
    %v3531 = vpack.c.b16 %v3351, %v3345
    %v3532 = vpack.c.b16 %v3352, %v3346
    %v3533 = vpack.c.b16 %v3359, %v3353
    %v3534 = vpack.c.b16 %v3360, %v3354
    %v3535 = vpack.c.b16 %v3361, %v3355
    %v3536 = vpack.c.b16 %v3362, %v3356
    %v3537 = vpack.c.b16 %v3363, %v3357
    %v3538 = vpack.c.b16 %v3364, %v3358
    %v3539 = vpack.c.b16 %v3371, %v3365
    %v3540 = vpack.c.b16 %v3372, %v3366
    %v3541 = vpack.c.b16 %v3373, %v3367
    %v3542 = vpack.c.b16 %v3374, %v3368
    %v3543 = vpack.c.b16 %v3375, %v3369
    %v3544 = vpack.c.b16 %v3376, %v3370
    %v3545 = vpack.c.b16 %v3383, %v3377
    %v3546 = vpack.c.b16 %v3384, %v3378
    %v3547 = vpack.c.b16 %v3385, %v3379
    %v3548 = vpack.c.b16 %v3386, %v3380
    %v3549 = vpack.c.b16 %v3387, %v3381
    %v3550 = vpack.c.b16 %v3388, %v3382
    %v3551 = vpack.c.b16 %v3395, %v3389
    %v3552 = vpack.c.b16 %v3396, %v3390
    %v3553 = vpack.c.b16 %v3397, %v3391
    %v3554 = vpack.c.b16 %v3398, %v3392
    %v3555 = vpack.c.b16 %v3399, %v3393
    %v3556 = vpack.c.b16 %v3400, %v3394
    %v3557 = vpack.c.b16 %v3407, %v3401
    %v3558 = vpack.c.b16 %v3408, %v3402
    %v3559 = vpack.c.b16 %v3409, %v3403
    %v3560 = vpack.c.b16 %v3410, %v3404
    %v3561 = vpack.c.b16 %v3411, %v3405
    %v3562 = vpack.c.b16 %v3412, %v3406
    %v3563 = vpack.c.b16 %v3419, %v3413
    %v3564 = vpack.c.b16 %v3420, %v3414
    %v3565 = vpack.c.b16 %v3421, %v3415
    %v3566 = vpack.c.b16 %v3422, %v3416
    %v3567 = vpack.c.b16 %v3423, %v3417
    %v3568 = vpack.c.b16 %v3424, %v3418
    %3713 = vmatprep.subr.bf16.mxu0 %v3468
    %3714 = vmatpush1.bf16.msra.mxu0 %v3467
    %3715 = vmatprep.subr.bf16.mxu0 %v3462
    %3716 = vmatpush1.bf16.msra.mxu0 %v3461
    %3717 = vmatprep.subr.bf16.mxu0 %v3456
    %3718 = vmatpush1.bf16.msra.mxu0 %v3455
    %3719 = vmatprep.subr.bf16.mxu0 %v3450
    %3720 = vmatpush1.bf16.msra.mxu0 %v3449
    %3721 = vmatprep.subr.bf16.mxu0 %v3444
    %3722 = vmatpush1.bf16.msra.mxu0 %v3443
    %3723 = vmatprep.subr.bf16.mxu0 %v3438
    %3724 = vmatpush1.bf16.msra.mxu0 %v3437
    %3725 = vmatprep.subr.bf16.mxu0 %v3432
    %3726 = vmatpush1.bf16.msra.mxu0 %v3431
    %3727 = vmatprep.subr.bf16.mxu0 %v3426
    %3728 = vmatpush1.bf16.msra.mxu0 %v3425
    %3729 = vmatprep.subr.bf16.mxu0 %v3516
    %3730 = vmatpush2.bf16.msra.mxu0 %v3515
    %3731 = vmatprep.subr.bf16.mxu0 %v3510
    %3732 = vmatpush2.bf16.msra.mxu0 %v3509
    %3733 = vmatprep.subr.bf16.mxu0 %v3504
    %3734 = vmatpush2.bf16.msra.mxu0 %v3503
    %3735 = vmatprep.subr.bf16.mxu0 %v3498
    %3736 = vmatpush2.bf16.msra.mxu0 %v3497
    %3737 = vmatprep.subr.bf16.mxu0 %v3492
    %3738 = vmatpush2.bf16.msra.mxu0 %v3491
    %3739 = vmatprep.subr.bf16.mxu0 %v3486
    %3740 = vmatpush2.bf16.msra.mxu0 %v3485
    %3741 = vmatprep.subr.bf16.mxu0 %v3480
    %3742 = vmatpush2.bf16.msra.mxu0 %v3479
    %3743 = vmatprep.subr.bf16.mxu0 %v3474
    %3744 = vmatpush2.bf16.msra.mxu0 %v3473
    %3745 = vmatprep.mubr.bf16.mxu0 %v2815
    %3746 = vmatmul.mubr.bf16.gmra.mxu0 %v2814
    %v3747 = vpop.f32.mrf.mxu0
    %v3748 = vadd.f32 %v2966, %v3747
    %v3749 = vpop.f32.mrf.mxu0
    %v3750 = vadd.f32 %v2970, %v3749
    %v3751 = vpop.f32.mrf.mxu0
    %v3752 = vpop.f32.mrf.mxu0
    %3753 = vdwg.mxu0
    %3754 = vmatprep.subr.bf16.mxu0 %v3564
    %3755 = vmatpush1.bf16.msra.mxu0 %v3563
    %3756 = vmatprep.subr.bf16.mxu0 %v3558
    %3757 = vmatpush1.bf16.msra.mxu0 %v3557
    %3758 = vmatprep.subr.bf16.mxu0 %v3552
    %3759 = vmatpush1.bf16.msra.mxu0 %v3551
    %3760 = vmatprep.subr.bf16.mxu0 %v3546
    %3761 = vmatpush1.bf16.msra.mxu0 %v3545
    %3762 = vmatprep.subr.bf16.mxu0 %v3540
    %3763 = vmatpush1.bf16.msra.mxu0 %v3539
    %3764 = vmatprep.subr.bf16.mxu0 %v3534
    %3765 = vmatpush1.bf16.msra.mxu0 %v3533
    %3766 = vmatprep.subr.bf16.mxu0 %v3528
    %3767 = vmatpush1.bf16.msra.mxu0 %v3527
    %3768 = vmatprep.subr.bf16.mxu0 %v3522
    %3769 = vmatpush1.bf16.msra.mxu0 %v3521
    %3770 = vmatprep.subr.bf16.mxu0 0
    %3771 = vmatpush2.bf16.msra.mxu0 0
    %3772 = vmatprep.subr.bf16.mxu0 0
    %3773 = vmatpush2.bf16.msra.mxu0 0
    %3774 = vmatprep.subr.bf16.mxu0 0
    %3775 = vmatpush2.bf16.msra.mxu0 0
    %3776 = vmatprep.subr.bf16.mxu0 0
    %3777 = vmatpush2.bf16.msra.mxu0 0
    %3778 = vmatprep.subr.bf16.mxu0 0
    %3779 = vmatpush2.bf16.msra.mxu0 0
    %3780 = vmatprep.subr.bf16.mxu0 0
    %3781 = vmatpush2.bf16.msra.mxu0 0
    %3782 = vmatprep.subr.bf16.mxu0 0
    %3783 = vmatpush2.bf16.msra.mxu0 0
    %3784 = vmatprep.subr.bf16.mxu0 0
    %3785 = vmatpush2.bf16.msra.mxu0 0
    %3786 = vmatprep.mubr.bf16.mxu0 0
    %3787 = vmatmul.mubr.bf16.gmra.mxu0 %v2816
    %v3788 = vpop.f32.mrf.mxu0
    %v3789 = vadd.f32 %v3748, %v3788
    %v3790 = vpop.f32.mrf.mxu0
    %v3791 = vadd.f32 %v3750, %v3790
    %v3792 = vpop.f32.mrf.mxu0
    %v3793 = vpop.f32.mrf.mxu0
    %3794 = vdwg.mxu0
    %3795 = vmatprep.subr.bf16.mxu0 %v3470
    %3796 = vmatpush1.bf16.msra.mxu0 %v3469
    %3797 = vmatprep.subr.bf16.mxu0 %v3464
    %3798 = vmatpush1.bf16.msra.mxu0 %v3463
    %3799 = vmatprep.subr.bf16.mxu0 %v3458
    %3800 = vmatpush1.bf16.msra.mxu0 %v3457
    %3801 = vmatprep.subr.bf16.mxu0 %v3452
    %3802 = vmatpush1.bf16.msra.mxu0 %v3451
    %3803 = vmatprep.subr.bf16.mxu0 %v3446
    %3804 = vmatpush1.bf16.msra.mxu0 %v3445
    %3805 = vmatprep.subr.bf16.mxu0 %v3440
    %3806 = vmatpush1.bf16.msra.mxu0 %v3439
    %3807 = vmatprep.subr.bf16.mxu0 %v3434
    %3808 = vmatpush1.bf16.msra.mxu0 %v3433
    %3809 = vmatprep.subr.bf16.mxu0 %v3428
    %3810 = vmatpush1.bf16.msra.mxu0 %v3427
    %3811 = vmatprep.subr.bf16.mxu0 %v3518
    %3812 = vmatpush2.bf16.msra.mxu0 %v3517
    %3813 = vmatprep.subr.bf16.mxu0 %v3512
    %3814 = vmatpush2.bf16.msra.mxu0 %v3511
    %3815 = vmatprep.subr.bf16.mxu0 %v3506
    %3816 = vmatpush2.bf16.msra.mxu0 %v3505
    %3817 = vmatprep.subr.bf16.mxu0 %v3500
    %3818 = vmatpush2.bf16.msra.mxu0 %v3499
    %3819 = vmatprep.subr.bf16.mxu0 %v3494
    %3820 = vmatpush2.bf16.msra.mxu0 %v3493
    %3821 = vmatprep.subr.bf16.mxu0 %v3488
    %3822 = vmatpush2.bf16.msra.mxu0 %v3487
    %3823 = vmatprep.subr.bf16.mxu0 %v3482
    %3824 = vmatpush2.bf16.msra.mxu0 %v3481
    %3825 = vmatprep.subr.bf16.mxu0 %v3476
    %3826 = vmatpush2.bf16.msra.mxu0 %v3475
    %3827 = vmatprep.mubr.bf16.mxu0 %v2815
    %3828 = vmatmul.mubr.bf16.gmra.mxu0 %v2814
    %v3829 = vpop.f32.mrf.mxu0
    %v3830 = vadd.f32 %v2974, %v3829
    %v3831 = vpop.f32.mrf.mxu0
    %v3832 = vadd.f32 %v2978, %v3831
    %v3833 = vpop.f32.mrf.mxu0
    %v3834 = vpop.f32.mrf.mxu0
    %3835 = vdwg.mxu0
    %3836 = vmatprep.subr.bf16.mxu0 %v3566
    %3837 = vmatpush1.bf16.msra.mxu0 %v3565
    %3838 = vmatprep.subr.bf16.mxu0 %v3560
    %3839 = vmatpush1.bf16.msra.mxu0 %v3559
    %3840 = vmatprep.subr.bf16.mxu0 %v3554
    %3841 = vmatpush1.bf16.msra.mxu0 %v3553
    %3842 = vmatprep.subr.bf16.mxu0 %v3548
    %3843 = vmatpush1.bf16.msra.mxu0 %v3547
    %3844 = vmatprep.subr.bf16.mxu0 %v3542
    %3845 = vmatpush1.bf16.msra.mxu0 %v3541
    %3846 = vmatprep.subr.bf16.mxu0 %v3536
    %3847 = vmatpush1.bf16.msra.mxu0 %v3535
    %3848 = vmatprep.subr.bf16.mxu0 %v3530
    %3849 = vmatpush1.bf16.msra.mxu0 %v3529
    %3850 = vmatprep.subr.bf16.mxu0 %v3524
    %3851 = vmatpush1.bf16.msra.mxu0 %v3523
    %3852 = vmatprep.subr.bf16.mxu0 0
    %3853 = vmatpush2.bf16.msra.mxu0 0
    %3854 = vmatprep.subr.bf16.mxu0 0
    %3855 = vmatpush2.bf16.msra.mxu0 0
    %3856 = vmatprep.subr.bf16.mxu0 0
    %3857 = vmatpush2.bf16.msra.mxu0 0
    %3858 = vmatprep.subr.bf16.mxu0 0
    %3859 = vmatpush2.bf16.msra.mxu0 0
    %3860 = vmatprep.subr.bf16.mxu0 0
    %3861 = vmatpush2.bf16.msra.mxu0 0
    %3862 = vmatprep.subr.bf16.mxu0 0
    %3863 = vmatpush2.bf16.msra.mxu0 0
    %3864 = vmatprep.subr.bf16.mxu0 0
    %3865 = vmatpush2.bf16.msra.mxu0 0
    %3866 = vmatprep.subr.bf16.mxu0 0
    %3867 = vmatpush2.bf16.msra.mxu0 0
    %3868 = vmatprep.mubr.bf16.mxu0 0
    %3869 = vmatmul.mubr.bf16.gmra.mxu0 %v2816
    %v3870 = vpop.f32.mrf.mxu0
    %v3871 = vadd.f32 %v3830, %v3870
    %v3872 = vpop.f32.mrf.mxu0
    %v3873 = vadd.f32 %v3832, %v3872
    %v3874 = vpop.f32.mrf.mxu0
    %v3875 = vpop.f32.mrf.mxu0
    %3876 = vdwg.mxu0
    %3877 = vmatprep.subr.bf16.mxu0 %v3472
    %3878 = vmatpush1.bf16.msra.mxu0 %v3471
    %3879 = vmatprep.subr.bf16.mxu0 %v3466
    %3880 = vmatpush1.bf16.msra.mxu0 %v3465
    %3881 = vmatprep.subr.bf16.mxu0 %v3460
    %3882 = vmatpush1.bf16.msra.mxu0 %v3459
    %3883 = vmatprep.subr.bf16.mxu0 %v3454
    %3884 = vmatpush1.bf16.msra.mxu0 %v3453
    %3885 = vmatprep.subr.bf16.mxu0 %v3448
    %3886 = vmatpush1.bf16.msra.mxu0 %v3447
    %3887 = vmatprep.subr.bf16.mxu0 %v3442
    %3888 = vmatpush1.bf16.msra.mxu0 %v3441
    %3889 = vmatprep.subr.bf16.mxu0 %v3436
    %3890 = vmatpush1.bf16.msra.mxu0 %v3435
    %3891 = vmatprep.subr.bf16.mxu0 %v3430
    %3892 = vmatpush1.bf16.msra.mxu0 %v3429
    %3893 = vmatprep.subr.bf16.mxu0 %v3520
    %3894 = vmatpush2.bf16.msra.mxu0 %v3519
    %3895 = vmatprep.subr.bf16.mxu0 %v3514
    %3896 = vmatpush2.bf16.msra.mxu0 %v3513
    %3897 = vmatprep.subr.bf16.mxu0 %v3508
    %3898 = vmatpush2.bf16.msra.mxu0 %v3507
    %3899 = vmatprep.subr.bf16.mxu0 %v3502
    %3900 = vmatpush2.bf16.msra.mxu0 %v3501
    %3901 = vmatprep.subr.bf16.mxu0 %v3496
    %3902 = vmatpush2.bf16.msra.mxu0 %v3495
    %3903 = vmatprep.subr.bf16.mxu0 %v3490
    %3904 = vmatpush2.bf16.msra.mxu0 %v3489
    %3905 = vmatprep.subr.bf16.mxu0 %v3484
    %3906 = vmatpush2.bf16.msra.mxu0 %v3483
    %3907 = vmatprep.subr.bf16.mxu0 %v3478
    %3908 = vmatpush2.bf16.msra.mxu0 %v3477
    %3909 = vmatprep.mubr.bf16.mxu0 %v2815
    %3910 = vmatmul.mubr.bf16.gmra.mxu0 %v2814
    %v3911 = vpop.f32.mrf.mxu0
    %v3912 = vadd.f32 %v2982, %v3911
    %v3913 = vpop.f32.mrf.mxu0
    %v3914 = vadd.f32 %v2986, %v3913
    %v3915 = vpop.f32.mrf.mxu0
    %v3916 = vpop.f32.mrf.mxu0
    %3917 = vdwg.mxu0
    %3918 = vmatprep.subr.bf16.mxu0 %v3568
    %3919 = vmatpush1.bf16.msra.mxu0 %v3567
    %3920 = vmatprep.subr.bf16.mxu0 %v3562
    %3921 = vmatpush1.bf16.msra.mxu0 %v3561
    %3922 = vmatprep.subr.bf16.mxu0 %v3556
    %3923 = vmatpush1.bf16.msra.mxu0 %v3555
    %3924 = vmatprep.subr.bf16.mxu0 %v3550
    %3925 = vmatpush1.bf16.msra.mxu0 %v3549
    %3926 = vmatprep.subr.bf16.mxu0 %v3544
    %3927 = vmatpush1.bf16.msra.mxu0 %v3543
    %3928 = vmatprep.subr.bf16.mxu0 %v3538
    %3929 = vmatpush1.bf16.msra.mxu0 %v3537
    %3930 = vmatprep.subr.bf16.mxu0 %v3532
    %3931 = vmatpush1.bf16.msra.mxu0 %v3531
    %3932 = vmatprep.subr.bf16.mxu0 %v3526
    %3933 = vmatpush1.bf16.msra.mxu0 %v3525
    %3934 = vmatprep.subr.bf16.mxu0 0
    %3935 = vmatpush2.bf16.msra.mxu0 0
    %3936 = vmatprep.subr.bf16.mxu0 0
    %3937 = vmatpush2.bf16.msra.mxu0 0
    %3938 = vmatprep.subr.bf16.mxu0 0
    %3939 = vmatpush2.bf16.msra.mxu0 0
    %3940 = vmatprep.subr.bf16.mxu0 0
    %3941 = vmatpush2.bf16.msra.mxu0 0
    %3942 = vmatprep.subr.bf16.mxu0 0
    %3943 = vmatpush2.bf16.msra.mxu0 0
    %3944 = vmatprep.subr.bf16.mxu0 0
    %3945 = vmatpush2.bf16.msra.mxu0 0
    %3946 = vmatprep.subr.bf16.mxu0 0
    %3947 = vmatpush2.bf16.msra.mxu0 0
    %3948 = vmatprep.subr.bf16.mxu0 0
    %3949 = vmatpush2.bf16.msra.mxu0 0
    %3950 = vmatprep.mubr.bf16.mxu0 0
    %3951 = vmatmul.mubr.bf16.gmra.mxu0 %v2816
    %v3952 = vpop.f32.mrf.mxu0
    %v3953 = vadd.f32 %v3912, %v3952
    %v3954 = vpop.f32.mrf.mxu0
    %v3955 = vadd.f32 %v3914, %v3954
    %v3956 = vpop.f32.mrf.mxu0
    %v3957 = vpop.f32.mrf.mxu0
    %3958 = vdwg.mxu0
    %v3960 = vrot.slane %v2644, 6
    %3961 = vrot.lane.b32.xlu0 %v3960, 64
    %v3962 = vpop.permute.xlu0 %3961
    %v3965 = vrot.slane %v2646, 4
    %v3967 = vrot.slane %v2646, 2
    %3968 = vrot.lane.b32.xlu0 %v3967, 64
    %v3969 = vpop.permute.xlu0 %3968
    %v3971 = vsel %vm1174, %v2644, %v3962
    %v3972 = vsel %vm1178, %v3971, %v3965
    %v3973 = vsel %vm497, %v3972, %v3969
    %v3975 = vrot.slane %v2726, 6
    %3976 = vrot.lane.b32.xlu0 %v3975, 64
    %v3977 = vpop.permute.xlu0 %3976
    %v3980 = vrot.slane %v2728, 4
    %v3982 = vrot.slane %v2728, 2
    %3983 = vrot.lane.b32.xlu0 %v3982, 64
    %v3984 = vpop.permute.xlu0 %3983
    %v3986 = vsel %vm1174, %v2726, %v3977
    %v3987 = vsel %vm1178, %v3986, %v3980
    %v3988 = vsel %vm497, %v3987, %v3984
    %v3990 = vrot.slane %v2808, 6
    %3991 = vrot.lane.b32.xlu0 %v3990, 64
    %v3992 = vpop.permute.xlu0 %3991
    %v3995 = vrot.slane %v2810, 4
    %v3997 = vrot.slane %v2810, 2
    %3998 = vrot.lane.b32.xlu0 %v3997, 64
    %v3999 = vpop.permute.xlu0 %3998
    %v4001 = vsel %vm1174, %v2808, %v3992
    %v4002 = vsel %vm1178, %v4001, %v3995
    %v4003 = vsel %vm497, %v4002, %v3999
    %v4005 = vrot.slane %v3789, 6
    %4006 = vrot.lane.b32.xlu0 %v4005, 64
    %v4007 = vpop.permute.xlu0 %4006
    %v4010 = vrot.slane %v3791, 4
    %v4012 = vrot.slane %v3791, 2
    %4013 = vrot.lane.b32.xlu0 %v4012, 64
    %v4014 = vpop.permute.xlu0 %4013
    %v4016 = vsel %vm1174, %v3789, %v4007
    %v4017 = vsel %vm1178, %v4016, %v4010
    %v4018 = vsel %vm497, %v4017, %v4014
    %v4020 = vrot.slane %v3871, 6
    %4021 = vrot.lane.b32.xlu0 %v4020, 64
    %v4022 = vpop.permute.xlu0 %4021
    %v4025 = vrot.slane %v3873, 4
    %v4027 = vrot.slane %v3873, 2
    %4028 = vrot.lane.b32.xlu0 %v4027, 64
    %v4029 = vpop.permute.xlu0 %4028
    %v4031 = vsel %vm1174, %v3871, %v4022
    %v4032 = vsel %vm1178, %v4031, %v4025
    %v4033 = vsel %vm497, %v4032, %v4029
    %v4035 = vrot.slane %v3953, 6
    %4036 = vrot.lane.b32.xlu0 %v4035, 64
    %v4037 = vpop.permute.xlu0 %4036
    %v4040 = vrot.slane %v3955, 4
    %v4042 = vrot.slane %v3955, 2
    %4043 = vrot.lane.b32.xlu0 %v4042, 64
    %v4044 = vpop.permute.xlu0 %4043
    %v4046 = vsel %vm1174, %v3953, %v4037
    %v4047 = vsel %vm1178, %v4046, %v4040
    %v4048 = vsel %vm497, %v4047, %v4044
    %v4049 = vlaneseq
    %v4050 = vshrl.u32 %v4049, 7
    %v4051 = vlaneseq
    %v4052 = vand.u32 %v4051, 127
    %vm4053 = vcmp.lt.s32.totalorder %v4050, 0
    %v4054 = vsub.s32 0, %v4050
    %v4055 = vsel %vm4053, %v4054, %v4050
    %v4056 = vshrl.u32 %v4055, 1
    %v4057 = vand.u32 %v4055, 1
    %v4058 = vsub.s32 0, %v4057
    %v4059 = vsel %vm4053, %v4058, %v4057
    %vm4060 = vcmp.ne.s32.totalorder %v4059, 0
    %vm4061 = vcmp.lt.s32.totalorder %v4059, 0
    %vm4062 = vmand %vm4061, %vm4060
    %v4063 = vadd.s32 %v4059, 2
    %v4064 = vsel %vm4062, %v4063, %v4059
    %vm4065 = vcmp.lt.s32.totalorder %v4052, 0
    %v4066 = vsub.s32 0, %v4052
    %v4067 = vsel %vm4065, %v4066, %v4052
    %v4068 = vshrl.u32 %v4067, 1
    %v4069 = vand.u32 %v4067, 1
    %v4070 = vsub.s32 0, %v4069
    %v4071 = vsel %vm4065, %v4070, %v4069
    %vm4072 = vcmp.ne.s32.totalorder %v4071, 0
    %vm4073 = vcmp.lt.s32.totalorder %v4071, 0
    %vm4074 = vmand %vm4073, %vm4072
    %v4075 = vadd.s32 %v4071, 2
    %v4076 = vsel %vm4074, %v4075, %v4071
    %vm4077 = vcmp.eq.s32.totalorder %v4064, %v4076
    %vm4078 = vcmask 523264
    %v4080 = vsel %vm4078, %v3973, 0
    %v4083 = vsel %vm4078, %v4033, 0
    %4085 = vmatprep.subr.mxu0 0.0
    %4086 = vmatpush1.xpose.msra.mxu0 0.0
    %4087 = vmatprep.subr.mxu0 0.0
    %4088 = vmatpush1.xpose.msra.mxu0 0.0
    %4089 = vmatprep.subr.mxu0 0.0
    %4090 = vmatpush1.xpose.msra.mxu0 0.0
    %4091 = vmatprep.subr.mxu0 0.0
    %4092 = vmatpush1.xpose.msra.mxu0 0.0
    %4093 = vmatprep.subr.mxu0 0.0
    %4094 = vmatpush1.xpose.msra.mxu0 0.0
    %4095 = vmatprep.subr.mxu0 0.0
    %4096 = vmatpush1.xpose.msra.mxu0 0.0
    %4097 = vmatprep.subr.mxu0 0.0
    %4098 = vmatpush1.xpose.msra.mxu0 0.0
    %4099 = vmatprep.subr.mxu0 0.0
    %4100 = vmatpush1.xpose.msra.mxu0 0.0
    %4101 = vmatprep.subr.mxu0 0.0
    %4102 = vmatpush1.xpose.msra.mxu0 0.0
    %4103 = vmatprep.subr.mxu0 0.0
    %4104 = vmatpush1.xpose.msra.mxu0 0.0
    %4105 = vmatprep.subr.mxu0 0.0
    %4106 = vmatpush1.xpose.msra.mxu0 0.0
    %4107 = vmatprep.subr.mxu0 0.0
    %4108 = vmatpush1.xpose.msra.mxu0 0.0
    %4109 = vmatprep.subr.mxu0 0.0
    %4110 = vmatpush1.xpose.msra.mxu0 0.0
    %4111 = vmatprep.subr.mxu0 0.0
    %4112 = vmatpush1.xpose.msra.mxu0 0.0
    %4113 = vmatprep.subr.mxu0 0.0
    %4114 = vmatpush1.xpose.msra.mxu0 0.0
    %4115 = vmatprep.subr.mxu0 0.0
    %4116 = vmatpush1.xpose.msra.mxu0 %v4083
    %4117 = vmatprep.subr.mxu0 0.0
    %4118 = vmatpush2.xpose.msra.mxu0 0.0
    %4119 = vmatprep.subr.mxu0 0.0
    %4120 = vmatpush2.xpose.msra.mxu0 0.0
    %4121 = vmatprep.subr.mxu0 0.0
    %4122 = vmatpush2.xpose.msra.mxu0 0.0
    %4123 = vmatprep.subr.mxu0 0.0
    %4124 = vmatpush2.xpose.msra.mxu0 0.0
    %4125 = vmatprep.subr.mxu0 0.0
    %4126 = vmatpush2.xpose.msra.mxu0 0.0
    %4127 = vmatprep.subr.mxu0 0.0
    %4128 = vmatpush2.xpose.msra.mxu0 0.0
    %4129 = vmatprep.subr.mxu0 0.0
    %4130 = vmatpush2.xpose.msra.mxu0 0.0
    %4131 = vmatprep.subr.mxu0 0.0
    %4132 = vmatpush2.xpose.msra.mxu0 0.0
    %4133 = vmatprep.subr.mxu0 0.0
    %4134 = vmatpush2.xpose.msra.mxu0 0.0
    %4135 = vmatprep.subr.mxu0 0.0
    %4136 = vmatpush2.xpose.msra.mxu0 0.0
    %4137 = vmatprep.subr.mxu0 0.0
    %4138 = vmatpush2.xpose.msra.mxu0 0.0
    %4139 = vmatprep.subr.mxu0 0.0
    %4140 = vmatpush2.xpose.msra.mxu0 0.0
    %4141 = vmatprep.subr.mxu0 0.0
    %4142 = vmatpush2.xpose.msra.mxu0 0.0
    %4143 = vmatprep.subr.mxu0 0.0
    %4144 = vmatpush2.xpose.msra.mxu0 0.0
    %4145 = vmatprep.subr.mxu0 0.0
    %4146 = vmatpush2.xpose.msra.mxu0 0.0
    %4147 = vmatprep.subr.mxu0 0.0
    %4148 = vmatpush2.xpose.msra.mxu0 0.0
    %4149 = vmatprep.mubr.f32.mxu0 0.0
    %4150 = vmatmul.mubr.f32.gmra.mxu0 %v4080
    %v4151 = vpop.f32.mrf.mxu0
    %v4152 = vadd.f32 0.0, %v4151
    %v4153 = vpop.f32.mrf.mxu0
    %4154 = vdwg.mxu0
    %v4155 = vmul.f32 %v4152, 0.125
    %v4156 = vsel %vm4077, %v4155, -1e+30
    %vm4157 = vcmask 64512
    %v4158 = vsel %vm4157, %v4156, -inf
    %4159 = vmax.xlane.f32.xlu0 %v4158
    %v4160 = vpop.xlane.xlu0 %4159
    %v4161 = vsub.f32 %v4156, %v4160
    %v4162 = vmul.f32 %v4161, 1.442695
    %v4163 = vpow.pop %v4162
    %v4164 = vsel %vm4157, %v4163, 0.0
    %4165 = vadd.xlane.f32.xlu0 %v4164
    %v4166 = vpop.xlane.xlu0 %4165
    %v4167 = vrcp.pop %v4166
    %v4168 = vmul.f32 %v4163, %v4167
    %v4170 = vsel %vm4157, %v4168, 0
    %4172 = vmatprep.subr.mxu0 0.0
    %4173 = vmatpush1.msra.mxu0 0.0
    %4174 = vmatprep.subr.mxu0 0.0
    %4175 = vmatpush1.msra.mxu0 0.0
    %4176 = vmatprep.subr.mxu0 0.0
    %4177 = vmatpush1.msra.mxu0 0.0
    %4178 = vmatprep.subr.mxu0 0.0
    %4179 = vmatpush1.msra.mxu0 0.0
    %4180 = vmatprep.subr.mxu0 0.0
    %4181 = vmatpush1.msra.mxu0 0.0
    %4182 = vmatprep.subr.mxu0 0.0
    %4183 = vmatpush1.msra.mxu0 0.0
    %4184 = vmatprep.subr.mxu0 0.0
    %4185 = vmatpush1.msra.mxu0 0.0
    %4186 = vmatprep.subr.mxu0 0.0
    %4187 = vmatpush1.msra.mxu0 0.0
    %4188 = vmatprep.subr.mxu0 0.0
    %4189 = vmatpush1.msra.mxu0 0.0
    %4190 = vmatprep.subr.mxu0 0.0
    %4191 = vmatpush1.msra.mxu0 0.0
    %4192 = vmatprep.subr.mxu0 0.0
    %4193 = vmatpush1.msra.mxu0 0.0
    %4194 = vmatprep.subr.mxu0 0.0
    %4195 = vmatpush1.msra.mxu0 0.0
    %4196 = vmatprep.subr.mxu0 0.0
    %4197 = vmatpush1.msra.mxu0 0.0
    %4198 = vmatprep.subr.mxu0 0.0
    %4199 = vmatpush1.msra.mxu0 0.0
    %4200 = vmatprep.subr.mxu0 0.0
    %4201 = vmatpush1.msra.mxu0 0.0
    %4202 = vmatprep.subr.mxu0 0.0
    %4203 = vmatpush1.msra.mxu0 %v4048
    %4204 = vmatprep.subr.mxu0 0.0
    %4205 = vmatpush2.msra.mxu0 0.0
    %4206 = vmatprep.subr.mxu0 0.0
    %4207 = vmatpush2.msra.mxu0 0.0
    %4208 = vmatprep.subr.mxu0 0.0
    %4209 = vmatpush2.msra.mxu0 0.0
    %4210 = vmatprep.subr.mxu0 0.0
    %4211 = vmatpush2.msra.mxu0 0.0
    %4212 = vmatprep.subr.mxu0 0.0
    %4213 = vmatpush2.msra.mxu0 0.0
    %4214 = vmatprep.subr.mxu0 0.0
    %4215 = vmatpush2.msra.mxu0 0.0
    %4216 = vmatprep.subr.mxu0 0.0
    %4217 = vmatpush2.msra.mxu0 0.0
    %4218 = vmatprep.subr.mxu0 0.0
    %4219 = vmatpush2.msra.mxu0 0.0
    %4220 = vmatprep.subr.mxu0 0.0
    %4221 = vmatpush2.msra.mxu0 0.0
    %4222 = vmatprep.subr.mxu0 0.0
    %4223 = vmatpush2.msra.mxu0 0.0
    %4224 = vmatprep.subr.mxu0 0.0
    %4225 = vmatpush2.msra.mxu0 0.0
    %4226 = vmatprep.subr.mxu0 0.0
    %4227 = vmatpush2.msra.mxu0 0.0
    %4228 = vmatprep.subr.mxu0 0.0
    %4229 = vmatpush2.msra.mxu0 0.0
    %4230 = vmatprep.subr.mxu0 0.0
    %4231 = vmatpush2.msra.mxu0 0.0
    %4232 = vmatprep.subr.mxu0 0.0
    %4233 = vmatpush2.msra.mxu0 0.0
    %4234 = vmatprep.subr.mxu0 0.0
    %4235 = vmatpush2.msra.mxu0 0.0
    %4236 = vmatprep.mubr.f32.mxu0 0.0
    %4237 = vmatmul.mubr.f32.gmra.mxu0 %v4170
    %v4238 = vpop.f32.mrf.mxu0
    %v4239 = vadd.f32 0.0, %v4238
    %v4240 = vpop.f32.mrf.mxu0
    %4241 = vdwg.mxu0
    %v4243 = vsel %vm4078, %v4018, 0
    %v4246 = vsel %vm4078, %v3988, 0
    %4248 = vmatprep.subr.mxu0 0.0
    %4249 = vmatpush1.xpose.msra.mxu0 0.0
    %4250 = vmatprep.subr.mxu0 0.0
    %4251 = vmatpush1.xpose.msra.mxu0 0.0
    %4252 = vmatprep.subr.mxu0 0.0
    %4253 = vmatpush1.xpose.msra.mxu0 0.0
    %4254 = vmatprep.subr.mxu0 0.0
    %4255 = vmatpush1.xpose.msra.mxu0 0.0
    %4256 = vmatprep.subr.mxu0 0.0
    %4257 = vmatpush1.xpose.msra.mxu0 0.0
    %4258 = vmatprep.subr.mxu0 0.0
    %4259 = vmatpush1.xpose.msra.mxu0 0.0
    %4260 = vmatprep.subr.mxu0 0.0
    %4261 = vmatpush1.xpose.msra.mxu0 0.0
    %4262 = vmatprep.subr.mxu0 0.0
    %4263 = vmatpush1.xpose.msra.mxu0 0.0
    %4264 = vmatprep.subr.mxu0 0.0
    %4265 = vmatpush1.xpose.msra.mxu0 0.0
    %4266 = vmatprep.subr.mxu0 0.0
    %4267 = vmatpush1.xpose.msra.mxu0 0.0
    %4268 = vmatprep.subr.mxu0 0.0
    %4269 = vmatpush1.xpose.msra.mxu0 0.0
    %4270 = vmatprep.subr.mxu0 0.0
    %4271 = vmatpush1.xpose.msra.mxu0 0.0
    %4272 = vmatprep.subr.mxu0 0.0
    %4273 = vmatpush1.xpose.msra.mxu0 0.0
    %4274 = vmatprep.subr.mxu0 0.0
    %4275 = vmatpush1.xpose.msra.mxu0 0.0
    %4276 = vmatprep.subr.mxu0 0.0
    %4277 = vmatpush1.xpose.msra.mxu0 0.0
    %4278 = vmatprep.subr.mxu0 0.0
    %4279 = vmatpush1.xpose.msra.mxu0 %v4246
    %4280 = vmatprep.subr.mxu0 0.0
    %4281 = vmatpush2.xpose.msra.mxu0 0.0
    %4282 = vmatprep.subr.mxu0 0.0
    %4283 = vmatpush2.xpose.msra.mxu0 0.0
    %4284 = vmatprep.subr.mxu0 0.0
    %4285 = vmatpush2.xpose.msra.mxu0 0.0
    %4286 = vmatprep.subr.mxu0 0.0
    %4287 = vmatpush2.xpose.msra.mxu0 0.0
    %4288 = vmatprep.subr.mxu0 0.0
    %4289 = vmatpush2.xpose.msra.mxu0 0.0
    %4290 = vmatprep.subr.mxu0 0.0
    %4291 = vmatpush2.xpose.msra.mxu0 0.0
    %4292 = vmatprep.subr.mxu0 0.0
    %4293 = vmatpush2.xpose.msra.mxu0 0.0
    %4294 = vmatprep.subr.mxu0 0.0
    %4295 = vmatpush2.xpose.msra.mxu0 0.0
    %4296 = vmatprep.subr.mxu0 0.0
    %4297 = vmatpush2.xpose.msra.mxu0 0.0
    %4298 = vmatprep.subr.mxu0 0.0
    %4299 = vmatpush2.xpose.msra.mxu0 0.0
    %4300 = vmatprep.subr.mxu0 0.0
    %4301 = vmatpush2.xpose.msra.mxu0 0.0
    %4302 = vmatprep.subr.mxu0 0.0
    %4303 = vmatpush2.xpose.msra.mxu0 0.0
    %4304 = vmatprep.subr.mxu0 0.0
    %4305 = vmatpush2.xpose.msra.mxu0 0.0
    %4306 = vmatprep.subr.mxu0 0.0
    %4307 = vmatpush2.xpose.msra.mxu0 0.0
    %4308 = vmatprep.subr.mxu0 0.0
    %4309 = vmatpush2.xpose.msra.mxu0 0.0
    %4310 = vmatprep.subr.mxu0 0.0
    %4311 = vmatpush2.xpose.msra.mxu0 0.0
    %4312 = vmatprep.mubr.f32.mxu0 0.0
    %4313 = vmatmul.mubr.f32.gmra.mxu0 %v4243
    %v4314 = vpop.f32.mrf.mxu0
    %v4315 = vadd.f32 0.0, %v4314
    %v4316 = vpop.f32.mrf.mxu0
    %4317 = vdwg.mxu0
    %v4318 = vmul.f32 %v4315, 0.125
    %v4319 = vsel %vm4077, %v4318, -1e+30
    %v4320 = vsel %vm4157, %v4319, -inf
    %4321 = vmax.xlane.f32.xlu0 %v4320
    %v4322 = vpop.xlane.xlu0 %4321
    %v4323 = vsub.f32 %v4319, %v4322
    %v4324 = vmul.f32 %v4323, 1.442695
    %v4325 = vpow.pop %v4324
    %v4326 = vsel %vm4157, %v4325, 0.0
    %4327 = vadd.xlane.f32.xlu0 %v4326
    %v4328 = vpop.xlane.xlu0 %4327
    %v4329 = vrcp.pop %v4328
    %v4330 = vmul.f32 %v4325, %v4329
    %v4332 = vsel %vm4157, %v4330, 0
    %4334 = vmatprep.subr.mxu0 0.0
    %4335 = vmatpush1.msra.mxu0 0.0
    %4336 = vmatprep.subr.mxu0 0.0
    %4337 = vmatpush1.msra.mxu0 0.0
    %4338 = vmatprep.subr.mxu0 0.0
    %4339 = vmatpush1.msra.mxu0 0.0
    %4340 = vmatprep.subr.mxu0 0.0
    %4341 = vmatpush1.msra.mxu0 0.0
    %4342 = vmatprep.subr.mxu0 0.0
    %4343 = vmatpush1.msra.mxu0 0.0
    %4344 = vmatprep.subr.mxu0 0.0
    %4345 = vmatpush1.msra.mxu0 0.0
    %4346 = vmatprep.subr.mxu0 0.0
    %4347 = vmatpush1.msra.mxu0 0.0
    %4348 = vmatprep.subr.mxu0 0.0
    %4349 = vmatpush1.msra.mxu0 0.0
    %4350 = vmatprep.subr.mxu0 0.0
    %4351 = vmatpush1.msra.mxu0 0.0
    %4352 = vmatprep.subr.mxu0 0.0
    %4353 = vmatpush1.msra.mxu0 0.0
    %4354 = vmatprep.subr.mxu0 0.0
    %4355 = vmatpush1.msra.mxu0 0.0
    %4356 = vmatprep.subr.mxu0 0.0
    %4357 = vmatpush1.msra.mxu0 0.0
    %4358 = vmatprep.subr.mxu0 0.0
    %4359 = vmatpush1.msra.mxu0 0.0
    %4360 = vmatprep.subr.mxu0 0.0
    %4361 = vmatpush1.msra.mxu0 0.0
    %4362 = vmatprep.subr.mxu0 0.0
    %4363 = vmatpush1.msra.mxu0 0.0
    %4364 = vmatprep.subr.mxu0 0.0
    %4365 = vmatpush1.msra.mxu0 %v4003
    %4366 = vmatprep.subr.mxu0 0.0
    %4367 = vmatpush2.msra.mxu0 0.0
    %4368 = vmatprep.subr.mxu0 0.0
    %4369 = vmatpush2.msra.mxu0 0.0
    %4370 = vmatprep.subr.mxu0 0.0
    %4371 = vmatpush2.msra.mxu0 0.0
    %4372 = vmatprep.subr.mxu0 0.0
    %4373 = vmatpush2.msra.mxu0 0.0
    %4374 = vmatprep.subr.mxu0 0.0
    %4375 = vmatpush2.msra.mxu0 0.0
    %4376 = vmatprep.subr.mxu0 0.0
    %4377 = vmatpush2.msra.mxu0 0.0
    %4378 = vmatprep.subr.mxu0 0.0
    %4379 = vmatpush2.msra.mxu0 0.0
    %4380 = vmatprep.subr.mxu0 0.0
    %4381 = vmatpush2.msra.mxu0 0.0
    %4382 = vmatprep.subr.mxu0 0.0
    %4383 = vmatpush2.msra.mxu0 0.0
    %4384 = vmatprep.subr.mxu0 0.0
    %4385 = vmatpush2.msra.mxu0 0.0
    %4386 = vmatprep.subr.mxu0 0.0
    %4387 = vmatpush2.msra.mxu0 0.0
    %4388 = vmatprep.subr.mxu0 0.0
    %4389 = vmatpush2.msra.mxu0 0.0
    %4390 = vmatprep.subr.mxu0 0.0
    %4391 = vmatpush2.msra.mxu0 0.0
    %4392 = vmatprep.subr.mxu0 0.0
    %4393 = vmatpush2.msra.mxu0 0.0
    %4394 = vmatprep.subr.mxu0 0.0
    %4395 = vmatpush2.msra.mxu0 0.0
    %4396 = vmatprep.subr.mxu0 0.0
    %4397 = vmatpush2.msra.mxu0 0.0
    %4398 = vmatprep.mubr.f32.mxu0 0.0
    %4399 = vmatmul.mubr.f32.gmra.mxu0 %v4332
    %v4400 = vpop.f32.mrf.mxu0
    %v4401 = vadd.f32 0.0, %v4400
    %v4402 = vpop.f32.mrf.mxu0
    %4403 = vdwg.mxu0
    %v4405 = vrot.slane %v4239, 2
    %4406 = vrot.lane.b32.xlu0 %v4405, 64
    %v4407 = vpop.permute.xlu0 %4406
    %v4409 = vrot.slane %v4239, 4
    %v4411 = vrot.slane %v4239, 6
    %4412 = vrot.lane.b32.xlu0 %v4411, 64
    %v4413 = vpop.permute.xlu0 %4412
    %v4415 = vsel %vm4078, %v4239, %v4407
    %v4416 = vsel %vm4078, %v4409, %v4413
    %v4418 = vrot.slane %v4401, 2
    %4419 = vrot.lane.b32.xlu0 %v4418, 64
    %v4420 = vpop.permute.xlu0 %4419
    %v4422 = vrot.slane %v4401, 4
    %v4424 = vrot.slane %v4401, 6
    %4425 = vrot.lane.b32.xlu0 %v4424, 64
    %v4426 = vpop.permute.xlu0 %4425
    %v4428 = vsel %vm4078, %v4401, %v4420
    %v4429 = vsel %vm4078, %v4422, %v4426
    %v4430 = vpack.c.bf16 %v4415, %v4415
    %v4431 = vpack.c.bf16 %v4416, %v4416
    %v4432 = vld [vmem:[%s25] sm:$0xff]
    %v4433 = vld [vmem:[%s25 + $0x8] sm:$0xf]
    %v4434 = vld [vmem:[%s25 + $0xc] sm:$0xff]
    %v4435 = vld [vmem:[%s25 + $0x14] sm:$0xf]
    %v4436 = vld [vmem:[%s25 + $0x18] sm:$0xff]
    %v4437 = vld [vmem:[%s25 + $0x20] sm:$0xf]
    %v4438 = vld [vmem:[%s25 + $0x24] sm:$0xff]
    %v4439 = vld [vmem:[%s25 + $0x2c] sm:$0xf]
    %v4440 = vld [vmem:[%s25 + $0x30] sm:$0xff]
    %v4441 = vld [vmem:[%s25 + $0x38] sm:$0xf]
    %v4442 = vld [vmem:[%s25 + $0x3c] sm:$0xff]
    %v4443 = vld [vmem:[%s25 + $0x44] sm:$0xf]
    %v4444 = vld [vmem:[%s25 + $0x48] sm:$0xff]
    %v4445 = vld [vmem:[%s25 + $0x50] sm:$0xf]
    %v4446 = vld [vmem:[%s25 + $0x54] sm:$0xff]
    %v4447 = vld [vmem:[%s25 + $0x5c] sm:$0xf]
    %v4448 = vld [vmem:[%s25 + $0x60] sm:$0xff]
    %v4449 = vld [vmem:[%s25 + $0x68] sm:$0xf]
    %v4450 = vld [vmem:[%s25 + $0x6c] sm:$0xff]
    %v4451 = vld [vmem:[%s25 + $0x74] sm:$0xf]
    %v4452 = vld [vmem:[%s25 + $0x78] sm:$0xff]
    %v4453 = vld [vmem:[%s25 + $0x80] sm:$0xf]
    %v4454 = vld [vmem:[%s25 + $0x84] sm:$0xff]
    %v4455 = vld [vmem:[%s25 + $0x8c] sm:$0xf]
    %v4456 = vld [vmem:[%s25 + $0x90] sm:$0xff]
    %v4457 = vld [vmem:[%s25 + $0x98] sm:$0xf]
    %v4458 = vld [vmem:[%s25 + $0x9c] sm:$0xff]
    %v4459 = vld [vmem:[%s25 + $0xa4] sm:$0xf]
    %v4460 = vld [vmem:[%s25 + $0xa8] sm:$0xff]
    %v4461 = vld [vmem:[%s25 + $0xb0] sm:$0xf]
    %v4462 = vld [vmem:[%s25 + $0xb4] sm:$0xff]
    %v4463 = vld [vmem:[%s25 + $0xbc] sm:$0xf]
    %v4464 = vld [vmem:[%s25 + $0xc0] sm:$0xff]
    %v4465 = vld [vmem:[%s25 + $0xc8] sm:$0xf]
    %v4466 = vld [vmem:[%s25 + $0xcc] sm:$0xff]
    %v4467 = vld [vmem:[%s25 + $0xd4] sm:$0xf]
    %v4468 = vld [vmem:[%s25 + $0xd8] sm:$0xff]
    %v4469 = vld [vmem:[%s25 + $0xe0] sm:$0xf]
    %v4470 = vld [vmem:[%s25 + $0xe4] sm:$0xff]
    %v4471 = vld [vmem:[%s25 + $0xec] sm:$0xf]
    %v4472 = vld [vmem:[%s25 + $0xf0] sm:$0xff]
    %v4473 = vld [vmem:[%s25 + $0xf8] sm:$0xf]
    %v4474 = vld [vmem:[%s25 + $0xfc] sm:$0xff]
    %v4475 = vld [vmem:[%s25 + $0x104] sm:$0xf]
    %v4476 = vld [vmem:[%s25 + $0x108] sm:$0xff]
    %v4477 = vld [vmem:[%s25 + $0x110] sm:$0xf]
    %v4478 = vld [vmem:[%s25 + $0x114] sm:$0xff]
    %v4479 = vld [vmem:[%s25 + $0x11c] sm:$0xf]
    %v4480 = vld [vmem:[%s25 + $0x120] sm:$0xff]
    %v4481 = vld [vmem:[%s25 + $0x128] sm:$0xf]
    %v4482 = vld [vmem:[%s25 + $0x12c] sm:$0xff]
    %v4483 = vld [vmem:[%s25 + $0x134] sm:$0xf]
    %v4484 = vld [vmem:[%s25 + $0x138] sm:$0xff]
    %v4485 = vld [vmem:[%s25 + $0x140] sm:$0xf]
    %v4486 = vld [vmem:[%s25 + $0x144] sm:$0xff]
    %v4487 = vld [vmem:[%s25 + $0x14c] sm:$0xf]
    %v4488 = vld [vmem:[%s25 + $0x150] sm:$0xff]
    %v4489 = vld [vmem:[%s25 + $0x158] sm:$0xf]
    %v4490 = vld [vmem:[%s25 + $0x15c] sm:$0xff]
    %v4491 = vld [vmem:[%s25 + $0x164] sm:$0xf]
    %v4492 = vld [vmem:[%s25 + $0x168] sm:$0xff]
    %v4493 = vld [vmem:[%s25 + $0x170] sm:$0xf]
    %v4494 = vld [vmem:[%s25 + $0x174] sm:$0xff]
    %v4495 = vld [vmem:[%s25 + $0x17c] sm:$0xf]
    %v4496 = vld [vmem:[%s27] sm:$0x7]
    %v4498 = vlaneseq
    %v4499 = vshrl.u32 %v4498, 7
    %v4500 = vsub.s32 0, %v4499
    %v4501 = vrot.slane %v4496, %v4500
    %v4502 = vlaneseq
    %v4503 = vshrl.u32 %v4502, 7
    %v4504 = vsub.s32 1, %v4503
    %v4505 = vrot.slane %v4496, %v4504
    %v4506 = vlaneseq
    %v4507 = vshrl.u32 %v4506, 7
    %v4508 = vsub.s32 2, %v4507
    %v4509 = vrot.slane %v4496, %v4508
    %v4577 = vunpack.c.l.b16 %v4432
    %v4578 = vunpack.c.h.b16 %v4432
    %v4579 = vunpack.c.l.b16 %v4433
    %v4580 = vunpack.c.l.b16 %v4434
    %v4581 = vunpack.c.h.b16 %v4434
    %v4582 = vunpack.c.l.b16 %v4435
    %v4583 = vunpack.c.l.b16 %v4436
    %v4584 = vunpack.c.h.b16 %v4436
    %v4585 = vunpack.c.l.b16 %v4437
    %v4586 = vunpack.c.l.b16 %v4438
    %v4587 = vunpack.c.h.b16 %v4438
    %v4588 = vunpack.c.l.b16 %v4439
    %v4589 = vunpack.c.l.b16 %v4440
    %v4590 = vunpack.c.h.b16 %v4440
    %v4591 = vunpack.c.l.b16 %v4441
    %v4592 = vunpack.c.l.b16 %v4442
    %v4593 = vunpack.c.h.b16 %v4442
    %v4594 = vunpack.c.l.b16 %v4443
    %v4595 = vunpack.c.l.b16 %v4444
    %v4596 = vunpack.c.h.b16 %v4444
    %v4597 = vunpack.c.l.b16 %v4445
    %v4598 = vunpack.c.l.b16 %v4446
    %v4599 = vunpack.c.h.b16 %v4446
    %v4600 = vunpack.c.l.b16 %v4447
    %v4601 = vunpack.c.l.b16 %v4448
    %v4602 = vunpack.c.h.b16 %v4448
    %v4603 = vunpack.c.l.b16 %v4449
    %v4604 = vunpack.c.l.b16 %v4450
    %v4605 = vunpack.c.h.b16 %v4450
    %v4606 = vunpack.c.l.b16 %v4451
    %v4607 = vunpack.c.l.b16 %v4452
    %v4608 = vunpack.c.h.b16 %v4452
    %v4609 = vunpack.c.l.b16 %v4453
    %v4610 = vunpack.c.l.b16 %v4454
    %v4611 = vunpack.c.h.b16 %v4454
    %v4612 = vunpack.c.l.b16 %v4455
    %v4613 = vunpack.c.l.b16 %v4456
    %v4614 = vunpack.c.h.b16 %v4456
    %v4615 = vunpack.c.l.b16 %v4457
    %v4616 = vunpack.c.l.b16 %v4458
    %v4617 = vunpack.c.h.b16 %v4458
    %v4618 = vunpack.c.l.b16 %v4459
    %v4619 = vunpack.c.l.b16 %v4460
    %v4620 = vunpack.c.h.b16 %v4460
    %v4621 = vunpack.c.l.b16 %v4461
    %v4622 = vunpack.c.l.b16 %v4462
    %v4623 = vunpack.c.h.b16 %v4462
    %v4624 = vunpack.c.l.b16 %v4463
    %v4625 = vunpack.c.l.b16 %v4464
    %v4626 = vunpack.c.h.b16 %v4464
    %v4627 = vunpack.c.l.b16 %v4465
    %v4628 = vunpack.c.l.b16 %v4466
    %v4629 = vunpack.c.h.b16 %v4466
    %v4630 = vunpack.c.l.b16 %v4467
    %v4631 = vunpack.c.l.b16 %v4468
    %v4632 = vunpack.c.h.b16 %v4468
    %v4633 = vunpack.c.l.b16 %v4469
    %v4634 = vunpack.c.l.b16 %v4470
    %v4635 = vunpack.c.h.b16 %v4470
    %v4636 = vunpack.c.l.b16 %v4471
    %v4637 = vunpack.c.l.b16 %v4472
    %v4638 = vunpack.c.h.b16 %v4472
    %v4639 = vunpack.c.l.b16 %v4473
    %v4640 = vunpack.c.l.b16 %v4474
    %v4641 = vunpack.c.h.b16 %v4474
    %v4642 = vunpack.c.l.b16 %v4475
    %v4643 = vunpack.c.l.b16 %v4476
    %v4644 = vunpack.c.h.b16 %v4476
    %v4645 = vunpack.c.l.b16 %v4477
    %v4646 = vunpack.c.l.b16 %v4478
    %v4647 = vunpack.c.h.b16 %v4478
    %v4648 = vunpack.c.l.b16 %v4479
    %v4649 = vunpack.c.l.b16 %v4480
    %v4650 = vunpack.c.h.b16 %v4480
    %v4651 = vunpack.c.l.b16 %v4481
    %v4652 = vunpack.c.l.b16 %v4482
    %v4653 = vunpack.c.h.b16 %v4482
    %v4654 = vunpack.c.l.b16 %v4483
    %v4655 = vunpack.c.l.b16 %v4484
    %v4656 = vunpack.c.h.b16 %v4484
    %v4657 = vunpack.c.l.b16 %v4485
    %v4658 = vunpack.c.l.b16 %v4486
    %v4659 = vunpack.c.h.b16 %v4486
    %v4660 = vunpack.c.l.b16 %v4487
    %v4661 = vunpack.c.l.b16 %v4488
    %v4662 = vunpack.c.h.b16 %v4488
    %v4663 = vunpack.c.l.b16 %v4489
    %v4664 = vunpack.c.l.b16 %v4490
    %v4665 = vunpack.c.h.b16 %v4490
    %v4666 = vunpack.c.l.b16 %v4491
    %v4667 = vunpack.c.l.b16 %v4492
    %v4668 = vunpack.c.h.b16 %v4492
    %v4669 = vunpack.c.l.b16 %v4493
    %v4670 = vunpack.c.l.b16 %v4494
    %v4671 = vunpack.c.h.b16 %v4494
    %v4672 = vunpack.c.l.b16 %v4495
    %v4673 = vpack.c.b16 %v4580, %v4577
    %v4674 = vpack.c.b16 %v4581, %v4578
    %v4675 = vpack.c.b16 %v4582, %v4579
    %v4676 = vpack.c.b16 %v4586, %v4583
    %v4677 = vpack.c.b16 %v4587, %v4584
    %v4678 = vpack.c.b16 %v4588, %v4585
    %v4679 = vpack.c.b16 %v4592, %v4589
    %v4680 = vpack.c.b16 %v4593, %v4590
    %v4681 = vpack.c.b16 %v4594, %v4591
    %v4682 = vpack.c.b16 %v4598, %v4595
    %v4683 = vpack.c.b16 %v4599, %v4596
    %v4684 = vpack.c.b16 %v4600, %v4597
    %v4685 = vpack.c.b16 %v4604, %v4601
    %v4686 = vpack.c.b16 %v4605, %v4602
    %v4687 = vpack.c.b16 %v4606, %v4603
    %v4688 = vpack.c.b16 %v4610, %v4607
    %v4689 = vpack.c.b16 %v4611, %v4608
    %v4690 = vpack.c.b16 %v4612, %v4609
    %v4691 = vpack.c.b16 %v4616, %v4613
    %v4692 = vpack.c.b16 %v4617, %v4614
    %v4693 = vpack.c.b16 %v4618, %v4615
    %v4694 = vpack.c.b16 %v4622, %v4619
    %v4695 = vpack.c.b16 %v4623, %v4620
    %v4696 = vpack.c.b16 %v4624, %v4621
    %v4697 = vpack.c.b16 %v4628, %v4625
    %v4698 = vpack.c.b16 %v4629, %v4626
    %v4699 = vpack.c.b16 %v4630, %v4627
    %v4700 = vpack.c.b16 %v4634, %v4631
    %v4701 = vpack.c.b16 %v4635, %v4632
    %v4702 = vpack.c.b16 %v4636, %v4633
    %v4703 = vpack.c.b16 %v4640, %v4637
    %v4704 = vpack.c.b16 %v4641, %v4638
    %v4705 = vpack.c.b16 %v4642, %v4639
    %v4706 = vpack.c.b16 %v4646, %v4643
    %v4707 = vpack.c.b16 %v4647, %v4644
    %v4708 = vpack.c.b16 %v4648, %v4645
    %v4709 = vpack.c.b16 %v4652, %v4649
    %v4710 = vpack.c.b16 %v4653, %v4650
    %v4711 = vpack.c.b16 %v4654, %v4651
    %v4712 = vpack.c.b16 %v4658, %v4655
    %v4713 = vpack.c.b16 %v4659, %v4656
    %v4714 = vpack.c.b16 %v4660, %v4657
    %v4715 = vpack.c.b16 %v4664, %v4661
    %v4716 = vpack.c.b16 %v4665, %v4662
    %v4717 = vpack.c.b16 %v4666, %v4663
    %v4718 = vpack.c.b16 %v4670, %v4667
    %v4719 = vpack.c.b16 %v4671, %v4668
    %v4720 = vpack.c.b16 %v4672, %v4669
    %4769 = vmatprep.subr.bf16.mxu0 %v4695
    %4770 = vmatpush1.bf16.msra.mxu0 %v4694
    %4771 = vmatprep.subr.bf16.mxu0 %v4692
    %4772 = vmatpush1.bf16.msra.mxu0 %v4691
    %4773 = vmatprep.subr.bf16.mxu0 %v4689
    %4774 = vmatpush1.bf16.msra.mxu0 %v4688
    %4775 = vmatprep.subr.bf16.mxu0 %v4686
    %4776 = vmatpush1.bf16.msra.mxu0 %v4685
    %4777 = vmatprep.subr.bf16.mxu0 %v4683
    %4778 = vmatpush1.bf16.msra.mxu0 %v4682
    %4779 = vmatprep.subr.bf16.mxu0 %v4680
    %4780 = vmatpush1.bf16.msra.mxu0 %v4679
    %4781 = vmatprep.subr.bf16.mxu0 %v4677
    %4782 = vmatpush1.bf16.msra.mxu0 %v4676
    %4783 = vmatprep.subr.bf16.mxu0 %v4674
    %4784 = vmatpush1.bf16.msra.mxu0 %v4673
    %4785 = vmatprep.subr.bf16.mxu0 %v4719
    %4786 = vmatpush2.bf16.msra.mxu0 %v4718
    %4787 = vmatprep.subr.bf16.mxu0 %v4716
    %4788 = vmatpush2.bf16.msra.mxu0 %v4715
    %4789 = vmatprep.subr.bf16.mxu0 %v4713
    %4790 = vmatpush2.bf16.msra.mxu0 %v4712
    %4791 = vmatprep.subr.bf16.mxu0 %v4710
    %4792 = vmatpush2.bf16.msra.mxu0 %v4709
    %4793 = vmatprep.subr.bf16.mxu0 %v4707
    %4794 = vmatpush2.bf16.msra.mxu0 %v4706
    %4795 = vmatprep.subr.bf16.mxu0 %v4704
    %4796 = vmatpush2.bf16.msra.mxu0 %v4703
    %4797 = vmatprep.subr.bf16.mxu0 %v4701
    %4798 = vmatpush2.bf16.msra.mxu0 %v4700
    %4799 = vmatprep.subr.bf16.mxu0 %v4698
    %4800 = vmatpush2.bf16.msra.mxu0 %v4697
    %4801 = vmatprep.mubr.bf16.mxu0 %v4431
    %4802 = vmatmul.mubr.bf16.gmra.mxu0 %v4430
    %v4803 = vpop.f32.mrf.mxu0
    %v4804 = vadd.f32 %v4501, %v4803
    %v4805 = vpop.f32.mrf.mxu0
    %v4806 = vadd.f32 %v4505, %v4805
    %v4807 = vpop.f32.mrf.mxu0
    %v4808 = vpop.f32.mrf.mxu0
    %4809 = vdwg.mxu0
    %4810 = vmatprep.subr.bf16.mxu0 0
    %4811 = vmatpush1.bf16.msra.mxu0 %v4696
    %4812 = vmatprep.subr.bf16.mxu0 0
    %4813 = vmatpush1.bf16.msra.mxu0 %v4693
    %4814 = vmatprep.subr.bf16.mxu0 0
    %4815 = vmatpush1.bf16.msra.mxu0 %v4690
    %4816 = vmatprep.subr.bf16.mxu0 0
    %4817 = vmatpush1.bf16.msra.mxu0 %v4687
    %4818 = vmatprep.subr.bf16.mxu0 0
    %4819 = vmatpush1.bf16.msra.mxu0 %v4684
    %4820 = vmatprep.subr.bf16.mxu0 0
    %4821 = vmatpush1.bf16.msra.mxu0 %v4681
    %4822 = vmatprep.subr.bf16.mxu0 0
    %4823 = vmatpush1.bf16.msra.mxu0 %v4678
    %4824 = vmatprep.subr.bf16.mxu0 0
    %4825 = vmatpush1.bf16.msra.mxu0 %v4675
    %4826 = vmatprep.subr.bf16.mxu0 0
    %4827 = vmatpush2.bf16.msra.mxu0 %v4720
    %4828 = vmatprep.subr.bf16.mxu0 0
    %4829 = vmatpush2.bf16.msra.mxu0 %v4717
    %4830 = vmatprep.subr.bf16.mxu0 0
    %4831 = vmatpush2.bf16.msra.mxu0 %v4714
    %4832 = vmatprep.subr.bf16.mxu0 0
    %4833 = vmatpush2.bf16.msra.mxu0 %v4711
    %4834 = vmatprep.subr.bf16.mxu0 0
    %4835 = vmatpush2.bf16.msra.mxu0 %v4708
    %4836 = vmatprep.subr.bf16.mxu0 0
    %4837 = vmatpush2.bf16.msra.mxu0 %v4705
    %4838 = vmatprep.subr.bf16.mxu0 0
    %4839 = vmatpush2.bf16.msra.mxu0 %v4702
    %4840 = vmatprep.subr.bf16.mxu0 0
    %4841 = vmatpush2.bf16.msra.mxu0 %v4699
    %4842 = vmatprep.mubr.bf16.mxu0 %v4431
    %4843 = vmatmul.mubr.bf16.gmra.mxu0 %v4430
    %v4844 = vpop.f32.mrf.mxu0
    %v4845 = vadd.f32 %v4509, %v4844
    %v4846 = vpop.f32.mrf.mxu0
    %v4847 = vpop.f32.mrf.mxu0
    %v4848 = vpop.f32.mrf.mxu0
    %4849 = vdwg.mxu0
    %v4850 = vpack.c.bf16 %v4428, %v4428
    %v4851 = vpack.c.bf16 %v4429, %v4429
    %v4852 = vld [vmem:[%s29] sm:$0xff]
    %v4853 = vld [vmem:[%s29 + $0x8] sm:$0xf]
    %v4854 = vld [vmem:[%s29 + $0xc] sm:$0xff]
    %v4855 = vld [vmem:[%s29 + $0x14] sm:$0xf]
    %v4856 = vld [vmem:[%s29 + $0x18] sm:$0xff]
    %v4857 = vld [vmem:[%s29 + $0x20] sm:$0xf]
    %v4858 = vld [vmem:[%s29 + $0x24] sm:$0xff]
    %v4859 = vld [vmem:[%s29 + $0x2c] sm:$0xf]
    %v4860 = vld [vmem:[%s29 + $0x30] sm:$0xff]
    %v4861 = vld [vmem:[%s29 + $0x38] sm:$0xf]
    %v4862 = vld [vmem:[%s29 + $0x3c] sm:$0xff]
    %v4863 = vld [vmem:[%s29 + $0x44] sm:$0xf]
    %v4864 = vld [vmem:[%s29 + $0x48] sm:$0xff]
    %v4865 = vld [vmem:[%s29 + $0x50] sm:$0xf]
    %v4866 = vld [vmem:[%s29 + $0x54] sm:$0xff]
    %v4867 = vld [vmem:[%s29 + $0x5c] sm:$0xf]
    %v4868 = vld [vmem:[%s29 + $0x60] sm:$0xff]
    %v4869 = vld [vmem:[%s29 + $0x68] sm:$0xf]
    %v4870 = vld [vmem:[%s29 + $0x6c] sm:$0xff]
    %v4871 = vld [vmem:[%s29 + $0x74] sm:$0xf]
    %v4872 = vld [vmem:[%s29 + $0x78] sm:$0xff]
    %v4873 = vld [vmem:[%s29 + $0x80] sm:$0xf]
    %v4874 = vld [vmem:[%s29 + $0x84] sm:$0xff]
    %v4875 = vld [vmem:[%s29 + $0x8c] sm:$0xf]
    %v4876 = vld [vmem:[%s29 + $0x90] sm:$0xff]
    %v4877 = vld [vmem:[%s29 + $0x98] sm:$0xf]
    %v4878 = vld [vmem:[%s29 + $0x9c] sm:$0xff]
    %v4879 = vld [vmem:[%s29 + $0xa4] sm:$0xf]
    %v4880 = vld [vmem:[%s29 + $0xa8] sm:$0xff]
    %v4881 = vld [vmem:[%s29 + $0xb0] sm:$0xf]
    %v4882 = vld [vmem:[%s29 + $0xb4] sm:$0xff]
    %v4883 = vld [vmem:[%s29 + $0xbc] sm:$0xf]
    %v4884 = vld [vmem:[%s29 + $0xc0] sm:$0xff]
    %v4885 = vld [vmem:[%s29 + $0xc8] sm:$0xf]
    %v4886 = vld [vmem:[%s29 + $0xcc] sm:$0xff]
    %v4887 = vld [vmem:[%s29 + $0xd4] sm:$0xf]
    %v4888 = vld [vmem:[%s29 + $0xd8] sm:$0xff]
    %v4889 = vld [vmem:[%s29 + $0xe0] sm:$0xf]
    %v4890 = vld [vmem:[%s29 + $0xe4] sm:$0xff]
    %v4891 = vld [vmem:[%s29 + $0xec] sm:$0xf]
    %v4892 = vld [vmem:[%s29 + $0xf0] sm:$0xff]
    %v4893 = vld [vmem:[%s29 + $0xf8] sm:$0xf]
    %v4894 = vld [vmem:[%s29 + $0xfc] sm:$0xff]
    %v4895 = vld [vmem:[%s29 + $0x104] sm:$0xf]
    %v4896 = vld [vmem:[%s29 + $0x108] sm:$0xff]
    %v4897 = vld [vmem:[%s29 + $0x110] sm:$0xf]
    %v4898 = vld [vmem:[%s29 + $0x114] sm:$0xff]
    %v4899 = vld [vmem:[%s29 + $0x11c] sm:$0xf]
    %v4900 = vld [vmem:[%s29 + $0x120] sm:$0xff]
    %v4901 = vld [vmem:[%s29 + $0x128] sm:$0xf]
    %v4902 = vld [vmem:[%s29 + $0x12c] sm:$0xff]
    %v4903 = vld [vmem:[%s29 + $0x134] sm:$0xf]
    %v4904 = vld [vmem:[%s29 + $0x138] sm:$0xff]
    %v4905 = vld [vmem:[%s29 + $0x140] sm:$0xf]
    %v4906 = vld [vmem:[%s29 + $0x144] sm:$0xff]
    %v4907 = vld [vmem:[%s29 + $0x14c] sm:$0xf]
    %v4908 = vld [vmem:[%s29 + $0x150] sm:$0xff]
    %v4909 = vld [vmem:[%s29 + $0x158] sm:$0xf]
    %v4910 = vld [vmem:[%s29 + $0x15c] sm:$0xff]
    %v4911 = vld [vmem:[%s29 + $0x164] sm:$0xf]
    %v4912 = vld [vmem:[%s29 + $0x168] sm:$0xff]
    %v4913 = vld [vmem:[%s29 + $0x170] sm:$0xf]
    %v4914 = vld [vmem:[%s29 + $0x174] sm:$0xff]
    %v4915 = vld [vmem:[%s29 + $0x17c] sm:$0xf]
    %v4916 = vld [vmem:[%s31] sm:$0x7]
    %v4918 = vlaneseq
    %v4919 = vshrl.u32 %v4918, 7
    %v4920 = vsub.s32 0, %v4919
    %v4921 = vrot.slane %v4916, %v4920
    %v4922 = vlaneseq
    %v4923 = vshrl.u32 %v4922, 7
    %v4924 = vsub.s32 1, %v4923
    %v4925 = vrot.slane %v4916, %v4924
    %v4926 = vlaneseq
    %v4927 = vshrl.u32 %v4926, 7
    %v4928 = vsub.s32 2, %v4927
    %v4929 = vrot.slane %v4916, %v4928
    %v4997 = vunpack.c.l.b16 %v4852
    %v4998 = vunpack.c.h.b16 %v4852
    %v4999 = vunpack.c.l.b16 %v4853
    %v5000 = vunpack.c.l.b16 %v4854
    %v5001 = vunpack.c.h.b16 %v4854
    %v5002 = vunpack.c.l.b16 %v4855
    %v5003 = vunpack.c.l.b16 %v4856
    %v5004 = vunpack.c.h.b16 %v4856
    %v5005 = vunpack.c.l.b16 %v4857
    %v5006 = vunpack.c.l.b16 %v4858
    %v5007 = vunpack.c.h.b16 %v4858
    %v5008 = vunpack.c.l.b16 %v4859
    %v5009 = vunpack.c.l.b16 %v4860
    %v5010 = vunpack.c.h.b16 %v4860
    %v5011 = vunpack.c.l.b16 %v4861
    %v5012 = vunpack.c.l.b16 %v4862
    %v5013 = vunpack.c.h.b16 %v4862
    %v5014 = vunpack.c.l.b16 %v4863
    %v5015 = vunpack.c.l.b16 %v4864
    %v5016 = vunpack.c.h.b16 %v4864
    %v5017 = vunpack.c.l.b16 %v4865
    %v5018 = vunpack.c.l.b16 %v4866
    %v5019 = vunpack.c.h.b16 %v4866
    %v5020 = vunpack.c.l.b16 %v4867
    %v5021 = vunpack.c.l.b16 %v4868
    %v5022 = vunpack.c.h.b16 %v4868
    %v5023 = vunpack.c.l.b16 %v4869
    %v5024 = vunpack.c.l.b16 %v4870
    %v5025 = vunpack.c.h.b16 %v4870
    %v5026 = vunpack.c.l.b16 %v4871
    %v5027 = vunpack.c.l.b16 %v4872
    %v5028 = vunpack.c.h.b16 %v4872
    %v5029 = vunpack.c.l.b16 %v4873
    %v5030 = vunpack.c.l.b16 %v4874
    %v5031 = vunpack.c.h.b16 %v4874
    %v5032 = vunpack.c.l.b16 %v4875
    %v5033 = vunpack.c.l.b16 %v4876
    %v5034 = vunpack.c.h.b16 %v4876
    %v5035 = vunpack.c.l.b16 %v4877
    %v5036 = vunpack.c.l.b16 %v4878
    %v5037 = vunpack.c.h.b16 %v4878
    %v5038 = vunpack.c.l.b16 %v4879
    %v5039 = vunpack.c.l.b16 %v4880
    %v5040 = vunpack.c.h.b16 %v4880
    %v5041 = vunpack.c.l.b16 %v4881
    %v5042 = vunpack.c.l.b16 %v4882
    %v5043 = vunpack.c.h.b16 %v4882
    %v5044 = vunpack.c.l.b16 %v4883
    %v5045 = vunpack.c.l.b16 %v4884
    %v5046 = vunpack.c.h.b16 %v4884
    %v5047 = vunpack.c.l.b16 %v4885
    %v5048 = vunpack.c.l.b16 %v4886
    %v5049 = vunpack.c.h.b16 %v4886
    %v5050 = vunpack.c.l.b16 %v4887
    %v5051 = vunpack.c.l.b16 %v4888
    %v5052 = vunpack.c.h.b16 %v4888
    %v5053 = vunpack.c.l.b16 %v4889
    %v5054 = vunpack.c.l.b16 %v4890
    %v5055 = vunpack.c.h.b16 %v4890
    %v5056 = vunpack.c.l.b16 %v4891
    %v5057 = vunpack.c.l.b16 %v4892
    %v5058 = vunpack.c.h.b16 %v4892
    %v5059 = vunpack.c.l.b16 %v4893
    %v5060 = vunpack.c.l.b16 %v4894
    %v5061 = vunpack.c.h.b16 %v4894
    %v5062 = vunpack.c.l.b16 %v4895
    %v5063 = vunpack.c.l.b16 %v4896
    %v5064 = vunpack.c.h.b16 %v4896
    %v5065 = vunpack.c.l.b16 %v4897
    %v5066 = vunpack.c.l.b16 %v4898
    %v5067 = vunpack.c.h.b16 %v4898
    %v5068 = vunpack.c.l.b16 %v4899
    %v5069 = vunpack.c.l.b16 %v4900
    %v5070 = vunpack.c.h.b16 %v4900
    %v5071 = vunpack.c.l.b16 %v4901
    %v5072 = vunpack.c.l.b16 %v4902
    %v5073 = vunpack.c.h.b16 %v4902
    %v5074 = vunpack.c.l.b16 %v4903
    %v5075 = vunpack.c.l.b16 %v4904
    %v5076 = vunpack.c.h.b16 %v4904
    %v5077 = vunpack.c.l.b16 %v4905
    %v5078 = vunpack.c.l.b16 %v4906
    %v5079 = vunpack.c.h.b16 %v4906
    %v5080 = vunpack.c.l.b16 %v4907
    %v5081 = vunpack.c.l.b16 %v4908
    %v5082 = vunpack.c.h.b16 %v4908
    %v5083 = vunpack.c.l.b16 %v4909
    %v5084 = vunpack.c.l.b16 %v4910
    %v5085 = vunpack.c.h.b16 %v4910
    %v5086 = vunpack.c.l.b16 %v4911
    %v5087 = vunpack.c.l.b16 %v4912
    %v5088 = vunpack.c.h.b16 %v4912
    %v5089 = vunpack.c.l.b16 %v4913
    %v5090 = vunpack.c.l.b16 %v4914
    %v5091 = vunpack.c.h.b16 %v4914
    %v5092 = vunpack.c.l.b16 %v4915
    %v5093 = vpack.c.b16 %v5000, %v4997
    %v5094 = vpack.c.b16 %v5001, %v4998
    %v5095 = vpack.c.b16 %v5002, %v4999
    %v5096 = vpack.c.b16 %v5006, %v5003
    %v5097 = vpack.c.b16 %v5007, %v5004
    %v5098 = vpack.c.b16 %v5008, %v5005
    %v5099 = vpack.c.b16 %v5012, %v5009
    %v5100 = vpack.c.b16 %v5013, %v5010
    %v5101 = vpack.c.b16 %v5014, %v5011
    %v5102 = vpack.c.b16 %v5018, %v5015
    %v5103 = vpack.c.b16 %v5019, %v5016
    %v5104 = vpack.c.b16 %v5020, %v5017
    %v5105 = vpack.c.b16 %v5024, %v5021
    %v5106 = vpack.c.b16 %v5025, %v5022
    %v5107 = vpack.c.b16 %v5026, %v5023
    %v5108 = vpack.c.b16 %v5030, %v5027
    %v5109 = vpack.c.b16 %v5031, %v5028
    %v5110 = vpack.c.b16 %v5032, %v5029
    %v5111 = vpack.c.b16 %v5036, %v5033
    %v5112 = vpack.c.b16 %v5037, %v5034
    %v5113 = vpack.c.b16 %v5038, %v5035
    %v5114 = vpack.c.b16 %v5042, %v5039
    %v5115 = vpack.c.b16 %v5043, %v5040
    %v5116 = vpack.c.b16 %v5044, %v5041
    %v5117 = vpack.c.b16 %v5048, %v5045
    %v5118 = vpack.c.b16 %v5049, %v5046
    %v5119 = vpack.c.b16 %v5050, %v5047
    %v5120 = vpack.c.b16 %v5054, %v5051
    %v5121 = vpack.c.b16 %v5055, %v5052
    %v5122 = vpack.c.b16 %v5056, %v5053
    %v5123 = vpack.c.b16 %v5060, %v5057
    %v5124 = vpack.c.b16 %v5061, %v5058
    %v5125 = vpack.c.b16 %v5062, %v5059
    %v5126 = vpack.c.b16 %v5066, %v5063
    %v5127 = vpack.c.b16 %v5067, %v5064
    %v5128 = vpack.c.b16 %v5068, %v5065
    %v5129 = vpack.c.b16 %v5072, %v5069
    %v5130 = vpack.c.b16 %v5073, %v5070
    %v5131 = vpack.c.b16 %v5074, %v5071
    %v5132 = vpack.c.b16 %v5078, %v5075
    %v5133 = vpack.c.b16 %v5079, %v5076
    %v5134 = vpack.c.b16 %v5080, %v5077
    %v5135 = vpack.c.b16 %v5084, %v5081
    %v5136 = vpack.c.b16 %v5085, %v5082
    %v5137 = vpack.c.b16 %v5086, %v5083
    %v5138 = vpack.c.b16 %v5090, %v5087
    %v5139 = vpack.c.b16 %v5091, %v5088
    %v5140 = vpack.c.b16 %v5092, %v5089
    %5189 = vmatprep.subr.bf16.mxu0 %v5115
    %5190 = vmatpush1.bf16.msra.mxu0 %v5114
    %5191 = vmatprep.subr.bf16.mxu0 %v5112
    %5192 = vmatpush1.bf16.msra.mxu0 %v5111
    %5193 = vmatprep.subr.bf16.mxu0 %v5109
    %5194 = vmatpush1.bf16.msra.mxu0 %v5108
    %5195 = vmatprep.subr.bf16.mxu0 %v5106
    %5196 = vmatpush1.bf16.msra.mxu0 %v5105
    %5197 = vmatprep.subr.bf16.mxu0 %v5103
    %5198 = vmatpush1.bf16.msra.mxu0 %v5102
    %5199 = vmatprep.subr.bf16.mxu0 %v5100
    %5200 = vmatpush1.bf16.msra.mxu0 %v5099
    %5201 = vmatprep.subr.bf16.mxu0 %v5097
    %5202 = vmatpush1.bf16.msra.mxu0 %v5096
    %5203 = vmatprep.subr.bf16.mxu0 %v5094
    %5204 = vmatpush1.bf16.msra.mxu0 %v5093
    %5205 = vmatprep.subr.bf16.mxu0 %v5139
    %5206 = vmatpush2.bf16.msra.mxu0 %v5138
    %5207 = vmatprep.subr.bf16.mxu0 %v5136
    %5208 = vmatpush2.bf16.msra.mxu0 %v5135
    %5209 = vmatprep.subr.bf16.mxu0 %v5133
    %5210 = vmatpush2.bf16.msra.mxu0 %v5132
    %5211 = vmatprep.subr.bf16.mxu0 %v5130
    %5212 = vmatpush2.bf16.msra.mxu0 %v5129
    %5213 = vmatprep.subr.bf16.mxu0 %v5127
    %5214 = vmatpush2.bf16.msra.mxu0 %v5126
    %5215 = vmatprep.subr.bf16.mxu0 %v5124
    %5216 = vmatpush2.bf16.msra.mxu0 %v5123
    %5217 = vmatprep.subr.bf16.mxu0 %v5121
    %5218 = vmatpush2.bf16.msra.mxu0 %v5120
    %5219 = vmatprep.subr.bf16.mxu0 %v5118
    %5220 = vmatpush2.bf16.msra.mxu0 %v5117
    %5221 = vmatprep.mubr.bf16.mxu0 %v4851
    %5222 = vmatmul.mubr.bf16.gmra.mxu0 %v4850
    %v5223 = vpop.f32.mrf.mxu0
    %v5224 = vadd.f32 %v4921, %v5223
    %v5225 = vpop.f32.mrf.mxu0
    %v5226 = vadd.f32 %v4925, %v5225
    %v5227 = vpop.f32.mrf.mxu0
    %v5228 = vpop.f32.mrf.mxu0
    %5229 = vdwg.mxu0
    %5230 = vmatprep.subr.bf16.mxu0 0
    %5231 = vmatpush1.bf16.msra.mxu0 %v5116
    %5232 = vmatprep.subr.bf16.mxu0 0
    %5233 = vmatpush1.bf16.msra.mxu0 %v5113
    %5234 = vmatprep.subr.bf16.mxu0 0
    %5235 = vmatpush1.bf16.msra.mxu0 %v5110
    %5236 = vmatprep.subr.bf16.mxu0 0
    %5237 = vmatpush1.bf16.msra.mxu0 %v5107
    %5238 = vmatprep.subr.bf16.mxu0 0
    %5239 = vmatpush1.bf16.msra.mxu0 %v5104
    %5240 = vmatprep.subr.bf16.mxu0 0
    %5241 = vmatpush1.bf16.msra.mxu0 %v5101
    %5242 = vmatprep.subr.bf16.mxu0 0
    %5243 = vmatpush1.bf16.msra.mxu0 %v5098
    %5244 = vmatprep.subr.bf16.mxu0 0
    %5245 = vmatpush1.bf16.msra.mxu0 %v5095
    %5246 = vmatprep.subr.bf16.mxu0 0
    %5247 = vmatpush2.bf16.msra.mxu0 %v5140
    %5248 = vmatprep.subr.bf16.mxu0 0
    %5249 = vmatpush2.bf16.msra.mxu0 %v5137
    %5250 = vmatprep.subr.bf16.mxu0 0
    %5251 = vmatpush2.bf16.msra.mxu0 %v5134
    %5252 = vmatprep.subr.bf16.mxu0 0
    %5253 = vmatpush2.bf16.msra.mxu0 %v5131
    %5254 = vmatprep.subr.bf16.mxu0 0
    %5255 = vmatpush2.bf16.msra.mxu0 %v5128
    %5256 = vmatprep.subr.bf16.mxu0 0
    %5257 = vmatpush2.bf16.msra.mxu0 %v5125
    %5258 = vmatprep.subr.bf16.mxu0 0
    %5259 = vmatpush2.bf16.msra.mxu0 %v5122
    %5260 = vmatprep.subr.bf16.mxu0 0
    %5261 = vmatpush2.bf16.msra.mxu0 %v5119
    %5262 = vmatprep.mubr.bf16.mxu0 %v4851
    %5263 = vmatmul.mubr.bf16.gmra.mxu0 %v4850
    %v5264 = vpop.f32.mrf.mxu0
    %v5265 = vadd.f32 %v4929, %v5264
    %v5266 = vpop.f32.mrf.mxu0
    %v5267 = vpop.f32.mrf.mxu0
    %v5268 = vpop.f32.mrf.mxu0
    %5269 = vdwg.mxu0
    %v5270 = vadd.f32 %v1540, %v4804
    %v5271 = vadd.f32 %v1542, %v4806
    %v5272 = vadd.f32 %v1581, %v4845
    %v5273 = vadd.f32 %v1629, %v5224
    %v5274 = vadd.f32 %v1632, %v5226
    %v5275 = vadd.f32 %v1635, %v5265
    %v5279 = vcombine.low %v5270, %v5271
    %v5281 = vunpack.c.l.s4 1983009808
    %v5282 = vunpack.c.0.s8 %v5281
    %v5283 = vlaneseq
    %v5284 = vshrl.u32 %v5283, 7
    %v5285 = vsub.s32 %v5282, %v5284
    %v5286 = vrot.slane %v5279, %v5285
    %v5288 = vunpack.c.l.s4 1983009808
    %v5289 = vunpack.c.0.s8 %v5288
    %v5290 = vlaneseq
    %v5291 = vshrl.u32 %v5290, 7
    %v5292 = vsub.s32 %v5289, %v5291
    %v5293 = vrot.slane %v5272, %v5292
    %v5294 = vcombine.low %v5286, %v5293
    %5296 = vst [vmem:[#allocation2] sm:$0x3f] %v5294
    %v5300 = vcombine.low %v5273, %v5274
    %v5302 = vunpack.c.l.s4 1983009808
    %v5303 = vunpack.c.0.s8 %v5302
    %v5304 = vlaneseq
    %v5305 = vshrl.u32 %v5304, 7
    %v5306 = vsub.s32 %v5303, %v5305
    %v5307 = vrot.slane %v5300, %v5306
    %v5309 = vunpack.c.l.s4 1983009808
    %v5310 = vunpack.c.0.s8 %v5309
    %v5311 = vlaneseq
    %v5312 = vshrl.u32 %v5311, 7
    %v5313 = vsub.s32 %v5310, %v5312
    %v5314 = vrot.slane %v5275, %v5313
    %v5315 = vcombine.low %v5307, %v5314
    %5317 = vst [vmem:[#allocation4] sm:$0x3f] %v5315
    %v5318 = vld [vmem:[%s33] sm:$0x3]
    %v5319 = vpack.c.bf16 %v5318, %v5318
    %v5320 = vld [vmem:[%s39] sm:$0xff]
    %v5321 = vld [vmem:[%s39 + $0x8] sm:$0xff]
    %v5322 = vld [vmem:[%s39 + $0x10] sm:$0xff]
    %v5323 = vld [vmem:[%s39 + $0x18] sm:$0xff]
    %v5324 = vld [vmem:[%s39 + $0x20] sm:$0x11]
    %v5325 = vld [vmem:[%s41] sm:$0x3]
    %v5327 = vlaneseq
    %v5328 = vshrl.u32 %v5327, 7
    %v5329 = vsub.s32 0, %v5328
    %v5330 = vrot.slane %v5325, %v5329
    %v5331 = vlaneseq
    %v5332 = vshrl.u32 %v5331, 7
    %v5333 = vsub.s32 1, %v5332
    %v5334 = vrot.slane %v5325, %v5333
    %v5342 = vunpack.c.l.b16 %v5320
    %v5343 = vunpack.c.h.b16 %v5320
    %v5344 = vunpack.c.l.b16 %v5321
    %v5345 = vunpack.c.h.b16 %v5321
    %v5346 = vunpack.c.l.b16 %v5322
    %v5347 = vunpack.c.h.b16 %v5322
    %v5348 = vunpack.c.l.b16 %v5323
    %v5349 = vunpack.c.h.b16 %v5323
    %v5350 = vunpack.c.l.b16 %v5324
    %v5351 = vunpack.c.h.b16 %v5324
    %v5352 = vpack.c.b16 %v5344, %v5342
    %v5353 = vpack.c.b16 %v5345, %v5343
    %v5354 = vpack.c.b16 %v5348, %v5346
    %v5355 = vpack.c.b16 %v5349, %v5347
    %v5356 = vpack.c.b16 %v5350, %v5350
    %v5357 = vpack.c.b16 %v5351, %v5351
    %vm5362 = vcmask 269312
    %v5364 = vsel %vm5362, %v5319, 0
    %v5366 = vsel 0, 4294967295, 65535
    %v5367 = vsel %vm1172, %v5366, 0
    %v5369 = vand.u32 %v5356, %v5367
    %v5372 = vand.u32 %v5357, %v5367
    %5374 = vmatprep.subr.bf16.mxu0 0
    %5375 = vmatpush1.bf16.msra.mxu0 0
    %5376 = vmatprep.subr.bf16.mxu0 0
    %5377 = vmatpush1.bf16.msra.mxu0 0
    %5378 = vmatprep.subr.bf16.mxu0 0
    %5379 = vmatpush1.bf16.msra.mxu0 0
    %5380 = vmatprep.subr.bf16.mxu0 0
    %5381 = vmatpush1.bf16.msra.mxu0 0
    %5382 = vmatprep.subr.bf16.mxu0 0
    %5383 = vmatpush1.bf16.msra.mxu0 0
    %5384 = vmatprep.subr.bf16.mxu0 %v5372
    %5385 = vmatpush1.bf16.msra.mxu0 %v5369
    %5386 = vmatprep.subr.bf16.mxu0 %v5355
    %5387 = vmatpush1.bf16.msra.mxu0 %v5354
    %5388 = vmatprep.subr.bf16.mxu0 %v5353
    %5389 = vmatpush1.bf16.msra.mxu0 %v5352
    %5390 = vmatprep.subr.bf16.mxu0 0
    %5391 = vmatpush2.bf16.msra.mxu0 0
    %5392 = vmatprep.subr.bf16.mxu0 0
    %5393 = vmatpush2.bf16.msra.mxu0 0
    %5394 = vmatprep.subr.bf16.mxu0 0
    %5395 = vmatpush2.bf16.msra.mxu0 0
    %5396 = vmatprep.subr.bf16.mxu0 0
    %5397 = vmatpush2.bf16.msra.mxu0 0
    %5398 = vmatprep.subr.bf16.mxu0 0
    %5399 = vmatpush2.bf16.msra.mxu0 0
    %5400 = vmatprep.subr.bf16.mxu0 0
    %5401 = vmatpush2.bf16.msra.mxu0 0
    %5402 = vmatprep.subr.bf16.mxu0 0
    %5403 = vmatpush2.bf16.msra.mxu0 0
    %5404 = vmatprep.subr.bf16.mxu0 0
    %5405 = vmatpush2.bf16.msra.mxu0 0
    %5406 = vmatprep.mubr.bf16.mxu0 0
    %5407 = vmatmul.mubr.bf16.gmra.mxu0 %v5364
    %v5408 = vpop.f32.mrf.mxu0
    %v5409 = vadd.f32 %v5330, %v5408
    %v5410 = vpop.f32.mrf.mxu0
    %v5411 = vadd.f32 %v5334, %v5410
    %v5412 = vpop.f32.mrf.mxu0
    %v5413 = vpop.f32.mrf.mxu0
    %5414 = vdwg.mxu0
    %vm5415 = vcmp.gt.f32.partialorder %v5409, 0.0
    %vm5416 = vcmp.gt.f32.partialorder %v5411, 0.0
    %v5417 = vmul.f32 %v5409, 1.442695
    %v5418 = vpow.pop %v5417
    %v5419 = vmul.f32 %v5411, 1.442695
    %v5420 = vpow.pop %v5419
    %v5421 = vsub.f32 %v5418, 1.0
    %v5422 = vsub.f32 %v5420, 1.0
    %v5423 = vmul.f32 %v5421, 1.6732632
    %v5424 = vmul.f32 %v5422, 1.6732632
    %v5425 = vsel %vm5415, %v5409, %v5423
    %v5426 = vsel %vm5416, %v5411, %v5424
    %v5427 = vmul.f32 %v5425, 1.050701
    %v5428 = vmul.f32 %v5426, 1.050701
    %v5429 = vpack.c.bf16 %v5427, %v5427
    %v5430 = vpack.c.bf16 %v5428, %v5428
    %v5431 = vld [vmem:[%s43] sm:$0xff]
    %v5432 = vld [vmem:[%s43 + $0x8] sm:$0xff]
    %v5433 = vld [vmem:[%s43 + $0x10] sm:$0xff]
    %v5434 = vld [vmem:[%s43 + $0x18] sm:$0xff]
    %v5435 = vld [vmem:[%s43 + $0x20] sm:$0xff]
    %v5436 = vld [vmem:[%s43 + $0x28] sm:$0xff]
    %v5437 = vld [vmem:[%s43 + $0x30] sm:$0xff]
    %v5438 = vld [vmem:[%s43 + $0x38] sm:$0xff]
    %v5439 = vld [vmem:[%s43 + $0x40] sm:$0xff]
    %v5440 = vld [vmem:[%s43 + $0x48] sm:$0xff]
    %v5441 = vld [vmem:[%s43 + $0x50] sm:$0xff]
    %v5442 = vld [vmem:[%s43 + $0x58] sm:$0xff]
    %v5443 = vld [vmem:[%s43 + $0x60] sm:$0xff]
    %v5444 = vld [vmem:[%s43 + $0x68] sm:$0xff]
    %v5445 = vld [vmem:[%s43 + $0x70] sm:$0xff]
    %v5446 = vld [vmem:[%s43 + $0x78] sm:$0xff]
    %v5447 = vld [vmem:[%s43 + $0x80] sm:$0xff]
    %v5448 = vld [vmem:[%s43 + $0x88] sm:$0xff]
    %v5449 = vld [vmem:[%s43 + $0x90] sm:$0xff]
    %v5450 = vld [vmem:[%s43 + $0x98] sm:$0xff]
    %v5451 = vld [vmem:[%s43 + $0xa0] sm:$0xff]
    %v5452 = vld [vmem:[%s43 + $0xa8] sm:$0xff]
    %v5453 = vld [vmem:[%s43 + $0xb0] sm:$0xff]
    %v5454 = vld [vmem:[%s43 + $0xb8] sm:$0xff]
    %v5455 = vld [vmem:[%s43 + $0xc0] sm:$0xff]
    %v5456 = vld [vmem:[%s43 + $0xc8] sm:$0xff]
    %v5457 = vld [vmem:[%s43 + $0xd0] sm:$0xff]
    %v5458 = vld [vmem:[%s43 + $0xd8] sm:$0xff]
    %v5459 = vld [vmem:[%s43 + $0xe0] sm:$0xff]
    %v5460 = vld [vmem:[%s43 + $0xe8] sm:$0xff]
    %v5461 = vld [vmem:[%s43 + $0xf0] sm:$0xff]
    %v5462 = vld [vmem:[%s43 + $0xf8] sm:$0xff]
    %v5463 = vld [vmem:[%s43 + $0x100] sm:$0xff]
    %v5464 = vld [vmem:[%s43 + $0x108] sm:$0xff]
    %v5465 = vld [vmem:[%s43 + $0x110] sm:$0xff]
    %v5466 = vld [vmem:[%s43 + $0x118] sm:$0xff]
    %v5467 = vld [vmem:[%s43 + $0x120] sm:$0xff]
    %v5468 = vld [vmem:[%s43 + $0x128] sm:$0xff]
    %v5469 = vld [vmem:[%s43 + $0x130] sm:$0xff]
    %v5470 = vld [vmem:[%s43 + $0x138] sm:$0xff]
    %v5471 = vld [vmem:[%s43 + $0x140] sm:$0xff]
    %v5472 = vld [vmem:[%s43 + $0x148] sm:$0xff]
    %v5473 = vld [vmem:[%s43 + $0x150] sm:$0xff]
    %v5474 = vld [vmem:[%s43 + $0x158] sm:$0xff]
    %v5475 = vld [vmem:[%s43 + $0x160] sm:$0xff]
    %v5476 = vld [vmem:[%s43 + $0x168] sm:$0xff]
    %v5477 = vld [vmem:[%s43 + $0x170] sm:$0xff]
    %v5478 = vld [vmem:[%s43 + $0x178] sm:$0xff]
    %v5479 = vld [vmem:[%s43 + $0x180] sm:$0xff]
    %v5480 = vld [vmem:[%s43 + $0x188] sm:$0xff]
    %v5481 = vld [vmem:[%s43 + $0x190] sm:$0xff]
    %v5482 = vld [vmem:[%s43 + $0x198] sm:$0xff]
    %v5483 = vld [vmem:[%s43 + $0x1a0] sm:$0xff]
    %v5484 = vld [vmem:[%s43 + $0x1a8] sm:$0xff]
    %v5485 = vld [vmem:[%s43 + $0x1b0] sm:$0xff]
    %v5486 = vld [vmem:[%s43 + $0x1b8] sm:$0xff]
    %v5487 = vld [vmem:[%s43 + $0x1c0] sm:$0xff]
    %v5488 = vld [vmem:[%s43 + $0x1c8] sm:$0xff]
    %v5489 = vld [vmem:[%s43 + $0x1d0] sm:$0xff]
    %v5490 = vld [vmem:[%s43 + $0x1d8] sm:$0xff]
    %v5491 = vld [vmem:[%s43 + $0x1e0] sm:$0xff]
    %v5492 = vld [vmem:[%s43 + $0x1e8] sm:$0xff]
    %v5493 = vld [vmem:[%s43 + $0x1f0] sm:$0xff]
    %v5494 = vld [vmem:[%s43 + $0x1f8] sm:$0xff]
    %v5495 = vld [vmem:[%s43 + $0x200] sm:$0xff]
    %v5496 = vld [vmem:[%s43 + $0x208] sm:$0xff]
    %v5497 = vld [vmem:[%s43 + $0x210] sm:$0xff]
    %v5498 = vld [vmem:[%s43 + $0x218] sm:$0xff]
    %v5499 = vld [vmem:[%s43 + $0x220] sm:$0xff]
    %v5500 = vld [vmem:[%s43 + $0x228] sm:$0xff]
    %v5501 = vld [vmem:[%s43 + $0x230] sm:$0xff]
    %v5502 = vld [vmem:[%s43 + $0x238] sm:$0xff]
    %v5503 = vld [vmem:[%s43 + $0x240] sm:$0xff]
    %v5504 = vld [vmem:[%s43 + $0x248] sm:$0xff]
    %v5505 = vld [vmem:[%s43 + $0x250] sm:$0xff]
    %v5506 = vld [vmem:[%s43 + $0x258] sm:$0xff]
    %v5507 = vld [vmem:[%s43 + $0x260] sm:$0xff]
    %v5508 = vld [vmem:[%s43 + $0x268] sm:$0xff]
    %v5509 = vld [vmem:[%s43 + $0x270] sm:$0xff]
    %v5510 = vld [vmem:[%s43 + $0x278] sm:$0xff]
    %v5511 = vld [vmem:[%s43 + $0x280] sm:$0xff]
    %v5512 = vld [vmem:[%s43 + $0x288] sm:$0xff]
    %v5513 = vld [vmem:[%s43 + $0x290] sm:$0xff]
    %v5514 = vld [vmem:[%s43 + $0x298] sm:$0xff]
    %v5515 = vld [vmem:[%s43 + $0x2a0] sm:$0xff]
    %v5516 = vld [vmem:[%s43 + $0x2a8] sm:$0xff]
    %v5517 = vld [vmem:[%s43 + $0x2b0] sm:$0xff]
    %v5518 = vld [vmem:[%s43 + $0x2b8] sm:$0xff]
    %v5519 = vld [vmem:[%s43 + $0x2c0] sm:$0xff]
    %v5520 = vld [vmem:[%s43 + $0x2c8] sm:$0xff]
    %v5521 = vld [vmem:[%s43 + $0x2d0] sm:$0xff]
    %v5522 = vld [vmem:[%s43 + $0x2d8] sm:$0xff]
    %v5523 = vld [vmem:[%s43 + $0x2e0] sm:$0xff]
    %v5524 = vld [vmem:[%s43 + $0x2e8] sm:$0xff]
    %v5525 = vld [vmem:[%s43 + $0x2f0] sm:$0xff]
    %v5526 = vld [vmem:[%s43 + $0x2f8] sm:$0xff]
    %v5527 = vld [vmem:[%s45] sm:$0x3f]
    %v5529 = vlaneseq
    %v5530 = vshrl.u32 %v5529, 7
    %v5531 = vsub.s32 0, %v5530
    %v5532 = vrot.slane %v5527, %v5531
    %v5533 = vlaneseq
    %v5534 = vshrl.u32 %v5533, 7
    %v5535 = vsub.s32 1, %v5534
    %v5536 = vrot.slane %v5527, %v5535
    %v5537 = vlaneseq
    %v5538 = vshrl.u32 %v5537, 7
    %v5539 = vsub.s32 2, %v5538
    %v5540 = vrot.slane %v5527, %v5539
    %v5541 = vlaneseq
    %v5542 = vshrl.u32 %v5541, 7
    %v5543 = vsub.s32 3, %v5542
    %v5544 = vrot.slane %v5527, %v5543
    %v5545 = vlaneseq
    %v5546 = vshrl.u32 %v5545, 7
    %v5547 = vsub.s32 4, %v5546
    %v5548 = vrot.slane %v5527, %v5547
    %v5549 = vlaneseq
    %v5550 = vshrl.u32 %v5549, 7
    %v5551 = vsub.s32 5, %v5550
    %v5552 = vrot.slane %v5527, %v5551
    %v5655 = vunpack.c.l.b16 %v5431
    %v5656 = vunpack.c.h.b16 %v5431
    %v5657 = vunpack.c.l.b16 %v5432
    %v5658 = vunpack.c.h.b16 %v5432
    %v5659 = vunpack.c.l.b16 %v5433
    %v5660 = vunpack.c.h.b16 %v5433
    %v5661 = vunpack.c.l.b16 %v5434
    %v5662 = vunpack.c.h.b16 %v5434
    %v5663 = vunpack.c.l.b16 %v5435
    %v5664 = vunpack.c.h.b16 %v5435
    %v5665 = vunpack.c.l.b16 %v5436
    %v5666 = vunpack.c.h.b16 %v5436
    %v5667 = vunpack.c.l.b16 %v5437
    %v5668 = vunpack.c.h.b16 %v5437
    %v5669 = vunpack.c.l.b16 %v5438
    %v5670 = vunpack.c.h.b16 %v5438
    %v5671 = vunpack.c.l.b16 %v5439
    %v5672 = vunpack.c.h.b16 %v5439
    %v5673 = vunpack.c.l.b16 %v5440
    %v5674 = vunpack.c.h.b16 %v5440
    %v5675 = vunpack.c.l.b16 %v5441
    %v5676 = vunpack.c.h.b16 %v5441
    %v5677 = vunpack.c.l.b16 %v5442
    %v5678 = vunpack.c.h.b16 %v5442
    %v5679 = vunpack.c.l.b16 %v5443
    %v5680 = vunpack.c.h.b16 %v5443
    %v5681 = vunpack.c.l.b16 %v5444
    %v5682 = vunpack.c.h.b16 %v5444
    %v5683 = vunpack.c.l.b16 %v5445
    %v5684 = vunpack.c.h.b16 %v5445
    %v5685 = vunpack.c.l.b16 %v5446
    %v5686 = vunpack.c.h.b16 %v5446
    %v5687 = vunpack.c.l.b16 %v5447
    %v5688 = vunpack.c.h.b16 %v5447
    %v5689 = vunpack.c.l.b16 %v5448
    %v5690 = vunpack.c.h.b16 %v5448
    %v5691 = vunpack.c.l.b16 %v5449
    %v5692 = vunpack.c.h.b16 %v5449
    %v5693 = vunpack.c.l.b16 %v5450
    %v5694 = vunpack.c.h.b16 %v5450
    %v5695 = vunpack.c.l.b16 %v5451
    %v5696 = vunpack.c.h.b16 %v5451
    %v5697 = vunpack.c.l.b16 %v5452
    %v5698 = vunpack.c.h.b16 %v5452
    %v5699 = vunpack.c.l.b16 %v5453
    %v5700 = vunpack.c.h.b16 %v5453
    %v5701 = vunpack.c.l.b16 %v5454
    %v5702 = vunpack.c.h.b16 %v5454
    %v5703 = vunpack.c.l.b16 %v5455
    %v5704 = vunpack.c.h.b16 %v5455
    %v5705 = vunpack.c.l.b16 %v5456
    %v5706 = vunpack.c.h.b16 %v5456
    %v5707 = vunpack.c.l.b16 %v5457
    %v5708 = vunpack.c.h.b16 %v5457
    %v5709 = vunpack.c.l.b16 %v5458
    %v5710 = vunpack.c.h.b16 %v5458
    %v5711 = vunpack.c.l.b16 %v5459
    %v5712 = vunpack.c.h.b16 %v5459
    %v5713 = vunpack.c.l.b16 %v5460
    %v5714 = vunpack.c.h.b16 %v5460
    %v5715 = vunpack.c.l.b16 %v5461
    %v5716 = vunpack.c.h.b16 %v5461
    %v5717 = vunpack.c.l.b16 %v5462
    %v5718 = vunpack.c.h.b16 %v5462
    %v5719 = vunpack.c.l.b16 %v5463
    %v5720 = vunpack.c.h.b16 %v5463
    %v5721 = vunpack.c.l.b16 %v5464
    %v5722 = vunpack.c.h.b16 %v5464
    %v5723 = vunpack.c.l.b16 %v5465
    %v5724 = vunpack.c.h.b16 %v5465
    %v5725 = vunpack.c.l.b16 %v5466
    %v5726 = vunpack.c.h.b16 %v5466
    %v5727 = vunpack.c.l.b16 %v5467
    %v5728 = vunpack.c.h.b16 %v5467
    %v5729 = vunpack.c.l.b16 %v5468
    %v5730 = vunpack.c.h.b16 %v5468
    %v5731 = vunpack.c.l.b16 %v5469
    %v5732 = vunpack.c.h.b16 %v5469
    %v5733 = vunpack.c.l.b16 %v5470
    %v5734 = vunpack.c.h.b16 %v5470
    %v5735 = vunpack.c.l.b16 %v5471
    %v5736 = vunpack.c.h.b16 %v5471
    %v5737 = vunpack.c.l.b16 %v5472
    %v5738 = vunpack.c.h.b16 %v5472
    %v5739 = vunpack.c.l.b16 %v5473
    %v5740 = vunpack.c.h.b16 %v5473
    %v5741 = vunpack.c.l.b16 %v5474
    %v5742 = vunpack.c.h.b16 %v5474
    %v5743 = vunpack.c.l.b16 %v5475
    %v5744 = vunpack.c.h.b16 %v5475
    %v5745 = vunpack.c.l.b16 %v5476
    %v5746 = vunpack.c.h.b16 %v5476
    %v5747 = vunpack.c.l.b16 %v5477
    %v5748 = vunpack.c.h.b16 %v5477
    %v5749 = vunpack.c.l.b16 %v5478
    %v5750 = vunpack.c.h.b16 %v5478
    %v5751 = vunpack.c.l.b16 %v5479
    %v5752 = vunpack.c.h.b16 %v5479
    %v5753 = vunpack.c.l.b16 %v5480
    %v5754 = vunpack.c.h.b16 %v5480
    %v5755 = vunpack.c.l.b16 %v5481
    %v5756 = vunpack.c.h.b16 %v5481
    %v5757 = vunpack.c.l.b16 %v5482
    %v5758 = vunpack.c.h.b16 %v5482
    %v5759 = vunpack.c.l.b16 %v5483
    %v5760 = vunpack.c.h.b16 %v5483
    %v5761 = vunpack.c.l.b16 %v5484
    %v5762 = vunpack.c.h.b16 %v5484
    %v5763 = vunpack.c.l.b16 %v5485
    %v5764 = vunpack.c.h.b16 %v5485
    %v5765 = vunpack.c.l.b16 %v5486
    %v5766 = vunpack.c.h.b16 %v5486
    %v5767 = vunpack.c.l.b16 %v5487
    %v5768 = vunpack.c.h.b16 %v5487
    %v5769 = vunpack.c.l.b16 %v5488
    %v5770 = vunpack.c.h.b16 %v5488
    %v5771 = vunpack.c.l.b16 %v5489
    %v5772 = vunpack.c.h.b16 %v5489
    %v5773 = vunpack.c.l.b16 %v5490
    %v5774 = vunpack.c.h.b16 %v5490
    %v5775 = vunpack.c.l.b16 %v5491
    %v5776 = vunpack.c.h.b16 %v5491
    %v5777 = vunpack.c.l.b16 %v5492
    %v5778 = vunpack.c.h.b16 %v5492
    %v5779 = vunpack.c.l.b16 %v5493
    %v5780 = vunpack.c.h.b16 %v5493
    %v5781 = vunpack.c.l.b16 %v5494
    %v5782 = vunpack.c.h.b16 %v5494
    %v5783 = vunpack.c.l.b16 %v5495
    %v5784 = vunpack.c.h.b16 %v5495
    %v5785 = vunpack.c.l.b16 %v5496
    %v5786 = vunpack.c.h.b16 %v5496
    %v5787 = vunpack.c.l.b16 %v5497
    %v5788 = vunpack.c.h.b16 %v5497
    %v5789 = vunpack.c.l.b16 %v5498
    %v5790 = vunpack.c.h.b16 %v5498
    %v5791 = vunpack.c.l.b16 %v5499
    %v5792 = vunpack.c.h.b16 %v5499
    %v5793 = vunpack.c.l.b16 %v5500
    %v5794 = vunpack.c.h.b16 %v5500
    %v5795 = vunpack.c.l.b16 %v5501
    %v5796 = vunpack.c.h.b16 %v5501
    %v5797 = vunpack.c.l.b16 %v5502
    %v5798 = vunpack.c.h.b16 %v5502
    %v5799 = vunpack.c.l.b16 %v5503
    %v5800 = vunpack.c.h.b16 %v5503
    %v5801 = vunpack.c.l.b16 %v5504
    %v5802 = vunpack.c.h.b16 %v5504
    %v5803 = vunpack.c.l.b16 %v5505
    %v5804 = vunpack.c.h.b16 %v5505
    %v5805 = vunpack.c.l.b16 %v5506
    %v5806 = vunpack.c.h.b16 %v5506
    %v5807 = vunpack.c.l.b16 %v5507
    %v5808 = vunpack.c.h.b16 %v5507
    %v5809 = vunpack.c.l.b16 %v5508
    %v5810 = vunpack.c.h.b16 %v5508
    %v5811 = vunpack.c.l.b16 %v5509
    %v5812 = vunpack.c.h.b16 %v5509
    %v5813 = vunpack.c.l.b16 %v5510
    %v5814 = vunpack.c.h.b16 %v5510
    %v5815 = vunpack.c.l.b16 %v5511
    %v5816 = vunpack.c.h.b16 %v5511
    %v5817 = vunpack.c.l.b16 %v5512
    %v5818 = vunpack.c.h.b16 %v5512
    %v5819 = vunpack.c.l.b16 %v5513
    %v5820 = vunpack.c.h.b16 %v5513
    %v5821 = vunpack.c.l.b16 %v5514
    %v5822 = vunpack.c.h.b16 %v5514
    %v5823 = vunpack.c.l.b16 %v5515
    %v5824 = vunpack.c.h.b16 %v5515
    %v5825 = vunpack.c.l.b16 %v5516
    %v5826 = vunpack.c.h.b16 %v5516
    %v5827 = vunpack.c.l.b16 %v5517
    %v5828 = vunpack.c.h.b16 %v5517
    %v5829 = vunpack.c.l.b16 %v5518
    %v5830 = vunpack.c.h.b16 %v5518
    %v5831 = vunpack.c.l.b16 %v5519
    %v5832 = vunpack.c.h.b16 %v5519
    %v5833 = vunpack.c.l.b16 %v5520
    %v5834 = vunpack.c.h.b16 %v5520
    %v5835 = vunpack.c.l.b16 %v5521
    %v5836 = vunpack.c.h.b16 %v5521
    %v5837 = vunpack.c.l.b16 %v5522
    %v5838 = vunpack.c.h.b16 %v5522
    %v5839 = vunpack.c.l.b16 %v5523
    %v5840 = vunpack.c.h.b16 %v5523
    %v5841 = vunpack.c.l.b16 %v5524
    %v5842 = vunpack.c.h.b16 %v5524
    %v5843 = vunpack.c.l.b16 %v5525
    %v5844 = vunpack.c.h.b16 %v5525
    %v5845 = vunpack.c.l.b16 %v5526
    %v5846 = vunpack.c.h.b16 %v5526
    %v5847 = vpack.c.b16 %v5661, %v5655
    %v5848 = vpack.c.b16 %v5662, %v5656
    %v5849 = vpack.c.b16 %v5663, %v5657
    %v5850 = vpack.c.b16 %v5664, %v5658
    %v5851 = vpack.c.b16 %v5665, %v5659
    %v5852 = vpack.c.b16 %v5666, %v5660
    %v5853 = vpack.c.b16 %v5673, %v5667
    %v5854 = vpack.c.b16 %v5674, %v5668
    %v5855 = vpack.c.b16 %v5675, %v5669
    %v5856 = vpack.c.b16 %v5676, %v5670
    %v5857 = vpack.c.b16 %v5677, %v5671
    %v5858 = vpack.c.b16 %v5678, %v5672
    %v5859 = vpack.c.b16 %v5685, %v5679
    %v5860 = vpack.c.b16 %v5686, %v5680
    %v5861 = vpack.c.b16 %v5687, %v5681
    %v5862 = vpack.c.b16 %v5688, %v5682
    %v5863 = vpack.c.b16 %v5689, %v5683
    %v5864 = vpack.c.b16 %v5690, %v5684
    %v5865 = vpack.c.b16 %v5697, %v5691
    %v5866 = vpack.c.b16 %v5698, %v5692
    %v5867 = vpack.c.b16 %v5699, %v5693
    %v5868 = vpack.c.b16 %v5700, %v5694
    %v5869 = vpack.c.b16 %v5701, %v5695
    %v5870 = vpack.c.b16 %v5702, %v5696
    %v5871 = vpack.c.b16 %v5709, %v5703
    %v5872 = vpack.c.b16 %v5710, %v5704
    %v5873 = vpack.c.b16 %v5711, %v5705
    %v5874 = vpack.c.b16 %v5712, %v5706
    %v5875 = vpack.c.b16 %v5713, %v5707
    %v5876 = vpack.c.b16 %v5714, %v5708
    %v5877 = vpack.c.b16 %v5721, %v5715
    %v5878 = vpack.c.b16 %v5722, %v5716
    %v5879 = vpack.c.b16 %v5723, %v5717
    %v5880 = vpack.c.b16 %v5724, %v5718
    %v5881 = vpack.c.b16 %v5725, %v5719
    %v5882 = vpack.c.b16 %v5726, %v5720
    %v5883 = vpack.c.b16 %v5733, %v5727
    %v5884 = vpack.c.b16 %v5734, %v5728
    %v5885 = vpack.c.b16 %v5735, %v5729
    %v5886 = vpack.c.b16 %v5736, %v5730
    %v5887 = vpack.c.b16 %v5737, %v5731
    %v5888 = vpack.c.b16 %v5738, %v5732
    %v5889 = vpack.c.b16 %v5745, %v5739
    %v5890 = vpack.c.b16 %v5746, %v5740
    %v5891 = vpack.c.b16 %v5747, %v5741
    %v5892 = vpack.c.b16 %v5748, %v5742
    %v5893 = vpack.c.b16 %v5749, %v5743
    %v5894 = vpack.c.b16 %v5750, %v5744
    %v5895 = vpack.c.b16 %v5757, %v5751
    %v5896 = vpack.c.b16 %v5758, %v5752
    %v5897 = vpack.c.b16 %v5759, %v5753
    %v5898 = vpack.c.b16 %v5760, %v5754
    %v5899 = vpack.c.b16 %v5761, %v5755
    %v5900 = vpack.c.b16 %v5762, %v5756
    %v5901 = vpack.c.b16 %v5769, %v5763
    %v5902 = vpack.c.b16 %v5770, %v5764
    %v5903 = vpack.c.b16 %v5771, %v5765
    %v5904 = vpack.c.b16 %v5772, %v5766
    %v5905 = vpack.c.b16 %v5773, %v5767
    %v5906 = vpack.c.b16 %v5774, %v5768
    %v5907 = vpack.c.b16 %v5781, %v5775
    %v5908 = vpack.c.b16 %v5782, %v5776
    %v5909 = vpack.c.b16 %v5783, %v5777
    %v5910 = vpack.c.b16 %v5784, %v5778
    %v5911 = vpack.c.b16 %v5785, %v5779
    %v5912 = vpack.c.b16 %v5786, %v5780
    %v5913 = vpack.c.b16 %v5793, %v5787
    %v5914 = vpack.c.b16 %v5794, %v5788
    %v5915 = vpack.c.b16 %v5795, %v5789
    %v5916 = vpack.c.b16 %v5796, %v5790
    %v5917 = vpack.c.b16 %v5797, %v5791
    %v5918 = vpack.c.b16 %v5798, %v5792
    %v5919 = vpack.c.b16 %v5805, %v5799
    %v5920 = vpack.c.b16 %v5806, %v5800
    %v5921 = vpack.c.b16 %v5807, %v5801
    %v5922 = vpack.c.b16 %v5808, %v5802
    %v5923 = vpack.c.b16 %v5809, %v5803
    %v5924 = vpack.c.b16 %v5810, %v5804
    %v5925 = vpack.c.b16 %v5817, %v5811
    %v5926 = vpack.c.b16 %v5818, %v5812
    %v5927 = vpack.c.b16 %v5819, %v5813
    %v5928 = vpack.c.b16 %v5820, %v5814
    %v5929 = vpack.c.b16 %v5821, %v5815
    %v5930 = vpack.c.b16 %v5822, %v5816
    %v5931 = vpack.c.b16 %v5829, %v5823
    %v5932 = vpack.c.b16 %v5830, %v5824
    %v5933 = vpack.c.b16 %v5831, %v5825
    %v5934 = vpack.c.b16 %v5832, %v5826
    %v5935 = vpack.c.b16 %v5833, %v5827
    %v5936 = vpack.c.b16 %v5834, %v5828
    %v5937 = vpack.c.b16 %v5841, %v5835
    %v5938 = vpack.c.b16 %v5842, %v5836
    %v5939 = vpack.c.b16 %v5843, %v5837
    %v5940 = vpack.c.b16 %v5844, %v5838
    %v5941 = vpack.c.b16 %v5845, %v5839
    %v5942 = vpack.c.b16 %v5846, %v5840
    %6039 = vmatprep.subr.bf16.mxu0 %v5890
    %6040 = vmatpush1.bf16.msra.mxu0 %v5889
    %6041 = vmatprep.subr.bf16.mxu0 %v5884
    %6042 = vmatpush1.bf16.msra.mxu0 %v5883
    %6043 = vmatprep.subr.bf16.mxu0 %v5878
    %6044 = vmatpush1.bf16.msra.mxu0 %v5877
    %6045 = vmatprep.subr.bf16.mxu0 %v5872
    %6046 = vmatpush1.bf16.msra.mxu0 %v5871
    %6047 = vmatprep.subr.bf16.mxu0 %v5866
    %6048 = vmatpush1.bf16.msra.mxu0 %v5865
    %6049 = vmatprep.subr.bf16.mxu0 %v5860
    %6050 = vmatpush1.bf16.msra.mxu0 %v5859
    %6051 = vmatprep.subr.bf16.mxu0 %v5854
    %6052 = vmatpush1.bf16.msra.mxu0 %v5853
    %6053 = vmatprep.subr.bf16.mxu0 %v5848
    %6054 = vmatpush1.bf16.msra.mxu0 %v5847
    %6055 = vmatprep.subr.bf16.mxu0 %v5938
    %6056 = vmatpush2.bf16.msra.mxu0 %v5937
    %6057 = vmatprep.subr.bf16.mxu0 %v5932
    %6058 = vmatpush2.bf16.msra.mxu0 %v5931
    %6059 = vmatprep.subr.bf16.mxu0 %v5926
    %6060 = vmatpush2.bf16.msra.mxu0 %v5925
    %6061 = vmatprep.subr.bf16.mxu0 %v5920
    %6062 = vmatpush2.bf16.msra.mxu0 %v5919
    %6063 = vmatprep.subr.bf16.mxu0 %v5914
    %6064 = vmatpush2.bf16.msra.mxu0 %v5913
    %6065 = vmatprep.subr.bf16.mxu0 %v5908
    %6066 = vmatpush2.bf16.msra.mxu0 %v5907
    %6067 = vmatprep.subr.bf16.mxu0 %v5902
    %6068 = vmatpush2.bf16.msra.mxu0 %v5901
    %6069 = vmatprep.subr.bf16.mxu0 %v5896
    %6070 = vmatpush2.bf16.msra.mxu0 %v5895
    %6071 = vmatprep.mubr.bf16.mxu0 %v5430
    %6072 = vmatmul.mubr.bf16.gmra.mxu0 %v5429
    %v6073 = vpop.f32.mrf.mxu0
    %v6074 = vadd.f32 %v5532, %v6073
    %v6075 = vpop.f32.mrf.mxu0
    %v6076 = vadd.f32 %v5536, %v6075
    %v6077 = vpop.f32.mrf.mxu0
    %v6078 = vpop.f32.mrf.mxu0
    %6079 = vdwg.mxu0
    %6080 = vmatprep.subr.bf16.mxu0 %v5892
    %6081 = vmatpush1.bf16.msra.mxu0 %v5891
    %6082 = vmatprep.subr.bf16.mxu0 %v5886
    %6083 = vmatpush1.bf16.msra.mxu0 %v5885
    %6084 = vmatprep.subr.bf16.mxu0 %v5880
    %6085 = vmatpush1.bf16.msra.mxu0 %v5879
    %6086 = vmatprep.subr.bf16.mxu0 %v5874
    %6087 = vmatpush1.bf16.msra.mxu0 %v5873
    %6088 = vmatprep.subr.bf16.mxu0 %v5868
    %6089 = vmatpush1.bf16.msra.mxu0 %v5867
    %6090 = vmatprep.subr.bf16.mxu0 %v5862
    %6091 = vmatpush1.bf16.msra.mxu0 %v5861
    %6092 = vmatprep.subr.bf16.mxu0 %v5856
    %6093 = vmatpush1.bf16.msra.mxu0 %v5855
    %6094 = vmatprep.subr.bf16.mxu0 %v5850
    %6095 = vmatpush1.bf16.msra.mxu0 %v5849
    %6096 = vmatprep.subr.bf16.mxu0 %v5940
    %6097 = vmatpush2.bf16.msra.mxu0 %v5939
    %6098 = vmatprep.subr.bf16.mxu0 %v5934
    %6099 = vmatpush2.bf16.msra.mxu0 %v5933
    %6100 = vmatprep.subr.bf16.mxu0 %v5928
    %6101 = vmatpush2.bf16.msra.mxu0 %v5927
    %6102 = vmatprep.subr.bf16.mxu0 %v5922
    %6103 = vmatpush2.bf16.msra.mxu0 %v5921
    %6104 = vmatprep.subr.bf16.mxu0 %v5916
    %6105 = vmatpush2.bf16.msra.mxu0 %v5915
    %6106 = vmatprep.subr.bf16.mxu0 %v5910
    %6107 = vmatpush2.bf16.msra.mxu0 %v5909
    %6108 = vmatprep.subr.bf16.mxu0 %v5904
    %6109 = vmatpush2.bf16.msra.mxu0 %v5903
    %6110 = vmatprep.subr.bf16.mxu0 %v5898
    %6111 = vmatpush2.bf16.msra.mxu0 %v5897
    %6112 = vmatprep.mubr.bf16.mxu0 %v5430
    %6113 = vmatmul.mubr.bf16.gmra.mxu0 %v5429
    %v6114 = vpop.f32.mrf.mxu0
    %v6115 = vadd.f32 %v5540, %v6114
    %v6116 = vpop.f32.mrf.mxu0
    %v6117 = vadd.f32 %v5544, %v6116
    %v6118 = vpop.f32.mrf.mxu0
    %v6119 = vpop.f32.mrf.mxu0
    %6120 = vdwg.mxu0
    %6121 = vmatprep.subr.bf16.mxu0 %v5894
    %6122 = vmatpush1.bf16.msra.mxu0 %v5893
    %6123 = vmatprep.subr.bf16.mxu0 %v5888
    %6124 = vmatpush1.bf16.msra.mxu0 %v5887
    %6125 = vmatprep.subr.bf16.mxu0 %v5882
    %6126 = vmatpush1.bf16.msra.mxu0 %v5881
    %6127 = vmatprep.subr.bf16.mxu0 %v5876
    %6128 = vmatpush1.bf16.msra.mxu0 %v5875
    %6129 = vmatprep.subr.bf16.mxu0 %v5870
    %6130 = vmatpush1.bf16.msra.mxu0 %v5869
    %6131 = vmatprep.subr.bf16.mxu0 %v5864
    %6132 = vmatpush1.bf16.msra.mxu0 %v5863
    %6133 = vmatprep.subr.bf16.mxu0 %v5858
    %6134 = vmatpush1.bf16.msra.mxu0 %v5857
    %6135 = vmatprep.subr.bf16.mxu0 %v5852
    %6136 = vmatpush1.bf16.msra.mxu0 %v5851
    %6137 = vmatprep.subr.bf16.mxu0 %v5942
    %6138 = vmatpush2.bf16.msra.mxu0 %v5941
    %6139 = vmatprep.subr.bf16.mxu0 %v5936
    %6140 = vmatpush2.bf16.msra.mxu0 %v5935
    %6141 = vmatprep.subr.bf16.mxu0 %v5930
    %6142 = vmatpush2.bf16.msra.mxu0 %v5929
    %6143 = vmatprep.subr.bf16.mxu0 %v5924
    %6144 = vmatpush2.bf16.msra.mxu0 %v5923
    %6145 = vmatprep.subr.bf16.mxu0 %v5918
    %6146 = vmatpush2.bf16.msra.mxu0 %v5917
    %6147 = vmatprep.subr.bf16.mxu0 %v5912
    %6148 = vmatpush2.bf16.msra.mxu0 %v5911
    %6149 = vmatprep.subr.bf16.mxu0 %v5906
    %6150 = vmatpush2.bf16.msra.mxu0 %v5905
    %6151 = vmatprep.subr.bf16.mxu0 %v5900
    %6152 = vmatpush2.bf16.msra.mxu0 %v5899
    %6153 = vmatprep.mubr.bf16.mxu0 %v5430
    %6154 = vmatmul.mubr.bf16.gmra.mxu0 %v5429
    %v6155 = vpop.f32.mrf.mxu0
    %v6156 = vadd.f32 %v5548, %v6155
    %v6157 = vpop.f32.mrf.mxu0
    %v6158 = vadd.f32 %v5552, %v6157
    %v6159 = vpop.f32.mrf.mxu0
    %v6160 = vpop.f32.mrf.mxu0
    %6161 = vdwg.mxu0
    %v6162 = vld [vmem:[%s35] sm:$0x3]
    %v6163 = vpack.c.bf16 %v6162, %v6162
    %v6164 = vld [vmem:[%s47] sm:$0xff]
    %v6165 = vld [vmem:[%s47 + $0x8] sm:$0xff]
    %v6166 = vld [vmem:[%s47 + $0x10] sm:$0xff]
    %v6167 = vld [vmem:[%s47 + $0x18] sm:$0xff]
    %v6168 = vld [vmem:[%s49] sm:$0x3]
    %v6170 = vlaneseq
    %v6171 = vshrl.u32 %v6170, 7
    %v6172 = vsub.s32 0, %v6171
    %v6173 = vrot.slane %v6168, %v6172
    %v6174 = vlaneseq
    %v6175 = vshrl.u32 %v6174, 7
    %v6176 = vsub.s32 1, %v6175
    %v6177 = vrot.slane %v6168, %v6176
    %v6184 = vunpack.c.l.b16 %v6164
    %v6185 = vunpack.c.h.b16 %v6164
    %v6186 = vunpack.c.l.b16 %v6165
    %v6187 = vunpack.c.h.b16 %v6165
    %v6188 = vunpack.c.l.b16 %v6166
    %v6189 = vunpack.c.h.b16 %v6166
    %v6190 = vunpack.c.l.b16 %v6167
    %v6191 = vunpack.c.h.b16 %v6167
    %v6192 = vpack.c.b16 %v6186, %v6184
    %v6193 = vpack.c.b16 %v6187, %v6185
    %v6194 = vpack.c.b16 %v6190, %v6188
    %v6195 = vpack.c.b16 %v6191, %v6189
    %vm6200 = vcmask 261120
    %v6202 = vsel %vm6200, %v6163, 0
    %6204 = vmatprep.subr.bf16.mxu0 0
    %6205 = vmatpush1.bf16.msra.mxu0 0
    %6206 = vmatprep.subr.bf16.mxu0 0
    %6207 = vmatpush1.bf16.msra.mxu0 0
    %6208 = vmatprep.subr.bf16.mxu0 0
    %6209 = vmatpush1.bf16.msra.mxu0 0
    %6210 = vmatprep.subr.bf16.mxu0 0
    %6211 = vmatpush1.bf16.msra.mxu0 0
    %6212 = vmatprep.subr.bf16.mxu0 0
    %6213 = vmatpush1.bf16.msra.mxu0 0
    %6214 = vmatprep.subr.bf16.mxu0 0
    %6215 = vmatpush1.bf16.msra.mxu0 0
    %6216 = vmatprep.subr.bf16.mxu0 %v6195
    %6217 = vmatpush1.bf16.msra.mxu0 %v6194
    %6218 = vmatprep.subr.bf16.mxu0 %v6193
    %6219 = vmatpush1.bf16.msra.mxu0 %v6192
    %6220 = vmatprep.subr.bf16.mxu0 0
    %6221 = vmatpush2.bf16.msra.mxu0 0
    %6222 = vmatprep.subr.bf16.mxu0 0
    %6223 = vmatpush2.bf16.msra.mxu0 0
    %6224 = vmatprep.subr.bf16.mxu0 0
    %6225 = vmatpush2.bf16.msra.mxu0 0
    %6226 = vmatprep.subr.bf16.mxu0 0
    %6227 = vmatpush2.bf16.msra.mxu0 0
    %6228 = vmatprep.subr.bf16.mxu0 0
    %6229 = vmatpush2.bf16.msra.mxu0 0
    %6230 = vmatprep.subr.bf16.mxu0 0
    %6231 = vmatpush2.bf16.msra.mxu0 0
    %6232 = vmatprep.subr.bf16.mxu0 0
    %6233 = vmatpush2.bf16.msra.mxu0 0
    %6234 = vmatprep.subr.bf16.mxu0 0
    %6235 = vmatpush2.bf16.msra.mxu0 0
    %6236 = vmatprep.mubr.bf16.mxu0 0
    %6237 = vmatmul.mubr.bf16.gmra.mxu0 %v6202
    %v6238 = vpop.f32.mrf.mxu0
    %v6239 = vadd.f32 %v6173, %v6238
    %v6240 = vpop.f32.mrf.mxu0
    %v6241 = vadd.f32 %v6177, %v6240
    %v6242 = vpop.f32.mrf.mxu0
    %v6243 = vpop.f32.mrf.mxu0
    %6244 = vdwg.mxu0
    %vm6245 = vcmp.gt.f32.partialorder %v6239, 0.0
    %vm6246 = vcmp.gt.f32.partialorder %v6241, 0.0
    %v6247 = vmul.f32 %v6239, 1.442695
    %v6248 = vpow.pop %v6247
    %v6249 = vmul.f32 %v6241, 1.442695
    %v6250 = vpow.pop %v6249
    %v6251 = vsub.f32 %v6248, 1.0
    %v6252 = vsub.f32 %v6250, 1.0
    %v6253 = vmul.f32 %v6251, 1.6732632
    %v6254 = vmul.f32 %v6252, 1.6732632
    %v6255 = vsel %vm6245, %v6239, %v6253
    %v6256 = vsel %vm6246, %v6241, %v6254
    %v6257 = vmul.f32 %v6255, 1.050701
    %v6258 = vmul.f32 %v6256, 1.050701
    %v6259 = vpack.c.bf16 %v6257, %v6257
    %v6260 = vpack.c.bf16 %v6258, %v6258
    %v6261 = vld [vmem:[%s51] sm:$0xff]
    %v6262 = vld [vmem:[%s51 + $0x8] sm:$0xff]
    %v6263 = vld [vmem:[%s51 + $0x10] sm:$0xff]
    %v6264 = vld [vmem:[%s51 + $0x18] sm:$0xff]
    %v6265 = vld [vmem:[%s51 + $0x20] sm:$0xff]
    %v6266 = vld [vmem:[%s51 + $0x28] sm:$0xff]
    %v6267 = vld [vmem:[%s51 + $0x30] sm:$0xff]
    %v6268 = vld [vmem:[%s51 + $0x38] sm:$0xff]
    %v6269 = vld [vmem:[%s51 + $0x40] sm:$0xff]
    %v6270 = vld [vmem:[%s51 + $0x48] sm:$0xff]
    %v6271 = vld [vmem:[%s51 + $0x50] sm:$0xff]
    %v6272 = vld [vmem:[%s51 + $0x58] sm:$0xff]
    %v6273 = vld [vmem:[%s51 + $0x60] sm:$0xff]
    %v6274 = vld [vmem:[%s51 + $0x68] sm:$0xff]
    %v6275 = vld [vmem:[%s51 + $0x70] sm:$0xff]
    %v6276 = vld [vmem:[%s51 + $0x78] sm:$0xff]
    %v6277 = vld [vmem:[%s51 + $0x80] sm:$0xff]
    %v6278 = vld [vmem:[%s51 + $0x88] sm:$0xff]
    %v6279 = vld [vmem:[%s51 + $0x90] sm:$0xff]
    %v6280 = vld [vmem:[%s51 + $0x98] sm:$0xff]
    %v6281 = vld [vmem:[%s51 + $0xa0] sm:$0xff]
    %v6282 = vld [vmem:[%s51 + $0xa8] sm:$0xff]
    %v6283 = vld [vmem:[%s51 + $0xb0] sm:$0xff]
    %v6284 = vld [vmem:[%s51 + $0xb8] sm:$0xff]
    %v6285 = vld [vmem:[%s51 + $0xc0] sm:$0xff]
    %v6286 = vld [vmem:[%s51 + $0xc8] sm:$0xff]
    %v6287 = vld [vmem:[%s51 + $0xd0] sm:$0xff]
    %v6288 = vld [vmem:[%s51 + $0xd8] sm:$0xff]
    %v6289 = vld [vmem:[%s51 + $0xe0] sm:$0xff]
    %v6290 = vld [vmem:[%s51 + $0xe8] sm:$0xff]
    %v6291 = vld [vmem:[%s51 + $0xf0] sm:$0xff]
    %v6292 = vld [vmem:[%s51 + $0xf8] sm:$0xff]
    %v6293 = vld [vmem:[%s51 + $0x100] sm:$0xff]
    %v6294 = vld [vmem:[%s51 + $0x108] sm:$0xff]
    %v6295 = vld [vmem:[%s51 + $0x110] sm:$0xff]
    %v6296 = vld [vmem:[%s51 + $0x118] sm:$0xff]
    %v6297 = vld [vmem:[%s51 + $0x120] sm:$0xff]
    %v6298 = vld [vmem:[%s51 + $0x128] sm:$0xff]
    %v6299 = vld [vmem:[%s51 + $0x130] sm:$0xff]
    %v6300 = vld [vmem:[%s51 + $0x138] sm:$0xff]
    %v6301 = vld [vmem:[%s51 + $0x140] sm:$0xff]
    %v6302 = vld [vmem:[%s51 + $0x148] sm:$0xff]
    %v6303 = vld [vmem:[%s51 + $0x150] sm:$0xff]
    %v6304 = vld [vmem:[%s51 + $0x158] sm:$0xff]
    %v6305 = vld [vmem:[%s51 + $0x160] sm:$0xff]
    %v6306 = vld [vmem:[%s51 + $0x168] sm:$0xff]
    %v6307 = vld [vmem:[%s51 + $0x170] sm:$0xff]
    %v6308 = vld [vmem:[%s51 + $0x178] sm:$0xff]
    %v6309 = vld [vmem:[%s51 + $0x180] sm:$0xff]
    %v6310 = vld [vmem:[%s51 + $0x188] sm:$0xff]
    %v6311 = vld [vmem:[%s51 + $0x190] sm:$0xff]
    %v6312 = vld [vmem:[%s51 + $0x198] sm:$0xff]
    %v6313 = vld [vmem:[%s51 + $0x1a0] sm:$0xff]
    %v6314 = vld [vmem:[%s51 + $0x1a8] sm:$0xff]
    %v6315 = vld [vmem:[%s51 + $0x1b0] sm:$0xff]
    %v6316 = vld [vmem:[%s51 + $0x1b8] sm:$0xff]
    %v6317 = vld [vmem:[%s51 + $0x1c0] sm:$0xff]
    %v6318 = vld [vmem:[%s51 + $0x1c8] sm:$0xff]
    %v6319 = vld [vmem:[%s51 + $0x1d0] sm:$0xff]
    %v6320 = vld [vmem:[%s51 + $0x1d8] sm:$0xff]
    %v6321 = vld [vmem:[%s51 + $0x1e0] sm:$0xff]
    %v6322 = vld [vmem:[%s51 + $0x1e8] sm:$0xff]
    %v6323 = vld [vmem:[%s51 + $0x1f0] sm:$0xff]
    %v6324 = vld [vmem:[%s51 + $0x1f8] sm:$0xff]
    %v6325 = vld [vmem:[%s51 + $0x200] sm:$0xff]
    %v6326 = vld [vmem:[%s51 + $0x208] sm:$0xff]
    %v6327 = vld [vmem:[%s51 + $0x210] sm:$0xff]
    %v6328 = vld [vmem:[%s51 + $0x218] sm:$0xff]
    %v6329 = vld [vmem:[%s51 + $0x220] sm:$0xff]
    %v6330 = vld [vmem:[%s51 + $0x228] sm:$0xff]
    %v6331 = vld [vmem:[%s51 + $0x230] sm:$0xff]
    %v6332 = vld [vmem:[%s51 + $0x238] sm:$0xff]
    %v6333 = vld [vmem:[%s51 + $0x240] sm:$0xff]
    %v6334 = vld [vmem:[%s51 + $0x248] sm:$0xff]
    %v6335 = vld [vmem:[%s51 + $0x250] sm:$0xff]
    %v6336 = vld [vmem:[%s51 + $0x258] sm:$0xff]
    %v6337 = vld [vmem:[%s51 + $0x260] sm:$0xff]
    %v6338 = vld [vmem:[%s51 + $0x268] sm:$0xff]
    %v6339 = vld [vmem:[%s51 + $0x270] sm:$0xff]
    %v6340 = vld [vmem:[%s51 + $0x278] sm:$0xff]
    %v6341 = vld [vmem:[%s51 + $0x280] sm:$0xff]
    %v6342 = vld [vmem:[%s51 + $0x288] sm:$0xff]
    %v6343 = vld [vmem:[%s51 + $0x290] sm:$0xff]
    %v6344 = vld [vmem:[%s51 + $0x298] sm:$0xff]
    %v6345 = vld [vmem:[%s51 + $0x2a0] sm:$0xff]
    %v6346 = vld [vmem:[%s51 + $0x2a8] sm:$0xff]
    %v6347 = vld [vmem:[%s51 + $0x2b0] sm:$0xff]
    %v6348 = vld [vmem:[%s51 + $0x2b8] sm:$0xff]
    %v6349 = vld [vmem:[%s51 + $0x2c0] sm:$0xff]
    %v6350 = vld [vmem:[%s51 + $0x2c8] sm:$0xff]
    %v6351 = vld [vmem:[%s51 + $0x2d0] sm:$0xff]
    %v6352 = vld [vmem:[%s51 + $0x2d8] sm:$0xff]
    %v6353 = vld [vmem:[%s51 + $0x2e0] sm:$0xff]
    %v6354 = vld [vmem:[%s51 + $0x2e8] sm:$0xff]
    %v6355 = vld [vmem:[%s51 + $0x2f0] sm:$0xff]
    %v6356 = vld [vmem:[%s51 + $0x2f8] sm:$0xff]
    %v6357 = vld [vmem:[%s53] sm:$0x3f]
    %v6359 = vlaneseq
    %v6360 = vshrl.u32 %v6359, 7
    %v6361 = vsub.s32 0, %v6360
    %v6362 = vrot.slane %v6357, %v6361
    %v6363 = vlaneseq
    %v6364 = vshrl.u32 %v6363, 7
    %v6365 = vsub.s32 1, %v6364
    %v6366 = vrot.slane %v6357, %v6365
    %v6367 = vlaneseq
    %v6368 = vshrl.u32 %v6367, 7
    %v6369 = vsub.s32 2, %v6368
    %v6370 = vrot.slane %v6357, %v6369
    %v6371 = vlaneseq
    %v6372 = vshrl.u32 %v6371, 7
    %v6373 = vsub.s32 3, %v6372
    %v6374 = vrot.slane %v6357, %v6373
    %v6375 = vlaneseq
    %v6376 = vshrl.u32 %v6375, 7
    %v6377 = vsub.s32 4, %v6376
    %v6378 = vrot.slane %v6357, %v6377
    %v6379 = vlaneseq
    %v6380 = vshrl.u32 %v6379, 7
    %v6381 = vsub.s32 5, %v6380
    %v6382 = vrot.slane %v6357, %v6381
    %v6485 = vunpack.c.l.b16 %v6261
    %v6486 = vunpack.c.h.b16 %v6261
    %v6487 = vunpack.c.l.b16 %v6262
    %v6488 = vunpack.c.h.b16 %v6262
    %v6489 = vunpack.c.l.b16 %v6263
    %v6490 = vunpack.c.h.b16 %v6263
    %v6491 = vunpack.c.l.b16 %v6264
    %v6492 = vunpack.c.h.b16 %v6264
    %v6493 = vunpack.c.l.b16 %v6265
    %v6494 = vunpack.c.h.b16 %v6265
    %v6495 = vunpack.c.l.b16 %v6266
    %v6496 = vunpack.c.h.b16 %v6266
    %v6497 = vunpack.c.l.b16 %v6267
    %v6498 = vunpack.c.h.b16 %v6267
    %v6499 = vunpack.c.l.b16 %v6268
    %v6500 = vunpack.c.h.b16 %v6268
    %v6501 = vunpack.c.l.b16 %v6269
    %v6502 = vunpack.c.h.b16 %v6269
    %v6503 = vunpack.c.l.b16 %v6270
    %v6504 = vunpack.c.h.b16 %v6270
    %v6505 = vunpack.c.l.b16 %v6271
    %v6506 = vunpack.c.h.b16 %v6271
    %v6507 = vunpack.c.l.b16 %v6272
    %v6508 = vunpack.c.h.b16 %v6272
    %v6509 = vunpack.c.l.b16 %v6273
    %v6510 = vunpack.c.h.b16 %v6273
    %v6511 = vunpack.c.l.b16 %v6274
    %v6512 = vunpack.c.h.b16 %v6274
    %v6513 = vunpack.c.l.b16 %v6275
    %v6514 = vunpack.c.h.b16 %v6275
    %v6515 = vunpack.c.l.b16 %v6276
    %v6516 = vunpack.c.h.b16 %v6276
    %v6517 = vunpack.c.l.b16 %v6277
    %v6518 = vunpack.c.h.b16 %v6277
    %v6519 = vunpack.c.l.b16 %v6278
    %v6520 = vunpack.c.h.b16 %v6278
    %v6521 = vunpack.c.l.b16 %v6279
    %v6522 = vunpack.c.h.b16 %v6279
    %v6523 = vunpack.c.l.b16 %v6280
    %v6524 = vunpack.c.h.b16 %v6280
    %v6525 = vunpack.c.l.b16 %v6281
    %v6526 = vunpack.c.h.b16 %v6281
    %v6527 = vunpack.c.l.b16 %v6282
    %v6528 = vunpack.c.h.b16 %v6282
    %v6529 = vunpack.c.l.b16 %v6283
    %v6530 = vunpack.c.h.b16 %v6283
    %v6531 = vunpack.c.l.b16 %v6284
    %v6532 = vunpack.c.h.b16 %v6284
    %v6533 = vunpack.c.l.b16 %v6285
    %v6534 = vunpack.c.h.b16 %v6285
    %v6535 = vunpack.c.l.b16 %v6286
    %v6536 = vunpack.c.h.b16 %v6286
    %v6537 = vunpack.c.l.b16 %v6287
    %v6538 = vunpack.c.h.b16 %v6287
    %v6539 = vunpack.c.l.b16 %v6288
    %v6540 = vunpack.c.h.b16 %v6288
    %v6541 = vunpack.c.l.b16 %v6289
    %v6542 = vunpack.c.h.b16 %v6289
    %v6543 = vunpack.c.l.b16 %v6290
    %v6544 = vunpack.c.h.b16 %v6290
    %v6545 = vunpack.c.l.b16 %v6291
    %v6546 = vunpack.c.h.b16 %v6291
    %v6547 = vunpack.c.l.b16 %v6292
    %v6548 = vunpack.c.h.b16 %v6292
    %v6549 = vunpack.c.l.b16 %v6293
    %v6550 = vunpack.c.h.b16 %v6293
    %v6551 = vunpack.c.l.b16 %v6294
    %v6552 = vunpack.c.h.b16 %v6294
    %v6553 = vunpack.c.l.b16 %v6295
    %v6554 = vunpack.c.h.b16 %v6295
    %v6555 = vunpack.c.l.b16 %v6296
    %v6556 = vunpack.c.h.b16 %v6296
    %v6557 = vunpack.c.l.b16 %v6297
    %v6558 = vunpack.c.h.b16 %v6297
    %v6559 = vunpack.c.l.b16 %v6298
    %v6560 = vunpack.c.h.b16 %v6298
    %v6561 = vunpack.c.l.b16 %v6299
    %v6562 = vunpack.c.h.b16 %v6299
    %v6563 = vunpack.c.l.b16 %v6300
    %v6564 = vunpack.c.h.b16 %v6300
    %v6565 = vunpack.c.l.b16 %v6301
    %v6566 = vunpack.c.h.b16 %v6301
    %v6567 = vunpack.c.l.b16 %v6302
    %v6568 = vunpack.c.h.b16 %v6302
    %v6569 = vunpack.c.l.b16 %v6303
    %v6570 = vunpack.c.h.b16 %v6303
    %v6571 = vunpack.c.l.b16 %v6304
    %v6572 = vunpack.c.h.b16 %v6304
    %v6573 = vunpack.c.l.b16 %v6305
    %v6574 = vunpack.c.h.b16 %v6305
    %v6575 = vunpack.c.l.b16 %v6306
    %v6576 = vunpack.c.h.b16 %v6306
    %v6577 = vunpack.c.l.b16 %v6307
    %v6578 = vunpack.c.h.b16 %v6307
    %v6579 = vunpack.c.l.b16 %v6308
    %v6580 = vunpack.c.h.b16 %v6308
    %v6581 = vunpack.c.l.b16 %v6309
    %v6582 = vunpack.c.h.b16 %v6309
    %v6583 = vunpack.c.l.b16 %v6310
    %v6584 = vunpack.c.h.b16 %v6310
    %v6585 = vunpack.c.l.b16 %v6311
    %v6586 = vunpack.c.h.b16 %v6311
    %v6587 = vunpack.c.l.b16 %v6312
    %v6588 = vunpack.c.h.b16 %v6312
    %v6589 = vunpack.c.l.b16 %v6313
    %v6590 = vunpack.c.h.b16 %v6313
    %v6591 = vunpack.c.l.b16 %v6314
    %v6592 = vunpack.c.h.b16 %v6314
    %v6593 = vunpack.c.l.b16 %v6315
    %v6594 = vunpack.c.h.b16 %v6315
    %v6595 = vunpack.c.l.b16 %v6316
    %v6596 = vunpack.c.h.b16 %v6316
    %v6597 = vunpack.c.l.b16 %v6317
    %v6598 = vunpack.c.h.b16 %v6317
    %v6599 = vunpack.c.l.b16 %v6318
    %v6600 = vunpack.c.h.b16 %v6318
    %v6601 = vunpack.c.l.b16 %v6319
    %v6602 = vunpack.c.h.b16 %v6319
    %v6603 = vunpack.c.l.b16 %v6320
    %v6604 = vunpack.c.h.b16 %v6320
    %v6605 = vunpack.c.l.b16 %v6321
    %v6606 = vunpack.c.h.b16 %v6321
    %v6607 = vunpack.c.l.b16 %v6322
    %v6608 = vunpack.c.h.b16 %v6322
    %v6609 = vunpack.c.l.b16 %v6323
    %v6610 = vunpack.c.h.b16 %v6323
    %v6611 = vunpack.c.l.b16 %v6324
    %v6612 = vunpack.c.h.b16 %v6324
    %v6613 = vunpack.c.l.b16 %v6325
    %v6614 = vunpack.c.h.b16 %v6325
    %v6615 = vunpack.c.l.b16 %v6326
    %v6616 = vunpack.c.h.b16 %v6326
    %v6617 = vunpack.c.l.b16 %v6327
    %v6618 = vunpack.c.h.b16 %v6327
    %v6619 = vunpack.c.l.b16 %v6328
    %v6620 = vunpack.c.h.b16 %v6328
    %v6621 = vunpack.c.l.b16 %v6329
    %v6622 = vunpack.c.h.b16 %v6329
    %v6623 = vunpack.c.l.b16 %v6330
    %v6624 = vunpack.c.h.b16 %v6330
    %v6625 = vunpack.c.l.b16 %v6331
    %v6626 = vunpack.c.h.b16 %v6331
    %v6627 = vunpack.c.l.b16 %v6332
    %v6628 = vunpack.c.h.b16 %v6332
    %v6629 = vunpack.c.l.b16 %v6333
    %v6630 = vunpack.c.h.b16 %v6333
    %v6631 = vunpack.c.l.b16 %v6334
    %v6632 = vunpack.c.h.b16 %v6334
    %v6633 = vunpack.c.l.b16 %v6335
    %v6634 = vunpack.c.h.b16 %v6335
    %v6635 = vunpack.c.l.b16 %v6336
    %v6636 = vunpack.c.h.b16 %v6336
    %v6637 = vunpack.c.l.b16 %v6337
    %v6638 = vunpack.c.h.b16 %v6337
    %v6639 = vunpack.c.l.b16 %v6338
    %v6640 = vunpack.c.h.b16 %v6338
    %v6641 = vunpack.c.l.b16 %v6339
    %v6642 = vunpack.c.h.b16 %v6339
    %v6643 = vunpack.c.l.b16 %v6340
    %v6644 = vunpack.c.h.b16 %v6340
    %v6645 = vunpack.c.l.b16 %v6341
    %v6646 = vunpack.c.h.b16 %v6341
    %v6647 = vunpack.c.l.b16 %v6342
    %v6648 = vunpack.c.h.b16 %v6342
    %v6649 = vunpack.c.l.b16 %v6343
    %v6650 = vunpack.c.h.b16 %v6343
    %v6651 = vunpack.c.l.b16 %v6344
    %v6652 = vunpack.c.h.b16 %v6344
    %v6653 = vunpack.c.l.b16 %v6345
    %v6654 = vunpack.c.h.b16 %v6345
    %v6655 = vunpack.c.l.b16 %v6346
    %v6656 = vunpack.c.h.b16 %v6346
    %v6657 = vunpack.c.l.b16 %v6347
    %v6658 = vunpack.c.h.b16 %v6347
    %v6659 = vunpack.c.l.b16 %v6348
    %v6660 = vunpack.c.h.b16 %v6348
    %v6661 = vunpack.c.l.b16 %v6349
    %v6662 = vunpack.c.h.b16 %v6349
    %v6663 = vunpack.c.l.b16 %v6350
    %v6664 = vunpack.c.h.b16 %v6350
    %v6665 = vunpack.c.l.b16 %v6351
    %v6666 = vunpack.c.h.b16 %v6351
    %v6667 = vunpack.c.l.b16 %v6352
    %v6668 = vunpack.c.h.b16 %v6352
    %v6669 = vunpack.c.l.b16 %v6353
    %v6670 = vunpack.c.h.b16 %v6353
    %v6671 = vunpack.c.l.b16 %v6354
    %v6672 = vunpack.c.h.b16 %v6354
    %v6673 = vunpack.c.l.b16 %v6355
    %v6674 = vunpack.c.h.b16 %v6355
    %v6675 = vunpack.c.l.b16 %v6356
    %v6676 = vunpack.c.h.b16 %v6356
    %v6677 = vpack.c.b16 %v6491, %v6485
    %v6678 = vpack.c.b16 %v6492, %v6486
    %v6679 = vpack.c.b16 %v6493, %v6487
    %v6680 = vpack.c.b16 %v6494, %v6488
    %v6681 = vpack.c.b16 %v6495, %v6489
    %v6682 = vpack.c.b16 %v6496, %v6490
    %v6683 = vpack.c.b16 %v6503, %v6497
    %v6684 = vpack.c.b16 %v6504, %v6498
    %v6685 = vpack.c.b16 %v6505, %v6499
    %v6686 = vpack.c.b16 %v6506, %v6500
    %v6687 = vpack.c.b16 %v6507, %v6501
    %v6688 = vpack.c.b16 %v6508, %v6502
    %v6689 = vpack.c.b16 %v6515, %v6509
    %v6690 = vpack.c.b16 %v6516, %v6510
    %v6691 = vpack.c.b16 %v6517, %v6511
    %v6692 = vpack.c.b16 %v6518, %v6512
    %v6693 = vpack.c.b16 %v6519, %v6513
    %v6694 = vpack.c.b16 %v6520, %v6514
    %v6695 = vpack.c.b16 %v6527, %v6521
    %v6696 = vpack.c.b16 %v6528, %v6522
    %v6697 = vpack.c.b16 %v6529, %v6523
    %v6698 = vpack.c.b16 %v6530, %v6524
    %v6699 = vpack.c.b16 %v6531, %v6525
    %v6700 = vpack.c.b16 %v6532, %v6526
    %v6701 = vpack.c.b16 %v6539, %v6533
    %v6702 = vpack.c.b16 %v6540, %v6534
    %v6703 = vpack.c.b16 %v6541, %v6535
    %v6704 = vpack.c.b16 %v6542, %v6536
    %v6705 = vpack.c.b16 %v6543, %v6537
    %v6706 = vpack.c.b16 %v6544, %v6538
    %v6707 = vpack.c.b16 %v6551, %v6545
    %v6708 = vpack.c.b16 %v6552, %v6546
    %v6709 = vpack.c.b16 %v6553, %v6547
    %v6710 = vpack.c.b16 %v6554, %v6548
    %v6711 = vpack.c.b16 %v6555, %v6549
    %v6712 = vpack.c.b16 %v6556, %v6550
    %v6713 = vpack.c.b16 %v6563, %v6557
    %v6714 = vpack.c.b16 %v6564, %v6558
    %v6715 = vpack.c.b16 %v6565, %v6559
    %v6716 = vpack.c.b16 %v6566, %v6560
    %v6717 = vpack.c.b16 %v6567, %v6561
    %v6718 = vpack.c.b16 %v6568, %v6562
    %v6719 = vpack.c.b16 %v6575, %v6569
    %v6720 = vpack.c.b16 %v6576, %v6570
    %v6721 = vpack.c.b16 %v6577, %v6571
    %v6722 = vpack.c.b16 %v6578, %v6572
    %v6723 = vpack.c.b16 %v6579, %v6573
    %v6724 = vpack.c.b16 %v6580, %v6574
    %v6725 = vpack.c.b16 %v6587, %v6581
    %v6726 = vpack.c.b16 %v6588, %v6582
    %v6727 = vpack.c.b16 %v6589, %v6583
    %v6728 = vpack.c.b16 %v6590, %v6584
    %v6729 = vpack.c.b16 %v6591, %v6585
    %v6730 = vpack.c.b16 %v6592, %v6586
    %v6731 = vpack.c.b16 %v6599, %v6593
    %v6732 = vpack.c.b16 %v6600, %v6594
    %v6733 = vpack.c.b16 %v6601, %v6595
    %v6734 = vpack.c.b16 %v6602, %v6596
    %v6735 = vpack.c.b16 %v6603, %v6597
    %v6736 = vpack.c.b16 %v6604, %v6598
    %v6737 = vpack.c.b16 %v6611, %v6605
    %v6738 = vpack.c.b16 %v6612, %v6606
    %v6739 = vpack.c.b16 %v6613, %v6607
    %v6740 = vpack.c.b16 %v6614, %v6608
    %v6741 = vpack.c.b16 %v6615, %v6609
    %v6742 = vpack.c.b16 %v6616, %v6610
    %v6743 = vpack.c.b16 %v6623, %v6617
    %v6744 = vpack.c.b16 %v6624, %v6618
    %v6745 = vpack.c.b16 %v6625, %v6619
    %v6746 = vpack.c.b16 %v6626, %v6620
    %v6747 = vpack.c.b16 %v6627, %v6621
    %v6748 = vpack.c.b16 %v6628, %v6622
    %v6749 = vpack.c.b16 %v6635, %v6629
    %v6750 = vpack.c.b16 %v6636, %v6630
    %v6751 = vpack.c.b16 %v6637, %v6631
    %v6752 = vpack.c.b16 %v6638, %v6632
    %v6753 = vpack.c.b16 %v6639, %v6633
    %v6754 = vpack.c.b16 %v6640, %v6634
    %v6755 = vpack.c.b16 %v6647, %v6641
    %v6756 = vpack.c.b16 %v6648, %v6642
    %v6757 = vpack.c.b16 %v6649, %v6643
    %v6758 = vpack.c.b16 %v6650, %v6644
    %v6759 = vpack.c.b16 %v6651, %v6645
    %v6760 = vpack.c.b16 %v6652, %v6646
    %v6761 = vpack.c.b16 %v6659, %v6653
    %v6762 = vpack.c.b16 %v6660, %v6654
    %v6763 = vpack.c.b16 %v6661, %v6655
    %v6764 = vpack.c.b16 %v6662, %v6656
    %v6765 = vpack.c.b16 %v6663, %v6657
    %v6766 = vpack.c.b16 %v6664, %v6658
    %v6767 = vpack.c.b16 %v6671, %v6665
    %v6768 = vpack.c.b16 %v6672, %v6666
    %v6769 = vpack.c.b16 %v6673, %v6667
    %v6770 = vpack.c.b16 %v6674, %v6668
    %v6771 = vpack.c.b16 %v6675, %v6669
    %v6772 = vpack.c.b16 %v6676, %v6670
    %6869 = vmatprep.subr.bf16.mxu0 %v6720
    %6870 = vmatpush1.bf16.msra.mxu0 %v6719
    %6871 = vmatprep.subr.bf16.mxu0 %v6714
    %6872 = vmatpush1.bf16.msra.mxu0 %v6713
    %6873 = vmatprep.subr.bf16.mxu0 %v6708
    %6874 = vmatpush1.bf16.msra.mxu0 %v6707
    %6875 = vmatprep.subr.bf16.mxu0 %v6702
    %6876 = vmatpush1.bf16.msra.mxu0 %v6701
    %6877 = vmatprep.subr.bf16.mxu0 %v6696
    %6878 = vmatpush1.bf16.msra.mxu0 %v6695
    %6879 = vmatprep.subr.bf16.mxu0 %v6690
    %6880 = vmatpush1.bf16.msra.mxu0 %v6689
    %6881 = vmatprep.subr.bf16.mxu0 %v6684
    %6882 = vmatpush1.bf16.msra.mxu0 %v6683
    %6883 = vmatprep.subr.bf16.mxu0 %v6678
    %6884 = vmatpush1.bf16.msra.mxu0 %v6677
    %6885 = vmatprep.subr.bf16.mxu0 %v6768
    %6886 = vmatpush2.bf16.msra.mxu0 %v6767
    %6887 = vmatprep.subr.bf16.mxu0 %v6762
    %6888 = vmatpush2.bf16.msra.mxu0 %v6761
    %6889 = vmatprep.subr.bf16.mxu0 %v6756
    %6890 = vmatpush2.bf16.msra.mxu0 %v6755
    %6891 = vmatprep.subr.bf16.mxu0 %v6750
    %6892 = vmatpush2.bf16.msra.mxu0 %v6749
    %6893 = vmatprep.subr.bf16.mxu0 %v6744
    %6894 = vmatpush2.bf16.msra.mxu0 %v6743
    %6895 = vmatprep.subr.bf16.mxu0 %v6738
    %6896 = vmatpush2.bf16.msra.mxu0 %v6737
    %6897 = vmatprep.subr.bf16.mxu0 %v6732
    %6898 = vmatpush2.bf16.msra.mxu0 %v6731
    %6899 = vmatprep.subr.bf16.mxu0 %v6726
    %6900 = vmatpush2.bf16.msra.mxu0 %v6725
    %6901 = vmatprep.mubr.bf16.mxu0 %v6260
    %6902 = vmatmul.mubr.bf16.gmra.mxu0 %v6259
    %v6903 = vpop.f32.mrf.mxu0
    %v6904 = vadd.f32 %v6362, %v6903
    %v6905 = vpop.f32.mrf.mxu0
    %v6906 = vadd.f32 %v6366, %v6905
    %v6907 = vpop.f32.mrf.mxu0
    %v6908 = vpop.f32.mrf.mxu0
    %6909 = vdwg.mxu0
    %6910 = vmatprep.subr.bf16.mxu0 %v6722
    %6911 = vmatpush1.bf16.msra.mxu0 %v6721
    %6912 = vmatprep.subr.bf16.mxu0 %v6716
    %6913 = vmatpush1.bf16.msra.mxu0 %v6715
    %6914 = vmatprep.subr.bf16.mxu0 %v6710
    %6915 = vmatpush1.bf16.msra.mxu0 %v6709
    %6916 = vmatprep.subr.bf16.mxu0 %v6704
    %6917 = vmatpush1.bf16.msra.mxu0 %v6703
    %6918 = vmatprep.subr.bf16.mxu0 %v6698
    %6919 = vmatpush1.bf16.msra.mxu0 %v6697
    %6920 = vmatprep.subr.bf16.mxu0 %v6692
    %6921 = vmatpush1.bf16.msra.mxu0 %v6691
    %6922 = vmatprep.subr.bf16.mxu0 %v6686
    %6923 = vmatpush1.bf16.msra.mxu0 %v6685
    %6924 = vmatprep.subr.bf16.mxu0 %v6680
    %6925 = vmatpush1.bf16.msra.mxu0 %v6679
    %6926 = vmatprep.subr.bf16.mxu0 %v6770
    %6927 = vmatpush2.bf16.msra.mxu0 %v6769
    %6928 = vmatprep.subr.bf16.mxu0 %v6764
    %6929 = vmatpush2.bf16.msra.mxu0 %v6763
    %6930 = vmatprep.subr.bf16.mxu0 %v6758
    %6931 = vmatpush2.bf16.msra.mxu0 %v6757
    %6932 = vmatprep.subr.bf16.mxu0 %v6752
    %6933 = vmatpush2.bf16.msra.mxu0 %v6751
    %6934 = vmatprep.subr.bf16.mxu0 %v6746
    %6935 = vmatpush2.bf16.msra.mxu0 %v6745
    %6936 = vmatprep.subr.bf16.mxu0 %v6740
    %6937 = vmatpush2.bf16.msra.mxu0 %v6739
    %6938 = vmatprep.subr.bf16.mxu0 %v6734
    %6939 = vmatpush2.bf16.msra.mxu0 %v6733
    %6940 = vmatprep.subr.bf16.mxu0 %v6728
    %6941 = vmatpush2.bf16.msra.mxu0 %v6727
    %6942 = vmatprep.mubr.bf16.mxu0 %v6260
    %6943 = vmatmul.mubr.bf16.gmra.mxu0 %v6259
    %v6944 = vpop.f32.mrf.mxu0
    %v6945 = vadd.f32 %v6370, %v6944
    %v6946 = vpop.f32.mrf.mxu0
    %v6947 = vadd.f32 %v6374, %v6946
    %v6948 = vpop.f32.mrf.mxu0
    %v6949 = vpop.f32.mrf.mxu0
    %6950 = vdwg.mxu0
    %6951 = vmatprep.subr.bf16.mxu0 %v6724
    %6952 = vmatpush1.bf16.msra.mxu0 %v6723
    %6953 = vmatprep.subr.bf16.mxu0 %v6718
    %6954 = vmatpush1.bf16.msra.mxu0 %v6717
    %6955 = vmatprep.subr.bf16.mxu0 %v6712
    %6956 = vmatpush1.bf16.msra.mxu0 %v6711
    %6957 = vmatprep.subr.bf16.mxu0 %v6706
    %6958 = vmatpush1.bf16.msra.mxu0 %v6705
    %6959 = vmatprep.subr.bf16.mxu0 %v6700
    %6960 = vmatpush1.bf16.msra.mxu0 %v6699
    %6961 = vmatprep.subr.bf16.mxu0 %v6694
    %6962 = vmatpush1.bf16.msra.mxu0 %v6693
    %6963 = vmatprep.subr.bf16.mxu0 %v6688
    %6964 = vmatpush1.bf16.msra.mxu0 %v6687
    %6965 = vmatprep.subr.bf16.mxu0 %v6682
    %6966 = vmatpush1.bf16.msra.mxu0 %v6681
    %6967 = vmatprep.subr.bf16.mxu0 %v6772
    %6968 = vmatpush2.bf16.msra.mxu0 %v6771
    %6969 = vmatprep.subr.bf16.mxu0 %v6766
    %6970 = vmatpush2.bf16.msra.mxu0 %v6765
    %6971 = vmatprep.subr.bf16.mxu0 %v6760
    %6972 = vmatpush2.bf16.msra.mxu0 %v6759
    %6973 = vmatprep.subr.bf16.mxu0 %v6754
    %6974 = vmatpush2.bf16.msra.mxu0 %v6753
    %6975 = vmatprep.subr.bf16.mxu0 %v6748
    %6976 = vmatpush2.bf16.msra.mxu0 %v6747
    %6977 = vmatprep.subr.bf16.mxu0 %v6742
    %6978 = vmatpush2.bf16.msra.mxu0 %v6741
    %6979 = vmatprep.subr.bf16.mxu0 %v6736
    %6980 = vmatpush2.bf16.msra.mxu0 %v6735
    %6981 = vmatprep.subr.bf16.mxu0 %v6730
    %6982 = vmatpush2.bf16.msra.mxu0 %v6729
    %6983 = vmatprep.mubr.bf16.mxu0 %v6260
    %6984 = vmatmul.mubr.bf16.gmra.mxu0 %v6259
    %v6985 = vpop.f32.mrf.mxu0
    %v6986 = vadd.f32 %v6378, %v6985
    %v6987 = vpop.f32.mrf.mxu0
    %v6988 = vadd.f32 %v6382, %v6987
    %v6989 = vpop.f32.mrf.mxu0
    %v6990 = vpop.f32.mrf.mxu0
    %6991 = vdwg.mxu0
    %v6992 = vld [vmem:[%s37] sm:$0x3]
    %v6993 = vpack.c.bf16 %v6992, %v6992
    %v6994 = vld [vmem:[%s55] sm:$0xff]
    %v6995 = vld [vmem:[%s55 + $0x8] sm:$0xff]
    %v6996 = vld [vmem:[%s55 + $0x10] sm:$0x33]
    %v6997 = vld [vmem:[%s57] sm:$0x3]
    %v6999 = vlaneseq
    %v7000 = vshrl.u32 %v6999, 7
    %v7001 = vsub.s32 0, %v7000
    %v7002 = vrot.slane %v6997, %v7001
    %v7003 = vlaneseq
    %v7004 = vshrl.u32 %v7003, 7
    %v7005 = vsub.s32 1, %v7004
    %v7006 = vrot.slane %v6997, %v7005
    %v7012 = vunpack.c.l.b16 %v6994
    %v7013 = vunpack.c.h.b16 %v6994
    %v7014 = vunpack.c.l.b16 %v6995
    %v7015 = vunpack.c.h.b16 %v6995
    %v7016 = vunpack.c.l.b16 %v6996
    %v7017 = vunpack.c.h.b16 %v6996
    %v7018 = vpack.c.b16 %v7014, %v7012
    %v7019 = vpack.c.b16 %v7015, %v7013
    %v7020 = vpack.c.b16 %v7016, %v7016
    %v7021 = vpack.c.b16 %v7017, %v7017
    %vm7024 = vcmask 154624
    %v7026 = vsel %vm7024, %v6993, 0
    %v7028 = vsel %vm1172, 4294967295, 65535
    %v7029 = vsel %vm1174, %v7028, 0
    %v7031 = vand.u32 %v7020, %v7029
    %v7034 = vand.u32 %v7021, %v7029
    %7036 = vmatprep.subr.bf16.mxu0 0
    %7037 = vmatpush1.bf16.msra.mxu0 0
    %7038 = vmatprep.subr.bf16.mxu0 0
    %7039 = vmatpush1.bf16.msra.mxu0 0
    %7040 = vmatprep.subr.bf16.mxu0 0
    %7041 = vmatpush1.bf16.msra.mxu0 0
    %7042 = vmatprep.subr.bf16.mxu0 0
    %7043 = vmatpush1.bf16.msra.mxu0 0
    %7044 = vmatprep.subr.bf16.mxu0 0
    %7045 = vmatpush1.bf16.msra.mxu0 0
    %7046 = vmatprep.subr.bf16.mxu0 0
    %7047 = vmatpush1.bf16.msra.mxu0 0
    %7048 = vmatprep.subr.bf16.mxu0 %v7034
    %7049 = vmatpush1.bf16.msra.mxu0 %v7031
    %7050 = vmatprep.subr.bf16.mxu0 %v7019
    %7051 = vmatpush1.bf16.msra.mxu0 %v7018
    %7052 = vmatprep.subr.bf16.mxu0 0
    %7053 = vmatpush2.bf16.msra.mxu0 0
    %7054 = vmatprep.subr.bf16.mxu0 0
    %7055 = vmatpush2.bf16.msra.mxu0 0
    %7056 = vmatprep.subr.bf16.mxu0 0
    %7057 = vmatpush2.bf16.msra.mxu0 0
    %7058 = vmatprep.subr.bf16.mxu0 0
    %7059 = vmatpush2.bf16.msra.mxu0 0
    %7060 = vmatprep.subr.bf16.mxu0 0
    %7061 = vmatpush2.bf16.msra.mxu0 0
    %7062 = vmatprep.subr.bf16.mxu0 0
    %7063 = vmatpush2.bf16.msra.mxu0 0
    %7064 = vmatprep.subr.bf16.mxu0 0
    %7065 = vmatpush2.bf16.msra.mxu0 0
    %7066 = vmatprep.subr.bf16.mxu0 0
    %7067 = vmatpush2.bf16.msra.mxu0 0
    %7068 = vmatprep.mubr.bf16.mxu0 0
    %7069 = vmatmul.mubr.bf16.gmra.mxu0 %v7026
    %v7070 = vpop.f32.mrf.mxu0
    %v7071 = vadd.f32 %v7002, %v7070
    %v7072 = vpop.f32.mrf.mxu0
    %v7073 = vadd.f32 %v7006, %v7072
    %v7074 = vpop.f32.mrf.mxu0
    %v7075 = vpop.f32.mrf.mxu0
    %7076 = vdwg.mxu0
    %vm7077 = vcmp.gt.f32.partialorder %v7071, 0.0
    %vm7078 = vcmp.gt.f32.partialorder %v7073, 0.0
    %v7079 = vmul.f32 %v7071, 1.442695
    %v7080 = vpow.pop %v7079
    %v7081 = vmul.f32 %v7073, 1.442695
    %v7082 = vpow.pop %v7081
    %v7083 = vsub.f32 %v7080, 1.0
    %v7084 = vsub.f32 %v7082, 1.0
    %v7085 = vmul.f32 %v7083, 1.6732632
    %v7086 = vmul.f32 %v7084, 1.6732632
    %v7087 = vsel %vm7077, %v7071, %v7085
    %v7088 = vsel %vm7078, %v7073, %v7086
    %v7089 = vmul.f32 %v7087, 1.050701
    %v7090 = vmul.f32 %v7088, 1.050701
    %v7091 = vpack.c.bf16 %v7089, %v7089
    %v7092 = vpack.c.bf16 %v7090, %v7090
    %v7093 = vld [vmem:[%s59] sm:$0xff]
    %v7094 = vld [vmem:[%s59 + $0x8] sm:$0xff]
    %v7095 = vld [vmem:[%s59 + $0x10] sm:$0xff]
    %v7096 = vld [vmem:[%s59 + $0x18] sm:$0xff]
    %v7097 = vld [vmem:[%s59 + $0x20] sm:$0xff]
    %v7098 = vld [vmem:[%s59 + $0x28] sm:$0xff]
    %v7099 = vld [vmem:[%s59 + $0x30] sm:$0xff]
    %v7100 = vld [vmem:[%s59 + $0x38] sm:$0xff]
    %v7101 = vld [vmem:[%s59 + $0x40] sm:$0xff]
    %v7102 = vld [vmem:[%s59 + $0x48] sm:$0xff]
    %v7103 = vld [vmem:[%s59 + $0x50] sm:$0xff]
    %v7104 = vld [vmem:[%s59 + $0x58] sm:$0xff]
    %v7105 = vld [vmem:[%s59 + $0x60] sm:$0xff]
    %v7106 = vld [vmem:[%s59 + $0x68] sm:$0xff]
    %v7107 = vld [vmem:[%s59 + $0x70] sm:$0xff]
    %v7108 = vld [vmem:[%s59 + $0x78] sm:$0xff]
    %v7109 = vld [vmem:[%s59 + $0x80] sm:$0xff]
    %v7110 = vld [vmem:[%s59 + $0x88] sm:$0xff]
    %v7111 = vld [vmem:[%s59 + $0x90] sm:$0xff]
    %v7112 = vld [vmem:[%s59 + $0x98] sm:$0xff]
    %v7113 = vld [vmem:[%s59 + $0xa0] sm:$0xff]
    %v7114 = vld [vmem:[%s59 + $0xa8] sm:$0xff]
    %v7115 = vld [vmem:[%s59 + $0xb0] sm:$0xff]
    %v7116 = vld [vmem:[%s59 + $0xb8] sm:$0xff]
    %v7117 = vld [vmem:[%s59 + $0xc0] sm:$0xff]
    %v7118 = vld [vmem:[%s59 + $0xc8] sm:$0xff]
    %v7119 = vld [vmem:[%s59 + $0xd0] sm:$0xff]
    %v7120 = vld [vmem:[%s59 + $0xd8] sm:$0xff]
    %v7121 = vld [vmem:[%s59 + $0xe0] sm:$0xff]
    %v7122 = vld [vmem:[%s59 + $0xe8] sm:$0xff]
    %v7123 = vld [vmem:[%s59 + $0xf0] sm:$0xff]
    %v7124 = vld [vmem:[%s59 + $0xf8] sm:$0xff]
    %v7125 = vld [vmem:[%s59 + $0x100] sm:$0xff]
    %v7126 = vld [vmem:[%s59 + $0x108] sm:$0xff]
    %v7127 = vld [vmem:[%s59 + $0x110] sm:$0xff]
    %v7128 = vld [vmem:[%s59 + $0x118] sm:$0xff]
    %v7129 = vld [vmem:[%s59 + $0x120] sm:$0xff]
    %v7130 = vld [vmem:[%s59 + $0x128] sm:$0xff]
    %v7131 = vld [vmem:[%s59 + $0x130] sm:$0xff]
    %v7132 = vld [vmem:[%s59 + $0x138] sm:$0xff]
    %v7133 = vld [vmem:[%s59 + $0x140] sm:$0xff]
    %v7134 = vld [vmem:[%s59 + $0x148] sm:$0xff]
    %v7135 = vld [vmem:[%s59 + $0x150] sm:$0xff]
    %v7136 = vld [vmem:[%s59 + $0x158] sm:$0xff]
    %v7137 = vld [vmem:[%s59 + $0x160] sm:$0xff]
    %v7138 = vld [vmem:[%s59 + $0x168] sm:$0xff]
    %v7139 = vld [vmem:[%s59 + $0x170] sm:$0xff]
    %v7140 = vld [vmem:[%s59 + $0x178] sm:$0xff]
    %v7141 = vld [vmem:[%s59 + $0x180] sm:$0xff]
    %v7142 = vld [vmem:[%s59 + $0x188] sm:$0xff]
    %v7143 = vld [vmem:[%s59 + $0x190] sm:$0xff]
    %v7144 = vld [vmem:[%s59 + $0x198] sm:$0xff]
    %v7145 = vld [vmem:[%s59 + $0x1a0] sm:$0xff]
    %v7146 = vld [vmem:[%s59 + $0x1a8] sm:$0xff]
    %v7147 = vld [vmem:[%s59 + $0x1b0] sm:$0xff]
    %v7148 = vld [vmem:[%s59 + $0x1b8] sm:$0xff]
    %v7149 = vld [vmem:[%s59 + $0x1c0] sm:$0xff]
    %v7150 = vld [vmem:[%s59 + $0x1c8] sm:$0xff]
    %v7151 = vld [vmem:[%s59 + $0x1d0] sm:$0xff]
    %v7152 = vld [vmem:[%s59 + $0x1d8] sm:$0xff]
    %v7153 = vld [vmem:[%s59 + $0x1e0] sm:$0xff]
    %v7154 = vld [vmem:[%s59 + $0x1e8] sm:$0xff]
    %v7155 = vld [vmem:[%s59 + $0x1f0] sm:$0xff]
    %v7156 = vld [vmem:[%s59 + $0x1f8] sm:$0xff]
    %v7157 = vld [vmem:[%s59 + $0x200] sm:$0xff]
    %v7158 = vld [vmem:[%s59 + $0x208] sm:$0xff]
    %v7159 = vld [vmem:[%s59 + $0x210] sm:$0xff]
    %v7160 = vld [vmem:[%s59 + $0x218] sm:$0xff]
    %v7161 = vld [vmem:[%s59 + $0x220] sm:$0xff]
    %v7162 = vld [vmem:[%s59 + $0x228] sm:$0xff]
    %v7163 = vld [vmem:[%s59 + $0x230] sm:$0xff]
    %v7164 = vld [vmem:[%s59 + $0x238] sm:$0xff]
    %v7165 = vld [vmem:[%s59 + $0x240] sm:$0xff]
    %v7166 = vld [vmem:[%s59 + $0x248] sm:$0xff]
    %v7167 = vld [vmem:[%s59 + $0x250] sm:$0xff]
    %v7168 = vld [vmem:[%s59 + $0x258] sm:$0xff]
    %v7169 = vld [vmem:[%s59 + $0x260] sm:$0xff]
    %v7170 = vld [vmem:[%s59 + $0x268] sm:$0xff]
    %v7171 = vld [vmem:[%s59 + $0x270] sm:$0xff]
    %v7172 = vld [vmem:[%s59 + $0x278] sm:$0xff]
    %v7173 = vld [vmem:[%s59 + $0x280] sm:$0xff]
    %v7174 = vld [vmem:[%s59 + $0x288] sm:$0xff]
    %v7175 = vld [vmem:[%s59 + $0x290] sm:$0xff]
    %v7176 = vld [vmem:[%s59 + $0x298] sm:$0xff]
    %v7177 = vld [vmem:[%s59 + $0x2a0] sm:$0xff]
    %v7178 = vld [vmem:[%s59 + $0x2a8] sm:$0xff]
    %v7179 = vld [vmem:[%s59 + $0x2b0] sm:$0xff]
    %v7180 = vld [vmem:[%s59 + $0x2b8] sm:$0xff]
    %v7181 = vld [vmem:[%s59 + $0x2c0] sm:$0xff]
    %v7182 = vld [vmem:[%s59 + $0x2c8] sm:$0xff]
    %v7183 = vld [vmem:[%s59 + $0x2d0] sm:$0xff]
    %v7184 = vld [vmem:[%s59 + $0x2d8] sm:$0xff]
    %v7185 = vld [vmem:[%s59 + $0x2e0] sm:$0xff]
    %v7186 = vld [vmem:[%s59 + $0x2e8] sm:$0xff]
    %v7187 = vld [vmem:[%s59 + $0x2f0] sm:$0xff]
    %v7188 = vld [vmem:[%s59 + $0x2f8] sm:$0xff]
    %v7189 = vld [vmem:[%s61] sm:$0x3f]
    %v7191 = vlaneseq
    %v7192 = vshrl.u32 %v7191, 7
    %v7193 = vsub.s32 0, %v7192
    %v7194 = vrot.slane %v7189, %v7193
    %v7195 = vlaneseq
    %v7196 = vshrl.u32 %v7195, 7
    %v7197 = vsub.s32 1, %v7196
    %v7198 = vrot.slane %v7189, %v7197
    %v7199 = vlaneseq
    %v7200 = vshrl.u32 %v7199, 7
    %v7201 = vsub.s32 2, %v7200
    %v7202 = vrot.slane %v7189, %v7201
    %v7203 = vlaneseq
    %v7204 = vshrl.u32 %v7203, 7
    %v7205 = vsub.s32 3, %v7204
    %v7206 = vrot.slane %v7189, %v7205
    %v7207 = vlaneseq
    %v7208 = vshrl.u32 %v7207, 7
    %v7209 = vsub.s32 4, %v7208
    %v7210 = vrot.slane %v7189, %v7209
    %v7211 = vlaneseq
    %v7212 = vshrl.u32 %v7211, 7
    %v7213 = vsub.s32 5, %v7212
    %v7214 = vrot.slane %v7189, %v7213
    %v7317 = vunpack.c.l.b16 %v7093
    %v7318 = vunpack.c.h.b16 %v7093
    %v7319 = vunpack.c.l.b16 %v7094
    %v7320 = vunpack.c.h.b16 %v7094
    %v7321 = vunpack.c.l.b16 %v7095
    %v7322 = vunpack.c.h.b16 %v7095
    %v7323 = vunpack.c.l.b16 %v7096
    %v7324 = vunpack.c.h.b16 %v7096
    %v7325 = vunpack.c.l.b16 %v7097
    %v7326 = vunpack.c.h.b16 %v7097
    %v7327 = vunpack.c.l.b16 %v7098
    %v7328 = vunpack.c.h.b16 %v7098
    %v7329 = vunpack.c.l.b16 %v7099
    %v7330 = vunpack.c.h.b16 %v7099
    %v7331 = vunpack.c.l.b16 %v7100
    %v7332 = vunpack.c.h.b16 %v7100
    %v7333 = vunpack.c.l.b16 %v7101
    %v7334 = vunpack.c.h.b16 %v7101
    %v7335 = vunpack.c.l.b16 %v7102
    %v7336 = vunpack.c.h.b16 %v7102
    %v7337 = vunpack.c.l.b16 %v7103
    %v7338 = vunpack.c.h.b16 %v7103
    %v7339 = vunpack.c.l.b16 %v7104
    %v7340 = vunpack.c.h.b16 %v7104
    %v7341 = vunpack.c.l.b16 %v7105
    %v7342 = vunpack.c.h.b16 %v7105
    %v7343 = vunpack.c.l.b16 %v7106
    %v7344 = vunpack.c.h.b16 %v7106
    %v7345 = vunpack.c.l.b16 %v7107
    %v7346 = vunpack.c.h.b16 %v7107
    %v7347 = vunpack.c.l.b16 %v7108
    %v7348 = vunpack.c.h.b16 %v7108
    %v7349 = vunpack.c.l.b16 %v7109
    %v7350 = vunpack.c.h.b16 %v7109
    %v7351 = vunpack.c.l.b16 %v7110
    %v7352 = vunpack.c.h.b16 %v7110
    %v7353 = vunpack.c.l.b16 %v7111
    %v7354 = vunpack.c.h.b16 %v7111
    %v7355 = vunpack.c.l.b16 %v7112
    %v7356 = vunpack.c.h.b16 %v7112
    %v7357 = vunpack.c.l.b16 %v7113
    %v7358 = vunpack.c.h.b16 %v7113
    %v7359 = vunpack.c.l.b16 %v7114
    %v7360 = vunpack.c.h.b16 %v7114
    %v7361 = vunpack.c.l.b16 %v7115
    %v7362 = vunpack.c.h.b16 %v7115
    %v7363 = vunpack.c.l.b16 %v7116
    %v7364 = vunpack.c.h.b16 %v7116
    %v7365 = vunpack.c.l.b16 %v7117
    %v7366 = vunpack.c.h.b16 %v7117
    %v7367 = vunpack.c.l.b16 %v7118
    %v7368 = vunpack.c.h.b16 %v7118
    %v7369 = vunpack.c.l.b16 %v7119
    %v7370 = vunpack.c.h.b16 %v7119
    %v7371 = vunpack.c.l.b16 %v7120
    %v7372 = vunpack.c.h.b16 %v7120
    %v7373 = vunpack.c.l.b16 %v7121
    %v7374 = vunpack.c.h.b16 %v7121
    %v7375 = vunpack.c.l.b16 %v7122
    %v7376 = vunpack.c.h.b16 %v7122
    %v7377 = vunpack.c.l.b16 %v7123
    %v7378 = vunpack.c.h.b16 %v7123
    %v7379 = vunpack.c.l.b16 %v7124
    %v7380 = vunpack.c.h.b16 %v7124
    %v7381 = vunpack.c.l.b16 %v7125
    %v7382 = vunpack.c.h.b16 %v7125
    %v7383 = vunpack.c.l.b16 %v7126
    %v7384 = vunpack.c.h.b16 %v7126
    %v7385 = vunpack.c.l.b16 %v7127
    %v7386 = vunpack.c.h.b16 %v7127
    %v7387 = vunpack.c.l.b16 %v7128
    %v7388 = vunpack.c.h.b16 %v7128
    %v7389 = vunpack.c.l.b16 %v7129
    %v7390 = vunpack.c.h.b16 %v7129
    %v7391 = vunpack.c.l.b16 %v7130
    %v7392 = vunpack.c.h.b16 %v7130
    %v7393 = vunpack.c.l.b16 %v7131
    %v7394 = vunpack.c.h.b16 %v7131
    %v7395 = vunpack.c.l.b16 %v7132
    %v7396 = vunpack.c.h.b16 %v7132
    %v7397 = vunpack.c.l.b16 %v7133
    %v7398 = vunpack.c.h.b16 %v7133
    %v7399 = vunpack.c.l.b16 %v7134
    %v7400 = vunpack.c.h.b16 %v7134
    %v7401 = vunpack.c.l.b16 %v7135
    %v7402 = vunpack.c.h.b16 %v7135
    %v7403 = vunpack.c.l.b16 %v7136
    %v7404 = vunpack.c.h.b16 %v7136
    %v7405 = vunpack.c.l.b16 %v7137
    %v7406 = vunpack.c.h.b16 %v7137
    %v7407 = vunpack.c.l.b16 %v7138
    %v7408 = vunpack.c.h.b16 %v7138
    %v7409 = vunpack.c.l.b16 %v7139
    %v7410 = vunpack.c.h.b16 %v7139
    %v7411 = vunpack.c.l.b16 %v7140
    %v7412 = vunpack.c.h.b16 %v7140
    %v7413 = vunpack.c.l.b16 %v7141
    %v7414 = vunpack.c.h.b16 %v7141
    %v7415 = vunpack.c.l.b16 %v7142
    %v7416 = vunpack.c.h.b16 %v7142
    %v7417 = vunpack.c.l.b16 %v7143
    %v7418 = vunpack.c.h.b16 %v7143
    %v7419 = vunpack.c.l.b16 %v7144
    %v7420 = vunpack.c.h.b16 %v7144
    %v7421 = vunpack.c.l.b16 %v7145
    %v7422 = vunpack.c.h.b16 %v7145
    %v7423 = vunpack.c.l.b16 %v7146
    %v7424 = vunpack.c.h.b16 %v7146
    %v7425 = vunpack.c.l.b16 %v7147
    %v7426 = vunpack.c.h.b16 %v7147
    %v7427 = vunpack.c.l.b16 %v7148
    %v7428 = vunpack.c.h.b16 %v7148
    %v7429 = vunpack.c.l.b16 %v7149
    %v7430 = vunpack.c.h.b16 %v7149
    %v7431 = vunpack.c.l.b16 %v7150
    %v7432 = vunpack.c.h.b16 %v7150
    %v7433 = vunpack.c.l.b16 %v7151
    %v7434 = vunpack.c.h.b16 %v7151
    %v7435 = vunpack.c.l.b16 %v7152
    %v7436 = vunpack.c.h.b16 %v7152
    %v7437 = vunpack.c.l.b16 %v7153
    %v7438 = vunpack.c.h.b16 %v7153
    %v7439 = vunpack.c.l.b16 %v7154
    %v7440 = vunpack.c.h.b16 %v7154
    %v7441 = vunpack.c.l.b16 %v7155
    %v7442 = vunpack.c.h.b16 %v7155
    %v7443 = vunpack.c.l.b16 %v7156
    %v7444 = vunpack.c.h.b16 %v7156
    %v7445 = vunpack.c.l.b16 %v7157
    %v7446 = vunpack.c.h.b16 %v7157
    %v7447 = vunpack.c.l.b16 %v7158
    %v7448 = vunpack.c.h.b16 %v7158
    %v7449 = vunpack.c.l.b16 %v7159
    %v7450 = vunpack.c.h.b16 %v7159
    %v7451 = vunpack.c.l.b16 %v7160
    %v7452 = vunpack.c.h.b16 %v7160
    %v7453 = vunpack.c.l.b16 %v7161
    %v7454 = vunpack.c.h.b16 %v7161
    %v7455 = vunpack.c.l.b16 %v7162
    %v7456 = vunpack.c.h.b16 %v7162
    %v7457 = vunpack.c.l.b16 %v7163
    %v7458 = vunpack.c.h.b16 %v7163
    %v7459 = vunpack.c.l.b16 %v7164
    %v7460 = vunpack.c.h.b16 %v7164
    %v7461 = vunpack.c.l.b16 %v7165
    %v7462 = vunpack.c.h.b16 %v7165
    %v7463 = vunpack.c.l.b16 %v7166
    %v7464 = vunpack.c.h.b16 %v7166
    %v7465 = vunpack.c.l.b16 %v7167
    %v7466 = vunpack.c.h.b16 %v7167
    %v7467 = vunpack.c.l.b16 %v7168
    %v7468 = vunpack.c.h.b16 %v7168
    %v7469 = vunpack.c.l.b16 %v7169
    %v7470 = vunpack.c.h.b16 %v7169
    %v7471 = vunpack.c.l.b16 %v7170
    %v7472 = vunpack.c.h.b16 %v7170
    %v7473 = vunpack.c.l.b16 %v7171
    %v7474 = vunpack.c.h.b16 %v7171
    %v7475 = vunpack.c.l.b16 %v7172
    %v7476 = vunpack.c.h.b16 %v7172
    %v7477 = vunpack.c.l.b16 %v7173
    %v7478 = vunpack.c.h.b16 %v7173
    %v7479 = vunpack.c.l.b16 %v7174
    %v7480 = vunpack.c.h.b16 %v7174
    %v7481 = vunpack.c.l.b16 %v7175
    %v7482 = vunpack.c.h.b16 %v7175
    %v7483 = vunpack.c.l.b16 %v7176
    %v7484 = vunpack.c.h.b16 %v7176
    %v7485 = vunpack.c.l.b16 %v7177
    %v7486 = vunpack.c.h.b16 %v7177
    %v7487 = vunpack.c.l.b16 %v7178
    %v7488 = vunpack.c.h.b16 %v7178
    %v7489 = vunpack.c.l.b16 %v7179
    %v7490 = vunpack.c.h.b16 %v7179
    %v7491 = vunpack.c.l.b16 %v7180
    %v7492 = vunpack.c.h.b16 %v7180
    %v7493 = vunpack.c.l.b16 %v7181
    %v7494 = vunpack.c.h.b16 %v7181
    %v7495 = vunpack.c.l.b16 %v7182
    %v7496 = vunpack.c.h.b16 %v7182
    %v7497 = vunpack.c.l.b16 %v7183
    %v7498 = vunpack.c.h.b16 %v7183
    %v7499 = vunpack.c.l.b16 %v7184
    %v7500 = vunpack.c.h.b16 %v7184
    %v7501 = vunpack.c.l.b16 %v7185
    %v7502 = vunpack.c.h.b16 %v7185
    %v7503 = vunpack.c.l.b16 %v7186
    %v7504 = vunpack.c.h.b16 %v7186
    %v7505 = vunpack.c.l.b16 %v7187
    %v7506 = vunpack.c.h.b16 %v7187
    %v7507 = vunpack.c.l.b16 %v7188
    %v7508 = vunpack.c.h.b16 %v7188
    %v7509 = vpack.c.b16 %v7323, %v7317
    %v7510 = vpack.c.b16 %v7324, %v7318
    %v7511 = vpack.c.b16 %v7325, %v7319
    %v7512 = vpack.c.b16 %v7326, %v7320
    %v7513 = vpack.c.b16 %v7327, %v7321
    %v7514 = vpack.c.b16 %v7328, %v7322
    %v7515 = vpack.c.b16 %v7335, %v7329
    %v7516 = vpack.c.b16 %v7336, %v7330
    %v7517 = vpack.c.b16 %v7337, %v7331
    %v7518 = vpack.c.b16 %v7338, %v7332
    %v7519 = vpack.c.b16 %v7339, %v7333
    %v7520 = vpack.c.b16 %v7340, %v7334
    %v7521 = vpack.c.b16 %v7347, %v7341
    %v7522 = vpack.c.b16 %v7348, %v7342
    %v7523 = vpack.c.b16 %v7349, %v7343
    %v7524 = vpack.c.b16 %v7350, %v7344
    %v7525 = vpack.c.b16 %v7351, %v7345
    %v7526 = vpack.c.b16 %v7352, %v7346
    %v7527 = vpack.c.b16 %v7359, %v7353
    %v7528 = vpack.c.b16 %v7360, %v7354
    %v7529 = vpack.c.b16 %v7361, %v7355
    %v7530 = vpack.c.b16 %v7362, %v7356
    %v7531 = vpack.c.b16 %v7363, %v7357
    %v7532 = vpack.c.b16 %v7364, %v7358
    %v7533 = vpack.c.b16 %v7371, %v7365
    %v7534 = vpack.c.b16 %v7372, %v7366
    %v7535 = vpack.c.b16 %v7373, %v7367
    %v7536 = vpack.c.b16 %v7374, %v7368
    %v7537 = vpack.c.b16 %v7375, %v7369
    %v7538 = vpack.c.b16 %v7376, %v7370
    %v7539 = vpack.c.b16 %v7383, %v7377
    %v7540 = vpack.c.b16 %v7384, %v7378
    %v7541 = vpack.c.b16 %v7385, %v7379
    %v7542 = vpack.c.b16 %v7386, %v7380
    %v7543 = vpack.c.b16 %v7387, %v7381
    %v7544 = vpack.c.b16 %v7388, %v7382
    %v7545 = vpack.c.b16 %v7395, %v7389
    %v7546 = vpack.c.b16 %v7396, %v7390
    %v7547 = vpack.c.b16 %v7397, %v7391
    %v7548 = vpack.c.b16 %v7398, %v7392
    %v7549 = vpack.c.b16 %v7399, %v7393
    %v7550 = vpack.c.b16 %v7400, %v7394
    %v7551 = vpack.c.b16 %v7407, %v7401
    %v7552 = vpack.c.b16 %v7408, %v7402
    %v7553 = vpack.c.b16 %v7409, %v7403
    %v7554 = vpack.c.b16 %v7410, %v7404
    %v7555 = vpack.c.b16 %v7411, %v7405
    %v7556 = vpack.c.b16 %v7412, %v7406
    %v7557 = vpack.c.b16 %v7419, %v7413
    %v7558 = vpack.c.b16 %v7420, %v7414
    %v7559 = vpack.c.b16 %v7421, %v7415
    %v7560 = vpack.c.b16 %v7422, %v7416
    %v7561 = vpack.c.b16 %v7423, %v7417
    %v7562 = vpack.c.b16 %v7424, %v7418
    %v7563 = vpack.c.b16 %v7431, %v7425
    %v7564 = vpack.c.b16 %v7432, %v7426
    %v7565 = vpack.c.b16 %v7433, %v7427
    %v7566 = vpack.c.b16 %v7434, %v7428
    %v7567 = vpack.c.b16 %v7435, %v7429
    %v7568 = vpack.c.b16 %v7436, %v7430
    %v7569 = vpack.c.b16 %v7443, %v7437
    %v7570 = vpack.c.b16 %v7444, %v7438
    %v7571 = vpack.c.b16 %v7445, %v7439
    %v7572 = vpack.c.b16 %v7446, %v7440
    %v7573 = vpack.c.b16 %v7447, %v7441
    %v7574 = vpack.c.b16 %v7448, %v7442
    %v7575 = vpack.c.b16 %v7455, %v7449
    %v7576 = vpack.c.b16 %v7456, %v7450
    %v7577 = vpack.c.b16 %v7457, %v7451
    %v7578 = vpack.c.b16 %v7458, %v7452
    %v7579 = vpack.c.b16 %v7459, %v7453
    %v7580 = vpack.c.b16 %v7460, %v7454
    %v7581 = vpack.c.b16 %v7467, %v7461
    %v7582 = vpack.c.b16 %v7468, %v7462
    %v7583 = vpack.c.b16 %v7469, %v7463
    %v7584 = vpack.c.b16 %v7470, %v7464
    %v7585 = vpack.c.b16 %v7471, %v7465
    %v7586 = vpack.c.b16 %v7472, %v7466
    %v7587 = vpack.c.b16 %v7479, %v7473
    %v7588 = vpack.c.b16 %v7480, %v7474
    %v7589 = vpack.c.b16 %v7481, %v7475
    %v7590 = vpack.c.b16 %v7482, %v7476
    %v7591 = vpack.c.b16 %v7483, %v7477
    %v7592 = vpack.c.b16 %v7484, %v7478
    %v7593 = vpack.c.b16 %v7491, %v7485
    %v7594 = vpack.c.b16 %v7492, %v7486
    %v7595 = vpack.c.b16 %v7493, %v7487
    %v7596 = vpack.c.b16 %v7494, %v7488
    %v7597 = vpack.c.b16 %v7495, %v7489
    %v7598 = vpack.c.b16 %v7496, %v7490
    %v7599 = vpack.c.b16 %v7503, %v7497
    %v7600 = vpack.c.b16 %v7504, %v7498
    %v7601 = vpack.c.b16 %v7505, %v7499
    %v7602 = vpack.c.b16 %v7506, %v7500
    %v7603 = vpack.c.b16 %v7507, %v7501
    %v7604 = vpack.c.b16 %v7508, %v7502
    %7701 = vmatprep.subr.bf16.mxu0 %v7552
    %7702 = vmatpush1.bf16.msra.mxu0 %v7551
    %7703 = vmatprep.subr.bf16.mxu0 %v7546
    %7704 = vmatpush1.bf16.msra.mxu0 %v7545
    %7705 = vmatprep.subr.bf16.mxu0 %v7540
    %7706 = vmatpush1.bf16.msra.mxu0 %v7539
    %7707 = vmatprep.subr.bf16.mxu0 %v7534
    %7708 = vmatpush1.bf16.msra.mxu0 %v7533
    %7709 = vmatprep.subr.bf16.mxu0 %v7528
    %7710 = vmatpush1.bf16.msra.mxu0 %v7527
    %7711 = vmatprep.subr.bf16.mxu0 %v7522
    %7712 = vmatpush1.bf16.msra.mxu0 %v7521
    %7713 = vmatprep.subr.bf16.mxu0 %v7516
    %7714 = vmatpush1.bf16.msra.mxu0 %v7515
    %7715 = vmatprep.subr.bf16.mxu0 %v7510
    %7716 = vmatpush1.bf16.msra.mxu0 %v7509
    %7717 = vmatprep.subr.bf16.mxu0 %v7600
    %7718 = vmatpush2.bf16.msra.mxu0 %v7599
    %7719 = vmatprep.subr.bf16.mxu0 %v7594
    %7720 = vmatpush2.bf16.msra.mxu0 %v7593
    %7721 = vmatprep.subr.bf16.mxu0 %v7588
    %7722 = vmatpush2.bf16.msra.mxu0 %v7587
    %7723 = vmatprep.subr.bf16.mxu0 %v7582
    %7724 = vmatpush2.bf16.msra.mxu0 %v7581
    %7725 = vmatprep.subr.bf16.mxu0 %v7576
    %7726 = vmatpush2.bf16.msra.mxu0 %v7575
    %7727 = vmatprep.subr.bf16.mxu0 %v7570
    %7728 = vmatpush2.bf16.msra.mxu0 %v7569
    %7729 = vmatprep.subr.bf16.mxu0 %v7564
    %7730 = vmatpush2.bf16.msra.mxu0 %v7563
    %7731 = vmatprep.subr.bf16.mxu0 %v7558
    %7732 = vmatpush2.bf16.msra.mxu0 %v7557
    %7733 = vmatprep.mubr.bf16.mxu0 %v7092
    %7734 = vmatmul.mubr.bf16.gmra.mxu0 %v7091
    %v7735 = vpop.f32.mrf.mxu0
    %v7736 = vadd.f32 %v7194, %v7735
    %v7737 = vpop.f32.mrf.mxu0
    %v7738 = vadd.f32 %v7198, %v7737
    %v7739 = vpop.f32.mrf.mxu0
    %v7740 = vpop.f32.mrf.mxu0
    %7741 = vdwg.mxu0
    %7742 = vmatprep.subr.bf16.mxu0 %v7554
    %7743 = vmatpush1.bf16.msra.mxu0 %v7553
    %7744 = vmatprep.subr.bf16.mxu0 %v7548
    %7745 = vmatpush1.bf16.msra.mxu0 %v7547
    %7746 = vmatprep.subr.bf16.mxu0 %v7542
    %7747 = vmatpush1.bf16.msra.mxu0 %v7541
    %7748 = vmatprep.subr.bf16.mxu0 %v7536
    %7749 = vmatpush1.bf16.msra.mxu0 %v7535
    %7750 = vmatprep.subr.bf16.mxu0 %v7530
    %7751 = vmatpush1.bf16.msra.mxu0 %v7529
    %7752 = vmatprep.subr.bf16.mxu0 %v7524
    %7753 = vmatpush1.bf16.msra.mxu0 %v7523
    %7754 = vmatprep.subr.bf16.mxu0 %v7518
    %7755 = vmatpush1.bf16.msra.mxu0 %v7517
    %7756 = vmatprep.subr.bf16.mxu0 %v7512
    %7757 = vmatpush1.bf16.msra.mxu0 %v7511
    %7758 = vmatprep.subr.bf16.mxu0 %v7602
    %7759 = vmatpush2.bf16.msra.mxu0 %v7601
    %7760 = vmatprep.subr.bf16.mxu0 %v7596
    %7761 = vmatpush2.bf16.msra.mxu0 %v7595
    %7762 = vmatprep.subr.bf16.mxu0 %v7590
    %7763 = vmatpush2.bf16.msra.mxu0 %v7589
    %7764 = vmatprep.subr.bf16.mxu0 %v7584
    %7765 = vmatpush2.bf16.msra.mxu0 %v7583
    %7766 = vmatprep.subr.bf16.mxu0 %v7578
    %7767 = vmatpush2.bf16.msra.mxu0 %v7577
    %7768 = vmatprep.subr.bf16.mxu0 %v7572
    %7769 = vmatpush2.bf16.msra.mxu0 %v7571
    %7770 = vmatprep.subr.bf16.mxu0 %v7566
    %7771 = vmatpush2.bf16.msra.mxu0 %v7565
    %7772 = vmatprep.subr.bf16.mxu0 %v7560
    %7773 = vmatpush2.bf16.msra.mxu0 %v7559
    %7774 = vmatprep.mubr.bf16.mxu0 %v7092
    %7775 = vmatmul.mubr.bf16.gmra.mxu0 %v7091
    %v7776 = vpop.f32.mrf.mxu0
    %v7777 = vadd.f32 %v7202, %v7776
    %v7778 = vpop.f32.mrf.mxu0
    %v7779 = vadd.f32 %v7206, %v7778
    %v7780 = vpop.f32.mrf.mxu0
    %v7781 = vpop.f32.mrf.mxu0
    %7782 = vdwg.mxu0
    %7783 = vmatprep.subr.bf16.mxu0 %v7556
    %7784 = vmatpush1.bf16.msra.mxu0 %v7555
    %7785 = vmatprep.subr.bf16.mxu0 %v7550
    %7786 = vmatpush1.bf16.msra.mxu0 %v7549
    %7787 = vmatprep.subr.bf16.mxu0 %v7544
    %7788 = vmatpush1.bf16.msra.mxu0 %v7543
    %7789 = vmatprep.subr.bf16.mxu0 %v7538
    %7790 = vmatpush1.bf16.msra.mxu0 %v7537
    %7791 = vmatprep.subr.bf16.mxu0 %v7532
    %7792 = vmatpush1.bf16.msra.mxu0 %v7531
    %7793 = vmatprep.subr.bf16.mxu0 %v7526
    %7794 = vmatpush1.bf16.msra.mxu0 %v7525
    %7795 = vmatprep.subr.bf16.mxu0 %v7520
    %7796 = vmatpush1.bf16.msra.mxu0 %v7519
    %7797 = vmatprep.subr.bf16.mxu0 %v7514
    %7798 = vmatpush1.bf16.msra.mxu0 %v7513
    %7799 = vmatprep.subr.bf16.mxu0 %v7604
    %7800 = vmatpush2.bf16.msra.mxu0 %v7603
    %7801 = vmatprep.subr.bf16.mxu0 %v7598
    %7802 = vmatpush2.bf16.msra.mxu0 %v7597
    %7803 = vmatprep.subr.bf16.mxu0 %v7592
    %7804 = vmatpush2.bf16.msra.mxu0 %v7591
    %7805 = vmatprep.subr.bf16.mxu0 %v7586
    %7806 = vmatpush2.bf16.msra.mxu0 %v7585
    %7807 = vmatprep.subr.bf16.mxu0 %v7580
    %7808 = vmatpush2.bf16.msra.mxu0 %v7579
    %7809 = vmatprep.subr.bf16.mxu0 %v7574
    %7810 = vmatpush2.bf16.msra.mxu0 %v7573
    %7811 = vmatprep.subr.bf16.mxu0 %v7568
    %7812 = vmatpush2.bf16.msra.mxu0 %v7567
    %7813 = vmatprep.subr.bf16.mxu0 %v7562
    %7814 = vmatpush2.bf16.msra.mxu0 %v7561
    %7815 = vmatprep.mubr.bf16.mxu0 %v7092
    %7816 = vmatmul.mubr.bf16.gmra.mxu0 %v7091
    %v7817 = vpop.f32.mrf.mxu0
    %v7818 = vadd.f32 %v7210, %v7817
    %v7819 = vpop.f32.mrf.mxu0
    %v7820 = vadd.f32 %v7214, %v7819
    %v7821 = vpop.f32.mrf.mxu0
    %v7822 = vpop.f32.mrf.mxu0
    %7823 = vdwg.mxu0
    %v7827 = vrot.slane %v5273, 6
    %v7828 = vrot.slane %v5274, 6
    %v7829 = vrot.slane %v5275, 6
    %v7830 = vrot.slane %v5224, 6
    %v7831 = vrot.slane %v5226, 6
    %v7832 = vrot.slane %v5265, 6
    %v7845 = vrot.slane %v6074, 4
    %v7846 = vrot.slane %v6076, 4
    %v7847 = vrot.slane %v6115, 4
    %v7848 = vrot.slane %v6117, 4
    %v7849 = vrot.slane %v6156, 4
    %v7850 = vrot.slane %v6158, 4
    %v7863 = vrot.slane %v6904, 2
    %v7864 = vrot.slane %v6906, 2
    %v7865 = vrot.slane %v6945, 2
    %v7866 = vrot.slane %v6947, 2
    %v7867 = vrot.slane %v6986, 2
    %v7868 = vrot.slane %v6988, 2
    %v7875 = vsel %vm1174, %v5270, %v7827
    %v7876 = vsel %vm1174, %v5271, %v7828
    %v7877 = vsel %vm1174, %v5272, %v7829
    %v7878 = vsel %vm1174, %v4804, %v7830
    %v7879 = vsel %vm1174, %v4806, %v7831
    %v7880 = vsel %vm1174, %v4845, %v7832
    %v7881 = vsel %vm1178, %v7875, %v7845
    %v7882 = vsel %vm1178, %v7876, %v7846
    %v7883 = vsel %vm1178, %v7877, %v7847
    %v7884 = vsel %vm1178, %v7878, %v7848
    %v7885 = vsel %vm1178, %v7879, %v7849
    %v7886 = vsel %vm1178, %v7880, %v7850
    %v7887 = vsel %vm497, %v7881, %v7863
    %v7888 = vsel %vm497, %v7882, %v7864
    %v7889 = vsel %vm497, %v7883, %v7865
    %v7890 = vsel %vm497, %v7884, %v7866
    %v7891 = vsel %vm497, %v7885, %v7867
    %v7892 = vsel %vm497, %v7886, %v7868
    %v7893 = vpack.c.bf16 %v7736, %v7887
    %v7894 = vpack.c.bf16 %v7738, %v7888
    %v7895 = vpack.c.bf16 %v7777, %v7889
    %v7896 = vpack.c.bf16 %v7779, %v7890
    %v7897 = vpack.c.bf16 %v7818, %v7891
    %v7898 = vpack.c.bf16 %v7820, %v7892
    %v7899 = vld [vmem:[%s63] sm:$0xf]
    %v7900 = vld [vmem:[%s63 + $0x4] sm:$0xf]
    %v7901 = vld [vmem:[%s63 + $0x8] sm:$0xf]
    %v7902 = vld [vmem:[%s63 + $0xc] sm:$0xf]
    %v7903 = vld [vmem:[%s63 + $0x10] sm:$0xf]
    %v7904 = vld [vmem:[%s63 + $0x14] sm:$0xf]
    %v7905 = vld [vmem:[%s63 + $0x18] sm:$0xf]
    %v7906 = vld [vmem:[%s63 + $0x1c] sm:$0xf]
    %v7907 = vld [vmem:[%s63 + $0x20] sm:$0xf]
    %v7908 = vld [vmem:[%s63 + $0x24] sm:$0xf]
    %v7909 = vld [vmem:[%s63 + $0x28] sm:$0xf]
    %v7910 = vld [vmem:[%s63 + $0x2c] sm:$0xf]
    %v7911 = vld [vmem:[%s63 + $0x30] sm:$0xf]
    %v7912 = vld [vmem:[%s63 + $0x34] sm:$0xf]
    %v7913 = vld [vmem:[%s63 + $0x38] sm:$0xf]
    %v7914 = vld [vmem:[%s63 + $0x3c] sm:$0xf]
    %v7915 = vld [vmem:[%s63 + $0x40] sm:$0xf]
    %v7916 = vld [vmem:[%s63 + $0x44] sm:$0xf]
    %v7917 = vld [vmem:[%s63 + $0x48] sm:$0xf]
    %v7918 = vld [vmem:[%s63 + $0x4c] sm:$0xf]
    %v7919 = vld [vmem:[%s63 + $0x50] sm:$0xf]
    %v7920 = vld [vmem:[%s63 + $0x54] sm:$0xf]
    %v7921 = vld [vmem:[%s63 + $0x58] sm:$0xf]
    %v7922 = vld [vmem:[%s63 + $0x5c] sm:$0xf]
    %v7923 = vld [vmem:[%s63 + $0x60] sm:$0xf]
    %v7924 = vld [vmem:[%s63 + $0x64] sm:$0xf]
    %v7925 = vld [vmem:[%s63 + $0x68] sm:$0xf]
    %v7926 = vld [vmem:[%s63 + $0x6c] sm:$0xf]
    %v7927 = vld [vmem:[%s63 + $0x70] sm:$0xf]
    %v7928 = vld [vmem:[%s63 + $0x74] sm:$0xf]
    %v7929 = vld [vmem:[%s63 + $0x78] sm:$0xf]
    %v7930 = vld [vmem:[%s63 + $0x7c] sm:$0xf]
    %v7931 = vld [vmem:[%s63 + $0x80] sm:$0xf]
    %v7932 = vld [vmem:[%s63 + $0x84] sm:$0xf]
    %v7933 = vld [vmem:[%s63 + $0x88] sm:$0xf]
    %v7934 = vld [vmem:[%s63 + $0x8c] sm:$0xf]
    %v7935 = vld [vmem:[%s63 + $0x90] sm:$0xf]
    %v7936 = vld [vmem:[%s63 + $0x94] sm:$0xf]
    %v7937 = vld [vmem:[%s63 + $0x98] sm:$0xf]
    %v7938 = vld [vmem:[%s63 + $0x9c] sm:$0xf]
    %v7939 = vld [vmem:[%s63 + $0xa0] sm:$0xf]
    %v7940 = vld [vmem:[%s63 + $0xa4] sm:$0xf]
    %v7941 = vld [vmem:[%s63 + $0xa8] sm:$0xf]
    %v7942 = vld [vmem:[%s63 + $0xac] sm:$0xf]
    %v7943 = vld [vmem:[%s63 + $0xb0] sm:$0xf]
    %v7944 = vld [vmem:[%s63 + $0xb4] sm:$0xf]
    %v7945 = vld [vmem:[%s63 + $0xb8] sm:$0xf]
    %v7946 = vld [vmem:[%s63 + $0xbc] sm:$0xf]
    %v7947 = vld [vmem:[%s63 + $0xc0] sm:$0xf]
    %v7948 = vld [vmem:[%s63 + $0xc4] sm:$0xf]
    %v7949 = vld [vmem:[%s63 + $0xc8] sm:$0xf]
    %v7950 = vld [vmem:[%s63 + $0xcc] sm:$0xf]
    %v7951 = vld [vmem:[%s63 + $0xd0] sm:$0xf]
    %v7952 = vld [vmem:[%s63 + $0xd4] sm:$0xf]
    %v7953 = vld [vmem:[%s63 + $0xd8] sm:$0xf]
    %v7954 = vld [vmem:[%s63 + $0xdc] sm:$0xf]
    %v7955 = vld [vmem:[%s63 + $0xe0] sm:$0xf]
    %v7956 = vld [vmem:[%s63 + $0xe4] sm:$0xf]
    %v7957 = vld [vmem:[%s63 + $0xe8] sm:$0xf]
    %v7958 = vld [vmem:[%s63 + $0xec] sm:$0xf]
    %v7959 = vld [vmem:[%s63 + $0xf0] sm:$0xf]
    %v7960 = vld [vmem:[%s63 + $0xf4] sm:$0xf]
    %v7961 = vld [vmem:[%s63 + $0xf8] sm:$0xf]
    %v7962 = vld [vmem:[%s63 + $0xfc] sm:$0xf]
    %v7963 = vld [vmem:[%s63 + $0x100] sm:$0xf]
    %v7964 = vld [vmem:[%s63 + $0x104] sm:$0xf]
    %v7965 = vld [vmem:[%s63 + $0x108] sm:$0xf]
    %v7966 = vld [vmem:[%s63 + $0x10c] sm:$0xf]
    %v7967 = vld [vmem:[%s63 + $0x110] sm:$0xf]
    %v7968 = vld [vmem:[%s63 + $0x114] sm:$0xf]
    %v7969 = vld [vmem:[%s63 + $0x118] sm:$0xf]
    %v7970 = vld [vmem:[%s63 + $0x11c] sm:$0xf]
    %v7971 = vld [vmem:[%s63 + $0x120] sm:$0xf]
    %v7972 = vld [vmem:[%s63 + $0x124] sm:$0xf]
    %v7973 = vld [vmem:[%s63 + $0x128] sm:$0xf]
    %v7974 = vld [vmem:[%s63 + $0x12c] sm:$0xf]
    %v7975 = vld [vmem:[%s63 + $0x130] sm:$0xf]
    %v7976 = vld [vmem:[%s63 + $0x134] sm:$0xf]
    %v7977 = vld [vmem:[%s63 + $0x138] sm:$0xf]
    %v7978 = vld [vmem:[%s63 + $0x13c] sm:$0xf]
    %v7979 = vld [vmem:[%s63 + $0x140] sm:$0xf]
    %v7980 = vld [vmem:[%s63 + $0x144] sm:$0xf]
    %v7981 = vld [vmem:[%s63 + $0x148] sm:$0xf]
    %v7982 = vld [vmem:[%s63 + $0x14c] sm:$0xf]
    %v7983 = vld [vmem:[%s63 + $0x150] sm:$0xf]
    %v7984 = vld [vmem:[%s63 + $0x154] sm:$0xf]
    %v7985 = vld [vmem:[%s63 + $0x158] sm:$0xf]
    %v7986 = vld [vmem:[%s63 + $0x15c] sm:$0xf]
    %v7987 = vld [vmem:[%s63 + $0x160] sm:$0xf]
    %v7988 = vld [vmem:[%s63 + $0x164] sm:$0xf]
    %v7989 = vld [vmem:[%s63 + $0x168] sm:$0xf]
    %v7990 = vld [vmem:[%s63 + $0x16c] sm:$0xf]
    %v7991 = vld [vmem:[%s63 + $0x170] sm:$0xf]
    %v7992 = vld [vmem:[%s63 + $0x174] sm:$0xf]
    %v7993 = vld [vmem:[%s63 + $0x178] sm:$0xf]
    %v7994 = vld [vmem:[%s63 + $0x17c] sm:$0xf]
    %v8091 = vunpack.c.l.b16 %v7899
    %v8092 = vunpack.c.l.b16 %v7900
    %v8093 = vunpack.c.l.b16 %v7901
    %v8094 = vunpack.c.l.b16 %v7902
    %v8095 = vunpack.c.l.b16 %v7903
    %v8096 = vunpack.c.l.b16 %v7904
    %v8097 = vunpack.c.l.b16 %v7905
    %v8098 = vunpack.c.l.b16 %v7906
    %v8099 = vunpack.c.l.b16 %v7907
    %v8100 = vunpack.c.l.b16 %v7908
    %v8101 = vunpack.c.l.b16 %v7909
    %v8102 = vunpack.c.l.b16 %v7910
    %v8103 = vunpack.c.l.b16 %v7911
    %v8104 = vunpack.c.l.b16 %v7912
    %v8105 = vunpack.c.l.b16 %v7913
    %v8106 = vunpack.c.l.b16 %v7914
    %v8107 = vunpack.c.l.b16 %v7915
    %v8108 = vunpack.c.l.b16 %v7916
    %v8109 = vunpack.c.l.b16 %v7917
    %v8110 = vunpack.c.l.b16 %v7918
    %v8111 = vunpack.c.l.b16 %v7919
    %v8112 = vunpack.c.l.b16 %v7920
    %v8113 = vunpack.c.l.b16 %v7921
    %v8114 = vunpack.c.l.b16 %v7922
    %v8115 = vunpack.c.l.b16 %v7923
    %v8116 = vunpack.c.l.b16 %v7924
    %v8117 = vunpack.c.l.b16 %v7925
    %v8118 = vunpack.c.l.b16 %v7926
    %v8119 = vunpack.c.l.b16 %v7927
    %v8120 = vunpack.c.l.b16 %v7928
    %v8121 = vunpack.c.l.b16 %v7929
    %v8122 = vunpack.c.l.b16 %v7930
    %v8123 = vunpack.c.l.b16 %v7931
    %v8124 = vunpack.c.l.b16 %v7932
    %v8125 = vunpack.c.l.b16 %v7933
    %v8126 = vunpack.c.l.b16 %v7934
    %v8127 = vunpack.c.l.b16 %v7935
    %v8128 = vunpack.c.l.b16 %v7936
    %v8129 = vunpack.c.l.b16 %v7937
    %v8130 = vunpack.c.l.b16 %v7938
    %v8131 = vunpack.c.l.b16 %v7939
    %v8132 = vunpack.c.l.b16 %v7940
    %v8133 = vunpack.c.l.b16 %v7941
    %v8134 = vunpack.c.l.b16 %v7942
    %v8135 = vunpack.c.l.b16 %v7943
    %v8136 = vunpack.c.l.b16 %v7944
    %v8137 = vunpack.c.l.b16 %v7945
    %v8138 = vunpack.c.l.b16 %v7946
    %v8139 = vunpack.c.l.b16 %v7947
    %v8140 = vunpack.c.l.b16 %v7948
    %v8141 = vunpack.c.l.b16 %v7949
    %v8142 = vunpack.c.l.b16 %v7950
    %v8143 = vunpack.c.l.b16 %v7951
    %v8144 = vunpack.c.l.b16 %v7952
    %v8145 = vunpack.c.l.b16 %v7953
    %v8146 = vunpack.c.l.b16 %v7954
    %v8147 = vunpack.c.l.b16 %v7955
    %v8148 = vunpack.c.l.b16 %v7956
    %v8149 = vunpack.c.l.b16 %v7957
    %v8150 = vunpack.c.l.b16 %v7958
    %v8151 = vunpack.c.l.b16 %v7959
    %v8152 = vunpack.c.l.b16 %v7960
    %v8153 = vunpack.c.l.b16 %v7961
    %v8154 = vunpack.c.l.b16 %v7962
    %v8155 = vunpack.c.l.b16 %v7963
    %v8156 = vunpack.c.l.b16 %v7964
    %v8157 = vunpack.c.l.b16 %v7965
    %v8158 = vunpack.c.l.b16 %v7966
    %v8159 = vunpack.c.l.b16 %v7967
    %v8160 = vunpack.c.l.b16 %v7968
    %v8161 = vunpack.c.l.b16 %v7969
    %v8162 = vunpack.c.l.b16 %v7970
    %v8163 = vunpack.c.l.b16 %v7971
    %v8164 = vunpack.c.l.b16 %v7972
    %v8165 = vunpack.c.l.b16 %v7973
    %v8166 = vunpack.c.l.b16 %v7974
    %v8167 = vunpack.c.l.b16 %v7975
    %v8168 = vunpack.c.l.b16 %v7976
    %v8169 = vunpack.c.l.b16 %v7977
    %v8170 = vunpack.c.l.b16 %v7978
    %v8171 = vunpack.c.l.b16 %v7979
    %v8172 = vunpack.c.l.b16 %v7980
    %v8173 = vunpack.c.l.b16 %v7981
    %v8174 = vunpack.c.l.b16 %v7982
    %v8175 = vunpack.c.l.b16 %v7983
    %v8176 = vunpack.c.l.b16 %v7984
    %v8177 = vunpack.c.l.b16 %v7985
    %v8178 = vunpack.c.l.b16 %v7986
    %v8179 = vunpack.c.l.b16 %v7987
    %v8180 = vunpack.c.l.b16 %v7988
    %v8181 = vunpack.c.l.b16 %v7989
    %v8182 = vunpack.c.l.b16 %v7990
    %v8183 = vunpack.c.l.b16 %v7991
    %v8184 = vunpack.c.l.b16 %v7992
    %v8185 = vunpack.c.l.b16 %v7993
    %v8186 = vunpack.c.l.b16 %v7994
    %v8187 = vpack.c.b16 %v8092, %v8091
    %v8188 = vpack.c.b16 %v8094, %v8093
    %v8189 = vpack.c.b16 %v8096, %v8095
    %v8190 = vpack.c.b16 %v8098, %v8097
    %v8191 = vpack.c.b16 %v8100, %v8099
    %v8192 = vpack.c.b16 %v8102, %v8101
    %v8193 = vpack.c.b16 %v8104, %v8103
    %v8194 = vpack.c.b16 %v8106, %v8105
    %v8195 = vpack.c.b16 %v8108, %v8107
    %v8196 = vpack.c.b16 %v8110, %v8109
    %v8197 = vpack.c.b16 %v8112, %v8111
    %v8198 = vpack.c.b16 %v8114, %v8113
    %v8199 = vpack.c.b16 %v8116, %v8115
    %v8200 = vpack.c.b16 %v8118, %v8117
    %v8201 = vpack.c.b16 %v8120, %v8119
    %v8202 = vpack.c.b16 %v8122, %v8121
    %v8203 = vpack.c.b16 %v8124, %v8123
    %v8204 = vpack.c.b16 %v8126, %v8125
    %v8205 = vpack.c.b16 %v8128, %v8127
    %v8206 = vpack.c.b16 %v8130, %v8129
    %v8207 = vpack.c.b16 %v8132, %v8131
    %v8208 = vpack.c.b16 %v8134, %v8133
    %v8209 = vpack.c.b16 %v8136, %v8135
    %v8210 = vpack.c.b16 %v8138, %v8137
    %v8211 = vpack.c.b16 %v8140, %v8139
    %v8212 = vpack.c.b16 %v8142, %v8141
    %v8213 = vpack.c.b16 %v8144, %v8143
    %v8214 = vpack.c.b16 %v8146, %v8145
    %v8215 = vpack.c.b16 %v8148, %v8147
    %v8216 = vpack.c.b16 %v8150, %v8149
    %v8217 = vpack.c.b16 %v8152, %v8151
    %v8218 = vpack.c.b16 %v8154, %v8153
    %v8219 = vpack.c.b16 %v8156, %v8155
    %v8220 = vpack.c.b16 %v8158, %v8157
    %v8221 = vpack.c.b16 %v8160, %v8159
    %v8222 = vpack.c.b16 %v8162, %v8161
    %v8223 = vpack.c.b16 %v8164, %v8163
    %v8224 = vpack.c.b16 %v8166, %v8165
    %v8225 = vpack.c.b16 %v8168, %v8167
    %v8226 = vpack.c.b16 %v8170, %v8169
    %v8227 = vpack.c.b16 %v8172, %v8171
    %v8228 = vpack.c.b16 %v8174, %v8173
    %v8229 = vpack.c.b16 %v8176, %v8175
    %v8230 = vpack.c.b16 %v8178, %v8177
    %v8231 = vpack.c.b16 %v8180, %v8179
    %v8232 = vpack.c.b16 %v8182, %v8181
    %v8233 = vpack.c.b16 %v8184, %v8183
    %v8234 = vpack.c.b16 %v8186, %v8185
    %8283 = vmatprep.subr.bf16.mxu0 0
    %8284 = vmatpush1.bf16.msra.mxu0 %v8194
    %8285 = vmatprep.subr.bf16.mxu0 0
    %8286 = vmatpush1.bf16.msra.mxu0 %v8193
    %8287 = vmatprep.subr.bf16.mxu0 0
    %8288 = vmatpush1.bf16.msra.mxu0 %v8192
    %8289 = vmatprep.subr.bf16.mxu0 0
    %8290 = vmatpush1.bf16.msra.mxu0 %v8191
    %8291 = vmatprep.subr.bf16.mxu0 0
    %8292 = vmatpush1.bf16.msra.mxu0 %v8190
    %8293 = vmatprep.subr.bf16.mxu0 0
    %8294 = vmatpush1.bf16.msra.mxu0 %v8189
    %8295 = vmatprep.subr.bf16.mxu0 0
    %8296 = vmatpush1.bf16.msra.mxu0 %v8188
    %8297 = vmatprep.subr.bf16.mxu0 0
    %8298 = vmatpush1.bf16.msra.mxu0 %v8187
    %8299 = vmatprep.subr.bf16.mxu0 0
    %8300 = vmatpush2.bf16.msra.mxu0 %v8202
    %8301 = vmatprep.subr.bf16.mxu0 0
    %8302 = vmatpush2.bf16.msra.mxu0 %v8201
    %8303 = vmatprep.subr.bf16.mxu0 0
    %8304 = vmatpush2.bf16.msra.mxu0 %v8200
    %8305 = vmatprep.subr.bf16.mxu0 0
    %8306 = vmatpush2.bf16.msra.mxu0 %v8199
    %8307 = vmatprep.subr.bf16.mxu0 0
    %8308 = vmatpush2.bf16.msra.mxu0 %v8198
    %8309 = vmatprep.subr.bf16.mxu0 0
    %8310 = vmatpush2.bf16.msra.mxu0 %v8197
    %8311 = vmatprep.subr.bf16.mxu0 0
    %8312 = vmatpush2.bf16.msra.mxu0 %v8196
    %8313 = vmatprep.subr.bf16.mxu0 0
    %8314 = vmatpush2.bf16.msra.mxu0 %v8195
    %8315 = vmatprep.mubr.bf16.mxu0 %v7894
    %8316 = vmatmul.mubr.bf16.gmra.mxu0 %v7893
    %v8317 = vpop.f32.mrf.mxu0
    %v8318 = vadd.f32 0.0, %v8317
    %v8319 = vpop.f32.mrf.mxu0
    %v8320 = vpop.f32.mrf.mxu0
    %v8321 = vadd.f32 0.0, %v8320
    %v8322 = vpop.f32.mrf.mxu0
    %8323 = vdwg.mxu0
    %8324 = vmatprep.subr.bf16.mxu0 0
    %8325 = vmatpush1.bf16.msra.mxu0 %v8210
    %8326 = vmatprep.subr.bf16.mxu0 0
    %8327 = vmatpush1.bf16.msra.mxu0 %v8209
    %8328 = vmatprep.subr.bf16.mxu0 0
    %8329 = vmatpush1.bf16.msra.mxu0 %v8208
    %8330 = vmatprep.subr.bf16.mxu0 0
    %8331 = vmatpush1.bf16.msra.mxu0 %v8207
    %8332 = vmatprep.subr.bf16.mxu0 0
    %8333 = vmatpush1.bf16.msra.mxu0 %v8206
    %8334 = vmatprep.subr.bf16.mxu0 0
    %8335 = vmatpush1.bf16.msra.mxu0 %v8205
    %8336 = vmatprep.subr.bf16.mxu0 0
    %8337 = vmatpush1.bf16.msra.mxu0 %v8204
    %8338 = vmatprep.subr.bf16.mxu0 0
    %8339 = vmatpush1.bf16.msra.mxu0 %v8203
    %8340 = vmatprep.subr.bf16.mxu0 0
    %8341 = vmatpush2.bf16.msra.mxu0 %v8218
    %8342 = vmatprep.subr.bf16.mxu0 0
    %8343 = vmatpush2.bf16.msra.mxu0 %v8217
    %8344 = vmatprep.subr.bf16.mxu0 0
    %8345 = vmatpush2.bf16.msra.mxu0 %v8216
    %8346 = vmatprep.subr.bf16.mxu0 0
    %8347 = vmatpush2.bf16.msra.mxu0 %v8215
    %8348 = vmatprep.subr.bf16.mxu0 0
    %8349 = vmatpush2.bf16.msra.mxu0 %v8214
    %8350 = vmatprep.subr.bf16.mxu0 0
    %8351 = vmatpush2.bf16.msra.mxu0 %v8213
    %8352 = vmatprep.subr.bf16.mxu0 0
    %8353 = vmatpush2.bf16.msra.mxu0 %v8212
    %8354 = vmatprep.subr.bf16.mxu0 0
    %8355 = vmatpush2.bf16.msra.mxu0 %v8211
    %8356 = vmatprep.mubr.bf16.mxu0 %v7896
    %8357 = vmatmul.mubr.bf16.gmra.mxu0 %v7895
    %v8358 = vpop.f32.mrf.mxu0
    %v8359 = vadd.f32 %v8318, %v8358
    %v8360 = vpop.f32.mrf.mxu0
    %v8361 = vpop.f32.mrf.mxu0
    %v8362 = vadd.f32 %v8321, %v8361
    %v8363 = vpop.f32.mrf.mxu0
    %8364 = vdwg.mxu0
    %8365 = vmatprep.subr.bf16.mxu0 0
    %8366 = vmatpush1.bf16.msra.mxu0 %v8226
    %8367 = vmatprep.subr.bf16.mxu0 0
    %8368 = vmatpush1.bf16.msra.mxu0 %v8225
    %8369 = vmatprep.subr.bf16.mxu0 0
    %8370 = vmatpush1.bf16.msra.mxu0 %v8224
    %8371 = vmatprep.subr.bf16.mxu0 0
    %8372 = vmatpush1.bf16.msra.mxu0 %v8223
    %8373 = vmatprep.subr.bf16.mxu0 0
    %8374 = vmatpush1.bf16.msra.mxu0 %v8222
    %8375 = vmatprep.subr.bf16.mxu0 0
    %8376 = vmatpush1.bf16.msra.mxu0 %v8221
    %8377 = vmatprep.subr.bf16.mxu0 0
    %8378 = vmatpush1.bf16.msra.mxu0 %v8220
    %8379 = vmatprep.subr.bf16.mxu0 0
    %8380 = vmatpush1.bf16.msra.mxu0 %v8219
    %8381 = vmatprep.subr.bf16.mxu0 0
    %8382 = vmatpush2.bf16.msra.mxu0 %v8234
    %8383 = vmatprep.subr.bf16.mxu0 0
    %8384 = vmatpush2.bf16.msra.mxu0 %v8233
    %8385 = vmatprep.subr.bf16.mxu0 0
    %8386 = vmatpush2.bf16.msra.mxu0 %v8232
    %8387 = vmatprep.subr.bf16.mxu0 0
    %8388 = vmatpush2.bf16.msra.mxu0 %v8231
    %8389 = vmatprep.subr.bf16.mxu0 0
    %8390 = vmatpush2.bf16.msra.mxu0 %v8230
    %8391 = vmatprep.subr.bf16.mxu0 0
    %8392 = vmatpush2.bf16.msra.mxu0 %v8229
    %8393 = vmatprep.subr.bf16.mxu0 0
    %8394 = vmatpush2.bf16.msra.mxu0 %v8228
    %8395 = vmatprep.subr.bf16.mxu0 0
    %8396 = vmatpush2.bf16.msra.mxu0 %v8227
    %8397 = vmatprep.mubr.bf16.mxu0 %v7898
    %8398 = vmatmul.mubr.bf16.gmra.mxu0 %v7897
    %v8399 = vpop.f32.mrf.mxu0
    %v8400 = vadd.f32 %v8359, %v8399
    %v8401 = vpop.f32.mrf.mxu0
    %v8402 = vpop.f32.mrf.mxu0
    %v8403 = vadd.f32 %v8362, %v8402
    %v8404 = vpop.f32.mrf.mxu0
    %8405 = vdwg.mxu0
    %v8406 = vld [vmem:[%s65] sm:$0x1]
    %v8408 = vlaneseq
    %v8409 = vshrl.u32 %v8408, 7
    %v8410 = vsub.s32 0, %v8409
    %v8411 = vrot.slane %v8406, %v8410
    %v8413 = vmul.f32 %v8400, %v8411
    %v8414 = vmul.f32 %v8403, %v8411
    %v8415 = vsel %vm4078, %v8413, 0.0
    %8416 = vadd.xlane.f32.xlu0 %v8415
    %v8417 = vpop.xlane.xlu0 %8416
    %vm8418 = vcmask 517120
    %v8419 = vsel %vm8418, %v8414, 0.0
    %8420 = vadd.xlane.f32.xlu0 %v8419
    %v8421 = vpop.xlane.xlu0 %8420
    %v8422 = vld [vmem:[%s67] sm:$0x1]
    %v8424 = vsel %vm4078, %v8422, 0
    %v8427 = vsel %vm4078, %v8400, 0
    %v8430 = vsel %vm4078, %v8403, 0
    %8432 = vmatprep.subr.mxu0 0.0
    %8433 = vmatpush1.xpose.msra.mxu0 0.0
    %8434 = vmatprep.subr.mxu0 0.0
    %8435 = vmatpush1.xpose.msra.mxu0 0.0
    %8436 = vmatprep.subr.mxu0 0.0
    %8437 = vmatpush1.xpose.msra.mxu0 0.0
    %8438 = vmatprep.subr.mxu0 0.0
    %8439 = vmatpush1.xpose.msra.mxu0 0.0
    %8440 = vmatprep.subr.mxu0 0.0
    %8441 = vmatpush1.xpose.msra.mxu0 0.0
    %8442 = vmatprep.subr.mxu0 0.0
    %8443 = vmatpush1.xpose.msra.mxu0 0.0
    %8444 = vmatprep.subr.mxu0 0.0
    %8445 = vmatpush1.xpose.msra.mxu0 0.0
    %8446 = vmatprep.subr.mxu0 0.0
    %8447 = vmatpush1.xpose.msra.mxu0 0.0
    %8448 = vmatprep.subr.mxu0 0.0
    %8449 = vmatpush1.xpose.msra.mxu0 0.0
    %8450 = vmatprep.subr.mxu0 0.0
    %8451 = vmatpush1.xpose.msra.mxu0 0.0
    %8452 = vmatprep.subr.mxu0 0.0
    %8453 = vmatpush1.xpose.msra.mxu0 0.0
    %8454 = vmatprep.subr.mxu0 0.0
    %8455 = vmatpush1.xpose.msra.mxu0 0.0
    %8456 = vmatprep.subr.mxu0 0.0
    %8457 = vmatpush1.xpose.msra.mxu0 0.0
    %8458 = vmatprep.subr.mxu0 0.0
    %8459 = vmatpush1.xpose.msra.mxu0 0.0
    %8460 = vmatprep.subr.mxu0 0.0
    %8461 = vmatpush1.xpose.msra.mxu0 %v8430
    %8462 = vmatprep.subr.mxu0 0.0
    %8463 = vmatpush1.xpose.msra.mxu0 %v8427
    %8464 = vmatprep.subr.mxu0 0.0
    %8465 = vmatpush2.xpose.msra.mxu0 0.0
    %8466 = vmatprep.subr.mxu0 0.0
    %8467 = vmatpush2.xpose.msra.mxu0 0.0
    %8468 = vmatprep.subr.mxu0 0.0
    %8469 = vmatpush2.xpose.msra.mxu0 0.0
    %8470 = vmatprep.subr.mxu0 0.0
    %8471 = vmatpush2.xpose.msra.mxu0 0.0
    %8472 = vmatprep.subr.mxu0 0.0
    %8473 = vmatpush2.xpose.msra.mxu0 0.0
    %8474 = vmatprep.subr.mxu0 0.0
    %8475 = vmatpush2.xpose.msra.mxu0 0.0
    %8476 = vmatprep.subr.mxu0 0.0
    %8477 = vmatpush2.xpose.msra.mxu0 0.0
    %8478 = vmatprep.subr.mxu0 0.0
    %8479 = vmatpush2.xpose.msra.mxu0 0.0
    %8480 = vmatprep.subr.mxu0 0.0
    %8481 = vmatpush2.xpose.msra.mxu0 0.0
    %8482 = vmatprep.subr.mxu0 0.0
    %8483 = vmatpush2.xpose.msra.mxu0 0.0
    %8484 = vmatprep.subr.mxu0 0.0
    %8485 = vmatpush2.xpose.msra.mxu0 0.0
    %8486 = vmatprep.subr.mxu0 0.0
    %8487 = vmatpush2.xpose.msra.mxu0 0.0
    %8488 = vmatprep.subr.mxu0 0.0
    %8489 = vmatpush2.xpose.msra.mxu0 0.0
    %8490 = vmatprep.subr.mxu0 0.0
    %8491 = vmatpush2.xpose.msra.mxu0 0.0
    %8492 = vmatprep.subr.mxu0 0.0
    %8493 = vmatpush2.xpose.msra.mxu0 0.0
    %8494 = vmatprep.subr.mxu0 0.0
    %8495 = vmatpush2.xpose.msra.mxu0 0.0
    %8496 = vmatprep.mubr.f32.mxu0 0.0
    %8497 = vmatmul.mubr.f32.gmra.mxu0 %v8424
    %v8498 = vpop.f32.mrf.mxu0
    %v8499 = vadd.f32 0.0, %v8498
    %v8500 = vpop.f32.mrf.mxu0
    %8501 = vdwg.mxu0
    %v8502 = vlaneseq
    %v8503 = vshrl.u32 %v8502, 7
    %v8504 = vsub.s32 0, %v8503
    %v8505 = vrot.slane %v8499, %v8504
    %v8506 = vadd.f32 %v8417, %v8505
    %v8507 = vadd.f32 %v8421, %v8505
    %vm8508 = vcmp.gt.f32.partialorder %v8506, 0.0
    %vm8509 = vcmp.gt.f32.partialorder %v8507, 0.0
    %v8510 = vmul.f32 %v8506, 0.2
    %v8511 = vmul.f32 %v8507, 0.2
    %v8512 = vsel %vm8508, %v8506, %v8510
    %v8513 = vsel %vm8509, %v8507, %v8511
    %v8514 = vadd.s32 %v4050, 8
    %vm8515 = vcmp.lt.s32.totalorder %v8514, 0
    %v8516 = vsub.s32 0, %v8514
    %v8517 = vsel %vm8515, %v8516, %v8514
    %v8518 = vshrl.u32 %v8517, 1
    %v8519 = vand.u32 %v8517, 1
    %v8520 = vsub.s32 0, %v8519
    %v8521 = vsel %vm8515, %v8520, %v8519
    %vm8522 = vcmp.ne.s32.totalorder %v8521, 0
    %vm8523 = vcmp.lt.s32.totalorder %v8521, 0
    %vm8524 = vmand %vm8523, %vm8522
    %v8525 = vadd.s32 %v8521, 2
    %v8526 = vsel %vm8524, %v8525, %v8521
    %vm8527 = vcmp.eq.s32.totalorder %v8526, %v4076
    %vm8528 = vcmp.ne.s32.totalorder %v4050, %v4052
    %vm8529 = vcmp.ne.s32.totalorder %v8514, %v4052
    %vm8530 = vmand %vm4077, %vm8528
    %vm8531 = vmand %vm8527, %vm8529
    %v8532 = vsel %vm8530, %v8512, -1e+30
    %v8533 = vsel %vm8531, %v8513, -1e+30
    %vm8534 = vcmask 80896
    %v8535 = vsel %vm8534, %v8532, -inf
    %8536 = vmax.xlane.f32.xlu0 %v8535
    %v8537 = vpop.xlane.xlu0 %8536
    %vm8538 = vcmask 74752
    %v8539 = vsel %vm8538, %v8533, -inf
    %8540 = vmax.xlane.f32.xlu0 %v8539
    %v8541 = vpop.xlane.xlu0 %8540
    %v8542 = vsub.f32 %v8532, %v8537
    %v8543 = vsub.f32 %v8533, %v8541
    %v8544 = vmul.f32 %v8542, 1.442695
    %v8545 = vpow.pop %v8544
    %v8546 = vmul.f32 %v8543, 1.442695
    %v8547 = vpow.pop %v8546
    %v8548 = vsel %vm8534, %v8545, 0.0
    %8549 = vadd.xlane.f32.xlu0 %v8548
    %v8550 = vpop.xlane.xlu0 %8549
    %v8551 = vsel %vm8538, %v8547, 0.0
    %8552 = vadd.xlane.f32.xlu0 %v8551
    %v8553 = vpop.xlane.xlu0 %8552
    %v8554 = vrcp.pop %v8550
    %v8555 = vrcp.pop %v8553
    %v8556 = vmul.f32 %v8545, %v8554
    %v8557 = vmul.f32 %v8547, %v8555
    %v8559 = vsel %vm8534, %v8556, 0
    %v8562 = vsel %vm8534, %v8557, 0
    %v8564 = vsel %vm1174, %v8403, 0
    %8566 = vmatprep.subr.mxu0 0.0
    %8567 = vmatpush1.msra.mxu0 0.0
    %8568 = vmatprep.subr.mxu0 0.0
    %8569 = vmatpush1.msra.mxu0 0.0
    %8570 = vmatprep.subr.mxu0 0.0
    %8571 = vmatpush1.msra.mxu0 0.0
    %8572 = vmatprep.subr.mxu0 0.0
    %8573 = vmatpush1.msra.mxu0 0.0
    %8574 = vmatprep.subr.mxu0 0.0
    %8575 = vmatpush1.msra.mxu0 0.0
    %8576 = vmatprep.subr.mxu0 0.0
    %8577 = vmatpush1.msra.mxu0 0.0
    %8578 = vmatprep.subr.mxu0 0.0
    %8579 = vmatpush1.msra.mxu0 0.0
    %8580 = vmatprep.subr.mxu0 0.0
    %8581 = vmatpush1.msra.mxu0 0.0
    %8582 = vmatprep.subr.mxu0 0.0
    %8583 = vmatpush1.msra.mxu0 0.0
    %8584 = vmatprep.subr.mxu0 0.0
    %8585 = vmatpush1.msra.mxu0 0.0
    %8586 = vmatprep.subr.mxu0 0.0
    %8587 = vmatpush1.msra.mxu0 0.0
    %8588 = vmatprep.subr.mxu0 0.0
    %8589 = vmatpush1.msra.mxu0 0.0
    %8590 = vmatprep.subr.mxu0 0.0
    %8591 = vmatpush1.msra.mxu0 0.0
    %8592 = vmatprep.subr.mxu0 0.0
    %8593 = vmatpush1.msra.mxu0 0.0
    %8594 = vmatprep.subr.mxu0 0.0
    %8595 = vmatpush1.msra.mxu0 %v8564
    %8596 = vmatprep.subr.mxu0 0.0
    %8597 = vmatpush1.msra.mxu0 %v8400
    %8598 = vmatprep.subr.mxu0 0.0
    %8599 = vmatpush2.msra.mxu0 0.0
    %8600 = vmatprep.subr.mxu0 0.0
    %8601 = vmatpush2.msra.mxu0 0.0
    %8602 = vmatprep.subr.mxu0 0.0
    %8603 = vmatpush2.msra.mxu0 0.0
    %8604 = vmatprep.subr.mxu0 0.0
    %8605 = vmatpush2.msra.mxu0 0.0
    %8606 = vmatprep.subr.mxu0 0.0
    %8607 = vmatpush2.msra.mxu0 0.0
    %8608 = vmatprep.subr.mxu0 0.0
    %8609 = vmatpush2.msra.mxu0 0.0
    %8610 = vmatprep.subr.mxu0 0.0
    %8611 = vmatpush2.msra.mxu0 0.0
    %8612 = vmatprep.subr.mxu0 0.0
    %8613 = vmatpush2.msra.mxu0 0.0
    %8614 = vmatprep.subr.mxu0 0.0
    %8615 = vmatpush2.msra.mxu0 0.0
    %8616 = vmatprep.subr.mxu0 0.0
    %8617 = vmatpush2.msra.mxu0 0.0
    %8618 = vmatprep.subr.mxu0 0.0
    %8619 = vmatpush2.msra.mxu0 0.0
    %8620 = vmatprep.subr.mxu0 0.0
    %8621 = vmatpush2.msra.mxu0 0.0
    %8622 = vmatprep.subr.mxu0 0.0
    %8623 = vmatpush2.msra.mxu0 0.0
    %8624 = vmatprep.subr.mxu0 0.0
    %8625 = vmatpush2.msra.mxu0 0.0
    %8626 = vmatprep.subr.mxu0 0.0
    %8627 = vmatpush2.msra.mxu0 0.0
    %8628 = vmatprep.subr.mxu0 0.0
    %8629 = vmatpush2.msra.mxu0 0.0
    %8630 = vmatprep.mubr.f32.mxu0 0.0
    %8631 = vmatmul.mubr.f32.gmra.mxu0 %v8559
    %v8632 = vpop.f32.mrf.mxu0
    %v8633 = vadd.f32 0.0, %v8632
    %v8634 = vpop.f32.mrf.mxu0
    %8635 = vmatprep.mubr.f32.mxu0 0.0
    %8636 = vmatmul.mubr.f32.gmra.mxu0 %v8562
    %v8637 = vpop.f32.mrf.mxu0
    %v8638 = vadd.f32 0.0, %v8637
    %v8639 = vpop.f32.mrf.mxu0
    %8640 = vdwg.mxu0
    %v8642 = vrot.slane %v8633, 2
    %8643 = vrot.lane.b32.xlu0 %v8642, 64
    %v8644 = vpop.permute.xlu0 %8643
    %v8646 = vrot.slane %v8633, 4
    %v8648 = vrot.slane %v8633, 6
    %8649 = vrot.lane.b32.xlu0 %v8648, 64
    %v8650 = vpop.permute.xlu0 %8649
    %v8652 = vsel %vm4078, %v8633, %v8644
    %v8653 = vsel %vm4078, %v8646, %v8650
    %v8654 = vsel %vm4078, %v8638, 0.0
    %v8658 = vcombine.low %v8652, %v8653
    %v8660 = vunpack.c.l.s4 1983009808
    %v8661 = vunpack.c.0.s8 %v8660
    %v8662 = vlaneseq
    %v8663 = vshrl.u32 %v8662, 7
    %v8664 = vsub.s32 %v8661, %v8663
    %v8665 = vrot.slane %v8658, %v8664
    %v8667 = vunpack.c.l.s4 1983009808
    %v8668 = vunpack.c.0.s8 %v8667
    %v8669 = vlaneseq
    %v8670 = vshrl.u32 %v8669, 7
    %v8671 = vsub.s32 %v8668, %v8670
    %v8672 = vrot.slane %v8654, %v8671
    %v8673 = vcombine.low %v8665, %v8672
    %8675 = vst [vmem:[#allocation6] sm:$0x3f] %v8673
    %v8676 = vpack.c.bf16 %v8652, %v8652
    %v8677 = vpack.c.bf16 %v8653, %v8653
    %v8678 = vpack.c.bf16 %v8654, %v8654
    %v8679 = vld [vmem:[%s69] sm:$0xff]
    %v8680 = vld [vmem:[%s69 + $0x8] sm:$0xff]
    %v8681 = vld [vmem:[%s69 + $0x10] sm:$0xff]
    %v8682 = vld [vmem:[%s69 + $0x18] sm:$0xff]
    %v8683 = vld [vmem:[%s69 + $0x20] sm:$0xff]
    %v8684 = vld [vmem:[%s69 + $0x28] sm:$0xff]
    %v8685 = vld [vmem:[%s69 + $0x30] sm:$0xff]
    %v8686 = vld [vmem:[%s69 + $0x38] sm:$0xff]
    %v8687 = vld [vmem:[%s69 + $0x40] sm:$0xff]
    %v8688 = vld [vmem:[%s69 + $0x48] sm:$0xff]
    %v8689 = vld [vmem:[%s69 + $0x50] sm:$0xff]
    %v8690 = vld [vmem:[%s69 + $0x58] sm:$0xff]
    %v8691 = vld [vmem:[%s69 + $0x60] sm:$0xff]
    %v8692 = vld [vmem:[%s69 + $0x68] sm:$0xff]
    %v8693 = vld [vmem:[%s69 + $0x70] sm:$0xff]
    %v8694 = vld [vmem:[%s69 + $0x78] sm:$0xff]
    %v8695 = vld [vmem:[%s69 + $0x80] sm:$0xff]
    %v8696 = vld [vmem:[%s69 + $0x88] sm:$0xff]
    %v8697 = vld [vmem:[%s69 + $0x90] sm:$0xff]
    %v8698 = vld [vmem:[%s69 + $0x98] sm:$0xff]
    %v8699 = vld [vmem:[%s69 + $0xa0] sm:$0xff]
    %v8700 = vld [vmem:[%s69 + $0xa8] sm:$0xff]
    %v8701 = vld [vmem:[%s69 + $0xb0] sm:$0xff]
    %v8702 = vld [vmem:[%s69 + $0xb8] sm:$0xff]
    %v8703 = vld [vmem:[%s69 + $0xc0] sm:$0xff]
    %v8704 = vld [vmem:[%s69 + $0xc8] sm:$0xff]
    %v8705 = vld [vmem:[%s69 + $0xd0] sm:$0xff]
    %v8706 = vld [vmem:[%s69 + $0xd8] sm:$0xff]
    %v8707 = vld [vmem:[%s69 + $0xe0] sm:$0xff]
    %v8708 = vld [vmem:[%s69 + $0xe8] sm:$0xff]
    %v8709 = vld [vmem:[%s69 + $0xf0] sm:$0xff]
    %v8710 = vld [vmem:[%s69 + $0xf8] sm:$0xff]
    %v8711 = vld [vmem:[%s69 + $0x100] sm:$0xff]
    %v8712 = vld [vmem:[%s69 + $0x108] sm:$0xff]
    %v8713 = vld [vmem:[%s69 + $0x110] sm:$0xff]
    %v8714 = vld [vmem:[%s69 + $0x118] sm:$0xff]
    %v8715 = vld [vmem:[%s69 + $0x120] sm:$0xff]
    %v8716 = vld [vmem:[%s69 + $0x128] sm:$0xff]
    %v8717 = vld [vmem:[%s69 + $0x130] sm:$0xff]
    %v8718 = vld [vmem:[%s69 + $0x138] sm:$0xff]
    %v8719 = vld [vmem:[%s69 + $0x140] sm:$0xff]
    %v8720 = vld [vmem:[%s69 + $0x148] sm:$0xff]
    %v8721 = vld [vmem:[%s69 + $0x150] sm:$0xff]
    %v8722 = vld [vmem:[%s69 + $0x158] sm:$0xff]
    %v8723 = vld [vmem:[%s69 + $0x160] sm:$0xff]
    %v8724 = vld [vmem:[%s69 + $0x168] sm:$0xff]
    %v8725 = vld [vmem:[%s69 + $0x170] sm:$0xff]
    %v8726 = vld [vmem:[%s69 + $0x178] sm:$0xff]
    %v8727 = vld [vmem:[%s69 + $0x180] sm:$0xff]
    %v8728 = vld [vmem:[%s69 + $0x188] sm:$0xff]
    %v8729 = vld [vmem:[%s69 + $0x190] sm:$0xff]
    %v8730 = vld [vmem:[%s69 + $0x198] sm:$0xff]
    %v8731 = vld [vmem:[%s69 + $0x1a0] sm:$0xff]
    %v8732 = vld [vmem:[%s69 + $0x1a8] sm:$0xff]
    %v8733 = vld [vmem:[%s69 + $0x1b0] sm:$0xff]
    %v8734 = vld [vmem:[%s69 + $0x1b8] sm:$0xff]
    %v8735 = vld [vmem:[%s69 + $0x1c0] sm:$0xff]
    %v8736 = vld [vmem:[%s69 + $0x1c8] sm:$0xff]
    %v8737 = vld [vmem:[%s69 + $0x1d0] sm:$0xff]
    %v8738 = vld [vmem:[%s69 + $0x1d8] sm:$0xff]
    %v8739 = vld [vmem:[%s69 + $0x1e0] sm:$0xff]
    %v8740 = vld [vmem:[%s69 + $0x1e8] sm:$0xff]
    %v8741 = vld [vmem:[%s69 + $0x1f0] sm:$0xff]
    %v8742 = vld [vmem:[%s69 + $0x1f8] sm:$0xff]
    %v8743 = vld [vmem:[%s69 + $0x200] sm:$0xff]
    %v8744 = vld [vmem:[%s69 + $0x208] sm:$0xff]
    %v8745 = vld [vmem:[%s69 + $0x210] sm:$0xff]
    %v8746 = vld [vmem:[%s69 + $0x218] sm:$0xff]
    %v8747 = vld [vmem:[%s69 + $0x220] sm:$0xff]
    %v8748 = vld [vmem:[%s69 + $0x228] sm:$0xff]
    %v8749 = vld [vmem:[%s69 + $0x230] sm:$0xff]
    %v8750 = vld [vmem:[%s69 + $0x238] sm:$0xff]
    %v8751 = vld [vmem:[%s69 + $0x240] sm:$0xff]
    %v8752 = vld [vmem:[%s69 + $0x248] sm:$0xff]
    %v8753 = vld [vmem:[%s69 + $0x250] sm:$0xff]
    %v8754 = vld [vmem:[%s69 + $0x258] sm:$0xff]
    %v8755 = vld [vmem:[%s69 + $0x260] sm:$0xff]
    %v8756 = vld [vmem:[%s69 + $0x268] sm:$0xff]
    %v8757 = vld [vmem:[%s69 + $0x270] sm:$0xff]
    %v8758 = vld [vmem:[%s69 + $0x278] sm:$0xff]
    %v8759 = vld [vmem:[%s69 + $0x280] sm:$0xff]
    %v8760 = vld [vmem:[%s69 + $0x288] sm:$0xff]
    %v8761 = vld [vmem:[%s69 + $0x290] sm:$0xff]
    %v8762 = vld [vmem:[%s69 + $0x298] sm:$0xff]
    %v8763 = vld [vmem:[%s69 + $0x2a0] sm:$0xff]
    %v8764 = vld [vmem:[%s69 + $0x2a8] sm:$0xff]
    %v8765 = vld [vmem:[%s69 + $0x2b0] sm:$0xff]
    %v8766 = vld [vmem:[%s69 + $0x2b8] sm:$0xff]
    %v8767 = vld [vmem:[%s69 + $0x2c0] sm:$0xff]
    %v8768 = vld [vmem:[%s69 + $0x2c8] sm:$0xff]
    %v8769 = vld [vmem:[%s69 + $0x2d0] sm:$0xff]
    %v8770 = vld [vmem:[%s69 + $0x2d8] sm:$0xff]
    %v8771 = vld [vmem:[%s69 + $0x2e0] sm:$0xff]
    %v8772 = vld [vmem:[%s69 + $0x2e8] sm:$0xff]
    %v8773 = vld [vmem:[%s69 + $0x2f0] sm:$0xff]
    %v8774 = vld [vmem:[%s69 + $0x2f8] sm:$0xff]
    %v8775 = vld [vmem:[%s69 + $0x300] sm:$0xff]
    %v8776 = vld [vmem:[%s69 + $0x308] sm:$0xff]
    %v8777 = vld [vmem:[%s69 + $0x310] sm:$0xff]
    %v8778 = vld [vmem:[%s69 + $0x318] sm:$0xff]
    %v8779 = vld [vmem:[%s69 + $0x320] sm:$0xff]
    %v8780 = vld [vmem:[%s69 + $0x328] sm:$0xff]
    %v8781 = vld [vmem:[%s69 + $0x330] sm:$0xff]
    %v8782 = vld [vmem:[%s69 + $0x338] sm:$0xff]
    %v8783 = vld [vmem:[%s69 + $0x340] sm:$0xff]
    %v8784 = vld [vmem:[%s69 + $0x348] sm:$0xff]
    %v8785 = vld [vmem:[%s69 + $0x350] sm:$0xff]
    %v8786 = vld [vmem:[%s69 + $0x358] sm:$0xff]
    %v8787 = vld [vmem:[%s69 + $0x360] sm:$0xff]
    %v8788 = vld [vmem:[%s69 + $0x368] sm:$0xff]
    %v8789 = vld [vmem:[%s69 + $0x370] sm:$0xff]
    %v8790 = vld [vmem:[%s69 + $0x378] sm:$0xff]
    %v8791 = vld [vmem:[%s69 + $0x380] sm:$0xff]
    %v8792 = vld [vmem:[%s69 + $0x388] sm:$0xff]
    %v8793 = vld [vmem:[%s69 + $0x390] sm:$0xff]
    %v8794 = vld [vmem:[%s69 + $0x398] sm:$0xff]
    %v8795 = vld [vmem:[%s69 + $0x3a0] sm:$0xff]
    %v8796 = vld [vmem:[%s69 + $0x3a8] sm:$0xff]
    %v8797 = vld [vmem:[%s69 + $0x3b0] sm:$0xff]
    %v8798 = vld [vmem:[%s69 + $0x3b8] sm:$0xff]
    %v8799 = vld [vmem:[%s69 + $0x3c0] sm:$0xff]
    %v8800 = vld [vmem:[%s69 + $0x3c8] sm:$0xff]
    %v8801 = vld [vmem:[%s69 + $0x3d0] sm:$0xff]
    %v8802 = vld [vmem:[%s69 + $0x3d8] sm:$0xff]
    %v8803 = vld [vmem:[%s69 + $0x3e0] sm:$0xff]
    %v8804 = vld [vmem:[%s69 + $0x3e8] sm:$0xff]
    %v8805 = vld [vmem:[%s69 + $0x3f0] sm:$0xff]
    %v8806 = vld [vmem:[%s69 + $0x3f8] sm:$0xff]
    %v8807 = vld [vmem:[%s69 + $0x400] sm:$0xff]
    %v8808 = vld [vmem:[%s69 + $0x408] sm:$0xff]
    %v8809 = vld [vmem:[%s69 + $0x410] sm:$0xff]
    %v8810 = vld [vmem:[%s69 + $0x418] sm:$0xff]
    %v8811 = vld [vmem:[%s69 + $0x420] sm:$0xff]
    %v8812 = vld [vmem:[%s69 + $0x428] sm:$0xff]
    %v8813 = vld [vmem:[%s69 + $0x430] sm:$0xff]
    %v8814 = vld [vmem:[%s69 + $0x438] sm:$0xff]
    %v8815 = vld [vmem:[%s69 + $0x440] sm:$0xff]
    %v8816 = vld [vmem:[%s69 + $0x448] sm:$0xff]
    %v8817 = vld [vmem:[%s69 + $0x450] sm:$0xff]
    %v8818 = vld [vmem:[%s69 + $0x458] sm:$0xff]
    %v8819 = vld [vmem:[%s69 + $0x460] sm:$0xff]
    %v8820 = vld [vmem:[%s69 + $0x468] sm:$0xff]
    %v8821 = vld [vmem:[%s69 + $0x470] sm:$0xff]
    %v8822 = vld [vmem:[%s69 + $0x478] sm:$0xff]
    %v8823 = vld [vmem:[%s69 + $0x480] sm:$0xff]
    %v8824 = vld [vmem:[%s69 + $0x488] sm:$0xff]
    %v8825 = vld [vmem:[%s69 + $0x490] sm:$0xff]
    %v8826 = vld [vmem:[%s69 + $0x498] sm:$0xff]
    %v8827 = vld [vmem:[%s69 + $0x4a0] sm:$0xff]
    %v8828 = vld [vmem:[%s69 + $0x4a8] sm:$0xff]
    %v8829 = vld [vmem:[%s69 + $0x4b0] sm:$0xff]
    %v8830 = vld [vmem:[%s69 + $0x4b8] sm:$0xff]
    %v8831 = vld [vmem:[%s69 + $0x4c0] sm:$0xff]
    %v8832 = vld [vmem:[%s69 + $0x4c8] sm:$0xff]
    %v8833 = vld [vmem:[%s69 + $0x4d0] sm:$0xff]
    %v8834 = vld [vmem:[%s69 + $0x4d8] sm:$0xff]
    %v8835 = vld [vmem:[%s69 + $0x4e0] sm:$0xff]
    %v8836 = vld [vmem:[%s69 + $0x4e8] sm:$0xff]
    %v8837 = vld [vmem:[%s69 + $0x4f0] sm:$0xff]
    %v8838 = vld [vmem:[%s69 + $0x4f8] sm:$0xff]
    %v8839 = vld [vmem:[%s69 + $0x500] sm:$0xff]
    %v8840 = vld [vmem:[%s69 + $0x508] sm:$0xff]
    %v8841 = vld [vmem:[%s69 + $0x510] sm:$0xff]
    %v8842 = vld [vmem:[%s69 + $0x518] sm:$0xff]
    %v8843 = vld [vmem:[%s69 + $0x520] sm:$0xff]
    %v8844 = vld [vmem:[%s69 + $0x528] sm:$0xff]
    %v8845 = vld [vmem:[%s69 + $0x530] sm:$0xff]
    %v8846 = vld [vmem:[%s69 + $0x538] sm:$0xff]
    %v8847 = vld [vmem:[%s69 + $0x540] sm:$0xff]
    %v8848 = vld [vmem:[%s69 + $0x548] sm:$0xff]
    %v8849 = vld [vmem:[%s69 + $0x550] sm:$0xff]
    %v8850 = vld [vmem:[%s69 + $0x558] sm:$0xff]
    %v8851 = vld [vmem:[%s69 + $0x560] sm:$0xff]
    %v8852 = vld [vmem:[%s69 + $0x568] sm:$0xff]
    %v8853 = vld [vmem:[%s69 + $0x570] sm:$0xff]
    %v8854 = vld [vmem:[%s69 + $0x578] sm:$0xff]
    %v8855 = vld [vmem:[%s69 + $0x580] sm:$0xff]
    %v8856 = vld [vmem:[%s69 + $0x588] sm:$0xff]
    %v8857 = vld [vmem:[%s69 + $0x590] sm:$0xff]
    %v8858 = vld [vmem:[%s69 + $0x598] sm:$0xff]
    %v8859 = vld [vmem:[%s69 + $0x5a0] sm:$0xff]
    %v8860 = vld [vmem:[%s69 + $0x5a8] sm:$0xff]
    %v8861 = vld [vmem:[%s69 + $0x5b0] sm:$0xff]
    %v8862 = vld [vmem:[%s69 + $0x5b8] sm:$0xff]
    %v8863 = vld [vmem:[%s69 + $0x5c0] sm:$0xff]
    %v8864 = vld [vmem:[%s69 + $0x5c8] sm:$0xff]
    %v8865 = vld [vmem:[%s69 + $0x5d0] sm:$0xff]
    %v8866 = vld [vmem:[%s69 + $0x5d8] sm:$0xff]
    %v8867 = vld [vmem:[%s69 + $0x5e0] sm:$0xff]
    %v8868 = vld [vmem:[%s69 + $0x5e8] sm:$0xff]
    %v8869 = vld [vmem:[%s69 + $0x5f0] sm:$0xff]
    %v8870 = vld [vmem:[%s69 + $0x5f8] sm:$0xff]
    %v8871 = vld [vmem:[%s71] sm:$0xff]
    %v8873 = vlaneseq
    %v8874 = vshrl.u32 %v8873, 7
    %v8875 = vsub.s32 0, %v8874
    %v8876 = vrot.slane %v8871, %v8875
    %v8877 = vlaneseq
    %v8878 = vshrl.u32 %v8877, 7
    %v8879 = vsub.s32 1, %v8878
    %v8880 = vrot.slane %v8871, %v8879
    %v8881 = vlaneseq
    %v8882 = vshrl.u32 %v8881, 7
    %v8883 = vsub.s32 2, %v8882
    %v8884 = vrot.slane %v8871, %v8883
    %v8885 = vlaneseq
    %v8886 = vshrl.u32 %v8885, 7
    %v8887 = vsub.s32 3, %v8886
    %v8888 = vrot.slane %v8871, %v8887
    %v8889 = vlaneseq
    %v8890 = vshrl.u32 %v8889, 7
    %v8891 = vsub.s32 4, %v8890
    %v8892 = vrot.slane %v8871, %v8891
    %v8893 = vlaneseq
    %v8894 = vshrl.u32 %v8893, 7
    %v8895 = vsub.s32 5, %v8894
    %v8896 = vrot.slane %v8871, %v8895
    %v8897 = vlaneseq
    %v8898 = vshrl.u32 %v8897, 7
    %v8899 = vsub.s32 6, %v8898
    %v8900 = vrot.slane %v8871, %v8899
    %v8901 = vlaneseq
    %v8902 = vshrl.u32 %v8901, 7
    %v8903 = vsub.s32 7, %v8902
    %v8904 = vrot.slane %v8871, %v8903
    %v9105 = vunpack.c.l.b16 %v8679
    %v9106 = vunpack.c.h.b16 %v8679
    %v9107 = vunpack.c.l.b16 %v8680
    %v9108 = vunpack.c.h.b16 %v8680
    %v9109 = vunpack.c.l.b16 %v8681
    %v9110 = vunpack.c.h.b16 %v8681
    %v9111 = vunpack.c.l.b16 %v8682
    %v9112 = vunpack.c.h.b16 %v8682
    %v9113 = vunpack.c.l.b16 %v8683
    %v9114 = vunpack.c.h.b16 %v8683
    %v9115 = vunpack.c.l.b16 %v8684
    %v9116 = vunpack.c.h.b16 %v8684
    %v9117 = vunpack.c.l.b16 %v8685
    %v9118 = vunpack.c.h.b16 %v8685
    %v9119 = vunpack.c.l.b16 %v8686
    %v9120 = vunpack.c.h.b16 %v8686
    %v9121 = vunpack.c.l.b16 %v8687
    %v9122 = vunpack.c.h.b16 %v8687
    %v9123 = vunpack.c.l.b16 %v8688
    %v9124 = vunpack.c.h.b16 %v8688
    %v9125 = vunpack.c.l.b16 %v8689
    %v9126 = vunpack.c.h.b16 %v8689
    %v9127 = vunpack.c.l.b16 %v8690
    %v9128 = vunpack.c.h.b16 %v8690
    %v9129 = vunpack.c.l.b16 %v8691
    %v9130 = vunpack.c.h.b16 %v8691
    %v9131 = vunpack.c.l.b16 %v8692
    %v9132 = vunpack.c.h.b16 %v8692
    %v9133 = vunpack.c.l.b16 %v8693
    %v9134 = vunpack.c.h.b16 %v8693
    %v9135 = vunpack.c.l.b16 %v8694
    %v9136 = vunpack.c.h.b16 %v8694
    %v9137 = vunpack.c.l.b16 %v8695
    %v9138 = vunpack.c.h.b16 %v8695
    %v9139 = vunpack.c.l.b16 %v8696
    %v9140 = vunpack.c.h.b16 %v8696
    %v9141 = vunpack.c.l.b16 %v8697
    %v9142 = vunpack.c.h.b16 %v8697
    %v9143 = vunpack.c.l.b16 %v8698
    %v9144 = vunpack.c.h.b16 %v8698
    %v9145 = vunpack.c.l.b16 %v8699
    %v9146 = vunpack.c.h.b16 %v8699
    %v9147 = vunpack.c.l.b16 %v8700
    %v9148 = vunpack.c.h.b16 %v8700
    %v9149 = vunpack.c.l.b16 %v8701
    %v9150 = vunpack.c.h.b16 %v8701
    %v9151 = vunpack.c.l.b16 %v8702
    %v9152 = vunpack.c.h.b16 %v8702
    %v9153 = vunpack.c.l.b16 %v8703
    %v9154 = vunpack.c.h.b16 %v8703
    %v9155 = vunpack.c.l.b16 %v8704
    %v9156 = vunpack.c.h.b16 %v8704
    %v9157 = vunpack.c.l.b16 %v8705
    %v9158 = vunpack.c.h.b16 %v8705
    %v9159 = vunpack.c.l.b16 %v8706
    %v9160 = vunpack.c.h.b16 %v8706
    %v9161 = vunpack.c.l.b16 %v8707
    %v9162 = vunpack.c.h.b16 %v8707
    %v9163 = vunpack.c.l.b16 %v8708
    %v9164 = vunpack.c.h.b16 %v8708
    %v9165 = vunpack.c.l.b16 %v8709
    %v9166 = vunpack.c.h.b16 %v8709
    %v9167 = vunpack.c.l.b16 %v8710
    %v9168 = vunpack.c.h.b16 %v8710
    %v9169 = vunpack.c.l.b16 %v8711
    %v9170 = vunpack.c.h.b16 %v8711
    %v9171 = vunpack.c.l.b16 %v8712
    %v9172 = vunpack.c.h.b16 %v8712
    %v9173 = vunpack.c.l.b16 %v8713
    %v9174 = vunpack.c.h.b16 %v8713
    %v9175 = vunpack.c.l.b16 %v8714
    %v9176 = vunpack.c.h.b16 %v8714
    %v9177 = vunpack.c.l.b16 %v8715
    %v9178 = vunpack.c.h.b16 %v8715
    %v9179 = vunpack.c.l.b16 %v8716
    %v9180 = vunpack.c.h.b16 %v8716
    %v9181 = vunpack.c.l.b16 %v8717
    %v9182 = vunpack.c.h.b16 %v8717
    %v9183 = vunpack.c.l.b16 %v8718
    %v9184 = vunpack.c.h.b16 %v8718
    %v9185 = vunpack.c.l.b16 %v8719
    %v9186 = vunpack.c.h.b16 %v8719
    %v9187 = vunpack.c.l.b16 %v8720
    %v9188 = vunpack.c.h.b16 %v8720
    %v9189 = vunpack.c.l.b16 %v8721
    %v9190 = vunpack.c.h.b16 %v8721
    %v9191 = vunpack.c.l.b16 %v8722
    %v9192 = vunpack.c.h.b16 %v8722
    %v9193 = vunpack.c.l.b16 %v8723
    %v9194 = vunpack.c.h.b16 %v8723
    %v9195 = vunpack.c.l.b16 %v8724
    %v9196 = vunpack.c.h.b16 %v8724
    %v9197 = vunpack.c.l.b16 %v8725
    %v9198 = vunpack.c.h.b16 %v8725
    %v9199 = vunpack.c.l.b16 %v8726
    %v9200 = vunpack.c.h.b16 %v8726
    %v9201 = vunpack.c.l.b16 %v8727
    %v9202 = vunpack.c.h.b16 %v8727
    %v9203 = vunpack.c.l.b16 %v8728
    %v9204 = vunpack.c.h.b16 %v8728
    %v9205 = vunpack.c.l.b16 %v8729
    %v9206 = vunpack.c.h.b16 %v8729
    %v9207 = vunpack.c.l.b16 %v8730
    %v9208 = vunpack.c.h.b16 %v8730
    %v9209 = vunpack.c.l.b16 %v8731
    %v9210 = vunpack.c.h.b16 %v8731
    %v9211 = vunpack.c.l.b16 %v8732
    %v9212 = vunpack.c.h.b16 %v8732
    %v9213 = vunpack.c.l.b16 %v8733
    %v9214 = vunpack.c.h.b16 %v8733
    %v9215 = vunpack.c.l.b16 %v8734
    %v9216 = vunpack.c.h.b16 %v8734
    %v9217 = vunpack.c.l.b16 %v8735
    %v9218 = vunpack.c.h.b16 %v8735
    %v9219 = vunpack.c.l.b16 %v8736
    %v9220 = vunpack.c.h.b16 %v8736
    %v9221 = vunpack.c.l.b16 %v8737
    %v9222 = vunpack.c.h.b16 %v8737
    %v9223 = vunpack.c.l.b16 %v8738
    %v9224 = vunpack.c.h.b16 %v8738
    %v9225 = vunpack.c.l.b16 %v8739
    %v9226 = vunpack.c.h.b16 %v8739
    %v9227 = vunpack.c.l.b16 %v8740
    %v9228 = vunpack.c.h.b16 %v8740
    %v9229 = vunpack.c.l.b16 %v8741
    %v9230 = vunpack.c.h.b16 %v8741
    %v9231 = vunpack.c.l.b16 %v8742
    %v9232 = vunpack.c.h.b16 %v8742
    %v9233 = vunpack.c.l.b16 %v8743
    %v9234 = vunpack.c.h.b16 %v8743
    %v9235 = vunpack.c.l.b16 %v8744
    %v9236 = vunpack.c.h.b16 %v8744
    %v9237 = vunpack.c.l.b16 %v8745
    %v9238 = vunpack.c.h.b16 %v8745
    %v9239 = vunpack.c.l.b16 %v8746
    %v9240 = vunpack.c.h.b16 %v8746
    %v9241 = vunpack.c.l.b16 %v8747
    %v9242 = vunpack.c.h.b16 %v8747
    %v9243 = vunpack.c.l.b16 %v8748
    %v9244 = vunpack.c.h.b16 %v8748
    %v9245 = vunpack.c.l.b16 %v8749
    %v9246 = vunpack.c.h.b16 %v8749
    %v9247 = vunpack.c.l.b16 %v8750
    %v9248 = vunpack.c.h.b16 %v8750
    %v9249 = vunpack.c.l.b16 %v8751
    %v9250 = vunpack.c.h.b16 %v8751
    %v9251 = vunpack.c.l.b16 %v8752
    %v9252 = vunpack.c.h.b16 %v8752
    %v9253 = vunpack.c.l.b16 %v8753
    %v9254 = vunpack.c.h.b16 %v8753
    %v9255 = vunpack.c.l.b16 %v8754
    %v9256 = vunpack.c.h.b16 %v8754
    %v9257 = vunpack.c.l.b16 %v8755
    %v9258 = vunpack.c.h.b16 %v8755
    %v9259 = vunpack.c.l.b16 %v8756
    %v9260 = vunpack.c.h.b16 %v8756
    %v9261 = vunpack.c.l.b16 %v8757
    %v9262 = vunpack.c.h.b16 %v8757
    %v9263 = vunpack.c.l.b16 %v8758
    %v9264 = vunpack.c.h.b16 %v8758
    %v9265 = vunpack.c.l.b16 %v8759
    %v9266 = vunpack.c.h.b16 %v8759
    %v9267 = vunpack.c.l.b16 %v8760
    %v9268 = vunpack.c.h.b16 %v8760
    %v9269 = vunpack.c.l.b16 %v8761
    %v9270 = vunpack.c.h.b16 %v8761
    %v9271 = vunpack.c.l.b16 %v8762
    %v9272 = vunpack.c.h.b16 %v8762
    %v9273 = vunpack.c.l.b16 %v8763
    %v9274 = vunpack.c.h.b16 %v8763
    %v9275 = vunpack.c.l.b16 %v8764
    %v9276 = vunpack.c.h.b16 %v8764
    %v9277 = vunpack.c.l.b16 %v8765
    %v9278 = vunpack.c.h.b16 %v8765
    %v9279 = vunpack.c.l.b16 %v8766
    %v9280 = vunpack.c.h.b16 %v8766
    %v9281 = vunpack.c.l.b16 %v8767
    %v9282 = vunpack.c.h.b16 %v8767
    %v9283 = vunpack.c.l.b16 %v8768
    %v9284 = vunpack.c.h.b16 %v8768
    %v9285 = vunpack.c.l.b16 %v8769
    %v9286 = vunpack.c.h.b16 %v8769
    %v9287 = vunpack.c.l.b16 %v8770
    %v9288 = vunpack.c.h.b16 %v8770
    %v9289 = vunpack.c.l.b16 %v8771
    %v9290 = vunpack.c.h.b16 %v8771
    %v9291 = vunpack.c.l.b16 %v8772
    %v9292 = vunpack.c.h.b16 %v8772
    %v9293 = vunpack.c.l.b16 %v8773
    %v9294 = vunpack.c.h.b16 %v8773
    %v9295 = vunpack.c.l.b16 %v8774
    %v9296 = vunpack.c.h.b16 %v8774
    %v9297 = vunpack.c.l.b16 %v8775
    %v9298 = vunpack.c.h.b16 %v8775
    %v9299 = vunpack.c.l.b16 %v8776
    %v9300 = vunpack.c.h.b16 %v8776
    %v9301 = vunpack.c.l.b16 %v8777
    %v9302 = vunpack.c.h.b16 %v8777
    %v9303 = vunpack.c.l.b16 %v8778
    %v9304 = vunpack.c.h.b16 %v8778
    %v9305 = vunpack.c.l.b16 %v8779
    %v9306 = vunpack.c.h.b16 %v8779
    %v9307 = vunpack.c.l.b16 %v8780
    %v9308 = vunpack.c.h.b16 %v8780
    %v9309 = vunpack.c.l.b16 %v8781
    %v9310 = vunpack.c.h.b16 %v8781
    %v9311 = vunpack.c.l.b16 %v8782
    %v9312 = vunpack.c.h.b16 %v8782
    %v9313 = vunpack.c.l.b16 %v8783
    %v9314 = vunpack.c.h.b16 %v8783
    %v9315 = vunpack.c.l.b16 %v8784
    %v9316 = vunpack.c.h.b16 %v8784
    %v9317 = vunpack.c.l.b16 %v8785
    %v9318 = vunpack.c.h.b16 %v8785
    %v9319 = vunpack.c.l.b16 %v8786
    %v9320 = vunpack.c.h.b16 %v8786
    %v9321 = vunpack.c.l.b16 %v8787
    %v9322 = vunpack.c.h.b16 %v8787
    %v9323 = vunpack.c.l.b16 %v8788
    %v9324 = vunpack.c.h.b16 %v8788
    %v9325 = vunpack.c.l.b16 %v8789
    %v9326 = vunpack.c.h.b16 %v8789
    %v9327 = vunpack.c.l.b16 %v8790
    %v9328 = vunpack.c.h.b16 %v8790
    %v9329 = vunpack.c.l.b16 %v8791
    %v9330 = vunpack.c.h.b16 %v8791
    %v9331 = vunpack.c.l.b16 %v8792
    %v9332 = vunpack.c.h.b16 %v8792
    %v9333 = vunpack.c.l.b16 %v8793
    %v9334 = vunpack.c.h.b16 %v8793
    %v9335 = vunpack.c.l.b16 %v8794
    %v9336 = vunpack.c.h.b16 %v8794
    %v9337 = vunpack.c.l.b16 %v8795
    %v9338 = vunpack.c.h.b16 %v8795
    %v9339 = vunpack.c.l.b16 %v8796
    %v9340 = vunpack.c.h.b16 %v8796
    %v9341 = vunpack.c.l.b16 %v8797
    %v9342 = vunpack.c.h.b16 %v8797
    %v9343 = vunpack.c.l.b16 %v8798
    %v9344 = vunpack.c.h.b16 %v8798
    %v9345 = vunpack.c.l.b16 %v8799
    %v9346 = vunpack.c.h.b16 %v8799
    %v9347 = vunpack.c.l.b16 %v8800
    %v9348 = vunpack.c.h.b16 %v8800
    %v9349 = vunpack.c.l.b16 %v8801
    %v9350 = vunpack.c.h.b16 %v8801
    %v9351 = vunpack.c.l.b16 %v8802
    %v9352 = vunpack.c.h.b16 %v8802
    %v9353 = vunpack.c.l.b16 %v8803
    %v9354 = vunpack.c.h.b16 %v8803
    %v9355 = vunpack.c.l.b16 %v8804
    %v9356 = vunpack.c.h.b16 %v8804
    %v9357 = vunpack.c.l.b16 %v8805
    %v9358 = vunpack.c.h.b16 %v8805
    %v9359 = vunpack.c.l.b16 %v8806
    %v9360 = vunpack.c.h.b16 %v8806
    %v9361 = vunpack.c.l.b16 %v8807
    %v9362 = vunpack.c.h.b16 %v8807
    %v9363 = vunpack.c.l.b16 %v8808
    %v9364 = vunpack.c.h.b16 %v8808
    %v9365 = vunpack.c.l.b16 %v8809
    %v9366 = vunpack.c.h.b16 %v8809
    %v9367 = vunpack.c.l.b16 %v8810
    %v9368 = vunpack.c.h.b16 %v8810
    %v9369 = vunpack.c.l.b16 %v8811
    %v9370 = vunpack.c.h.b16 %v8811
    %v9371 = vunpack.c.l.b16 %v8812
    %v9372 = vunpack.c.h.b16 %v8812
    %v9373 = vunpack.c.l.b16 %v8813
    %v9374 = vunpack.c.h.b16 %v8813
    %v9375 = vunpack.c.l.b16 %v8814
    %v9376 = vunpack.c.h.b16 %v8814
    %v9377 = vunpack.c.l.b16 %v8815
    %v9378 = vunpack.c.h.b16 %v8815
    %v9379 = vunpack.c.l.b16 %v8816
    %v9380 = vunpack.c.h.b16 %v8816
    %v9381 = vunpack.c.l.b16 %v8817
    %v9382 = vunpack.c.h.b16 %v8817
    %v9383 = vunpack.c.l.b16 %v8818
    %v9384 = vunpack.c.h.b16 %v8818
    %v9385 = vunpack.c.l.b16 %v8819
    %v9386 = vunpack.c.h.b16 %v8819
    %v9387 = vunpack.c.l.b16 %v8820
    %v9388 = vunpack.c.h.b16 %v8820
    %v9389 = vunpack.c.l.b16 %v8821
    %v9390 = vunpack.c.h.b16 %v8821
    %v9391 = vunpack.c.l.b16 %v8822
    %v9392 = vunpack.c.h.b16 %v8822
    %v9393 = vunpack.c.l.b16 %v8823
    %v9394 = vunpack.c.h.b16 %v8823
    %v9395 = vunpack.c.l.b16 %v8824
    %v9396 = vunpack.c.h.b16 %v8824
    %v9397 = vunpack.c.l.b16 %v8825
    %v9398 = vunpack.c.h.b16 %v8825
    %v9399 = vunpack.c.l.b16 %v8826
    %v9400 = vunpack.c.h.b16 %v8826
    %v9401 = vunpack.c.l.b16 %v8827
    %v9402 = vunpack.c.h.b16 %v8827
    %v9403 = vunpack.c.l.b16 %v8828
    %v9404 = vunpack.c.h.b16 %v8828
    %v9405 = vunpack.c.l.b16 %v8829
    %v9406 = vunpack.c.h.b16 %v8829
    %v9407 = vunpack.c.l.b16 %v8830
    %v9408 = vunpack.c.h.b16 %v8830
    %v9409 = vunpack.c.l.b16 %v8831
    %v9410 = vunpack.c.h.b16 %v8831
    %v9411 = vunpack.c.l.b16 %v8832
    %v9412 = vunpack.c.h.b16 %v8832
    %v9413 = vunpack.c.l.b16 %v8833
    %v9414 = vunpack.c.h.b16 %v8833
    %v9415 = vunpack.c.l.b16 %v8834
    %v9416 = vunpack.c.h.b16 %v8834
    %v9417 = vunpack.c.l.b16 %v8835
    %v9418 = vunpack.c.h.b16 %v8835
    %v9419 = vunpack.c.l.b16 %v8836
    %v9420 = vunpack.c.h.b16 %v8836
    %v9421 = vunpack.c.l.b16 %v8837
    %v9422 = vunpack.c.h.b16 %v8837
    %v9423 = vunpack.c.l.b16 %v8838
    %v9424 = vunpack.c.h.b16 %v8838
    %v9425 = vunpack.c.l.b16 %v8839
    %v9426 = vunpack.c.h.b16 %v8839
    %v9427 = vunpack.c.l.b16 %v8840
    %v9428 = vunpack.c.h.b16 %v8840
    %v9429 = vunpack.c.l.b16 %v8841
    %v9430 = vunpack.c.h.b16 %v8841
    %v9431 = vunpack.c.l.b16 %v8842
    %v9432 = vunpack.c.h.b16 %v8842
    %v9433 = vunpack.c.l.b16 %v8843
    %v9434 = vunpack.c.h.b16 %v8843
    %v9435 = vunpack.c.l.b16 %v8844
    %v9436 = vunpack.c.h.b16 %v8844
    %v9437 = vunpack.c.l.b16 %v8845
    %v9438 = vunpack.c.h.b16 %v8845
    %v9439 = vunpack.c.l.b16 %v8846
    %v9440 = vunpack.c.h.b16 %v8846
    %v9441 = vunpack.c.l.b16 %v8847
    %v9442 = vunpack.c.h.b16 %v8847
    %v9443 = vunpack.c.l.b16 %v8848
    %v9444 = vunpack.c.h.b16 %v8848
    %v9445 = vunpack.c.l.b16 %v8849
    %v9446 = vunpack.c.h.b16 %v8849
    %v9447 = vunpack.c.l.b16 %v8850
    %v9448 = vunpack.c.h.b16 %v8850
    %v9449 = vunpack.c.l.b16 %v8851
    %v9450 = vunpack.c.h.b16 %v8851
    %v9451 = vunpack.c.l.b16 %v8852
    %v9452 = vunpack.c.h.b16 %v8852
    %v9453 = vunpack.c.l.b16 %v8853
    %v9454 = vunpack.c.h.b16 %v8853
    %v9455 = vunpack.c.l.b16 %v8854
    %v9456 = vunpack.c.h.b16 %v8854
    %v9457 = vunpack.c.l.b16 %v8855
    %v9458 = vunpack.c.h.b16 %v8855
    %v9459 = vunpack.c.l.b16 %v8856
    %v9460 = vunpack.c.h.b16 %v8856
    %v9461 = vunpack.c.l.b16 %v8857
    %v9462 = vunpack.c.h.b16 %v8857
    %v9463 = vunpack.c.l.b16 %v8858
    %v9464 = vunpack.c.h.b16 %v8858
    %v9465 = vunpack.c.l.b16 %v8859
    %v9466 = vunpack.c.h.b16 %v8859
    %v9467 = vunpack.c.l.b16 %v8860
    %v9468 = vunpack.c.h.b16 %v8860
    %v9469 = vunpack.c.l.b16 %v8861
    %v9470 = vunpack.c.h.b16 %v8861
    %v9471 = vunpack.c.l.b16 %v8862
    %v9472 = vunpack.c.h.b16 %v8862
    %v9473 = vunpack.c.l.b16 %v8863
    %v9474 = vunpack.c.h.b16 %v8863
    %v9475 = vunpack.c.l.b16 %v8864
    %v9476 = vunpack.c.h.b16 %v8864
    %v9477 = vunpack.c.l.b16 %v8865
    %v9478 = vunpack.c.h.b16 %v8865
    %v9479 = vunpack.c.l.b16 %v8866
    %v9480 = vunpack.c.h.b16 %v8866
    %v9481 = vunpack.c.l.b16 %v8867
    %v9482 = vunpack.c.h.b16 %v8867
    %v9483 = vunpack.c.l.b16 %v8868
    %v9484 = vunpack.c.h.b16 %v8868
    %v9485 = vunpack.c.l.b16 %v8869
    %v9486 = vunpack.c.h.b16 %v8869
    %v9487 = vunpack.c.l.b16 %v8870
    %v9488 = vunpack.c.h.b16 %v8870
    %v9489 = vpack.c.b16 %v9113, %v9105
    %v9490 = vpack.c.b16 %v9114, %v9106
    %v9491 = vpack.c.b16 %v9115, %v9107
    %v9492 = vpack.c.b16 %v9116, %v9108
    %v9493 = vpack.c.b16 %v9117, %v9109
    %v9494 = vpack.c.b16 %v9118, %v9110
    %v9495 = vpack.c.b16 %v9119, %v9111
    %v9496 = vpack.c.b16 %v9120, %v9112
    %v9497 = vpack.c.b16 %v9129, %v9121
    %v9498 = vpack.c.b16 %v9130, %v9122
    %v9499 = vpack.c.b16 %v9131, %v9123
    %v9500 = vpack.c.b16 %v9132, %v9124
    %v9501 = vpack.c.b16 %v9133, %v9125
    %v9502 = vpack.c.b16 %v9134, %v9126
    %v9503 = vpack.c.b16 %v9135, %v9127
    %v9504 = vpack.c.b16 %v9136, %v9128
    %v9505 = vpack.c.b16 %v9145, %v9137
    %v9506 = vpack.c.b16 %v9146, %v9138
    %v9507 = vpack.c.b16 %v9147, %v9139
    %v9508 = vpack.c.b16 %v9148, %v9140
    %v9509 = vpack.c.b16 %v9149, %v9141
    %v9510 = vpack.c.b16 %v9150, %v9142
    %v9511 = vpack.c.b16 %v9151, %v9143
    %v9512 = vpack.c.b16 %v9152, %v9144
    %v9513 = vpack.c.b16 %v9161, %v9153
    %v9514 = vpack.c.b16 %v9162, %v9154
    %v9515 = vpack.c.b16 %v9163, %v9155
    %v9516 = vpack.c.b16 %v9164, %v9156
    %v9517 = vpack.c.b16 %v9165, %v9157
    %v9518 = vpack.c.b16 %v9166, %v9158
    %v9519 = vpack.c.b16 %v9167, %v9159
    %v9520 = vpack.c.b16 %v9168, %v9160
    %v9521 = vpack.c.b16 %v9177, %v9169
    %v9522 = vpack.c.b16 %v9178, %v9170
    %v9523 = vpack.c.b16 %v9179, %v9171
    %v9524 = vpack.c.b16 %v9180, %v9172
    %v9525 = vpack.c.b16 %v9181, %v9173
    %v9526 = vpack.c.b16 %v9182, %v9174
    %v9527 = vpack.c.b16 %v9183, %v9175
    %v9528 = vpack.c.b16 %v9184, %v9176
    %v9529 = vpack.c.b16 %v9193, %v9185
    %v9530 = vpack.c.b16 %v9194, %v9186
    %v9531 = vpack.c.b16 %v9195, %v9187
    %v9532 = vpack.c.b16 %v9196, %v9188
    %v9533 = vpack.c.b16 %v9197, %v9189
    %v9534 = vpack.c.b16 %v9198, %v9190
    %v9535 = vpack.c.b16 %v9199, %v9191
    %v9536 = vpack.c.b16 %v9200, %v9192
    %v9537 = vpack.c.b16 %v9209, %v9201
    %v9538 = vpack.c.b16 %v9210, %v9202
    %v9539 = vpack.c.b16 %v9211, %v9203
    %v9540 = vpack.c.b16 %v9212, %v9204
    %v9541 = vpack.c.b16 %v9213, %v9205
    %v9542 = vpack.c.b16 %v9214, %v9206
    %v9543 = vpack.c.b16 %v9215, %v9207
    %v9544 = vpack.c.b16 %v9216, %v9208
    %v9545 = vpack.c.b16 %v9225, %v9217
    %v9546 = vpack.c.b16 %v9226, %v9218
    %v9547 = vpack.c.b16 %v9227, %v9219
    %v9548 = vpack.c.b16 %v9228, %v9220
    %v9549 = vpack.c.b16 %v9229, %v9221
    %v9550 = vpack.c.b16 %v9230, %v9222
    %v9551 = vpack.c.b16 %v9231, %v9223
    %v9552 = vpack.c.b16 %v9232, %v9224
    %v9553 = vpack.c.b16 %v9241, %v9233
    %v9554 = vpack.c.b16 %v9242, %v9234
    %v9555 = vpack.c.b16 %v9243, %v9235
    %v9556 = vpack.c.b16 %v9244, %v9236
    %v9557 = vpack.c.b16 %v9245, %v9237
    %v9558 = vpack.c.b16 %v9246, %v9238
    %v9559 = vpack.c.b16 %v9247, %v9239
    %v9560 = vpack.c.b16 %v9248, %v9240
    %v9561 = vpack.c.b16 %v9257, %v9249
    %v9562 = vpack.c.b16 %v9258, %v9250
    %v9563 = vpack.c.b16 %v9259, %v9251
    %v9564 = vpack.c.b16 %v9260, %v9252
    %v9565 = vpack.c.b16 %v9261, %v9253
    %v9566 = vpack.c.b16 %v9262, %v9254
    %v9567 = vpack.c.b16 %v9263, %v9255
    %v9568 = vpack.c.b16 %v9264, %v9256
    %v9569 = vpack.c.b16 %v9273, %v9265
    %v9570 = vpack.c.b16 %v9274, %v9266
    %v9571 = vpack.c.b16 %v9275, %v9267
    %v9572 = vpack.c.b16 %v9276, %v9268
    %v9573 = vpack.c.b16 %v9277, %v9269
    %v9574 = vpack.c.b16 %v9278, %v9270
    %v9575 = vpack.c.b16 %v9279, %v9271
    %v9576 = vpack.c.b16 %v9280, %v9272
    %v9577 = vpack.c.b16 %v9289, %v9281
    %v9578 = vpack.c.b16 %v9290, %v9282
    %v9579 = vpack.c.b16 %v9291, %v9283
    %v9580 = vpack.c.b16 %v9292, %v9284
    %v9581 = vpack.c.b16 %v9293, %v9285
    %v9582 = vpack.c.b16 %v9294, %v9286
    %v9583 = vpack.c.b16 %v9295, %v9287
    %v9584 = vpack.c.b16 %v9296, %v9288
    %v9585 = vpack.c.b16 %v9305, %v9297
    %v9586 = vpack.c.b16 %v9306, %v9298
    %v9587 = vpack.c.b16 %v9307, %v9299
    %v9588 = vpack.c.b16 %v9308, %v9300
    %v9589 = vpack.c.b16 %v9309, %v9301
    %v9590 = vpack.c.b16 %v9310, %v9302
    %v9591 = vpack.c.b16 %v9311, %v9303
    %v9592 = vpack.c.b16 %v9312, %v9304
    %v9593 = vpack.c.b16 %v9321, %v9313
    %v9594 = vpack.c.b16 %v9322, %v9314
    %v9595 = vpack.c.b16 %v9323, %v9315
    %v9596 = vpack.c.b16 %v9324, %v9316
    %v9597 = vpack.c.b16 %v9325, %v9317
    %v9598 = vpack.c.b16 %v9326, %v9318
    %v9599 = vpack.c.b16 %v9327, %v9319
    %v9600 = vpack.c.b16 %v9328, %v9320
    %v9601 = vpack.c.b16 %v9337, %v9329
    %v9602 = vpack.c.b16 %v9338, %v9330
    %v9603 = vpack.c.b16 %v9339, %v9331
    %v9604 = vpack.c.b16 %v9340, %v9332
    %v9605 = vpack.c.b16 %v9341, %v9333
    %v9606 = vpack.c.b16 %v9342, %v9334
    %v9607 = vpack.c.b16 %v9343, %v9335
    %v9608 = vpack.c.b16 %v9344, %v9336
    %v9609 = vpack.c.b16 %v9353, %v9345
    %v9610 = vpack.c.b16 %v9354, %v9346
    %v9611 = vpack.c.b16 %v9355, %v9347
    %v9612 = vpack.c.b16 %v9356, %v9348
    %v9613 = vpack.c.b16 %v9357, %v9349
    %v9614 = vpack.c.b16 %v9358, %v9350
    %v9615 = vpack.c.b16 %v9359, %v9351
    %v9616 = vpack.c.b16 %v9360, %v9352
    %v9617 = vpack.c.b16 %v9369, %v9361
    %v9618 = vpack.c.b16 %v9370, %v9362
    %v9619 = vpack.c.b16 %v9371, %v9363
    %v9620 = vpack.c.b16 %v9372, %v9364
    %v9621 = vpack.c.b16 %v9373, %v9365
    %v9622 = vpack.c.b16 %v9374, %v9366
    %v9623 = vpack.c.b16 %v9375, %v9367
    %v9624 = vpack.c.b16 %v9376, %v9368
    %v9625 = vpack.c.b16 %v9385, %v9377
    %v9626 = vpack.c.b16 %v9386, %v9378
    %v9627 = vpack.c.b16 %v9387, %v9379
    %v9628 = vpack.c.b16 %v9388, %v9380
    %v9629 = vpack.c.b16 %v9389, %v9381
    %v9630 = vpack.c.b16 %v9390, %v9382
    %v9631 = vpack.c.b16 %v9391, %v9383
    %v9632 = vpack.c.b16 %v9392, %v9384
    %v9633 = vpack.c.b16 %v9401, %v9393
    %v9634 = vpack.c.b16 %v9402, %v9394
    %v9635 = vpack.c.b16 %v9403, %v9395
    %v9636 = vpack.c.b16 %v9404, %v9396
    %v9637 = vpack.c.b16 %v9405, %v9397
    %v9638 = vpack.c.b16 %v9406, %v9398
    %v9639 = vpack.c.b16 %v9407, %v9399
    %v9640 = vpack.c.b16 %v9408, %v9400
    %v9641 = vpack.c.b16 %v9417, %v9409
    %v9642 = vpack.c.b16 %v9418, %v9410
    %v9643 = vpack.c.b16 %v9419, %v9411
    %v9644 = vpack.c.b16 %v9420, %v9412
    %v9645 = vpack.c.b16 %v9421, %v9413
    %v9646 = vpack.c.b16 %v9422, %v9414
    %v9647 = vpack.c.b16 %v9423, %v9415
    %v9648 = vpack.c.b16 %v9424, %v9416
    %v9649 = vpack.c.b16 %v9433, %v9425
    %v9650 = vpack.c.b16 %v9434, %v9426
    %v9651 = vpack.c.b16 %v9435, %v9427
    %v9652 = vpack.c.b16 %v9436, %v9428
    %v9653 = vpack.c.b16 %v9437, %v9429
    %v9654 = vpack.c.b16 %v9438, %v9430
    %v9655 = vpack.c.b16 %v9439, %v9431
    %v9656 = vpack.c.b16 %v9440, %v9432
    %v9657 = vpack.c.b16 %v9449, %v9441
    %v9658 = vpack.c.b16 %v9450, %v9442
    %v9659 = vpack.c.b16 %v9451, %v9443
    %v9660 = vpack.c.b16 %v9452, %v9444
    %v9661 = vpack.c.b16 %v9453, %v9445
    %v9662 = vpack.c.b16 %v9454, %v9446
    %v9663 = vpack.c.b16 %v9455, %v9447
    %v9664 = vpack.c.b16 %v9456, %v9448
    %v9665 = vpack.c.b16 %v9465, %v9457
    %v9666 = vpack.c.b16 %v9466, %v9458
    %v9667 = vpack.c.b16 %v9467, %v9459
    %v9668 = vpack.c.b16 %v9468, %v9460
    %v9669 = vpack.c.b16 %v9469, %v9461
    %v9670 = vpack.c.b16 %v9470, %v9462
    %v9671 = vpack.c.b16 %v9471, %v9463
    %v9672 = vpack.c.b16 %v9472, %v9464
    %v9673 = vpack.c.b16 %v9481, %v9473
    %v9674 = vpack.c.b16 %v9482, %v9474
    %v9675 = vpack.c.b16 %v9483, %v9475
    %v9676 = vpack.c.b16 %v9484, %v9476
    %v9677 = vpack.c.b16 %v9485, %v9477
    %v9678 = vpack.c.b16 %v9486, %v9478
    %v9679 = vpack.c.b16 %v9487, %v9479
    %v9680 = vpack.c.b16 %v9488, %v9480
    %9873 = vmatprep.subr.bf16.mxu0 %v9546
    %9874 = vmatpush1.bf16.msra.mxu0 %v9545
    %9875 = vmatprep.subr.bf16.mxu0 %v9538
    %9876 = vmatpush1.bf16.msra.mxu0 %v9537
    %9877 = vmatprep.subr.bf16.mxu0 %v9530
    %9878 = vmatpush1.bf16.msra.mxu0 %v9529
    %9879 = vmatprep.subr.bf16.mxu0 %v9522
    %9880 = vmatpush1.bf16.msra.mxu0 %v9521
    %9881 = vmatprep.subr.bf16.mxu0 %v9514
    %9882 = vmatpush1.bf16.msra.mxu0 %v9513
    %9883 = vmatprep.subr.bf16.mxu0 %v9506
    %9884 = vmatpush1.bf16.msra.mxu0 %v9505
    %9885 = vmatprep.subr.bf16.mxu0 %v9498
    %9886 = vmatpush1.bf16.msra.mxu0 %v9497
    %9887 = vmatprep.subr.bf16.mxu0 %v9490
    %9888 = vmatpush1.bf16.msra.mxu0 %v9489
    %9889 = vmatprep.subr.bf16.mxu0 %v9610
    %9890 = vmatpush2.bf16.msra.mxu0 %v9609
    %9891 = vmatprep.subr.bf16.mxu0 %v9602
    %9892 = vmatpush2.bf16.msra.mxu0 %v9601
    %9893 = vmatprep.subr.bf16.mxu0 %v9594
    %9894 = vmatpush2.bf16.msra.mxu0 %v9593
    %9895 = vmatprep.subr.bf16.mxu0 %v9586
    %9896 = vmatpush2.bf16.msra.mxu0 %v9585
    %9897 = vmatprep.subr.bf16.mxu0 %v9578
    %9898 = vmatpush2.bf16.msra.mxu0 %v9577
    %9899 = vmatprep.subr.bf16.mxu0 %v9570
    %9900 = vmatpush2.bf16.msra.mxu0 %v9569
    %9901 = vmatprep.subr.bf16.mxu0 %v9562
    %9902 = vmatpush2.bf16.msra.mxu0 %v9561
    %9903 = vmatprep.subr.bf16.mxu0 %v9554
    %9904 = vmatpush2.bf16.msra.mxu0 %v9553
    %9905 = vmatprep.mubr.bf16.mxu0 %v8677
    %9906 = vmatmul.mubr.bf16.gmra.mxu0 %v8676
    %v9907 = vpop.f32.mrf.mxu0
    %v9908 = vadd.f32 %v8876, %v9907
    %v9909 = vpop.f32.mrf.mxu0
    %v9910 = vadd.f32 %v8880, %v9909
    %v9911 = vpop.f32.mrf.mxu0
    %v9912 = vpop.f32.mrf.mxu0
    %9913 = vdwg.mxu0
    %9914 = vmatprep.subr.bf16.mxu0 %v9674
    %9915 = vmatpush1.bf16.msra.mxu0 %v9673
    %9916 = vmatprep.subr.bf16.mxu0 %v9666
    %9917 = vmatpush1.bf16.msra.mxu0 %v9665
    %9918 = vmatprep.subr.bf16.mxu0 %v9658
    %9919 = vmatpush1.bf16.msra.mxu0 %v9657
    %9920 = vmatprep.subr.bf16.mxu0 %v9650
    %9921 = vmatpush1.bf16.msra.mxu0 %v9649
    %9922 = vmatprep.subr.bf16.mxu0 %v9642
    %9923 = vmatpush1.bf16.msra.mxu0 %v9641
    %9924 = vmatprep.subr.bf16.mxu0 %v9634
    %9925 = vmatpush1.bf16.msra.mxu0 %v9633
    %9926 = vmatprep.subr.bf16.mxu0 %v9626
    %9927 = vmatpush1.bf16.msra.mxu0 %v9625
    %9928 = vmatprep.subr.bf16.mxu0 %v9618
    %9929 = vmatpush1.bf16.msra.mxu0 %v9617
    %9930 = vmatprep.subr.bf16.mxu0 0
    %9931 = vmatpush2.bf16.msra.mxu0 0
    %9932 = vmatprep.subr.bf16.mxu0 0
    %9933 = vmatpush2.bf16.msra.mxu0 0
    %9934 = vmatprep.subr.bf16.mxu0 0
    %9935 = vmatpush2.bf16.msra.mxu0 0
    %9936 = vmatprep.subr.bf16.mxu0 0
    %9937 = vmatpush2.bf16.msra.mxu0 0
    %9938 = vmatprep.subr.bf16.mxu0 0
    %9939 = vmatpush2.bf16.msra.mxu0 0
    %9940 = vmatprep.subr.bf16.mxu0 0
    %9941 = vmatpush2.bf16.msra.mxu0 0
    %9942 = vmatprep.subr.bf16.mxu0 0
    %9943 = vmatpush2.bf16.msra.mxu0 0
    %9944 = vmatprep.subr.bf16.mxu0 0
    %9945 = vmatpush2.bf16.msra.mxu0 0
    %9946 = vmatprep.mubr.bf16.mxu0 0
    %9947 = vmatmul.mubr.bf16.gmra.mxu0 %v8678
    %v9948 = vpop.f32.mrf.mxu0
    %v9949 = vadd.f32 %v9908, %v9948
    %v9950 = vpop.f32.mrf.mxu0
    %v9951 = vadd.f32 %v9910, %v9950
    %v9952 = vpop.f32.mrf.mxu0
    %v9953 = vpop.f32.mrf.mxu0
    %9954 = vdwg.mxu0
    %9955 = vmatprep.subr.bf16.mxu0 %v9548
    %9956 = vmatpush1.bf16.msra.mxu0 %v9547
    %9957 = vmatprep.subr.bf16.mxu0 %v9540
    %9958 = vmatpush1.bf16.msra.mxu0 %v9539
    %9959 = vmatprep.subr.bf16.mxu0 %v9532
    %9960 = vmatpush1.bf16.msra.mxu0 %v9531
    %9961 = vmatprep.subr.bf16.mxu0 %v9524
    %9962 = vmatpush1.bf16.msra.mxu0 %v9523
    %9963 = vmatprep.subr.bf16.mxu0 %v9516
    %9964 = vmatpush1.bf16.msra.mxu0 %v9515
    %9965 = vmatprep.subr.bf16.mxu0 %v9508
    %9966 = vmatpush1.bf16.msra.mxu0 %v9507
    %9967 = vmatprep.subr.bf16.mxu0 %v9500
    %9968 = vmatpush1.bf16.msra.mxu0 %v9499
    %9969 = vmatprep.subr.bf16.mxu0 %v9492
    %9970 = vmatpush1.bf16.msra.mxu0 %v9491
    %9971 = vmatprep.subr.bf16.mxu0 %v9612
    %9972 = vmatpush2.bf16.msra.mxu0 %v9611
    %9973 = vmatprep.subr.bf16.mxu0 %v9604
    %9974 = vmatpush2.bf16.msra.mxu0 %v9603
    %9975 = vmatprep.subr.bf16.mxu0 %v9596
    %9976 = vmatpush2.bf16.msra.mxu0 %v9595
    %9977 = vmatprep.subr.bf16.mxu0 %v9588
    %9978 = vmatpush2.bf16.msra.mxu0 %v9587
    %9979 = vmatprep.subr.bf16.mxu0 %v9580
    %9980 = vmatpush2.bf16.msra.mxu0 %v9579
    %9981 = vmatprep.subr.bf16.mxu0 %v9572
    %9982 = vmatpush2.bf16.msra.mxu0 %v9571
    %9983 = vmatprep.subr.bf16.mxu0 %v9564
    %9984 = vmatpush2.bf16.msra.mxu0 %v9563
    %9985 = vmatprep.subr.bf16.mxu0 %v9556
    %9986 = vmatpush2.bf16.msra.mxu0 %v9555
    %9987 = vmatprep.mubr.bf16.mxu0 %v8677
    %9988 = vmatmul.mubr.bf16.gmra.mxu0 %v8676
    %v9989 = vpop.f32.mrf.mxu0
    %v9990 = vadd.f32 %v8884, %v9989
    %v9991 = vpop.f32.mrf.mxu0
    %v9992 = vadd.f32 %v8888, %v9991
    %v9993 = vpop.f32.mrf.mxu0
    %v9994 = vpop.f32.mrf.mxu0
    %9995 = vdwg.mxu0
    %9996 = vmatprep.subr.bf16.mxu0 %v9676
    %9997 = vmatpush1.bf16.msra.mxu0 %v9675
    %9998 = vmatprep.subr.bf16.mxu0 %v9668
    %9999 = vmatpush1.bf16.msra.mxu0 %v9667
    %10000 = vmatprep.subr.bf16.mxu0 %v9660
    %10001 = vmatpush1.bf16.msra.mxu0 %v9659
    %10002 = vmatprep.subr.bf16.mxu0 %v9652
    %10003 = vmatpush1.bf16.msra.mxu0 %v9651
    %10004 = vmatprep.subr.bf16.mxu0 %v9644
    %10005 = vmatpush1.bf16.msra.mxu0 %v9643
    %10006 = vmatprep.subr.bf16.mxu0 %v9636
    %10007 = vmatpush1.bf16.msra.mxu0 %v9635
    %10008 = vmatprep.subr.bf16.mxu0 %v9628
    %10009 = vmatpush1.bf16.msra.mxu0 %v9627
    %10010 = vmatprep.subr.bf16.mxu0 %v9620
    %10011 = vmatpush1.bf16.msra.mxu0 %v9619
    %10012 = vmatprep.subr.bf16.mxu0 0
    %10013 = vmatpush2.bf16.msra.mxu0 0
    %10014 = vmatprep.subr.bf16.mxu0 0
    %10015 = vmatpush2.bf16.msra.mxu0 0
    %10016 = vmatprep.subr.bf16.mxu0 0
    %10017 = vmatpush2.bf16.msra.mxu0 0
    %10018 = vmatprep.subr.bf16.mxu0 0
    %10019 = vmatpush2.bf16.msra.mxu0 0
    %10020 = vmatprep.subr.bf16.mxu0 0
    %10021 = vmatpush2.bf16.msra.mxu0 0
    %10022 = vmatprep.subr.bf16.mxu0 0
    %10023 = vmatpush2.bf16.msra.mxu0 0
    %10024 = vmatprep.subr.bf16.mxu0 0
    %10025 = vmatpush2.bf16.msra.mxu0 0
    %10026 = vmatprep.subr.bf16.mxu0 0
    %10027 = vmatpush2.bf16.msra.mxu0 0
    %10028 = vmatprep.mubr.bf16.mxu0 0
    %10029 = vmatmul.mubr.bf16.gmra.mxu0 %v8678
    %v10030 = vpop.f32.mrf.mxu0
    %v10031 = vadd.f32 %v9990, %v10030
    %v10032 = vpop.f32.mrf.mxu0
    %v10033 = vadd.f32 %v9992, %v10032
    %v10034 = vpop.f32.mrf.mxu0
    %v10035 = vpop.f32.mrf.mxu0
    %10036 = vdwg.mxu0
    %10037 = vmatprep.subr.bf16.mxu0 %v9550
    %10038 = vmatpush1.bf16.msra.mxu0 %v9549
    %10039 = vmatprep.subr.bf16.mxu0 %v9542
    %10040 = vmatpush1.bf16.msra.mxu0 %v9541
    %10041 = vmatprep.subr.bf16.mxu0 %v9534
    %10042 = vmatpush1.bf16.msra.mxu0 %v9533
    %10043 = vmatprep.subr.bf16.mxu0 %v9526
    %10044 = vmatpush1.bf16.msra.mxu0 %v9525
    %10045 = vmatprep.subr.bf16.mxu0 %v9518
    %10046 = vmatpush1.bf16.msra.mxu0 %v9517
    %10047 = vmatprep.subr.bf16.mxu0 %v9510
    %10048 = vmatpush1.bf16.msra.mxu0 %v9509
    %10049 = vmatprep.subr.bf16.mxu0 %v9502
    %10050 = vmatpush1.bf16.msra.mxu0 %v9501
    %10051 = vmatprep.subr.bf16.mxu0 %v9494
    %10052 = vmatpush1.bf16.msra.mxu0 %v9493
    %10053 = vmatprep.subr.bf16.mxu0 %v9614
    %10054 = vmatpush2.bf16.msra.mxu0 %v9613
    %10055 = vmatprep.subr.bf16.mxu0 %v9606
    %10056 = vmatpush2.bf16.msra.mxu0 %v9605
    %10057 = vmatprep.subr.bf16.mxu0 %v9598
    %10058 = vmatpush2.bf16.msra.mxu0 %v9597
    %10059 = vmatprep.subr.bf16.mxu0 %v9590
    %10060 = vmatpush2.bf16.msra.mxu0 %v9589
    %10061 = vmatprep.subr.bf16.mxu0 %v9582
    %10062 = vmatpush2.bf16.msra.mxu0 %v9581
    %10063 = vmatprep.subr.bf16.mxu0 %v9574
    %10064 = vmatpush2.bf16.msra.mxu0 %v9573
    %10065 = vmatprep.subr.bf16.mxu0 %v9566
    %10066 = vmatpush2.bf16.msra.mxu0 %v9565
    %10067 = vmatprep.subr.bf16.mxu0 %v9558
    %10068 = vmatpush2.bf16.msra.mxu0 %v9557
    %10069 = vmatprep.mubr.bf16.mxu0 %v8677
    %10070 = vmatmul.mubr.bf16.gmra.mxu0 %v8676
    %v10071 = vpop.f32.mrf.mxu0
    %v10072 = vadd.f32 %v8892, %v10071
    %v10073 = vpop.f32.mrf.mxu0
    %v10074 = vadd.f32 %v8896, %v10073
    %v10075 = vpop.f32.mrf.mxu0
    %v10076 = vpop.f32.mrf.mxu0
    %10077 = vdwg.mxu0
    %10078 = vmatprep.subr.bf16.mxu0 %v9678
    %10079 = vmatpush1.bf16.msra.mxu0 %v9677
    %10080 = vmatprep.subr.bf16.mxu0 %v9670
    %10081 = vmatpush1.bf16.msra.mxu0 %v9669
    %10082 = vmatprep.subr.bf16.mxu0 %v9662
    %10083 = vmatpush1.bf16.msra.mxu0 %v9661
    %10084 = vmatprep.subr.bf16.mxu0 %v9654
    %10085 = vmatpush1.bf16.msra.mxu0 %v9653
    %10086 = vmatprep.subr.bf16.mxu0 %v9646
    %10087 = vmatpush1.bf16.msra.mxu0 %v9645
    %10088 = vmatprep.subr.bf16.mxu0 %v9638
    %10089 = vmatpush1.bf16.msra.mxu0 %v9637
    %10090 = vmatprep.subr.bf16.mxu0 %v9630
    %10091 = vmatpush1.bf16.msra.mxu0 %v9629
    %10092 = vmatprep.subr.bf16.mxu0 %v9622
    %10093 = vmatpush1.bf16.msra.mxu0 %v9621
    %10094 = vmatprep.subr.bf16.mxu0 0
    %10095 = vmatpush2.bf16.msra.mxu0 0
    %10096 = vmatprep.subr.bf16.mxu0 0
    %10097 = vmatpush2.bf16.msra.mxu0 0
    %10098 = vmatprep.subr.bf16.mxu0 0
    %10099 = vmatpush2.bf16.msra.mxu0 0
    %10100 = vmatprep.subr.bf16.mxu0 0
    %10101 = vmatpush2.bf16.msra.mxu0 0
    %10102 = vmatprep.subr.bf16.mxu0 0
    %10103 = vmatpush2.bf16.msra.mxu0 0
    %10104 = vmatprep.subr.bf16.mxu0 0
    %10105 = vmatpush2.bf16.msra.mxu0 0
    %10106 = vmatprep.subr.bf16.mxu0 0
    %10107 = vmatpush2.bf16.msra.mxu0 0
    %10108 = vmatprep.subr.bf16.mxu0 0
    %10109 = vmatpush2.bf16.msra.mxu0 0
    %10110 = vmatprep.mubr.bf16.mxu0 0
    %10111 = vmatmul.mubr.bf16.gmra.mxu0 %v8678
    %v10112 = vpop.f32.mrf.mxu0
    %v10113 = vadd.f32 %v10072, %v10112
    %v10114 = vpop.f32.mrf.mxu0
    %v10115 = vadd.f32 %v10074, %v10114
    %v10116 = vpop.f32.mrf.mxu0
    %v10117 = vpop.f32.mrf.mxu0
    %10118 = vdwg.mxu0
    %10119 = vmatprep.subr.bf16.mxu0 %v9552
    %10120 = vmatpush1.bf16.msra.mxu0 %v9551
    %10121 = vmatprep.subr.bf16.mxu0 %v9544
    %10122 = vmatpush1.bf16.msra.mxu0 %v9543
    %10123 = vmatprep.subr.bf16.mxu0 %v9536
    %10124 = vmatpush1.bf16.msra.mxu0 %v9535
    %10125 = vmatprep.subr.bf16.mxu0 %v9528
    %10126 = vmatpush1.bf16.msra.mxu0 %v9527
    %10127 = vmatprep.subr.bf16.mxu0 %v9520
    %10128 = vmatpush1.bf16.msra.mxu0 %v9519
    %10129 = vmatprep.subr.bf16.mxu0 %v9512
    %10130 = vmatpush1.bf16.msra.mxu0 %v9511
    %10131 = vmatprep.subr.bf16.mxu0 %v9504
    %10132 = vmatpush1.bf16.msra.mxu0 %v9503
    %10133 = vmatprep.subr.bf16.mxu0 %v9496
    %10134 = vmatpush1.bf16.msra.mxu0 %v9495
    %10135 = vmatprep.subr.bf16.mxu0 %v9616
    %10136 = vmatpush2.bf16.msra.mxu0 %v9615
    %10137 = vmatprep.subr.bf16.mxu0 %v9608
    %10138 = vmatpush2.bf16.msra.mxu0 %v9607
    %10139 = vmatprep.subr.bf16.mxu0 %v9600
    %10140 = vmatpush2.bf16.msra.mxu0 %v9599
    %10141 = vmatprep.subr.bf16.mxu0 %v9592
    %10142 = vmatpush2.bf16.msra.mxu0 %v9591
    %10143 = vmatprep.subr.bf16.mxu0 %v9584
    %10144 = vmatpush2.bf16.msra.mxu0 %v9583
    %10145 = vmatprep.subr.bf16.mxu0 %v9576
    %10146 = vmatpush2.bf16.msra.mxu0 %v9575
    %10147 = vmatprep.subr.bf16.mxu0 %v9568
    %10148 = vmatpush2.bf16.msra.mxu0 %v9567
    %10149 = vmatprep.subr.bf16.mxu0 %v9560
    %10150 = vmatpush2.bf16.msra.mxu0 %v9559
    %10151 = vmatprep.mubr.bf16.mxu0 %v8677
    %10152 = vmatmul.mubr.bf16.gmra.mxu0 %v8676
    %v10153 = vpop.f32.mrf.mxu0
    %v10154 = vadd.f32 %v8900, %v10153
    %v10155 = vpop.f32.mrf.mxu0
    %v10156 = vadd.f32 %v8904, %v10155
    %v10157 = vpop.f32.mrf.mxu0
    %v10158 = vpop.f32.mrf.mxu0
    %10159 = vdwg.mxu0
    %10160 = vmatprep.subr.bf16.mxu0 %v9680
    %10161 = vmatpush1.bf16.msra.mxu0 %v9679
    %10162 = vmatprep.subr.bf16.mxu0 %v9672
    %10163 = vmatpush1.bf16.msra.mxu0 %v9671
    %10164 = vmatprep.subr.bf16.mxu0 %v9664
    %10165 = vmatpush1.bf16.msra.mxu0 %v9663
    %10166 = vmatprep.subr.bf16.mxu0 %v9656
    %10167 = vmatpush1.bf16.msra.mxu0 %v9655
    %10168 = vmatprep.subr.bf16.mxu0 %v9648
    %10169 = vmatpush1.bf16.msra.mxu0 %v9647
    %10170 = vmatprep.subr.bf16.mxu0 %v9640
    %10171 = vmatpush1.bf16.msra.mxu0 %v9639
    %10172 = vmatprep.subr.bf16.mxu0 %v9632
    %10173 = vmatpush1.bf16.msra.mxu0 %v9631
    %10174 = vmatprep.subr.bf16.mxu0 %v9624
    %10175 = vmatpush1.bf16.msra.mxu0 %v9623
    %10176 = vmatprep.subr.bf16.mxu0 0
    %10177 = vmatpush2.bf16.msra.mxu0 0
    %10178 = vmatprep.subr.bf16.mxu0 0
    %10179 = vmatpush2.bf16.msra.mxu0 0
    %10180 = vmatprep.subr.bf16.mxu0 0
    %10181 = vmatpush2.bf16.msra.mxu0 0
    %10182 = vmatprep.subr.bf16.mxu0 0
    %10183 = vmatpush2.bf16.msra.mxu0 0
    %10184 = vmatprep.subr.bf16.mxu0 0
    %10185 = vmatpush2.bf16.msra.mxu0 0
    %10186 = vmatprep.subr.bf16.mxu0 0
    %10187 = vmatpush2.bf16.msra.mxu0 0
    %10188 = vmatprep.subr.bf16.mxu0 0
    %10189 = vmatpush2.bf16.msra.mxu0 0
    %10190 = vmatprep.subr.bf16.mxu0 0
    %10191 = vmatpush2.bf16.msra.mxu0 0
    %10192 = vmatprep.mubr.bf16.mxu0 0
    %10193 = vmatmul.mubr.bf16.gmra.mxu0 %v8678
    %v10194 = vpop.f32.mrf.mxu0
    %v10195 = vadd.f32 %v10154, %v10194
    %v10196 = vpop.f32.mrf.mxu0
    %v10197 = vadd.f32 %v10156, %v10196
    %v10198 = vpop.f32.mrf.mxu0
    %v10199 = vpop.f32.mrf.mxu0
    %10200 = vdwg.mxu0
    %vm10201 = vcmp.gt.f32.partialorder %v9949, 0.0
    %vm10202 = vcmp.gt.f32.partialorder %v9951, 0.0
    %vm10203 = vcmp.gt.f32.partialorder %v10031, 0.0
    %vm10204 = vcmp.gt.f32.partialorder %v10033, 0.0
    %vm10205 = vcmp.gt.f32.partialorder %v10113, 0.0
    %vm10206 = vcmp.gt.f32.partialorder %v10115, 0.0
    %vm10207 = vcmp.gt.f32.partialorder %v10195, 0.0
    %vm10208 = vcmp.gt.f32.partialorder %v10197, 0.0
    %v10209 = vmul.f32 %v9949, 1.442695
    %v10210 = vpow.pop %v10209
    %v10211 = vmul.f32 %v9951, 1.442695
    %v10212 = vpow.pop %v10211
    %v10213 = vmul.f32 %v10031, 1.442695
    %v10214 = vpow.pop %v10213
    %v10215 = vmul.f32 %v10033, 1.442695
    %v10216 = vpow.pop %v10215
    %v10217 = vmul.f32 %v10113, 1.442695
    %v10218 = vpow.pop %v10217
    %v10219 = vmul.f32 %v10115, 1.442695
    %v10220 = vpow.pop %v10219
    %v10221 = vmul.f32 %v10195, 1.442695
    %v10222 = vpow.pop %v10221
    %v10223 = vmul.f32 %v10197, 1.442695
    %v10224 = vpow.pop %v10223
    %v10225 = vsub.f32 %v10210, 1.0
    %v10226 = vsub.f32 %v10212, 1.0
    %v10227 = vsub.f32 %v10214, 1.0
    %v10228 = vsub.f32 %v10216, 1.0
    %v10229 = vsub.f32 %v10218, 1.0
    %v10230 = vsub.f32 %v10220, 1.0
    %v10231 = vsub.f32 %v10222, 1.0
    %v10232 = vsub.f32 %v10224, 1.0
    %v10233 = vmul.f32 %v10225, 1.6732632
    %v10234 = vmul.f32 %v10226, 1.6732632
    %v10235 = vmul.f32 %v10227, 1.6732632
    %v10236 = vmul.f32 %v10228, 1.6732632
    %v10237 = vmul.f32 %v10229, 1.6732632
    %v10238 = vmul.f32 %v10230, 1.6732632
    %v10239 = vmul.f32 %v10231, 1.6732632
    %v10240 = vmul.f32 %v10232, 1.6732632
    %v10241 = vsel %vm10201, %v9949, %v10233
    %v10242 = vsel %vm10202, %v9951, %v10234
    %v10243 = vsel %vm10203, %v10031, %v10235
    %v10244 = vsel %vm10204, %v10033, %v10236
    %v10245 = vsel %vm10205, %v10113, %v10237
    %v10246 = vsel %vm10206, %v10115, %v10238
    %v10247 = vsel %vm10207, %v10195, %v10239
    %v10248 = vsel %vm10208, %v10197, %v10240
    %v10249 = vmul.f32 %v10241, 1.050701
    %v10250 = vmul.f32 %v10242, 1.050701
    %v10251 = vmul.f32 %v10243, 1.050701
    %v10252 = vmul.f32 %v10244, 1.050701
    %v10253 = vmul.f32 %v10245, 1.050701
    %v10254 = vmul.f32 %v10246, 1.050701
    %v10255 = vmul.f32 %v10247, 1.050701
    %v10256 = vmul.f32 %v10248, 1.050701
    %v10257 = vpack.c.bf16 %v10249, %v10249
    %v10258 = vpack.c.bf16 %v10250, %v10250
    %v10259 = vpack.c.bf16 %v10251, %v10251
    %v10260 = vpack.c.bf16 %v10252, %v10252
    %v10261 = vpack.c.bf16 %v10253, %v10253
    %v10262 = vpack.c.bf16 %v10254, %v10254
    %v10263 = vpack.c.bf16 %v10255, %v10255
    %v10264 = vpack.c.bf16 %v10256, %v10256
    %v10265 = vld [vmem:[%s73] sm:$0xff]
    %v10266 = vld [vmem:[%s73 + $0x8] sm:$0xff]
    %v10267 = vld [vmem:[%s73 + $0x10] sm:$0xff]
    %v10268 = vld [vmem:[%s73 + $0x18] sm:$0xff]
    %v10269 = vld [vmem:[%s73 + $0x20] sm:$0xff]
    %v10270 = vld [vmem:[%s73 + $0x28] sm:$0xff]
    %v10271 = vld [vmem:[%s73 + $0x30] sm:$0xff]
    %v10272 = vld [vmem:[%s73 + $0x38] sm:$0xff]
    %v10273 = vld [vmem:[%s73 + $0x40] sm:$0xff]
    %v10274 = vld [vmem:[%s73 + $0x48] sm:$0xff]
    %v10275 = vld [vmem:[%s73 + $0x50] sm:$0xff]
    %v10276 = vld [vmem:[%s73 + $0x58] sm:$0xff]
    %v10277 = vld [vmem:[%s73 + $0x60] sm:$0xff]
    %v10278 = vld [vmem:[%s73 + $0x68] sm:$0xff]
    %v10279 = vld [vmem:[%s73 + $0x70] sm:$0xff]
    %v10280 = vld [vmem:[%s73 + $0x78] sm:$0xff]
    %v10281 = vld [vmem:[%s73 + $0x80] sm:$0xff]
    %v10282 = vld [vmem:[%s73 + $0x88] sm:$0xff]
    %v10283 = vld [vmem:[%s73 + $0x90] sm:$0xff]
    %v10284 = vld [vmem:[%s73 + $0x98] sm:$0xff]
    %v10285 = vld [vmem:[%s73 + $0xa0] sm:$0xff]
    %v10286 = vld [vmem:[%s73 + $0xa8] sm:$0xff]
    %v10287 = vld [vmem:[%s73 + $0xb0] sm:$0xff]
    %v10288 = vld [vmem:[%s73 + $0xb8] sm:$0xff]
    %v10289 = vld [vmem:[%s73 + $0xc0] sm:$0xff]
    %v10290 = vld [vmem:[%s73 + $0xc8] sm:$0xff]
    %v10291 = vld [vmem:[%s73 + $0xd0] sm:$0xff]
    %v10292 = vld [vmem:[%s73 + $0xd8] sm:$0xff]
    %v10293 = vld [vmem:[%s73 + $0xe0] sm:$0xff]
    %v10294 = vld [vmem:[%s73 + $0xe8] sm:$0xff]
    %v10295 = vld [vmem:[%s73 + $0xf0] sm:$0xff]
    %v10296 = vld [vmem:[%s73 + $0xf8] sm:$0xff]
    %v10297 = vld [vmem:[%s73 + $0x100] sm:$0xff]
    %v10298 = vld [vmem:[%s73 + $0x108] sm:$0xff]
    %v10299 = vld [vmem:[%s73 + $0x110] sm:$0xff]
    %v10300 = vld [vmem:[%s73 + $0x118] sm:$0xff]
    %v10301 = vld [vmem:[%s73 + $0x120] sm:$0xff]
    %v10302 = vld [vmem:[%s73 + $0x128] sm:$0xff]
    %v10303 = vld [vmem:[%s73 + $0x130] sm:$0xff]
    %v10304 = vld [vmem:[%s73 + $0x138] sm:$0xff]
    %v10305 = vld [vmem:[%s73 + $0x140] sm:$0xff]
    %v10306 = vld [vmem:[%s73 + $0x148] sm:$0xff]
    %v10307 = vld [vmem:[%s73 + $0x150] sm:$0xff]
    %v10308 = vld [vmem:[%s73 + $0x158] sm:$0xff]
    %v10309 = vld [vmem:[%s73 + $0x160] sm:$0xff]
    %v10310 = vld [vmem:[%s73 + $0x168] sm:$0xff]
    %v10311 = vld [vmem:[%s73 + $0x170] sm:$0xff]
    %v10312 = vld [vmem:[%s73 + $0x178] sm:$0xff]
    %v10313 = vld [vmem:[%s73 + $0x180] sm:$0xff]
    %v10314 = vld [vmem:[%s73 + $0x188] sm:$0xff]
    %v10315 = vld [vmem:[%s73 + $0x190] sm:$0xff]
    %v10316 = vld [vmem:[%s73 + $0x198] sm:$0xff]
    %v10317 = vld [vmem:[%s73 + $0x1a0] sm:$0xff]
    %v10318 = vld [vmem:[%s73 + $0x1a8] sm:$0xff]
    %v10319 = vld [vmem:[%s73 + $0x1b0] sm:$0xff]
    %v10320 = vld [vmem:[%s73 + $0x1b8] sm:$0xff]
    %v10321 = vld [vmem:[%s73 + $0x1c0] sm:$0xff]
    %v10322 = vld [vmem:[%s73 + $0x1c8] sm:$0xff]
    %v10323 = vld [vmem:[%s73 + $0x1d0] sm:$0xff]
    %v10324 = vld [vmem:[%s73 + $0x1d8] sm:$0xff]
    %v10325 = vld [vmem:[%s73 + $0x1e0] sm:$0xff]
    %v10326 = vld [vmem:[%s73 + $0x1e8] sm:$0xff]
    %v10327 = vld [vmem:[%s73 + $0x1f0] sm:$0xff]
    %v10328 = vld [vmem:[%s73 + $0x1f8] sm:$0xff]
    %v10329 = vld [vmem:[%s73 + $0x200] sm:$0xff]
    %v10330 = vld [vmem:[%s73 + $0x208] sm:$0xff]
    %v10331 = vld [vmem:[%s73 + $0x210] sm:$0xff]
    %v10332 = vld [vmem:[%s73 + $0x218] sm:$0xff]
    %v10333 = vld [vmem:[%s73 + $0x220] sm:$0xff]
    %v10334 = vld [vmem:[%s73 + $0x228] sm:$0xff]
    %v10335 = vld [vmem:[%s73 + $0x230] sm:$0xff]
    %v10336 = vld [vmem:[%s73 + $0x238] sm:$0xff]
    %v10337 = vld [vmem:[%s73 + $0x240] sm:$0xff]
    %v10338 = vld [vmem:[%s73 + $0x248] sm:$0xff]
    %v10339 = vld [vmem:[%s73 + $0x250] sm:$0xff]
    %v10340 = vld [vmem:[%s73 + $0x258] sm:$0xff]
    %v10341 = vld [vmem:[%s73 + $0x260] sm:$0xff]
    %v10342 = vld [vmem:[%s73 + $0x268] sm:$0xff]
    %v10343 = vld [vmem:[%s73 + $0x270] sm:$0xff]
    %v10344 = vld [vmem:[%s73 + $0x278] sm:$0xff]
    %v10345 = vld [vmem:[%s73 + $0x280] sm:$0xff]
    %v10346 = vld [vmem:[%s73 + $0x288] sm:$0xff]
    %v10347 = vld [vmem:[%s73 + $0x290] sm:$0xff]
    %v10348 = vld [vmem:[%s73 + $0x298] sm:$0xff]
    %v10349 = vld [vmem:[%s73 + $0x2a0] sm:$0xff]
    %v10350 = vld [vmem:[%s73 + $0x2a8] sm:$0xff]
    %v10351 = vld [vmem:[%s73 + $0x2b0] sm:$0xff]
    %v10352 = vld [vmem:[%s73 + $0x2b8] sm:$0xff]
    %v10353 = vld [vmem:[%s73 + $0x2c0] sm:$0xff]
    %v10354 = vld [vmem:[%s73 + $0x2c8] sm:$0xff]
    %v10355 = vld [vmem:[%s73 + $0x2d0] sm:$0xff]
    %v10356 = vld [vmem:[%s73 + $0x2d8] sm:$0xff]
    %v10357 = vld [vmem:[%s73 + $0x2e0] sm:$0xff]
    %v10358 = vld [vmem:[%s73 + $0x2e8] sm:$0xff]
    %v10359 = vld [vmem:[%s73 + $0x2f0] sm:$0xff]
    %v10360 = vld [vmem:[%s73 + $0x2f8] sm:$0xff]
    %v10361 = vld [vmem:[%s73 + $0x300] sm:$0xff]
    %v10362 = vld [vmem:[%s73 + $0x308] sm:$0xff]
    %v10363 = vld [vmem:[%s73 + $0x310] sm:$0xff]
    %v10364 = vld [vmem:[%s73 + $0x318] sm:$0xff]
    %v10365 = vld [vmem:[%s73 + $0x320] sm:$0xff]
    %v10366 = vld [vmem:[%s73 + $0x328] sm:$0xff]
    %v10367 = vld [vmem:[%s73 + $0x330] sm:$0xff]
    %v10368 = vld [vmem:[%s73 + $0x338] sm:$0xff]
    %v10369 = vld [vmem:[%s73 + $0x340] sm:$0xff]
    %v10370 = vld [vmem:[%s73 + $0x348] sm:$0xff]
    %v10371 = vld [vmem:[%s73 + $0x350] sm:$0xff]
    %v10372 = vld [vmem:[%s73 + $0x358] sm:$0xff]
    %v10373 = vld [vmem:[%s73 + $0x360] sm:$0xff]
    %v10374 = vld [vmem:[%s73 + $0x368] sm:$0xff]
    %v10375 = vld [vmem:[%s73 + $0x370] sm:$0xff]
    %v10376 = vld [vmem:[%s73 + $0x378] sm:$0xff]
    %v10377 = vld [vmem:[%s73 + $0x380] sm:$0xff]
    %v10378 = vld [vmem:[%s73 + $0x388] sm:$0xff]
    %v10379 = vld [vmem:[%s73 + $0x390] sm:$0xff]
    %v10380 = vld [vmem:[%s73 + $0x398] sm:$0xff]
    %v10381 = vld [vmem:[%s73 + $0x3a0] sm:$0xff]
    %v10382 = vld [vmem:[%s73 + $0x3a8] sm:$0xff]
    %v10383 = vld [vmem:[%s73 + $0x3b0] sm:$0xff]
    %v10384 = vld [vmem:[%s73 + $0x3b8] sm:$0xff]
    %v10385 = vld [vmem:[%s73 + $0x3c0] sm:$0xff]
    %v10386 = vld [vmem:[%s73 + $0x3c8] sm:$0xff]
    %v10387 = vld [vmem:[%s73 + $0x3d0] sm:$0xff]
    %v10388 = vld [vmem:[%s73 + $0x3d8] sm:$0xff]
    %v10389 = vld [vmem:[%s73 + $0x3e0] sm:$0xff]
    %v10390 = vld [vmem:[%s73 + $0x3e8] sm:$0xff]
    %v10391 = vld [vmem:[%s73 + $0x3f0] sm:$0xff]
    %v10392 = vld [vmem:[%s73 + $0x3f8] sm:$0xff]
    %v10393 = vld [vmem:[%s75] sm:$0x3]
    %v10395 = vlaneseq
    %v10396 = vshrl.u32 %v10395, 7
    %v10397 = vsub.s32 0, %v10396
    %v10398 = vrot.slane %v10393, %v10397
    %v10399 = vlaneseq
    %v10400 = vshrl.u32 %v10399, 7
    %v10401 = vsub.s32 1, %v10400
    %v10402 = vrot.slane %v10393, %v10401
    %v10533 = vunpack.c.l.b16 %v10265
    %v10534 = vunpack.c.h.b16 %v10265
    %v10535 = vunpack.c.l.b16 %v10266
    %v10536 = vunpack.c.h.b16 %v10266
    %v10537 = vunpack.c.l.b16 %v10267
    %v10538 = vunpack.c.h.b16 %v10267
    %v10539 = vunpack.c.l.b16 %v10268
    %v10540 = vunpack.c.h.b16 %v10268
    %v10541 = vunpack.c.l.b16 %v10269
    %v10542 = vunpack.c.h.b16 %v10269
    %v10543 = vunpack.c.l.b16 %v10270
    %v10544 = vunpack.c.h.b16 %v10270
    %v10545 = vunpack.c.l.b16 %v10271
    %v10546 = vunpack.c.h.b16 %v10271
    %v10547 = vunpack.c.l.b16 %v10272
    %v10548 = vunpack.c.h.b16 %v10272
    %v10549 = vunpack.c.l.b16 %v10273
    %v10550 = vunpack.c.h.b16 %v10273
    %v10551 = vunpack.c.l.b16 %v10274
    %v10552 = vunpack.c.h.b16 %v10274
    %v10553 = vunpack.c.l.b16 %v10275
    %v10554 = vunpack.c.h.b16 %v10275
    %v10555 = vunpack.c.l.b16 %v10276
    %v10556 = vunpack.c.h.b16 %v10276
    %v10557 = vunpack.c.l.b16 %v10277
    %v10558 = vunpack.c.h.b16 %v10277
    %v10559 = vunpack.c.l.b16 %v10278
    %v10560 = vunpack.c.h.b16 %v10278
    %v10561 = vunpack.c.l.b16 %v10279
    %v10562 = vunpack.c.h.b16 %v10279
    %v10563 = vunpack.c.l.b16 %v10280
    %v10564 = vunpack.c.h.b16 %v10280
    %v10565 = vunpack.c.l.b16 %v10281
    %v10566 = vunpack.c.h.b16 %v10281
    %v10567 = vunpack.c.l.b16 %v10282
    %v10568 = vunpack.c.h.b16 %v10282
    %v10569 = vunpack.c.l.b16 %v10283
    %v10570 = vunpack.c.h.b16 %v10283
    %v10571 = vunpack.c.l.b16 %v10284
    %v10572 = vunpack.c.h.b16 %v10284
    %v10573 = vunpack.c.l.b16 %v10285
    %v10574 = vunpack.c.h.b16 %v10285
    %v10575 = vunpack.c.l.b16 %v10286
    %v10576 = vunpack.c.h.b16 %v10286
    %v10577 = vunpack.c.l.b16 %v10287
    %v10578 = vunpack.c.h.b16 %v10287
    %v10579 = vunpack.c.l.b16 %v10288
    %v10580 = vunpack.c.h.b16 %v10288
    %v10581 = vunpack.c.l.b16 %v10289
    %v10582 = vunpack.c.h.b16 %v10289
    %v10583 = vunpack.c.l.b16 %v10290
    %v10584 = vunpack.c.h.b16 %v10290
    %v10585 = vunpack.c.l.b16 %v10291
    %v10586 = vunpack.c.h.b16 %v10291
    %v10587 = vunpack.c.l.b16 %v10292
    %v10588 = vunpack.c.h.b16 %v10292
    %v10589 = vunpack.c.l.b16 %v10293
    %v10590 = vunpack.c.h.b16 %v10293
    %v10591 = vunpack.c.l.b16 %v10294
    %v10592 = vunpack.c.h.b16 %v10294
    %v10593 = vunpack.c.l.b16 %v10295
    %v10594 = vunpack.c.h.b16 %v10295
    %v10595 = vunpack.c.l.b16 %v10296
    %v10596 = vunpack.c.h.b16 %v10296
    %v10597 = vunpack.c.l.b16 %v10297
    %v10598 = vunpack.c.h.b16 %v10297
    %v10599 = vunpack.c.l.b16 %v10298
    %v10600 = vunpack.c.h.b16 %v10298
    %v10601 = vunpack.c.l.b16 %v10299
    %v10602 = vunpack.c.h.b16 %v10299
    %v10603 = vunpack.c.l.b16 %v10300
    %v10604 = vunpack.c.h.b16 %v10300
    %v10605 = vunpack.c.l.b16 %v10301
    %v10606 = vunpack.c.h.b16 %v10301
    %v10607 = vunpack.c.l.b16 %v10302
    %v10608 = vunpack.c.h.b16 %v10302
    %v10609 = vunpack.c.l.b16 %v10303
    %v10610 = vunpack.c.h.b16 %v10303
    %v10611 = vunpack.c.l.b16 %v10304
    %v10612 = vunpack.c.h.b16 %v10304
    %v10613 = vunpack.c.l.b16 %v10305
    %v10614 = vunpack.c.h.b16 %v10305
    %v10615 = vunpack.c.l.b16 %v10306
    %v10616 = vunpack.c.h.b16 %v10306
    %v10617 = vunpack.c.l.b16 %v10307
    %v10618 = vunpack.c.h.b16 %v10307
    %v10619 = vunpack.c.l.b16 %v10308
    %v10620 = vunpack.c.h.b16 %v10308
    %v10621 = vunpack.c.l.b16 %v10309
    %v10622 = vunpack.c.h.b16 %v10309
    %v10623 = vunpack.c.l.b16 %v10310
    %v10624 = vunpack.c.h.b16 %v10310
    %v10625 = vunpack.c.l.b16 %v10311
    %v10626 = vunpack.c.h.b16 %v10311
    %v10627 = vunpack.c.l.b16 %v10312
    %v10628 = vunpack.c.h.b16 %v10312
    %v10629 = vunpack.c.l.b16 %v10313
    %v10630 = vunpack.c.h.b16 %v10313
    %v10631 = vunpack.c.l.b16 %v10314
    %v10632 = vunpack.c.h.b16 %v10314
    %v10633 = vunpack.c.l.b16 %v10315
    %v10634 = vunpack.c.h.b16 %v10315
    %v10635 = vunpack.c.l.b16 %v10316
    %v10636 = vunpack.c.h.b16 %v10316
    %v10637 = vunpack.c.l.b16 %v10317
    %v10638 = vunpack.c.h.b16 %v10317
    %v10639 = vunpack.c.l.b16 %v10318
    %v10640 = vunpack.c.h.b16 %v10318
    %v10641 = vunpack.c.l.b16 %v10319
    %v10642 = vunpack.c.h.b16 %v10319
    %v10643 = vunpack.c.l.b16 %v10320
    %v10644 = vunpack.c.h.b16 %v10320
    %v10645 = vunpack.c.l.b16 %v10321
    %v10646 = vunpack.c.h.b16 %v10321
    %v10647 = vunpack.c.l.b16 %v10322
    %v10648 = vunpack.c.h.b16 %v10322
    %v10649 = vunpack.c.l.b16 %v10323
    %v10650 = vunpack.c.h.b16 %v10323
    %v10651 = vunpack.c.l.b16 %v10324
    %v10652 = vunpack.c.h.b16 %v10324
    %v10653 = vunpack.c.l.b16 %v10325
    %v10654 = vunpack.c.h.b16 %v10325
    %v10655 = vunpack.c.l.b16 %v10326
    %v10656 = vunpack.c.h.b16 %v10326
    %v10657 = vunpack.c.l.b16 %v10327
    %v10658 = vunpack.c.h.b16 %v10327
    %v10659 = vunpack.c.l.b16 %v10328
    %v10660 = vunpack.c.h.b16 %v10328
    %v10661 = vunpack.c.l.b16 %v10329
    %v10662 = vunpack.c.h.b16 %v10329
    %v10663 = vunpack.c.l.b16 %v10330
    %v10664 = vunpack.c.h.b16 %v10330
    %v10665 = vunpack.c.l.b16 %v10331
    %v10666 = vunpack.c.h.b16 %v10331
    %v10667 = vunpack.c.l.b16 %v10332
    %v10668 = vunpack.c.h.b16 %v10332
    %v10669 = vunpack.c.l.b16 %v10333
    %v10670 = vunpack.c.h.b16 %v10333
    %v10671 = vunpack.c.l.b16 %v10334
    %v10672 = vunpack.c.h.b16 %v10334
    %v10673 = vunpack.c.l.b16 %v10335
    %v10674 = vunpack.c.h.b16 %v10335
    %v10675 = vunpack.c.l.b16 %v10336
    %v10676 = vunpack.c.h.b16 %v10336
    %v10677 = vunpack.c.l.b16 %v10337
    %v10678 = vunpack.c.h.b16 %v10337
    %v10679 = vunpack.c.l.b16 %v10338
    %v10680 = vunpack.c.h.b16 %v10338
    %v10681 = vunpack.c.l.b16 %v10339
    %v10682 = vunpack.c.h.b16 %v10339
    %v10683 = vunpack.c.l.b16 %v10340
    %v10684 = vunpack.c.h.b16 %v10340
    %v10685 = vunpack.c.l.b16 %v10341
    %v10686 = vunpack.c.h.b16 %v10341
    %v10687 = vunpack.c.l.b16 %v10342
    %v10688 = vunpack.c.h.b16 %v10342
    %v10689 = vunpack.c.l.b16 %v10343
    %v10690 = vunpack.c.h.b16 %v10343
    %v10691 = vunpack.c.l.b16 %v10344
    %v10692 = vunpack.c.h.b16 %v10344
    %v10693 = vunpack.c.l.b16 %v10345
    %v10694 = vunpack.c.h.b16 %v10345
    %v10695 = vunpack.c.l.b16 %v10346
    %v10696 = vunpack.c.h.b16 %v10346
    %v10697 = vunpack.c.l.b16 %v10347
    %v10698 = vunpack.c.h.b16 %v10347
    %v10699 = vunpack.c.l.b16 %v10348
    %v10700 = vunpack.c.h.b16 %v10348
    %v10701 = vunpack.c.l.b16 %v10349
    %v10702 = vunpack.c.h.b16 %v10349
    %v10703 = vunpack.c.l.b16 %v10350
    %v10704 = vunpack.c.h.b16 %v10350
    %v10705 = vunpack.c.l.b16 %v10351
    %v10706 = vunpack.c.h.b16 %v10351
    %v10707 = vunpack.c.l.b16 %v10352
    %v10708 = vunpack.c.h.b16 %v10352
    %v10709 = vunpack.c.l.b16 %v10353
    %v10710 = vunpack.c.h.b16 %v10353
    %v10711 = vunpack.c.l.b16 %v10354
    %v10712 = vunpack.c.h.b16 %v10354
    %v10713 = vunpack.c.l.b16 %v10355
    %v10714 = vunpack.c.h.b16 %v10355
    %v10715 = vunpack.c.l.b16 %v10356
    %v10716 = vunpack.c.h.b16 %v10356
    %v10717 = vunpack.c.l.b16 %v10357
    %v10718 = vunpack.c.h.b16 %v10357
    %v10719 = vunpack.c.l.b16 %v10358
    %v10720 = vunpack.c.h.b16 %v10358
    %v10721 = vunpack.c.l.b16 %v10359
    %v10722 = vunpack.c.h.b16 %v10359
    %v10723 = vunpack.c.l.b16 %v10360
    %v10724 = vunpack.c.h.b16 %v10360
    %v10725 = vunpack.c.l.b16 %v10361
    %v10726 = vunpack.c.h.b16 %v10361
    %v10727 = vunpack.c.l.b16 %v10362
    %v10728 = vunpack.c.h.b16 %v10362
    %v10729 = vunpack.c.l.b16 %v10363
    %v10730 = vunpack.c.h.b16 %v10363
    %v10731 = vunpack.c.l.b16 %v10364
    %v10732 = vunpack.c.h.b16 %v10364
    %v10733 = vunpack.c.l.b16 %v10365
    %v10734 = vunpack.c.h.b16 %v10365
    %v10735 = vunpack.c.l.b16 %v10366
    %v10736 = vunpack.c.h.b16 %v10366
    %v10737 = vunpack.c.l.b16 %v10367
    %v10738 = vunpack.c.h.b16 %v10367
    %v10739 = vunpack.c.l.b16 %v10368
    %v10740 = vunpack.c.h.b16 %v10368
    %v10741 = vunpack.c.l.b16 %v10369
    %v10742 = vunpack.c.h.b16 %v10369
    %v10743 = vunpack.c.l.b16 %v10370
    %v10744 = vunpack.c.h.b16 %v10370
    %v10745 = vunpack.c.l.b16 %v10371
    %v10746 = vunpack.c.h.b16 %v10371
    %v10747 = vunpack.c.l.b16 %v10372
    %v10748 = vunpack.c.h.b16 %v10372
    %v10749 = vunpack.c.l.b16 %v10373
    %v10750 = vunpack.c.h.b16 %v10373
    %v10751 = vunpack.c.l.b16 %v10374
    %v10752 = vunpack.c.h.b16 %v10374
    %v10753 = vunpack.c.l.b16 %v10375
    %v10754 = vunpack.c.h.b16 %v10375
    %v10755 = vunpack.c.l.b16 %v10376
    %v10756 = vunpack.c.h.b16 %v10376
    %v10757 = vunpack.c.l.b16 %v10377
    %v10758 = vunpack.c.h.b16 %v10377
    %v10759 = vunpack.c.l.b16 %v10378
    %v10760 = vunpack.c.h.b16 %v10378
    %v10761 = vunpack.c.l.b16 %v10379
    %v10762 = vunpack.c.h.b16 %v10379
    %v10763 = vunpack.c.l.b16 %v10380
    %v10764 = vunpack.c.h.b16 %v10380
    %v10765 = vunpack.c.l.b16 %v10381
    %v10766 = vunpack.c.h.b16 %v10381
    %v10767 = vunpack.c.l.b16 %v10382
    %v10768 = vunpack.c.h.b16 %v10382
    %v10769 = vunpack.c.l.b16 %v10383
    %v10770 = vunpack.c.h.b16 %v10383
    %v10771 = vunpack.c.l.b16 %v10384
    %v10772 = vunpack.c.h.b16 %v10384
    %v10773 = vunpack.c.l.b16 %v10385
    %v10774 = vunpack.c.h.b16 %v10385
    %v10775 = vunpack.c.l.b16 %v10386
    %v10776 = vunpack.c.h.b16 %v10386
    %v10777 = vunpack.c.l.b16 %v10387
    %v10778 = vunpack.c.h.b16 %v10387
    %v10779 = vunpack.c.l.b16 %v10388
    %v10780 = vunpack.c.h.b16 %v10388
    %v10781 = vunpack.c.l.b16 %v10389
    %v10782 = vunpack.c.h.b16 %v10389
    %v10783 = vunpack.c.l.b16 %v10390
    %v10784 = vunpack.c.h.b16 %v10390
    %v10785 = vunpack.c.l.b16 %v10391
    %v10786 = vunpack.c.h.b16 %v10391
    %v10787 = vunpack.c.l.b16 %v10392
    %v10788 = vunpack.c.h.b16 %v10392
    %v10789 = vpack.c.b16 %v10535, %v10533
    %v10790 = vpack.c.b16 %v10536, %v10534
    %v10791 = vpack.c.b16 %v10539, %v10537
    %v10792 = vpack.c.b16 %v10540, %v10538
    %v10793 = vpack.c.b16 %v10543, %v10541
    %v10794 = vpack.c.b16 %v10544, %v10542
    %v10795 = vpack.c.b16 %v10547, %v10545
    %v10796 = vpack.c.b16 %v10548, %v10546
    %v10797 = vpack.c.b16 %v10551, %v10549
    %v10798 = vpack.c.b16 %v10552, %v10550
    %v10799 = vpack.c.b16 %v10555, %v10553
    %v10800 = vpack.c.b16 %v10556, %v10554
    %v10801 = vpack.c.b16 %v10559, %v10557
    %v10802 = vpack.c.b16 %v10560, %v10558
    %v10803 = vpack.c.b16 %v10563, %v10561
    %v10804 = vpack.c.b16 %v10564, %v10562
    %v10805 = vpack.c.b16 %v10567, %v10565
    %v10806 = vpack.c.b16 %v10568, %v10566
    %v10807 = vpack.c.b16 %v10571, %v10569
    %v10808 = vpack.c.b16 %v10572, %v10570
    %v10809 = vpack.c.b16 %v10575, %v10573
    %v10810 = vpack.c.b16 %v10576, %v10574
    %v10811 = vpack.c.b16 %v10579, %v10577
    %v10812 = vpack.c.b16 %v10580, %v10578
    %v10813 = vpack.c.b16 %v10583, %v10581
    %v10814 = vpack.c.b16 %v10584, %v10582
    %v10815 = vpack.c.b16 %v10587, %v10585
    %v10816 = vpack.c.b16 %v10588, %v10586
    %v10817 = vpack.c.b16 %v10591, %v10589
    %v10818 = vpack.c.b16 %v10592, %v10590
    %v10819 = vpack.c.b16 %v10595, %v10593
    %v10820 = vpack.c.b16 %v10596, %v10594
    %v10821 = vpack.c.b16 %v10599, %v10597
    %v10822 = vpack.c.b16 %v10600, %v10598
    %v10823 = vpack.c.b16 %v10603, %v10601
    %v10824 = vpack.c.b16 %v10604, %v10602
    %v10825 = vpack.c.b16 %v10607, %v10605
    %v10826 = vpack.c.b16 %v10608, %v10606
    %v10827 = vpack.c.b16 %v10611, %v10609
    %v10828 = vpack.c.b16 %v10612, %v10610
    %v10829 = vpack.c.b16 %v10615, %v10613
    %v10830 = vpack.c.b16 %v10616, %v10614
    %v10831 = vpack.c.b16 %v10619, %v10617
    %v10832 = vpack.c.b16 %v10620, %v10618
    %v10833 = vpack.c.b16 %v10623, %v10621
    %v10834 = vpack.c.b16 %v10624, %v10622
    %v10835 = vpack.c.b16 %v10627, %v10625
    %v10836 = vpack.c.b16 %v10628, %v10626
    %v10837 = vpack.c.b16 %v10631, %v10629
    %v10838 = vpack.c.b16 %v10632, %v10630
    %v10839 = vpack.c.b16 %v10635, %v10633
    %v10840 = vpack.c.b16 %v10636, %v10634
    %v10841 = vpack.c.b16 %v10639, %v10637
    %v10842 = vpack.c.b16 %v10640, %v10638
    %v10843 = vpack.c.b16 %v10643, %v10641
    %v10844 = vpack.c.b16 %v10644, %v10642
    %v10845 = vpack.c.b16 %v10647, %v10645
    %v10846 = vpack.c.b16 %v10648, %v10646
    %v10847 = vpack.c.b16 %v10651, %v10649
    %v10848 = vpack.c.b16 %v10652, %v10650
    %v10849 = vpack.c.b16 %v10655, %v10653
    %v10850 = vpack.c.b16 %v10656, %v10654
    %v10851 = vpack.c.b16 %v10659, %v10657
    %v10852 = vpack.c.b16 %v10660, %v10658
    %v10853 = vpack.c.b16 %v10663, %v10661
    %v10854 = vpack.c.b16 %v10664, %v10662
    %v10855 = vpack.c.b16 %v10667, %v10665
    %v10856 = vpack.c.b16 %v10668, %v10666
    %v10857 = vpack.c.b16 %v10671, %v10669
    %v10858 = vpack.c.b16 %v10672, %v10670
    %v10859 = vpack.c.b16 %v10675, %v10673
    %v10860 = vpack.c.b16 %v10676, %v10674
    %v10861 = vpack.c.b16 %v10679, %v10677
    %v10862 = vpack.c.b16 %v10680, %v10678
    %v10863 = vpack.c.b16 %v10683, %v10681
    %v10864 = vpack.c.b16 %v10684, %v10682
    %v10865 = vpack.c.b16 %v10687, %v10685
    %v10866 = vpack.c.b16 %v10688, %v10686
    %v10867 = vpack.c.b16 %v10691, %v10689
    %v10868 = vpack.c.b16 %v10692, %v10690
    %v10869 = vpack.c.b16 %v10695, %v10693
    %v10870 = vpack.c.b16 %v10696, %v10694
    %v10871 = vpack.c.b16 %v10699, %v10697
    %v10872 = vpack.c.b16 %v10700, %v10698
    %v10873 = vpack.c.b16 %v10703, %v10701
    %v10874 = vpack.c.b16 %v10704, %v10702
    %v10875 = vpack.c.b16 %v10707, %v10705
    %v10876 = vpack.c.b16 %v10708, %v10706
    %v10877 = vpack.c.b16 %v10711, %v10709
    %v10878 = vpack.c.b16 %v10712, %v10710
    %v10879 = vpack.c.b16 %v10715, %v10713
    %v10880 = vpack.c.b16 %v10716, %v10714
    %v10881 = vpack.c.b16 %v10719, %v10717
    %v10882 = vpack.c.b16 %v10720, %v10718
    %v10883 = vpack.c.b16 %v10723, %v10721
    %v10884 = vpack.c.b16 %v10724, %v10722
    %v10885 = vpack.c.b16 %v10727, %v10725
    %v10886 = vpack.c.b16 %v10728, %v10726
    %v10887 = vpack.c.b16 %v10731, %v10729
    %v10888 = vpack.c.b16 %v10732, %v10730
    %v10889 = vpack.c.b16 %v10735, %v10733
    %v10890 = vpack.c.b16 %v10736, %v10734
    %v10891 = vpack.c.b16 %v10739, %v10737
    %v10892 = vpack.c.b16 %v10740, %v10738
    %v10893 = vpack.c.b16 %v10743, %v10741
    %v10894 = vpack.c.b16 %v10744, %v10742
    %v10895 = vpack.c.b16 %v10747, %v10745
    %v10896 = vpack.c.b16 %v10748, %v10746
    %v10897 = vpack.c.b16 %v10751, %v10749
    %v10898 = vpack.c.b16 %v10752, %v10750
    %v10899 = vpack.c.b16 %v10755, %v10753
    %v10900 = vpack.c.b16 %v10756, %v10754
    %v10901 = vpack.c.b16 %v10759, %v10757
    %v10902 = vpack.c.b16 %v10760, %v10758
    %v10903 = vpack.c.b16 %v10763, %v10761
    %v10904 = vpack.c.b16 %v10764, %v10762
    %v10905 = vpack.c.b16 %v10767, %v10765
    %v10906 = vpack.c.b16 %v10768, %v10766
    %v10907 = vpack.c.b16 %v10771, %v10769
    %v10908 = vpack.c.b16 %v10772, %v10770
    %v10909 = vpack.c.b16 %v10775, %v10773
    %v10910 = vpack.c.b16 %v10776, %v10774
    %v10911 = vpack.c.b16 %v10779, %v10777
    %v10912 = vpack.c.b16 %v10780, %v10778
    %v10913 = vpack.c.b16 %v10783, %v10781
    %v10914 = vpack.c.b16 %v10784, %v10782
    %v10915 = vpack.c.b16 %v10787, %v10785
    %v10916 = vpack.c.b16 %v10788, %v10786
    %11045 = vmatprep.subr.bf16.mxu0 %v10804
    %11046 = vmatpush1.bf16.msra.mxu0 %v10803
    %11047 = vmatprep.subr.bf16.mxu0 %v10802
    %11048 = vmatpush1.bf16.msra.mxu0 %v10801
    %11049 = vmatprep.subr.bf16.mxu0 %v10800
    %11050 = vmatpush1.bf16.msra.mxu0 %v10799
    %11051 = vmatprep.subr.bf16.mxu0 %v10798
    %11052 = vmatpush1.bf16.msra.mxu0 %v10797
    %11053 = vmatprep.subr.bf16.mxu0 %v10796
    %11054 = vmatpush1.bf16.msra.mxu0 %v10795
    %11055 = vmatprep.subr.bf16.mxu0 %v10794
    %11056 = vmatpush1.bf16.msra.mxu0 %v10793
    %11057 = vmatprep.subr.bf16.mxu0 %v10792
    %11058 = vmatpush1.bf16.msra.mxu0 %v10791
    %11059 = vmatprep.subr.bf16.mxu0 %v10790
    %11060 = vmatpush1.bf16.msra.mxu0 %v10789
    %11061 = vmatprep.subr.bf16.mxu0 %v10820
    %11062 = vmatpush2.bf16.msra.mxu0 %v10819
    %11063 = vmatprep.subr.bf16.mxu0 %v10818
    %11064 = vmatpush2.bf16.msra.mxu0 %v10817
    %11065 = vmatprep.subr.bf16.mxu0 %v10816
    %11066 = vmatpush2.bf16.msra.mxu0 %v10815
    %11067 = vmatprep.subr.bf16.mxu0 %v10814
    %11068 = vmatpush2.bf16.msra.mxu0 %v10813
    %11069 = vmatprep.subr.bf16.mxu0 %v10812
    %11070 = vmatpush2.bf16.msra.mxu0 %v10811
    %11071 = vmatprep.subr.bf16.mxu0 %v10810
    %11072 = vmatpush2.bf16.msra.mxu0 %v10809
    %11073 = vmatprep.subr.bf16.mxu0 %v10808
    %11074 = vmatpush2.bf16.msra.mxu0 %v10807
    %11075 = vmatprep.subr.bf16.mxu0 %v10806
    %11076 = vmatpush2.bf16.msra.mxu0 %v10805
    %11077 = vmatprep.mubr.bf16.mxu0 %v10258
    %11078 = vmatmul.mubr.bf16.gmra.mxu0 %v10257
    %v11079 = vpop.f32.mrf.mxu0
    %v11080 = vadd.f32 %v10398, %v11079
    %v11081 = vpop.f32.mrf.mxu0
    %v11082 = vadd.f32 %v10402, %v11081
    %v11083 = vpop.f32.mrf.mxu0
    %v11084 = vpop.f32.mrf.mxu0
    %11085 = vdwg.mxu0
    %11086 = vmatprep.subr.bf16.mxu0 %v10836
    %11087 = vmatpush1.bf16.msra.mxu0 %v10835
    %11088 = vmatprep.subr.bf16.mxu0 %v10834
    %11089 = vmatpush1.bf16.msra.mxu0 %v10833
    %11090 = vmatprep.subr.bf16.mxu0 %v10832
    %11091 = vmatpush1.bf16.msra.mxu0 %v10831
    %11092 = vmatprep.subr.bf16.mxu0 %v10830
    %11093 = vmatpush1.bf16.msra.mxu0 %v10829
    %11094 = vmatprep.subr.bf16.mxu0 %v10828
    %11095 = vmatpush1.bf16.msra.mxu0 %v10827
    %11096 = vmatprep.subr.bf16.mxu0 %v10826
    %11097 = vmatpush1.bf16.msra.mxu0 %v10825
    %11098 = vmatprep.subr.bf16.mxu0 %v10824
    %11099 = vmatpush1.bf16.msra.mxu0 %v10823
    %11100 = vmatprep.subr.bf16.mxu0 %v10822
    %11101 = vmatpush1.bf16.msra.mxu0 %v10821
    %11102 = vmatprep.subr.bf16.mxu0 %v10852
    %11103 = vmatpush2.bf16.msra.mxu0 %v10851
    %11104 = vmatprep.subr.bf16.mxu0 %v10850
    %11105 = vmatpush2.bf16.msra.mxu0 %v10849
    %11106 = vmatprep.subr.bf16.mxu0 %v10848
    %11107 = vmatpush2.bf16.msra.mxu0 %v10847
    %11108 = vmatprep.subr.bf16.mxu0 %v10846
    %11109 = vmatpush2.bf16.msra.mxu0 %v10845
    %11110 = vmatprep.subr.bf16.mxu0 %v10844
    %11111 = vmatpush2.bf16.msra.mxu0 %v10843
    %11112 = vmatprep.subr.bf16.mxu0 %v10842
    %11113 = vmatpush2.bf16.msra.mxu0 %v10841
    %11114 = vmatprep.subr.bf16.mxu0 %v10840
    %11115 = vmatpush2.bf16.msra.mxu0 %v10839
    %11116 = vmatprep.subr.bf16.mxu0 %v10838
    %11117 = vmatpush2.bf16.msra.mxu0 %v10837
    %11118 = vmatprep.mubr.bf16.mxu0 %v10260
    %11119 = vmatmul.mubr.bf16.gmra.mxu0 %v10259
    %v11120 = vpop.f32.mrf.mxu0
    %v11121 = vadd.f32 %v11080, %v11120
    %v11122 = vpop.f32.mrf.mxu0
    %v11123 = vadd.f32 %v11082, %v11122
    %v11124 = vpop.f32.mrf.mxu0
    %v11125 = vpop.f32.mrf.mxu0
    %11126 = vdwg.mxu0
    %11127 = vmatprep.subr.bf16.mxu0 %v10868
    %11128 = vmatpush1.bf16.msra.mxu0 %v10867
    %11129 = vmatprep.subr.bf16.mxu0 %v10866
    %11130 = vmatpush1.bf16.msra.mxu0 %v10865
    %11131 = vmatprep.subr.bf16.mxu0 %v10864
    %11132 = vmatpush1.bf16.msra.mxu0 %v10863
    %11133 = vmatprep.subr.bf16.mxu0 %v10862
    %11134 = vmatpush1.bf16.msra.mxu0 %v10861
    %11135 = vmatprep.subr.bf16.mxu0 %v10860
    %11136 = vmatpush1.bf16.msra.mxu0 %v10859
    %11137 = vmatprep.subr.bf16.mxu0 %v10858
    %11138 = vmatpush1.bf16.msra.mxu0 %v10857
    %11139 = vmatprep.subr.bf16.mxu0 %v10856
    %11140 = vmatpush1.bf16.msra.mxu0 %v10855
    %11141 = vmatprep.subr.bf16.mxu0 %v10854
    %11142 = vmatpush1.bf16.msra.mxu0 %v10853
    %11143 = vmatprep.subr.bf16.mxu0 %v10884
    %11144 = vmatpush2.bf16.msra.mxu0 %v10883
    %11145 = vmatprep.subr.bf16.mxu0 %v10882
    %11146 = vmatpush2.bf16.msra.mxu0 %v10881
    %11147 = vmatprep.subr.bf16.mxu0 %v10880
    %11148 = vmatpush2.bf16.msra.mxu0 %v10879
    %11149 = vmatprep.subr.bf16.mxu0 %v10878
    %11150 = vmatpush2.bf16.msra.mxu0 %v10877
    %11151 = vmatprep.subr.bf16.mxu0 %v10876
    %11152 = vmatpush2.bf16.msra.mxu0 %v10875
    %11153 = vmatprep.subr.bf16.mxu0 %v10874
    %11154 = vmatpush2.bf16.msra.mxu0 %v10873
    %11155 = vmatprep.subr.bf16.mxu0 %v10872
    %11156 = vmatpush2.bf16.msra.mxu0 %v10871
    %11157 = vmatprep.subr.bf16.mxu0 %v10870
    %11158 = vmatpush2.bf16.msra.mxu0 %v10869
    %11159 = vmatprep.mubr.bf16.mxu0 %v10262
    %11160 = vmatmul.mubr.bf16.gmra.mxu0 %v10261
    %v11161 = vpop.f32.mrf.mxu0
    %v11162 = vadd.f32 %v11121, %v11161
    %v11163 = vpop.f32.mrf.mxu0
    %v11164 = vadd.f32 %v11123, %v11163
    %v11165 = vpop.f32.mrf.mxu0
    %v11166 = vpop.f32.mrf.mxu0
    %11167 = vdwg.mxu0
    %11168 = vmatprep.subr.bf16.mxu0 %v10900
    %11169 = vmatpush1.bf16.msra.mxu0 %v10899
    %11170 = vmatprep.subr.bf16.mxu0 %v10898
    %11171 = vmatpush1.bf16.msra.mxu0 %v10897
    %11172 = vmatprep.subr.bf16.mxu0 %v10896
    %11173 = vmatpush1.bf16.msra.mxu0 %v10895
    %11174 = vmatprep.subr.bf16.mxu0 %v10894
    %11175 = vmatpush1.bf16.msra.mxu0 %v10893
    %11176 = vmatprep.subr.bf16.mxu0 %v10892
    %11177 = vmatpush1.bf16.msra.mxu0 %v10891
    %11178 = vmatprep.subr.bf16.mxu0 %v10890
    %11179 = vmatpush1.bf16.msra.mxu0 %v10889
    %11180 = vmatprep.subr.bf16.mxu0 %v10888
    %11181 = vmatpush1.bf16.msra.mxu0 %v10887
    %11182 = vmatprep.subr.bf16.mxu0 %v10886
    %11183 = vmatpush1.bf16.msra.mxu0 %v10885
    %11184 = vmatprep.subr.bf16.mxu0 %v10916
    %11185 = vmatpush2.bf16.msra.mxu0 %v10915
    %11186 = vmatprep.subr.bf16.mxu0 %v10914
    %11187 = vmatpush2.bf16.msra.mxu0 %v10913
    %11188 = vmatprep.subr.bf16.mxu0 %v10912
    %11189 = vmatpush2.bf16.msra.mxu0 %v10911
    %11190 = vmatprep.subr.bf16.mxu0 %v10910
    %11191 = vmatpush2.bf16.msra.mxu0 %v10909
    %11192 = vmatprep.subr.bf16.mxu0 %v10908
    %11193 = vmatpush2.bf16.msra.mxu0 %v10907
    %11194 = vmatprep.subr.bf16.mxu0 %v10906
    %11195 = vmatpush2.bf16.msra.mxu0 %v10905
    %11196 = vmatprep.subr.bf16.mxu0 %v10904
    %11197 = vmatpush2.bf16.msra.mxu0 %v10903
    %11198 = vmatprep.subr.bf16.mxu0 %v10902
    %11199 = vmatpush2.bf16.msra.mxu0 %v10901
    %11200 = vmatprep.mubr.bf16.mxu0 %v10264
    %11201 = vmatmul.mubr.bf16.gmra.mxu0 %v10263
    %v11202 = vpop.f32.mrf.mxu0
    %v11203 = vadd.f32 %v11162, %v11202
    %v11204 = vpop.f32.mrf.mxu0
    %v11205 = vadd.f32 %v11164, %v11204
    %v11206 = vpop.f32.mrf.mxu0
    %v11207 = vpop.f32.mrf.mxu0
    %11208 = vdwg.mxu0
    %vm11209 = vcmp.gt.f32.partialorder %v11203, 0.0
    %vm11210 = vcmp.gt.f32.partialorder %v11205, 0.0
    %v11211 = vmul.f32 %v11203, 1.442695
    %v11212 = vpow.pop %v11211
    %v11213 = vmul.f32 %v11205, 1.442695
    %v11214 = vpow.pop %v11213
    %v11215 = vsub.f32 %v11212, 1.0
    %v11216 = vsub.f32 %v11214, 1.0
    %v11217 = vmul.f32 %v11215, 1.6732632
    %v11218 = vmul.f32 %v11216, 1.6732632
    %v11219 = vsel %vm11209, %v11203, %v11217
    %v11220 = vsel %vm11210, %v11205, %v11218
    %v11221 = vmul.f32 %v11219, 1.050701
    %v11222 = vmul.f32 %v11220, 1.050701
    %v11223 = vpack.c.bf16 %v11221, %v11221
    %v11224 = vpack.c.bf16 %v11222, %v11222
    %v11225 = vld [vmem:[%s77] sm:$0xf]
    %v11226 = vld [vmem:[%s77 + $0x4] sm:$0xf]
    %v11227 = vld [vmem:[%s77 + $0x8] sm:$0xf]
    %v11228 = vld [vmem:[%s77 + $0xc] sm:$0xf]
    %v11229 = vld [vmem:[%s77 + $0x10] sm:$0xf]
    %v11230 = vld [vmem:[%s77 + $0x14] sm:$0xf]
    %v11231 = vld [vmem:[%s77 + $0x18] sm:$0xf]
    %v11232 = vld [vmem:[%s77 + $0x1c] sm:$0xf]
    %v11233 = vld [vmem:[%s77 + $0x20] sm:$0xf]
    %v11234 = vld [vmem:[%s77 + $0x24] sm:$0xf]
    %v11235 = vld [vmem:[%s77 + $0x28] sm:$0xf]
    %v11236 = vld [vmem:[%s77 + $0x2c] sm:$0xf]
    %v11237 = vld [vmem:[%s77 + $0x30] sm:$0xf]
    %v11238 = vld [vmem:[%s77 + $0x34] sm:$0xf]
    %v11239 = vld [vmem:[%s77 + $0x38] sm:$0xf]
    %v11240 = vld [vmem:[%s77 + $0x3c] sm:$0xf]
    %v11241 = vld [vmem:[%s77 + $0x40] sm:$0xf]
    %v11242 = vld [vmem:[%s77 + $0x44] sm:$0xf]
    %v11243 = vld [vmem:[%s77 + $0x48] sm:$0xf]
    %v11244 = vld [vmem:[%s77 + $0x4c] sm:$0xf]
    %v11245 = vld [vmem:[%s77 + $0x50] sm:$0xf]
    %v11246 = vld [vmem:[%s77 + $0x54] sm:$0xf]
    %v11247 = vld [vmem:[%s77 + $0x58] sm:$0xf]
    %v11248 = vld [vmem:[%s77 + $0x5c] sm:$0xf]
    %v11249 = vld [vmem:[%s77 + $0x60] sm:$0xf]
    %v11250 = vld [vmem:[%s77 + $0x64] sm:$0xf]
    %v11251 = vld [vmem:[%s77 + $0x68] sm:$0xf]
    %v11252 = vld [vmem:[%s77 + $0x6c] sm:$0xf]
    %v11253 = vld [vmem:[%s77 + $0x70] sm:$0xf]
    %v11254 = vld [vmem:[%s77 + $0x74] sm:$0xf]
    %v11255 = vld [vmem:[%s77 + $0x78] sm:$0xf]
    %v11256 = vld [vmem:[%s77 + $0x7c] sm:$0xf]
    %v11257 = vld [vmem:[%s79] sm:$0x1]
    %v11259 = vlaneseq
    %v11260 = vshrl.u32 %v11259, 7
    %v11261 = vsub.s32 0, %v11260
    %v11262 = vrot.slane %v11257, %v11261
    %v11296 = vunpack.c.l.b16 %v11225
    %v11297 = vunpack.c.l.b16 %v11226
    %v11298 = vunpack.c.l.b16 %v11227
    %v11299 = vunpack.c.l.b16 %v11228
    %v11300 = vunpack.c.l.b16 %v11229
    %v11301 = vunpack.c.l.b16 %v11230
    %v11302 = vunpack.c.l.b16 %v11231
    %v11303 = vunpack.c.l.b16 %v11232
    %v11304 = vunpack.c.l.b16 %v11233
    %v11305 = vunpack.c.l.b16 %v11234
    %v11306 = vunpack.c.l.b16 %v11235
    %v11307 = vunpack.c.l.b16 %v11236
    %v11308 = vunpack.c.l.b16 %v11237
    %v11309 = vunpack.c.l.b16 %v11238
    %v11310 = vunpack.c.l.b16 %v11239
    %v11311 = vunpack.c.l.b16 %v11240
    %v11312 = vunpack.c.l.b16 %v11241
    %v11313 = vunpack.c.l.b16 %v11242
    %v11314 = vunpack.c.l.b16 %v11243
    %v11315 = vunpack.c.l.b16 %v11244
    %v11316 = vunpack.c.l.b16 %v11245
    %v11317 = vunpack.c.l.b16 %v11246
    %v11318 = vunpack.c.l.b16 %v11247
    %v11319 = vunpack.c.l.b16 %v11248
    %v11320 = vunpack.c.l.b16 %v11249
    %v11321 = vunpack.c.l.b16 %v11250
    %v11322 = vunpack.c.l.b16 %v11251
    %v11323 = vunpack.c.l.b16 %v11252
    %v11324 = vunpack.c.l.b16 %v11253
    %v11325 = vunpack.c.l.b16 %v11254
    %v11326 = vunpack.c.l.b16 %v11255
    %v11327 = vunpack.c.l.b16 %v11256
    %v11328 = vpack.c.b16 %v11297, %v11296
    %v11329 = vpack.c.b16 %v11299, %v11298
    %v11330 = vpack.c.b16 %v11301, %v11300
    %v11331 = vpack.c.b16 %v11303, %v11302
    %v11332 = vpack.c.b16 %v11305, %v11304
    %v11333 = vpack.c.b16 %v11307, %v11306
    %v11334 = vpack.c.b16 %v11309, %v11308
    %v11335 = vpack.c.b16 %v11311, %v11310
    %v11336 = vpack.c.b16 %v11313, %v11312
    %v11337 = vpack.c.b16 %v11315, %v11314
    %v11338 = vpack.c.b16 %v11317, %v11316
    %v11339 = vpack.c.b16 %v11319, %v11318
    %v11340 = vpack.c.b16 %v11321, %v11320
    %v11341 = vpack.c.b16 %v11323, %v11322
    %v11342 = vpack.c.b16 %v11325, %v11324
    %v11343 = vpack.c.b16 %v11327, %v11326
    %11360 = vmatprep.subr.bf16.mxu0 0
    %11361 = vmatpush1.bf16.msra.mxu0 %v11335
    %11362 = vmatprep.subr.bf16.mxu0 0
    %11363 = vmatpush1.bf16.msra.mxu0 %v11334
    %11364 = vmatprep.subr.bf16.mxu0 0
    %11365 = vmatpush1.bf16.msra.mxu0 %v11333
    %11366 = vmatprep.subr.bf16.mxu0 0
    %11367 = vmatpush1.bf16.msra.mxu0 %v11332
    %11368 = vmatprep.subr.bf16.mxu0 0
    %11369 = vmatpush1.bf16.msra.mxu0 %v11331
    %11370 = vmatprep.subr.bf16.mxu0 0
    %11371 = vmatpush1.bf16.msra.mxu0 %v11330
    %11372 = vmatprep.subr.bf16.mxu0 0
    %11373 = vmatpush1.bf16.msra.mxu0 %v11329
    %11374 = vmatprep.subr.bf16.mxu0 0
    %11375 = vmatpush1.bf16.msra.mxu0 %v11328
    %11376 = vmatprep.subr.bf16.mxu0 0
    %11377 = vmatpush2.bf16.msra.mxu0 %v11343
    %11378 = vmatprep.subr.bf16.mxu0 0
    %11379 = vmatpush2.bf16.msra.mxu0 %v11342
    %11380 = vmatprep.subr.bf16.mxu0 0
    %11381 = vmatpush2.bf16.msra.mxu0 %v11341
    %11382 = vmatprep.subr.bf16.mxu0 0
    %11383 = vmatpush2.bf16.msra.mxu0 %v11340
    %11384 = vmatprep.subr.bf16.mxu0 0
    %11385 = vmatpush2.bf16.msra.mxu0 %v11339
    %11386 = vmatprep.subr.bf16.mxu0 0
    %11387 = vmatpush2.bf16.msra.mxu0 %v11338
    %11388 = vmatprep.subr.bf16.mxu0 0
    %11389 = vmatpush2.bf16.msra.mxu0 %v11337
    %11390 = vmatprep.subr.bf16.mxu0 0
    %11391 = vmatpush2.bf16.msra.mxu0 %v11336
    %11392 = vmatprep.mubr.bf16.mxu0 %v11224
    %11393 = vmatmul.mubr.bf16.gmra.mxu0 %v11223
    %v11394 = vpop.f32.mrf.mxu0
    %v11395 = vadd.f32 %v11262, %v11394
    %v11396 = vpop.f32.mrf.mxu0
    %v11397 = vpop.f32.mrf.mxu0
    %v11398 = vpop.f32.mrf.mxu0
    %11399 = vdwg.mxu0
    %vm11400 = vcmp.lt.s32.totalorder %v4052, 10
    %v11401 = vsel %vm11400, %v11395, -1e+30
    %v11402 = vsel %vm1174, %v11401, -inf
    %11403 = vmax.xlane.f32.xlu0 %v11402
    %v11404 = vpop.xlane.xlu0 %11403
    %v11405 = vsub.f32 %v11401, %v11404
    %v11406 = vmul.f32 %v11405, 1.442695
    %v11407 = vpow.pop %v11406
    %v11408 = vsel %vm1174, %v11407, 0.0
    %11409 = vadd.xlane.f32.xlu0 %v11408
    %v11410 = vpop.xlane.xlu0 %11409
    %v11411 = vrcp.pop %v11410
    %v11412 = vmul.f32 %v11407, %v11411
    %11413 = vst [vmem:[#allocation7] sm:$0x3] %v11412
    // Predicated region
    $region162: #{build_model_forward.1} parent=1 // pred_check
      _
    $region163: #{build_model_forward.1} parent=1 // pred_check_branch
      %11415 = sbr.rel (0) target = $region165
    $region164: #{build_model_forward.1} parent=1 // pred_region
      _
    $region165: #{build_model_forward.1} parent=1 // pred_fallthru
      _
    // Predicated region
    $region166: #{build_model_forward.1} parent=1 // pred_check
      _
    $region167: #{build_model_forward.1} parent=1 // pred_check_branch
      %11417 = sbr.rel (0) target = $region169
    $region168: #{build_model_forward.1} parent=1 // pred_region
      %s11419 = ssub.s32 96, 96
      %11420 = vsyncadd [#allocation3], %s11419
      %s11422 = sshll.u32 [#allocation2], 4
      %s11423 = int_to_ptr.vmem [resolvable:$true] %s11422
      %11425 = dma.vmem_to_hbm [thread:$0]  %s11423, 96, %s83, [#allocation3]
    $region169: #{build_model_forward.1} parent=1 // pred_fallthru
      _
    // Predicated region
    $region170: #{build_model_forward.1} parent=1 // pred_check
      _
    $region171: #{build_model_forward.1} parent=1 // pred_check_branch
      %11427 = sbr.rel (0) target = $region173
    $region172: #{build_model_forward.1} parent=1 // pred_region
      %s11429 = ssub.s32 96, 96
      %11430 = vsyncadd [#allocation5], %s11429
      %s11432 = sshll.u32 [#allocation4], 4
      %s11433 = int_to_ptr.vmem [resolvable:$true] %s11432
      %11435 = dma.vmem_to_hbm [thread:$0]  %s11433, 96, %s85, [#allocation5]
    $region173: #{build_model_forward.1} parent=1 // pred_fallthru
      _
    // Predicated region
    $region174: #{build_model_forward.1} parent=1 // pred_check
      _
    $region175: #{build_model_forward.1} parent=1 // pred_check_branch
      %11437 = sbr.rel (0) target = $region177
    $region176: #{build_model_forward.1} parent=1 // pred_region
      %s11439 = ssub.s32 96, 96
      %11440 = vsyncadd [#allocation5], %s11439
      %s11442 = sshll.u32 [#allocation6], 4
      %s11443 = int_to_ptr.vmem [resolvable:$true] %s11442
      %11445 = dma.vmem_to_hbm [thread:$0]  %s11443, 96, %s87, [#allocation5]
    $region177: #{build_model_forward.1} parent=1 // pred_fallthru
      _
    // Predicated region
    $region178: #{build_model_forward.1} parent=1 // pred_check
      _
    $region179: #{build_model_forward.1} parent=1 // pred_check_branch
      %11447 = sbr.rel (0) target = $region181
    $region180: #{build_model_forward.1} parent=1 // pred_region
      %s11449 = ssub.s32 32, 32
      %11450 = vsyncadd [#allocation8], %s11449
      %s11452 = sshll.u32 [#allocation7], 4
      %s11453 = int_to_ptr.vmem [resolvable:$true] %s11452
      %11455 = dma.vmem_to_hbm [thread:$0]  %s11453, 32, %s89, [#allocation8]
    $region181: #{build_model_forward.1} parent=1 // pred_fallthru
      _
    // Predicated region
    $region182: #{build_model_forward.1} parent=1 // pred_check
      _
    $region183: #{build_model_forward.1} parent=1 // pred_check_branch
      %11457 = sbr.rel (0) target = $region185
    $region184: #{build_model_forward.1} parent=1 // pred_region
      _
    $region185: #{build_model_forward.1} parent=1 // pred_fallthru
      _
    // Predicated region
    $region186: #{build_model_forward.1} parent=1 // pred_check
      _
    $region187: #{build_model_forward.1} parent=1 // pred_check_branch
      %11459 = sbr.rel (0) target = $region189
    $region188: #{build_model_forward.1} parent=1 // pred_region
      %11460 = dma.done [#allocation3], 96
    $region189: #{build_model_forward.1} parent=1 // pred_fallthru
      _
    // Predicated region
    $region190: #{build_model_forward.1} parent=1 // pred_check
      _
    $region191: #{build_model_forward.1} parent=1 // pred_check_branch
      %11462 = sbr.rel (0) target = $region193
    $region192: #{build_model_forward.1} parent=1 // pred_region
      %11463 = dma.done [#allocation5], 96
    $region193: #{build_model_forward.1} parent=1 // pred_fallthru
      _
    // Predicated region
    $region194: #{build_model_forward.1} parent=1 // pred_check
      _
    $region195: #{build_model_forward.1} parent=1 // pred_check_branch
      %11465 = sbr.rel (0) target = $region197
    $region196: #{build_model_forward.1} parent=1 // pred_region
      %11466 = dma.done [#allocation5], 96
    $region197: #{build_model_forward.1} parent=1 // pred_fallthru
      _
    // Predicated region
    $region198: #{build_model_forward.1} parent=1 // pred_check
      _
    $region199: #{build_model_forward.1} parent=1 // pred_check_branch
      %11468 = sbr.rel (0) target = $region201
    $region200: #{build_model_forward.1} parent=1 // pred_region
      %11469 = dma.done [#allocation8], 32
    $region201: #{build_model_forward.1} parent=1 // pred_fallthru
      _
    %11470 = vsyncpa [#allocation3], 1
    %11471 = vsyncpa [#allocation5], 1
    %11472 = vsyncpa [#allocation8], 1

</llo_original>
